<compile_context>
chip_gen: v7x
topology: tpu7x:2x2x1
jax: 0.10.0
libtpu: 0.0.40
codegen_flags: <defaults>
</compile_context>

<pallas_src>
import functools

import jax
import jax.numpy as jnp
from jax.experimental import pallas as pl
from jax.experimental.pallas import tpu as pltpu


# ----------------------------------------------------------------------------
# Kernel: one batch element per grid step, full DoubleConv fused in VMEM.
# ----------------------------------------------------------------------------
def _double_conv_kernel(xp_ref, w1_ref, b1_ref, w2_ref, b2_ref, o_ref, mid_ref,
                        *, hh, ww, cout):
    # xp_ref : (H+2, W+2, Cin)   bf16, zero-padded input for this image
    # w1_ref : (9, Cin,  Cout)   bf16, tap-major (dy*3+dx)
    # w2_ref : (9, Cout, Cout)   bf16
    # b*_ref : (1, Cout)         f32
    # o_ref  : (H, W, Cout)      f32
    # mid_ref: (H+2, W+2, Cout)  f32 scratch (padded intermediate activation)
    hw = hh * ww

    def conv3x3(read_tap, w_ref, b_ref):
        # In-kernel im2col: 3x3 conv = 9 shifted MXU dots, f32 accumulation.
        acc = jnp.zeros((hw, cout), jnp.float32)
        for dy in range(3):
            for dx in range(3):
                tap = read_tap(dy, dx)                    # (H, W, Cs) bf16
                a = tap.reshape(hw, tap.shape[-1])
                acc = acc + jnp.dot(a, w_ref[dy * 3 + dx],
                                    preferred_element_type=jnp.float32)
        return acc + b_ref[...]

    def inorm_relu(y):
        # InstanceNorm2d(affine=False, eps=1e-5): stats over spatial, then ReLU.
        mu = jnp.mean(y, axis=0, keepdims=True)
        var = jnp.mean(jnp.square(y - mu), axis=0, keepdims=True)
        return jnp.maximum((y - mu) * jax.lax.rsqrt(var + 1e-5), 0.0)

    # ---- conv1 -> InstanceNorm -> ReLU (reads the pre-padded bf16 block) ----
    y1 = inorm_relu(conv3x3(
        lambda dy, dx: xp_ref[pl.ds(dy, hh), pl.ds(dx, ww), :],
        w1_ref, b1_ref))

    # Stage the intermediate in a zero-padded VMEM scratch so conv2's taps are
    # plain shifted slices; the padding ring never leaves VMEM.
    mid_ref[...] = jnp.zeros_like(mid_ref)
    mid_ref[1:hh + 1, 1:ww + 1, :] = y1.reshape(hh, ww, cout)

    # ---- conv2 -> InstanceNorm -> ReLU ----
    y2 = inorm_relu(conv3x3(
        lambda dy, dx: mid_ref[pl.ds(dy, hh), pl.ds(dx, ww), :].astype(jnp.bfloat16),
        w2_ref, b2_ref))

    o_ref[...] = y2.reshape(hh, ww, cout)


# ----------------------------------------------------------------------------
# Wrapper
# ----------------------------------------------------------------------------
def _prep_weight(w):
    # torch (Cout, Cin, 3, 3) -> (9, Cin, Cout) bf16, tap index = dy*3+dx.
    cout, cin = w.shape[0], w.shape[1]
    return jnp.transpose(w, (2, 3, 1, 0)).reshape(9, cin, cout).astype(jnp.bfloat16)


def inconv_forward(x_nchw, params):
    """Inconv/DoubleConv forward. x: (B, Cin, H, W) f32 -> (B, Cout, H, W) f32."""
    b, cin, hh, ww = x_nchw.shape
    cout = params['w1'].shape[0]

    # TODO(synk): spatial tiling is precluded by the full-H*W InstanceNorm
    # statistics at this fusion level; very large images would need a two-pass
    # (stats then normalize) variant.
    x = jnp.transpose(x_nchw, (0, 2, 3, 1))                      # NHWC
    xp = jnp.pad(x, ((0, 0), (1, 1), (1, 1), (0, 0))).astype(jnp.bfloat16)

    w1 = _prep_weight(params['w1'])
    w2 = _prep_weight(params['w2'])
    b1 = params['b1'].reshape(1, cout).astype(jnp.float32)
    b2 = params['b2'].reshape(1, cout).astype(jnp.float32)

    out_nhwc = pl.pallas_call(
        functools.partial(_double_conv_kernel, hh=hh, ww=ww, cout=cout),
        out_shape=jax.ShapeDtypeStruct((b, hh, ww, cout), jnp.float32),
        grid_spec=pltpu.PrefetchScalarGridSpec(
            num_scalar_prefetch=0,
            grid=(b,),
            in_specs=[
                pl.BlockSpec((None, hh + 2, ww + 2, cin), lambda i: (i, 0, 0, 0)),
                pl.BlockSpec((9, cin, cout), lambda i: (0, 0, 0)),
                pl.BlockSpec((1, cout), lambda i: (0, 0)),
                pl.BlockSpec((9, cout, cout), lambda i: (0, 0, 0)),
                pl.BlockSpec((1, cout), lambda i: (0, 0)),
            ],
            out_specs=pl.BlockSpec((None, hh, ww, cout), lambda i: (i, 0, 0, 0)),
            scratch_shapes=[pltpu.VMEM((hh + 2, ww + 2, cout), jnp.float32)],
        ),
        compiler_params=pltpu.CompilerParams(
            dimension_semantics=("parallel",),
            vmem_limit_bytes=32 * 1024 * 1024),
    )(xp, w1, b1, w2, b2)

    return jnp.transpose(out_nhwc, (0, 3, 1, 2))                 # NCHW out


# ----------------------------------------------------------------------------
# Pure-JAX f32 reference (for a sanity check only)
# ----------------------------------------------------------------------------
def inconv_reference(x_nchw, params):
    def conv_in_relu(x, w, bias):
        y = jax.lax.conv_general_dilated(
            x, w, window_strides=(1, 1), padding=((1, 1), (1, 1)),
            dimension_numbers=('NCHW', 'OIHW', 'NCHW'))
        y = y + bias[None, :, None, None]
        mu = jnp.mean(y, axis=(2, 3), keepdims=True)
        var = jnp.mean(jnp.square(y - mu), axis=(2, 3), keepdims=True)
        return jnp.maximum((y - mu) * jax.lax.rsqrt(var + 1e-5), 0.0)

    y = conv_in_relu(x_nchw, params['w1'], params['b1'])
    return conv_in_relu(y, params['w2'], params['b2'])


# ----------------------------------------------------------------------------
if __name__ == "__main__":
    B, Cin, Cout, H, W = 2, 4, 64, 16, 16

    key = jax.random.PRNGKey(0)
    k1, k2, k3, k4, kx = jax.random.split(key, 5)
    params = {
        'w1': 0.05 * jax.random.normal(k1, (Cout, Cin, 3, 3), jnp.float32),
        'b1': 0.05 * jax.random.normal(k2, (Cout,), jnp.float32),
        'w2': 0.05 * jax.random.normal(k3, (Cout, Cout, 3, 3), jnp.float32),
        'b2': 0.05 * jax.random.normal(k4, (Cout,), jnp.float32),
    }
    x = jax.random.normal(kx, (B, Cin, H, W), jnp.float32)

    out = jax.jit(inconv_forward)(x, params)
    jax.block_until_ready(out)

    assert out.shape == (B, Cout, H, W)
    assert bool(jnp.all(jnp.isfinite(out)))

    ref = inconv_reference(x, params)
    max_err = float(jnp.max(jnp.abs(out - ref)))
    # bf16 MXU operands with f32 accumulation: allow a small tolerance.
    assert max_err < 0.2, f"max abs err vs f32 reference: {max_err}"

    print("KERNEL_OK")
</pallas_src>

<mosaic_0001>
module attributes {stable_mosaic.version = 11 : i64} {
  func.func @_double_conv_kernel(%arg0: i32, %arg1: memref<1x18x18x4xbf16, #tpu.memory_space<vmem>>, %arg2: memref<9x4x64xbf16, #tpu.memory_space<vmem>>, %arg3: memref<1x64xf32, #tpu.memory_space<vmem>>, %arg4: memref<9x64x64xbf16, #tpu.memory_space<vmem>>, %arg5: memref<1x64xf32, #tpu.memory_space<vmem>>, %arg6: memref<1x16x16x64xf32, #tpu.memory_space<vmem>>, %arg7: memref<18x18x64xf32, #tpu.memory_space<vmem>>) attributes {dimension_semantics = [#tpu.dimension_semantics<parallel>], iteration_bounds = array<i64: 2>, scalar_prefetch = 0 : i64, scratch_operands = 1 : i64, tpu.core_type = #tpu.core_type<tc>, window_params = [{transform_indices = @transform_0, window_bounds = array<i64: 1, 18, 18, 4>}, {pipeline_mode = #tpu.pipeline_mode<synchronous>, transform_indices = @transform_1, window_bounds = array<i64: 9, 4, 64>}, {pipeline_mode = #tpu.pipeline_mode<synchronous>, transform_indices = @transform_2, window_bounds = array<i64: 1, 64>}, {pipeline_mode = #tpu.pipeline_mode<synchronous>, transform_indices = @transform_3, window_bounds = array<i64: 9, 64, 64>}, {pipeline_mode = #tpu.pipeline_mode<synchronous>, transform_indices = @transform_4, window_bounds = array<i64: 1, 64>}, {transform_indices = @transform_5, window_bounds = array<i64: 1, 16, 16, 64>}]} {
    %cst = arith.constant 0.000000e+00 : f32
    %0 = vector.broadcast %cst : f32 to vector<256x64xf32>
    %c0 = arith.constant 0 : index
    %c0_0 = arith.constant 0 : index
    %c0_1 = arith.constant 0 : index
    %c0_2 = arith.constant 0 : index
    %1 = vector.load %arg1[%c0, %c0_0, %c0_1, %c0_2] : memref<1x18x18x4xbf16, #tpu.memory_space<vmem>>, vector<1x16x16x4xbf16>
    %2 = vector.shape_cast %1 : vector<1x16x16x4xbf16> to vector<16x16x4xbf16>
    %3 = vector.shape_cast %2 : vector<16x16x4xbf16> to vector<256x4xbf16>
    %c0_3 = arith.constant 0 : index
    %c0_4 = arith.constant 0 : index
    %c0_5 = arith.constant 0 : index
    %4 = vector.load %arg2[%c0_3, %c0_4, %c0_5] : memref<9x4x64xbf16, #tpu.memory_space<vmem>>, vector<1x4x64xbf16>
    %5 = vector.shape_cast %4 : vector<1x4x64xbf16> to vector<4x64xbf16>
    %cst_6 = arith.constant dense<0.000000e+00> : vector<256x64xf32>
    %6 = tpu.matmul %3, %5, %cst_6 {dimension_numbers = #tpu.dot_dimension_numbers<[1], [0], [0], [1], [0, 0, 1, 1], [], []>} : vector<256x4xbf16>, vector<4x64xbf16>, vector<256x64xf32> -> vector<256x64xf32>
    %7 = arith.addf %0, %6 : vector<256x64xf32>
    %c0_7 = arith.constant 0 : index
    %c0_8 = arith.constant 0 : index
    %c1 = arith.constant 1 : index
    %c0_9 = arith.constant 0 : index
    %8 = vector.load %arg1[%c0_7, %c0_8, %c1, %c0_9] : memref<1x18x18x4xbf16, #tpu.memory_space<vmem>>, vector<1x16x16x4xbf16>
    %9 = vector.shape_cast %8 : vector<1x16x16x4xbf16> to vector<16x16x4xbf16>
    %10 = vector.shape_cast %9 : vector<16x16x4xbf16> to vector<256x4xbf16>
    %c1_10 = arith.constant 1 : index
    %c0_11 = arith.constant 0 : index
    %c0_12 = arith.constant 0 : index
    %11 = vector.load %arg2[%c1_10, %c0_11, %c0_12] : memref<9x4x64xbf16, #tpu.memory_space<vmem>>, vector<1x4x64xbf16>
    %12 = vector.shape_cast %11 : vector<1x4x64xbf16> to vector<4x64xbf16>
    %cst_13 = arith.constant dense<0.000000e+00> : vector<256x64xf32>
    %13 = tpu.matmul %10, %12, %cst_13 {dimension_numbers = #tpu.dot_dimension_numbers<[1], [0], [0], [1], [0, 0, 1, 1], [], []>} : vector<256x4xbf16>, vector<4x64xbf16>, vector<256x64xf32> -> vector<256x64xf32>
    %14 = arith.addf %7, %13 : vector<256x64xf32>
    %c0_14 = arith.constant 0 : index
    %c0_15 = arith.constant 0 : index
    %c2 = arith.constant 2 : index
    %c0_16 = arith.constant 0 : index
    %15 = vector.load %arg1[%c0_14, %c0_15, %c2, %c0_16] : memref<1x18x18x4xbf16, #tpu.memory_space<vmem>>, vector<1x16x16x4xbf16>
    %16 = vector.shape_cast %15 : vector<1x16x16x4xbf16> to vector<16x16x4xbf16>
    %17 = vector.shape_cast %16 : vector<16x16x4xbf16> to vector<256x4xbf16>
    %c2_17 = arith.constant 2 : index
    %c0_18 = arith.constant 0 : index
    %c0_19 = arith.constant 0 : index
    %18 = vector.load %arg2[%c2_17, %c0_18, %c0_19] : memref<9x4x64xbf16, #tpu.memory_space<vmem>>, vector<1x4x64xbf16>
    %19 = vector.shape_cast %18 : vector<1x4x64xbf16> to vector<4x64xbf16>
    %cst_20 = arith.constant dense<0.000000e+00> : vector<256x64xf32>
    %20 = tpu.matmul %17, %19, %cst_20 {dimension_numbers = #tpu.dot_dimension_numbers<[1], [0], [0], [1], [0, 0, 1, 1], [], []>} : vector<256x4xbf16>, vector<4x64xbf16>, vector<256x64xf32> -> vector<256x64xf32>
    %21 = arith.addf %14, %20 : vector<256x64xf32>
    %c0_21 = arith.constant 0 : index
    %c1_22 = arith.constant 1 : index
    %c0_23 = arith.constant 0 : index
    %c0_24 = arith.constant 0 : index
    %22 = vector.load %arg1[%c0_21, %c1_22, %c0_23, %c0_24] : memref<1x18x18x4xbf16, #tpu.memory_space<vmem>>, vector<1x16x16x4xbf16>
    %23 = vector.shape_cast %22 : vector<1x16x16x4xbf16> to vector<16x16x4xbf16>
    %24 = vector.shape_cast %23 : vector<16x16x4xbf16> to vector<256x4xbf16>
    %c3 = arith.constant 3 : index
    %c0_25 = arith.constant 0 : index
    %c0_26 = arith.constant 0 : index
    %25 = vector.load %arg2[%c3, %c0_25, %c0_26] : memref<9x4x64xbf16, #tpu.memory_space<vmem>>, vector<1x4x64xbf16>
    %26 = vector.shape_cast %25 : vector<1x4x64xbf16> to vector<4x64xbf16>
    %cst_27 = arith.constant dense<0.000000e+00> : vector<256x64xf32>
    %27 = tpu.matmul %24, %26, %cst_27 {dimension_numbers = #tpu.dot_dimension_numbers<[1], [0], [0], [1], [0, 0, 1, 1], [], []>} : vector<256x4xbf16>, vector<4x64xbf16>, vector<256x64xf32> -> vector<256x64xf32>
    %28 = arith.addf %21, %27 : vector<256x64xf32>
    %c0_28 = arith.constant 0 : index
    %c1_29 = arith.constant 1 : index
    %c1_30 = arith.constant 1 : index
    %c0_31 = arith.constant 0 : index
    %29 = vector.load %arg1[%c0_28, %c1_29, %c1_30, %c0_31] : memref<1x18x18x4xbf16, #tpu.memory_space<vmem>>, vector<1x16x16x4xbf16>
    %30 = vector.shape_cast %29 : vector<1x16x16x4xbf16> to vector<16x16x4xbf16>
    %31 = vector.shape_cast %30 : vector<16x16x4xbf16> to vector<256x4xbf16>
    %c4 = arith.constant 4 : index
    %c0_32 = arith.constant 0 : index
    %c0_33 = arith.constant 0 : index
    %32 = vector.load %arg2[%c4, %c0_32, %c0_33] : memref<9x4x64xbf16, #tpu.memory_space<vmem>>, vector<1x4x64xbf16>
    %33 = vector.shape_cast %32 : vector<1x4x64xbf16> to vector<4x64xbf16>
    %cst_34 = arith.constant dense<0.000000e+00> : vector<256x64xf32>
    %34 = tpu.matmul %31, %33, %cst_34 {dimension_numbers = #tpu.dot_dimension_numbers<[1], [0], [0], [1], [0, 0, 1, 1], [], []>} : vector<256x4xbf16>, vector<4x64xbf16>, vector<256x64xf32> -> vector<256x64xf32>
    %35 = arith.addf %28, %34 : vector<256x64xf32>
    %c0_35 = arith.constant 0 : index
    %c1_36 = arith.constant 1 : index
    %c2_37 = arith.constant 2 : index
    %c0_38 = arith.constant 0 : index
    %36 = vector.load %arg1[%c0_35, %c1_36, %c2_37, %c0_38] : memref<1x18x18x4xbf16, #tpu.memory_space<vmem>>, vector<1x16x16x4xbf16>
    %37 = vector.shape_cast %36 : vector<1x16x16x4xbf16> to vector<16x16x4xbf16>
    %38 = vector.shape_cast %37 : vector<16x16x4xbf16> to vector<256x4xbf16>
    %c5 = arith.constant 5 : index
    %c0_39 = arith.constant 0 : index
    %c0_40 = arith.constant 0 : index
    %39 = vector.load %arg2[%c5, %c0_39, %c0_40] : memref<9x4x64xbf16, #tpu.memory_space<vmem>>, vector<1x4x64xbf16>
    %40 = vector.shape_cast %39 : vector<1x4x64xbf16> to vector<4x64xbf16>
    %cst_41 = arith.constant dense<0.000000e+00> : vector<256x64xf32>
    %41 = tpu.matmul %38, %40, %cst_41 {dimension_numbers = #tpu.dot_dimension_numbers<[1], [0], [0], [1], [0, 0, 1, 1], [], []>} : vector<256x4xbf16>, vector<4x64xbf16>, vector<256x64xf32> -> vector<256x64xf32>
    %42 = arith.addf %35, %41 : vector<256x64xf32>
    %c0_42 = arith.constant 0 : index
    %c2_43 = arith.constant 2 : index
    %c0_44 = arith.constant 0 : index
    %c0_45 = arith.constant 0 : index
    %43 = vector.load %arg1[%c0_42, %c2_43, %c0_44, %c0_45] : memref<1x18x18x4xbf16, #tpu.memory_space<vmem>>, vector<1x16x16x4xbf16>
    %44 = vector.shape_cast %43 : vector<1x16x16x4xbf16> to vector<16x16x4xbf16>
    %45 = vector.shape_cast %44 : vector<16x16x4xbf16> to vector<256x4xbf16>
    %c6 = arith.constant 6 : index
    %c0_46 = arith.constant 0 : index
    %c0_47 = arith.constant 0 : index
    %46 = vector.load %arg2[%c6, %c0_46, %c0_47] : memref<9x4x64xbf16, #tpu.memory_space<vmem>>, vector<1x4x64xbf16>
    %47 = vector.shape_cast %46 : vector<1x4x64xbf16> to vector<4x64xbf16>
    %cst_48 = arith.constant dense<0.000000e+00> : vector<256x64xf32>
    %48 = tpu.matmul %45, %47, %cst_48 {dimension_numbers = #tpu.dot_dimension_numbers<[1], [0], [0], [1], [0, 0, 1, 1], [], []>} : vector<256x4xbf16>, vector<4x64xbf16>, vector<256x64xf32> -> vector<256x64xf32>
    %49 = arith.addf %42, %48 : vector<256x64xf32>
    %c0_49 = arith.constant 0 : index
    %c2_50 = arith.constant 2 : index
    %c1_51 = arith.constant 1 : index
    %c0_52 = arith.constant 0 : index
    %50 = vector.load %arg1[%c0_49, %c2_50, %c1_51, %c0_52] : memref<1x18x18x4xbf16, #tpu.memory_space<vmem>>, vector<1x16x16x4xbf16>
    %51 = vector.shape_cast %50 : vector<1x16x16x4xbf16> to vector<16x16x4xbf16>
    %52 = vector.shape_cast %51 : vector<16x16x4xbf16> to vector<256x4xbf16>
    %c7 = arith.constant 7 : index
    %c0_53 = arith.constant 0 : index
    %c0_54 = arith.constant 0 : index
    %53 = vector.load %arg2[%c7, %c0_53, %c0_54] : memref<9x4x64xbf16, #tpu.memory_space<vmem>>, vector<1x4x64xbf16>
    %54 = vector.shape_cast %53 : vector<1x4x64xbf16> to vector<4x64xbf16>
    %cst_55 = arith.constant dense<0.000000e+00> : vector<256x64xf32>
    %55 = tpu.matmul %52, %54, %cst_55 {dimension_numbers = #tpu.dot_dimension_numbers<[1], [0], [0], [1], [0, 0, 1, 1], [], []>} : vector<256x4xbf16>, vector<4x64xbf16>, vector<256x64xf32> -> vector<256x64xf32>
    %56 = arith.addf %49, %55 : vector<256x64xf32>
    %c0_56 = arith.constant 0 : index
    %c2_57 = arith.constant 2 : index
    %c2_58 = arith.constant 2 : index
    %c0_59 = arith.constant 0 : index
    %57 = vector.load %arg1[%c0_56, %c2_57, %c2_58, %c0_59] : memref<1x18x18x4xbf16, #tpu.memory_space<vmem>>, vector<1x16x16x4xbf16>
    %58 = vector.shape_cast %57 : vector<1x16x16x4xbf16> to vector<16x16x4xbf16>
    %59 = vector.shape_cast %58 : vector<16x16x4xbf16> to vector<256x4xbf16>
    %c8 = arith.constant 8 : index
    %c0_60 = arith.constant 0 : index
    %c0_61 = arith.constant 0 : index
    %60 = vector.load %arg2[%c8, %c0_60, %c0_61] : memref<9x4x64xbf16, #tpu.memory_space<vmem>>, vector<1x4x64xbf16>
    %61 = vector.shape_cast %60 : vector<1x4x64xbf16> to vector<4x64xbf16>
    %cst_62 = arith.constant dense<0.000000e+00> : vector<256x64xf32>
    %62 = tpu.matmul %59, %61, %cst_62 {dimension_numbers = #tpu.dot_dimension_numbers<[1], [0], [0], [1], [0, 0, 1, 1], [], []>} : vector<256x4xbf16>, vector<4x64xbf16>, vector<256x64xf32> -> vector<256x64xf32>
    %63 = arith.addf %56, %62 : vector<256x64xf32>
    %c0_63 = arith.constant 0 : index
    %c0_64 = arith.constant 0 : index
    %64 = vector.load %arg3[%c0_63, %c0_64] : memref<1x64xf32, #tpu.memory_space<vmem>>, vector<1x64xf32>
    %65 = vector.broadcast %64 : vector<1x64xf32> to vector<256x64xf32>
    %66 = arith.addf %63, %65 : vector<256x64xf32>
    %cst_65 = arith.constant dense<0.000000e+00> : vector<64xf32>
    %67 = vector.multi_reduction <add>, %66, %cst_65 [0] : vector<256x64xf32> to vector<64xf32>
    %68 = vector.shape_cast %67 : vector<64xf32> to vector<1x64xf32>
    %cst_66 = arith.constant 2.560000e+02 : f32
    %69 = vector.broadcast %cst_66 : f32 to vector<1x64xf32>
    %70 = arith.divf %68, %69 : vector<1x64xf32>
    %71 = vector.broadcast %70 : vector<1x64xf32> to vector<256x64xf32>
    %72 = arith.subf %66, %71 : vector<256x64xf32>
    %73 = arith.mulf %72, %72 : vector<256x64xf32>
    %cst_67 = arith.constant dense<0.000000e+00> : vector<64xf32>
    %74 = vector.multi_reduction <add>, %73, %cst_67 [0] : vector<256x64xf32> to vector<64xf32>
    %75 = vector.shape_cast %74 : vector<64xf32> to vector<1x64xf32>
    %cst_68 = arith.constant 2.560000e+02 : f32
    %76 = vector.broadcast %cst_68 : f32 to vector<1x64xf32>
    %77 = arith.divf %75, %76 : vector<1x64xf32>
    %78 = vector.broadcast %70 : vector<1x64xf32> to vector<256x64xf32>
    %79 = arith.subf %66, %78 : vector<256x64xf32>
    %cst_69 = arith.constant 9.99999974E-6 : f32
    %80 = vector.broadcast %cst_69 : f32 to vector<1x64xf32>
    %81 = arith.addf %77, %80 : vector<1x64xf32>
    %82 = math.rsqrt %81 : vector<1x64xf32>
    %83 = vector.broadcast %82 : vector<1x64xf32> to vector<256x64xf32>
    %84 = arith.mulf %79, %83 : vector<256x64xf32>
    %cst_70 = arith.constant 0.000000e+00 : f32
    %85 = vector.broadcast %cst_70 : f32 to vector<256x64xf32>
    %86 = arith.maximumf %84, %85 : vector<256x64xf32>
    %cst_71 = arith.constant 0.000000e+00 : f32
    %87 = vector.broadcast %cst_71 : f32 to vector<18x18x64xf32>
    %c0_72 = arith.constant 0 : index
    %c0_73 = arith.constant 0 : index
    %c0_74 = arith.constant 0 : index
    %88 = vector.load %arg7[%c0_72, %c0_73, %c0_74] : memref<18x18x64xf32, #tpu.memory_space<vmem>>, vector<18x18x64xf32>
    tpu.vector_store %arg7[%c0_72, %c0_73, %c0_74], %87 {strides = array<i32>} : memref<18x18x64xf32, #tpu.memory_space<vmem>>, vector<18x18x64xf32>,
    %89 = vector.shape_cast %86 : vector<256x64xf32> to vector<16x16x64xf32>
    %c1_75 = arith.constant 1 : index
    %c1_76 = arith.constant 1 : index
    %c0_77 = arith.constant 0 : index
    %90 = vector.load %arg7[%c1_75, %c1_76, %c0_77] : memref<18x18x64xf32, #tpu.memory_space<vmem>>, vector<16x16x64xf32>
    tpu.vector_store %arg7[%c1_75, %c1_76, %c0_77], %89 {strides = array<i32>} : memref<18x18x64xf32, #tpu.memory_space<vmem>>, vector<16x16x64xf32>,
    %cst_78 = arith.constant 0.000000e+00 : f32
    %91 = vector.broadcast %cst_78 : f32 to vector<256x64xf32>
    %c0_79 = arith.constant 0 : index
    %c0_80 = arith.constant 0 : index
    %c0_81 = arith.constant 0 : index
    %92 = vector.load %arg7[%c0_79, %c0_80, %c0_81] : memref<18x18x64xf32, #tpu.memory_space<vmem>>, vector<16x16x64xf32>
    %93 = arith.truncf %92 : vector<16x16x64xf32> to vector<16x16x64xbf16>
    %94 = vector.shape_cast %93 : vector<16x16x64xbf16> to vector<256x64xbf16>
    %c0_82 = arith.constant 0 : index
    %c0_83 = arith.constant 0 : index
    %c0_84 = arith.constant 0 : index
    %95 = vector.load %arg4[%c0_82, %c0_83, %c0_84] : memref<9x64x64xbf16, #tpu.memory_space<vmem>>, vector<1x64x64xbf16>
    %96 = vector.shape_cast %95 : vector<1x64x64xbf16> to vector<64x64xbf16>
    %cst_85 = arith.constant dense<0.000000e+00> : vector<256x64xf32>
    %97 = tpu.matmul %94, %96, %cst_85 {dimension_numbers = #tpu.dot_dimension_numbers<[1], [0], [0], [1], [0, 0, 1, 1], [], []>} : vector<256x64xbf16>, vector<64x64xbf16>, vector<256x64xf32> -> vector<256x64xf32>
    %98 = arith.addf %91, %97 : vector<256x64xf32>
    %c0_86 = arith.constant 0 : index
    %c1_87 = arith.constant 1 : index
    %c0_88 = arith.constant 0 : index
    %99 = vector.load %arg7[%c0_86, %c1_87, %c0_88] : memref<18x18x64xf32, #tpu.memory_space<vmem>>, vector<16x16x64xf32>
    %100 = arith.truncf %99 : vector<16x16x64xf32> to vector<16x16x64xbf16>
    %101 = vector.shape_cast %100 : vector<16x16x64xbf16> to vector<256x64xbf16>
    %c1_89 = arith.constant 1 : index
    %c0_90 = arith.constant 0 : index
    %c0_91 = arith.constant 0 : index
    %102 = vector.load %arg4[%c1_89, %c0_90, %c0_91] : memref<9x64x64xbf16, #tpu.memory_space<vmem>>, vector<1x64x64xbf16>
    %103 = vector.shape_cast %102 : vector<1x64x64xbf16> to vector<64x64xbf16>
    %cst_92 = arith.constant dense<0.000000e+00> : vector<256x64xf32>
    %104 = tpu.matmul %101, %103, %cst_92 {dimension_numbers = #tpu.dot_dimension_numbers<[1], [0], [0], [1], [0, 0, 1, 1], [], []>} : vector<256x64xbf16>, vector<64x64xbf16>, vector<256x64xf32> -> vector<256x64xf32>
    %105 = arith.addf %98, %104 : vector<256x64xf32>
    %c0_93 = arith.constant 0 : index
    %c2_94 = arith.constant 2 : index
    %c0_95 = arith.constant 0 : index
    %106 = vector.load %arg7[%c0_93, %c2_94, %c0_95] : memref<18x18x64xf32, #tpu.memory_space<vmem>>, vector<16x16x64xf32>
    %107 = arith.truncf %106 : vector<16x16x64xf32> to vector<16x16x64xbf16>
    %108 = vector.shape_cast %107 : vector<16x16x64xbf16> to vector<256x64xbf16>
    %c2_96 = arith.constant 2 : index
    %c0_97 = arith.constant 0 : index
    %c0_98 = arith.constant 0 : index
    %109 = vector.load %arg4[%c2_96, %c0_97, %c0_98] : memref<9x64x64xbf16, #tpu.memory_space<vmem>>, vector<1x64x64xbf16>
    %110 = vector.shape_cast %109 : vector<1x64x64xbf16> to vector<64x64xbf16>
    %cst_99 = arith.constant dense<0.000000e+00> : vector<256x64xf32>
    %111 = tpu.matmul %108, %110, %cst_99 {dimension_numbers = #tpu.dot_dimension_numbers<[1], [0], [0], [1], [0, 0, 1, 1], [], []>} : vector<256x64xbf16>, vector<64x64xbf16>, vector<256x64xf32> -> vector<256x64xf32>
    %112 = arith.addf %105, %111 : vector<256x64xf32>
    %c1_100 = arith.constant 1 : index
    %c0_101 = arith.constant 0 : index
    %c0_102 = arith.constant 0 : index
    %113 = vector.load %arg7[%c1_100, %c0_101, %c0_102] : memref<18x18x64xf32, #tpu.memory_space<vmem>>, vector<16x16x64xf32>
    %114 = arith.truncf %113 : vector<16x16x64xf32> to vector<16x16x64xbf16>
    %115 = vector.shape_cast %114 : vector<16x16x64xbf16> to vector<256x64xbf16>
    %c3_103 = arith.constant 3 : index
    %c0_104 = arith.constant 0 : index
    %c0_105 = arith.constant 0 : index
    %116 = vector.load %arg4[%c3_103, %c0_104, %c0_105] : memref<9x64x64xbf16, #tpu.memory_space<vmem>>, vector<1x64x64xbf16>
    %117 = vector.shape_cast %116 : vector<1x64x64xbf16> to vector<64x64xbf16>
    %cst_106 = arith.constant dense<0.000000e+00> : vector<256x64xf32>
    %118 = tpu.matmul %115, %117, %cst_106 {dimension_numbers = #tpu.dot_dimension_numbers<[1], [0], [0], [1], [0, 0, 1, 1], [], []>} : vector<256x64xbf16>, vector<64x64xbf16>, vector<256x64xf32> -> vector<256x64xf32>
    %119 = arith.addf %112, %118 : vector<256x64xf32>
    %c1_107 = arith.constant 1 : index
    %c1_108 = arith.constant 1 : index
    %c0_109 = arith.constant 0 : index
    %120 = vector.load %arg7[%c1_107, %c1_108, %c0_109] : memref<18x18x64xf32, #tpu.memory_space<vmem>>, vector<16x16x64xf32>
    %121 = arith.truncf %120 : vector<16x16x64xf32> to vector<16x16x64xbf16>
    %122 = vector.shape_cast %121 : vector<16x16x64xbf16> to vector<256x64xbf16>
    %c4_110 = arith.constant 4 : index
    %c0_111 = arith.constant 0 : index
    %c0_112 = arith.constant 0 : index
    %123 = vector.load %arg4[%c4_110, %c0_111, %c0_112] : memref<9x64x64xbf16, #tpu.memory_space<vmem>>, vector<1x64x64xbf16>
    %124 = vector.shape_cast %123 : vector<1x64x64xbf16> to vector<64x64xbf16>
    %cst_113 = arith.constant dense<0.000000e+00> : vector<256x64xf32>
    %125 = tpu.matmul %122, %124, %cst_113 {dimension_numbers = #tpu.dot_dimension_numbers<[1], [0], [0], [1], [0, 0, 1, 1], [], []>} : vector<256x64xbf16>, vector<64x64xbf16>, vector<256x64xf32> -> vector<256x64xf32>
    %126 = arith.addf %119, %125 : vector<256x64xf32>
    %c1_114 = arith.constant 1 : index
    %c2_115 = arith.constant 2 : index
    %c0_116 = arith.constant 0 : index
    %127 = vector.load %arg7[%c1_114, %c2_115, %c0_116] : memref<18x18x64xf32, #tpu.memory_space<vmem>>, vector<16x16x64xf32>
    %128 = arith.truncf %127 : vector<16x16x64xf32> to vector<16x16x64xbf16>
    %129 = vector.shape_cast %128 : vector<16x16x64xbf16> to vector<256x64xbf16>
    %c5_117 = arith.constant 5 : index
    %c0_118 = arith.constant 0 : index
    %c0_119 = arith.constant 0 : index
    %130 = vector.load %arg4[%c5_117, %c0_118, %c0_119] : memref<9x64x64xbf16, #tpu.memory_space<vmem>>, vector<1x64x64xbf16>
    %131 = vector.shape_cast %130 : vector<1x64x64xbf16> to vector<64x64xbf16>
    %cst_120 = arith.constant dense<0.000000e+00> : vector<256x64xf32>
    %132 = tpu.matmul %129, %131, %cst_120 {dimension_numbers = #tpu.dot_dimension_numbers<[1], [0], [0], [1], [0, 0, 1, 1], [], []>} : vector<256x64xbf16>, vector<64x64xbf16>, vector<256x64xf32> -> vector<256x64xf32>
    %133 = arith.addf %126, %132 : vector<256x64xf32>
    %c2_121 = arith.constant 2 : index
    %c0_122 = arith.constant 0 : index
    %c0_123 = arith.constant 0 : index
    %134 = vector.load %arg7[%c2_121, %c0_122, %c0_123] : memref<18x18x64xf32, #tpu.memory_space<vmem>>, vector<16x16x64xf32>
    %135 = arith.truncf %134 : vector<16x16x64xf32> to vector<16x16x64xbf16>
    %136 = vector.shape_cast %135 : vector<16x16x64xbf16> to vector<256x64xbf16>
    %c6_124 = arith.constant 6 : index
    %c0_125 = arith.constant 0 : index
    %c0_126 = arith.constant 0 : index
    %137 = vector.load %arg4[%c6_124, %c0_125, %c0_126] : memref<9x64x64xbf16, #tpu.memory_space<vmem>>, vector<1x64x64xbf16>
    %138 = vector.shape_cast %137 : vector<1x64x64xbf16> to vector<64x64xbf16>
    %cst_127 = arith.constant dense<0.000000e+00> : vector<256x64xf32>
    %139 = tpu.matmul %136, %138, %cst_127 {dimension_numbers = #tpu.dot_dimension_numbers<[1], [0], [0], [1], [0, 0, 1, 1], [], []>} : vector<256x64xbf16>, vector<64x64xbf16>, vector<256x64xf32> -> vector<256x64xf32>
    %140 = arith.addf %133, %139 : vector<256x64xf32>
    %c2_128 = arith.constant 2 : index
    %c1_129 = arith.constant 1 : index
    %c0_130 = arith.constant 0 : index
    %141 = vector.load %arg7[%c2_128, %c1_129, %c0_130] : memref<18x18x64xf32, #tpu.memory_space<vmem>>, vector<16x16x64xf32>
    %142 = arith.truncf %141 : vector<16x16x64xf32> to vector<16x16x64xbf16>
    %143 = vector.shape_cast %142 : vector<16x16x64xbf16> to vector<256x64xbf16>
    %c7_131 = arith.constant 7 : index
    %c0_132 = arith.constant 0 : index
    %c0_133 = arith.constant 0 : index
    %144 = vector.load %arg4[%c7_131, %c0_132, %c0_133] : memref<9x64x64xbf16, #tpu.memory_space<vmem>>, vector<1x64x64xbf16>
    %145 = vector.shape_cast %144 : vector<1x64x64xbf16> to vector<64x64xbf16>
    %cst_134 = arith.constant dense<0.000000e+00> : vector<256x64xf32>
    %146 = tpu.matmul %143, %145, %cst_134 {dimension_numbers = #tpu.dot_dimension_numbers<[1], [0], [0], [1], [0, 0, 1, 1], [], []>} : vector<256x64xbf16>, vector<64x64xbf16>, vector<256x64xf32> -> vector<256x64xf32>
    %147 = arith.addf %140, %146 : vector<256x64xf32>
    %c2_135 = arith.constant 2 : index
    %c2_136 = arith.constant 2 : index
    %c0_137 = arith.constant 0 : index
    %148 = vector.load %arg7[%c2_135, %c2_136, %c0_137] : memref<18x18x64xf32, #tpu.memory_space<vmem>>, vector<16x16x64xf32>
    %149 = arith.truncf %148 : vector<16x16x64xf32> to vector<16x16x64xbf16>
    %150 = vector.shape_cast %149 : vector<16x16x64xbf16> to vector<256x64xbf16>
    %c8_138 = arith.constant 8 : index
    %c0_139 = arith.constant 0 : index
    %c0_140 = arith.constant 0 : index
    %151 = vector.load %arg4[%c8_138, %c0_139, %c0_140] : memref<9x64x64xbf16, #tpu.memory_space<vmem>>, vector<1x64x64xbf16>
    %152 = vector.shape_cast %151 : vector<1x64x64xbf16> to vector<64x64xbf16>
    %cst_141 = arith.constant dense<0.000000e+00> : vector<256x64xf32>
    %153 = tpu.matmul %150, %152, %cst_141 {dimension_numbers = #tpu.dot_dimension_numbers<[1], [0], [0], [1], [0, 0, 1, 1], [], []>} : vector<256x64xbf16>, vector<64x64xbf16>, vector<256x64xf32> -> vector<256x64xf32>
    %154 = arith.addf %147, %153 : vector<256x64xf32>
    %c0_142 = arith.constant 0 : index
    %c0_143 = arith.constant 0 : index
    %155 = vector.load %arg5[%c0_142, %c0_143] : memref<1x64xf32, #tpu.memory_space<vmem>>, vector<1x64xf32>
    %156 = vector.broadcast %155 : vector<1x64xf32> to vector<256x64xf32>
    %157 = arith.addf %154, %156 : vector<256x64xf32>
    %cst_144 = arith.constant dense<0.000000e+00> : vector<64xf32>
    %158 = vector.multi_reduction <add>, %157, %cst_144 [0] : vector<256x64xf32> to vector<64xf32>
    %159 = vector.shape_cast %158 : vector<64xf32> to vector<1x64xf32>
    %cst_145 = arith.constant 2.560000e+02 : f32
    %160 = vector.broadcast %cst_145 : f32 to vector<1x64xf32>
    %161 = arith.divf %159, %160 : vector<1x64xf32>
    %162 = vector.broadcast %161 : vector<1x64xf32> to vector<256x64xf32>
    %163 = arith.subf %157, %162 : vector<256x64xf32>
    %164 = arith.mulf %163, %163 : vector<256x64xf32>
    %cst_146 = arith.constant dense<0.000000e+00> : vector<64xf32>
    %165 = vector.multi_reduction <add>, %164, %cst_146 [0] : vector<256x64xf32> to vector<64xf32>
    %166 = vector.shape_cast %165 : vector<64xf32> to vector<1x64xf32>
    %cst_147 = arith.constant 2.560000e+02 : f32
    %167 = vector.broadcast %cst_147 : f32 to vector<1x64xf32>
    %168 = arith.divf %166, %167 : vector<1x64xf32>
    %169 = vector.broadcast %161 : vector<1x64xf32> to vector<256x64xf32>
    %170 = arith.subf %157, %169 : vector<256x64xf32>
    %cst_148 = arith.constant 9.99999974E-6 : f32
    %171 = vector.broadcast %cst_148 : f32 to vector<1x64xf32>
    %172 = arith.addf %168, %171 : vector<1x64xf32>
    %173 = math.rsqrt %172 : vector<1x64xf32>
    %174 = vector.broadcast %173 : vector<1x64xf32> to vector<256x64xf32>
    %175 = arith.mulf %170, %174 : vector<256x64xf32>
    %cst_149 = arith.constant 0.000000e+00 : f32
    %176 = vector.broadcast %cst_149 : f32 to vector<256x64xf32>
    %177 = arith.maximumf %175, %176 : vector<256x64xf32>
    %178 = vector.shape_cast %177 : vector<256x64xf32> to vector<16x16x64xf32>
    %c0_150 = arith.constant 0 : index
    %c0_151 = arith.constant 0 : index
    %c0_152 = arith.constant 0 : index
    %c0_153 = arith.constant 0 : index
    %179 = vector.load %arg6[%c0_150, %c0_151, %c0_152, %c0_153] : memref<1x16x16x64xf32, #tpu.memory_space<vmem>>, vector<1x16x16x64xf32>
    %180 = vector.shape_cast %179 : vector<1x16x16x64xf32> to vector<16x16x64xf32>
    %181 = vector.shape_cast %178 : vector<16x16x64xf32> to vector<1x16x16x64xf32>
    tpu.vector_store %arg6[%c0_150, %c0_151, %c0_152, %c0_153], %181 {strides = array<i32>} : memref<1x16x16x64xf32, #tpu.memory_space<vmem>>, vector<1x16x16x64xf32>,
    return
  }
  func.func @transform_0(%arg0: i32) -> (i32, i32, i32, i32) {
    %c0_i32 = arith.constant 0 : i32
    %c0_i32_0 = arith.constant 0 : i32
    %c0_i32_1 = arith.constant 0 : i32
    %c0_i32_2 = arith.constant 0 : i32
    return %arg0, %c0_i32, %c0_i32_0, %c0_i32_1 : i32, i32, i32, i32
  }
  func.func @transform_1(%arg0: i32) -> (i32, i32, i32) {
    %c0_i32 = arith.constant 0 : i32
    %c0_i32_0 = arith.constant 0 : i32
    %c0_i32_1 = arith.constant 0 : i32
    %c0_i32_2 = arith.constant 0 : i32
    return %c0_i32, %c0_i32_0, %c0_i32_1 : i32, i32, i32
  }
  func.func @transform_2(%arg0: i32) -> (i32, i32) {
    %c0_i32 = arith.constant 0 : i32
    %c0_i32_0 = arith.constant 0 : i32
    %c0_i32_1 = arith.constant 0 : i32
    return %c0_i32, %c0_i32_0 : i32, i32
  }
  func.func @transform_3(%arg0: i32) -> (i32, i32, i32) {
    %c0_i32 = arith.constant 0 : i32
    %c0_i32_0 = arith.constant 0 : i32
    %c0_i32_1 = arith.constant 0 : i32
    %c0_i32_2 = arith.constant 0 : i32
    return %c0_i32, %c0_i32_0, %c0_i32_1 : i32, i32, i32
  }
  func.func @transform_4(%arg0: i32) -> (i32, i32) {
    %c0_i32 = arith.constant 0 : i32
    %c0_i32_0 = arith.constant 0 : i32
    %c0_i32_1 = arith.constant 0 : i32
    return %c0_i32, %c0_i32_0 : i32, i32
  }
  func.func @transform_5(%arg0: i32) -> (i32, i32, i32, i32) {
    %c0_i32 = arith.constant 0 : i32
    %c0_i32_0 = arith.constant 0 : i32
    %c0_i32_1 = arith.constant 0 : i32
    %c0_i32_2 = arith.constant 0 : i32
    return %arg0, %c0_i32, %c0_i32_0, %c0_i32_1 : i32, i32, i32, i32
  }
}

</mosaic_0001>

<llo_original>
// kernel: inconv_forward.1
$region0: #{inconv_forward.1}
  #allocation0 [shape = 'u32[]', space=smem, size = 0x4, offset = 0x4, fixed_abs, tag = 'smem constant byte address 0x4 - core index']
  #allocation1 [shape = 'u32[144,128]{1,0:T(1,128)}', space=vmem, size = 0x12000, scoped, tag = 'internal scratch']
  #allocation2 [shape = 'f32[18,18,64]{2,1,0:T(8,128)}', space=vmem, size = 0x36000, scoped, tag = 'scratch operand']
  %s0 = inlined_call_operand.vmem [shape: bf16[2,18,18,4], index: 0, kind: input, shape index: {}]
  %s1 = inlined_call_operand.vmem [shape: bf16[9,4,64], index: 1, kind: input, shape index: {}]
  %s2 = inlined_call_operand.vmem [shape: f32[1,64], index: 2, kind: input, shape index: {}]
  %s3 = inlined_call_operand.vmem [shape: bf16[9,64,64], index: 3, kind: input, shape index: {}]
  %s4 = inlined_call_operand.vmem [shape: f32[1,64], index: 4, kind: input, shape index: {}]
  %s5 = inlined_call_operand.hbm [shape: f32[2,16,16,64], index: 5, kind: output, shape index: {}]
  %s6 = sld [smem:[#allocation0]]
  $region53: #{inconv_forward.1} parent=0
    _
  %s8 = ssub.s32 1, %s6
  %s9 = scalar_select 0, %s8, %s6
  $region1: #{inconv_forward.1} parent=0
    #allocation3 [shape = 'u8[262144]{0}', space=vmem, size = 0x40000, scoped, tag = 'output window, operand 0']
    #allocation4 [shape = 's32[2]{0}', space=sflag, size = 0x8, scoped, tag = 'scoped memory for inconv_forward.1']
    %10 = vsyncpa [#allocation4], 0
    %s11 = scalar_lea.sflag [#allocation4], 1
    %12 = vsyncpa %s11, 0
    loop: start=0, step=1, limit=4
    $region2: #{inconv_forward.1} parent=1 // loop_pre_header
      _
    $region3: #{inconv_forward.1} parent=1 // loop_header
      %s14 = sphi 0, %s18
      %p15 = scmp.ge.s32.totalorder %s14, 4
      %s24 = sphi 0, %s26
      %s27 = sphi 0, %s24
      %s28 = sphi 0, %s27
      %s44 = sphi 0, %s28
      %s48 = sphi 0, %s48
      %s50 = sphi 0, %s48
      %s51 = sphi 0, %s50
      %s65 = sphi 0, %s51
      %s69 = sphi 0, %s69
      %s71 = sphi 0, %s69
      %s72 = sphi 0, %s71
      %s86 = sphi 0, %s72
      %s90 = sphi 0, %s90
      %s92 = sphi 0, %s90
      %s93 = sphi 0, %s92
      %s107 = sphi 0, %s93
      %s111 = sphi 0, %s111
      %s113 = sphi 0, %s111
      %s114 = sphi 0, %s113
      %s128 = sphi 0, %s114
      %s134 = sphi 0, %s136
      %s137 = sphi 0, %s134
      %s138 = sphi 0, %s137
      %s154 = sphi 0, %s138
    $region4: #{inconv_forward.1} parent=1 // loop_header_branch
      %17 = sbr.rel (%p15) target = $region8
    $region5: #{inconv_forward.1} parent=1 // loop_body
      %s19 = ssub.s32 %s14, 1
      %s20 = ssub.s32 %s14, 2
      %s21 = sadd.s32 %s14, 1
      %s22 = ssub.s32 %s14, %s21
      %p23 = scmp.eq.s32.totalorder %s22, 0
      %s25 = sadd.s32 %s24, 1
      %s26 = scalar_select %p23, %s24, %s25
      %p29 = pneg %p23
      %p30 = scmp.eq.s32.totalorder %s14, 1
      %p31 = por %p29, %p30
      %p32 = scmp.ne.s32.totalorder %s24, %s27
      %p33 = scmp.eq.s32.totalorder %s14, 0
      %p34 = por %p32, %p33
      %p35 = scmp.ne.s32.totalorder %s24, %s27
      %p36 = scmp.eq.s32.totalorder %s19, 1
      %p37 = por %p35, %p36
      %p38 = scmp.ne.s32.totalorder %s27, %s28
      %p39 = scmp.eq.s32.totalorder %s19, 0
      %p40 = por %p38, %p39
      %p41 = scmp.ne.s32.totalorder %s27, %s28
      %p42 = scmp.eq.s32.totalorder %s20, 1
      %p43 = por %p41, %p42
      %p45 = scmp.ne.s32.totalorder %s28, %s44
      %p46 = scmp.eq.s32.totalorder %s20, 0
      %p47 = por %p45, %p46
      %s49 = sadd.s32 %s48, 1
      %p52 = scmp.eq.s32.totalorder %s14, 1
      %p53 = scmp.ne.s32.totalorder %s48, %s50
      %p54 = scmp.eq.s32.totalorder %s14, 0
      %p55 = por %p53, %p54
      %p56 = scmp.ne.s32.totalorder %s48, %s50
      %p57 = scmp.eq.s32.totalorder %s19, 1
      %p58 = por %p56, %p57
      %p59 = scmp.ne.s32.totalorder %s50, %s51
      %p60 = scmp.eq.s32.totalorder %s19, 0
      %p61 = por %p59, %p60
      %p62 = scmp.ne.s32.totalorder %s50, %s51
      %p63 = scmp.eq.s32.totalorder %s20, 1
      %p64 = por %p62, %p63
      %p66 = scmp.ne.s32.totalorder %s51, %s65
      %p67 = scmp.eq.s32.totalorder %s20, 0
      %p68 = por %p66, %p67
      %s70 = sadd.s32 %s69, 1
      %p73 = scmp.eq.s32.totalorder %s14, 1
      %p74 = scmp.ne.s32.totalorder %s69, %s71
      %p75 = scmp.eq.s32.totalorder %s14, 0
      %p76 = por %p74, %p75
      %p77 = scmp.ne.s32.totalorder %s69, %s71
      %p78 = scmp.eq.s32.totalorder %s19, 1
      %p79 = por %p77, %p78
      %p80 = scmp.ne.s32.totalorder %s71, %s72
      %p81 = scmp.eq.s32.totalorder %s19, 0
      %p82 = por %p80, %p81
      %p83 = scmp.ne.s32.totalorder %s71, %s72
      %p84 = scmp.eq.s32.totalorder %s20, 1
      %p85 = por %p83, %p84
      %p87 = scmp.ne.s32.totalorder %s72, %s86
      %p88 = scmp.eq.s32.totalorder %s20, 0
      %p89 = por %p87, %p88
      %s91 = sadd.s32 %s90, 1
      %p94 = scmp.eq.s32.totalorder %s14, 1
      %p95 = scmp.ne.s32.totalorder %s90, %s92
      %p96 = scmp.eq.s32.totalorder %s14, 0
      %p97 = por %p95, %p96
      %p98 = scmp.ne.s32.totalorder %s90, %s92
      %p99 = scmp.eq.s32.totalorder %s19, 1
      %p100 = por %p98, %p99
      %p101 = scmp.ne.s32.totalorder %s92, %s93
      %p102 = scmp.eq.s32.totalorder %s19, 0
      %p103 = por %p101, %p102
      %p104 = scmp.ne.s32.totalorder %s92, %s93
      %p105 = scmp.eq.s32.totalorder %s20, 1
      %p106 = por %p104, %p105
      %p108 = scmp.ne.s32.totalorder %s93, %s107
      %p109 = scmp.eq.s32.totalorder %s20, 0
      %p110 = por %p108, %p109
      %s112 = sadd.s32 %s111, 1
      %p115 = scmp.eq.s32.totalorder %s14, 1
      %p116 = scmp.ne.s32.totalorder %s111, %s113
      %p117 = scmp.eq.s32.totalorder %s14, 0
      %p118 = por %p116, %p117
      %p119 = scmp.ne.s32.totalorder %s111, %s113
      %p120 = scmp.eq.s32.totalorder %s19, 1
      %p121 = por %p119, %p120
      %p122 = scmp.ne.s32.totalorder %s113, %s114
      %p123 = scmp.eq.s32.totalorder %s19, 0
      %p124 = por %p122, %p123
      %p125 = scmp.ne.s32.totalorder %s113, %s114
      %p126 = scmp.eq.s32.totalorder %s20, 1
      %p127 = por %p125, %p126
      %p129 = scmp.ne.s32.totalorder %s114, %s128
      %p130 = scmp.eq.s32.totalorder %s20, 0
      %p131 = por %p129, %p130
      %s132 = ssub.s32 %s14, %s21
      %p133 = scmp.eq.s32.totalorder %s132, 0
      %s135 = sadd.s32 %s134, 1
      %s136 = scalar_select %p133, %s134, %s135
      %p139 = pneg %p133
      %p140 = scmp.eq.s32.totalorder %s14, 1
      %p141 = por %p139, %p140
      %p142 = scmp.ne.s32.totalorder %s134, %s137
      %p143 = scmp.eq.s32.totalorder %s14, 0
      %p144 = por %p142, %p143
      %p145 = scmp.ne.s32.totalorder %s134, %s137
      %p146 = scmp.eq.s32.totalorder %s19, 1
      %p147 = por %p145, %p146
      %p148 = scmp.ne.s32.totalorder %s137, %s138
      %p149 = scmp.eq.s32.totalorder %s19, 0
      %p150 = por %p148, %p149
      %p151 = scmp.ne.s32.totalorder %s137, %s138
      %p152 = scmp.eq.s32.totalorder %s20, 1
      %p153 = por %p151, %p152
      %p155 = scmp.ne.s32.totalorder %s138, %s154
      %p156 = scmp.eq.s32.totalorder %s20, 0
      %p157 = por %p155, %p156
      %p158 = scmp.le.s32.totalorder 1, %s14
      %p159 = scmp.lt.s32.totalorder %s14, 3
      %p160 = pnand %p158, %p159
      %p161 = pneg %p160
      // Predicated region
      $region9: #{inconv_forward.1} parent=5 // pred_check
        _
      $region10: #{inconv_forward.1} parent=5 // pred_check_branch
        %163 = sbr.rel (%p160) target = $region12
      $region11: #{inconv_forward.1} parent=5 // pred_region
        %s164 = ssub.s32 %s14, 1
        // Predicated region
        $region13: #{inconv_forward.1} parent=11 // pred_check
          %p165 = pneg %p61
        $region14: #{inconv_forward.1} parent=11 // pred_check_branch
          %167 = sbr.rel (%p165) target = $region16
        $region15: #{inconv_forward.1} parent=11 // pred_region
          _
        $region16: #{inconv_forward.1} parent=11 // pred_fallthru
          _
        // Predicated region
        $region17: #{inconv_forward.1} parent=11 // pred_check
          %p168 = pneg %p82
        $region18: #{inconv_forward.1} parent=11 // pred_check_branch
          %170 = sbr.rel (%p168) target = $region20
        $region19: #{inconv_forward.1} parent=11 // pred_region
          _
        $region20: #{inconv_forward.1} parent=11 // pred_fallthru
          _
        // Predicated region
        $region21: #{inconv_forward.1} parent=11 // pred_check
          %p171 = pneg %p103
        $region22: #{inconv_forward.1} parent=11 // pred_check_branch
          %173 = sbr.rel (%p171) target = $region24
        $region23: #{inconv_forward.1} parent=11 // pred_region
          _
        $region24: #{inconv_forward.1} parent=11 // pred_fallthru
          _
        // Predicated region
        $region25: #{inconv_forward.1} parent=11 // pred_check
          %p174 = pneg %p124
        $region26: #{inconv_forward.1} parent=11 // pred_check_branch
          %176 = sbr.rel (%p174) target = $region28
        $region27: #{inconv_forward.1} parent=11 // pred_region
          _
        $region28: #{inconv_forward.1} parent=11 // pred_fallthru
          _
      $region12: #{inconv_forward.1} parent=5 // pred_fallthru
        _
      %p177 = scmp.lt.s32.totalorder %s14, 2
      // Predicated region
      $region29: #{inconv_forward.1} parent=5 // pred_check
        %p178 = pneg %p177
      $region30: #{inconv_forward.1} parent=5 // pred_check_branch
        %180 = sbr.rel (%p178) target = $region32
      $region31: #{inconv_forward.1} parent=5 // pred_region
        // Predicated region
        $region33: #{inconv_forward.1} parent=31 // pred_check
          %p181 = pneg %p34
        $region34: #{inconv_forward.1} parent=31 // pred_check_branch
          %183 = sbr.rel (%p181) target = $region36
        $region35: #{inconv_forward.1} parent=31 // pred_region
          %p184 = scmp.lt.s32.totalorder %s14, 1
          %s185 = scalar_select %p184, %s14, 1
          %s186 = smul.addr %s185, 54
          %s187 = smul.addr %s186, 4
          %s188 = scalar_lea.vmem %s0, %s187
        $region36: #{inconv_forward.1} parent=31 // pred_fallthru
          _
      $region32: #{inconv_forward.1} parent=5 // pred_fallthru
        _
      %p189 = scmp.le.s32.totalorder 1, %s14
      %p190 = scmp.lt.s32.totalorder %s14, 3
      %p191 = pnand %p189, %p190
      %p192 = pneg %p191
      // Predicated region
      $region37: #{inconv_forward.1} parent=5 // pred_check
        _
      $region38: #{inconv_forward.1} parent=5 // pred_check_branch
        %194 = sbr.rel (%p191) target = $region40
      $region39: #{inconv_forward.1} parent=5 // pred_region
        %s195 = ssub.s32 %s14, 1
        %p196 = scmp.lt.s32.totalorder %s19, 1
        %s197 = scalar_select %p196, %s19, 1
        %s198 = smul.addr %s197, 54
        %s199 = smul.addr %s198, 4
        %s200 = scalar_lea.vmem %s0, %s199
        %p201 = pneg %p40
        %p202 = pneg %p37
        %p203 = pneg %p61
        %p204 = pneg %p58
        %p205 = pneg %p82
        %p206 = pneg %p79
        %p207 = pneg %p103
        %p208 = pneg %p100
        %p209 = pneg %p124
        %p210 = pneg %p121
        %p211 = pneg %p150
        %p212 = pneg %p147
        %s213 = sand.u32 %s137, 1
        %s214 = scalar_lea.sflag [#allocation4], %s213
        %s215 = sand.u32 %s137, 1
        %s216 = smul.addr %s215, 256
        %s217 = scalar_lea.vmem [#allocation3], %s216
        %p218 = scmp.lt.s32.totalorder %s19, 1
        %s219 = scalar_select %p218, %s19, 1
        %s220 = smul.addr %s219, 54
        %s221 = smul.addr %s220, 4
        %s222 = scalar_lea.vmem %s0, %s221
        %v224 = vld [vmem:[%s222] sm:$0xf]
        %v225 = vld [vmem:[%s222 + $0x4] sm:$0xf]
        %v226 = vld [vmem:[%s222 + $0xc] sm:$0xf]
        %v227 = vld [vmem:[%s222 + $0x10] sm:$0xf]
        %v228 = vld [vmem:[%s222 + $0x18] sm:$0xf]
        %v229 = vld [vmem:[%s222 + $0x1c] sm:$0xf]
        %v230 = vld [vmem:[%s222 + $0x24] sm:$0xf]
        %v231 = vld [vmem:[%s222 + $0x28] sm:$0xf]
        %v232 = vld [vmem:[%s222 + $0x30] sm:$0xf]
        %v233 = vld [vmem:[%s222 + $0x34] sm:$0xf]
        %v234 = vld [vmem:[%s222 + $0x3c] sm:$0xf]
        %v235 = vld [vmem:[%s222 + $0x40] sm:$0xf]
        %v236 = vld [vmem:[%s222 + $0x48] sm:$0xf]
        %v237 = vld [vmem:[%s222 + $0x4c] sm:$0xf]
        %v238 = vld [vmem:[%s222 + $0x54] sm:$0xf]
        %v239 = vld [vmem:[%s222 + $0x58] sm:$0xf]
        %v240 = vld [vmem:[%s222 + $0x60] sm:$0xf]
        %v241 = vld [vmem:[%s222 + $0x64] sm:$0xf]
        %v242 = vld [vmem:[%s222 + $0x6c] sm:$0xf]
        %v243 = vld [vmem:[%s222 + $0x70] sm:$0xf]
        %v244 = vld [vmem:[%s222 + $0x78] sm:$0xf]
        %v245 = vld [vmem:[%s222 + $0x7c] sm:$0xf]
        %v246 = vld [vmem:[%s222 + $0x84] sm:$0xf]
        %v247 = vld [vmem:[%s222 + $0x88] sm:$0xf]
        %v248 = vld [vmem:[%s222 + $0x90] sm:$0xf]
        %v249 = vld [vmem:[%s222 + $0x94] sm:$0xf]
        %v250 = vld [vmem:[%s222 + $0x9c] sm:$0xf]
        %v251 = vld [vmem:[%s222 + $0xa0] sm:$0xf]
        %v252 = vld [vmem:[%s222 + $0xa8] sm:$0xf]
        %v253 = vld [vmem:[%s222 + $0xac] sm:$0xf]
        %v254 = vld [vmem:[%s222 + $0xb4] sm:$0xf]
        %v255 = vld [vmem:[%s222 + $0xb8] sm:$0xf]
        %v256 = vld [vmem:[%s1] sm:$0x3]
        %v257 = vld [vmem:[%s222 + $0x8] sm:$0x1]
        %v258 = vld [vmem:[%s222 + $0x14] sm:$0x1]
        %v259 = vld [vmem:[%s222 + $0x20] sm:$0x1]
        %v260 = vld [vmem:[%s222 + $0x2c] sm:$0x1]
        %v261 = vld [vmem:[%s222 + $0x38] sm:$0x1]
        %v262 = vld [vmem:[%s222 + $0x44] sm:$0x1]
        %v263 = vld [vmem:[%s222 + $0x50] sm:$0x1]
        %v264 = vld [vmem:[%s222 + $0x5c] sm:$0x1]
        %v265 = vld [vmem:[%s222 + $0x68] sm:$0x1]
        %v266 = vld [vmem:[%s222 + $0x74] sm:$0x1]
        %v267 = vld [vmem:[%s222 + $0x80] sm:$0x1]
        %v268 = vld [vmem:[%s222 + $0x8c] sm:$0x1]
        %v269 = vld [vmem:[%s222 + $0x98] sm:$0x1]
        %v270 = vld [vmem:[%s222 + $0xa4] sm:$0x1]
        %v271 = vld [vmem:[%s222 + $0xb0] sm:$0x1]
        %v272 = vld [vmem:[%s222 + $0xbc] sm:$0x1]
        %vm273 = vsmask.f32 3328
        %vm274 = vsmask.f32 7440
        %vm275 = vmor %vm273, %vm274
        %v277 = vshrl.u32 %v224, 16
        %v279 = vrot.slane %v277, 4
        %v280 = vshll.u32 %v224, 16
        %v282 = vrot.slane %v280, 5
        %v283 = vor.u32 %v279, %v282
        %v284 = vrot.slane %v283, 4
        %v286 = vshll.u32 %v225, 16
        %v288 = vrot.slane %v286, 5
        %v289 = vsel %vm275, %v284, %v288
        %v290 = vshrl.u32 %v225, 16
        %v292 = vrot.slane %v290, 4
        %v293 = vor.u32 %v292, %v288
        %v294 = vrot.slane %v293, 4
        %v296 = vshll.u32 %v257, 16
        %v298 = vrot.slane %v296, 5
        %v299 = vsel %vm275, %v294, %v298
        %v301 = vshrl.u32 %v226, 16
        %v303 = vrot.slane %v301, 4
        %v304 = vshll.u32 %v226, 16
        %v306 = vrot.slane %v304, 5
        %v307 = vor.u32 %v303, %v306
        %v308 = vrot.slane %v307, 4
        %v310 = vshll.u32 %v227, 16
        %v312 = vrot.slane %v310, 5
        %v313 = vsel %vm275, %v308, %v312
        %v314 = vshrl.u32 %v227, 16
        %v316 = vrot.slane %v314, 4
        %v317 = vor.u32 %v316, %v312
        %v318 = vrot.slane %v317, 4
        %v320 = vshll.u32 %v258, 16
        %v322 = vrot.slane %v320, 5
        %v323 = vsel %vm275, %v318, %v322
        %v325 = vshrl.u32 %v228, 16
        %v327 = vrot.slane %v325, 4
        %v328 = vshll.u32 %v228, 16
        %v330 = vrot.slane %v328, 5
        %v331 = vor.u32 %v327, %v330
        %v332 = vrot.slane %v331, 4
        %v334 = vshll.u32 %v229, 16
        %v336 = vrot.slane %v334, 5
        %v337 = vsel %vm275, %v332, %v336
        %v338 = vshrl.u32 %v229, 16
        %v340 = vrot.slane %v338, 4
        %v341 = vor.u32 %v340, %v336
        %v342 = vrot.slane %v341, 4
        %v344 = vshll.u32 %v259, 16
        %v346 = vrot.slane %v344, 5
        %v347 = vsel %vm275, %v342, %v346
        %v349 = vshrl.u32 %v230, 16
        %v351 = vrot.slane %v349, 4
        %v352 = vshll.u32 %v230, 16
        %v354 = vrot.slane %v352, 5
        %v355 = vor.u32 %v351, %v354
        %v356 = vrot.slane %v355, 4
        %v358 = vshll.u32 %v231, 16
        %v360 = vrot.slane %v358, 5
        %v361 = vsel %vm275, %v356, %v360
        %v362 = vshrl.u32 %v231, 16
        %v364 = vrot.slane %v362, 4
        %v365 = vor.u32 %v364, %v360
        %v366 = vrot.slane %v365, 4
        %v368 = vshll.u32 %v260, 16
        %v370 = vrot.slane %v368, 5
        %v371 = vsel %vm275, %v366, %v370
        %v373 = vshrl.u32 %v232, 16
        %v375 = vrot.slane %v373, 4
        %v376 = vshll.u32 %v232, 16
        %v378 = vrot.slane %v376, 5
        %v379 = vor.u32 %v375, %v378
        %v380 = vrot.slane %v379, 4
        %v382 = vshll.u32 %v233, 16
        %v384 = vrot.slane %v382, 5
        %v385 = vsel %vm275, %v380, %v384
        %v386 = vshrl.u32 %v233, 16
        %v388 = vrot.slane %v386, 4
        %v389 = vor.u32 %v388, %v384
        %v390 = vrot.slane %v389, 4
        %v392 = vshll.u32 %v261, 16
        %v394 = vrot.slane %v392, 5
        %v395 = vsel %vm275, %v390, %v394
        %v397 = vshrl.u32 %v234, 16
        %v399 = vrot.slane %v397, 4
        %v400 = vshll.u32 %v234, 16
        %v402 = vrot.slane %v400, 5
        %v403 = vor.u32 %v399, %v402
        %v404 = vrot.slane %v403, 4
        %v406 = vshll.u32 %v235, 16
        %v408 = vrot.slane %v406, 5
        %v409 = vsel %vm275, %v404, %v408
        %v410 = vshrl.u32 %v235, 16
        %v412 = vrot.slane %v410, 4
        %v413 = vor.u32 %v412, %v408
        %v414 = vrot.slane %v413, 4
        %v416 = vshll.u32 %v262, 16
        %v418 = vrot.slane %v416, 5
        %v419 = vsel %vm275, %v414, %v418
        %v421 = vshrl.u32 %v236, 16
        %v423 = vrot.slane %v421, 4
        %v424 = vshll.u32 %v236, 16
        %v426 = vrot.slane %v424, 5
        %v427 = vor.u32 %v423, %v426
        %v428 = vrot.slane %v427, 4
        %v430 = vshll.u32 %v237, 16
        %v432 = vrot.slane %v430, 5
        %v433 = vsel %vm275, %v428, %v432
        %v434 = vshrl.u32 %v237, 16
        %v436 = vrot.slane %v434, 4
        %v437 = vor.u32 %v436, %v432
        %v438 = vrot.slane %v437, 4
        %v440 = vshll.u32 %v263, 16
        %v442 = vrot.slane %v440, 5
        %v443 = vsel %vm275, %v438, %v442
        %v445 = vshrl.u32 %v238, 16
        %v447 = vrot.slane %v445, 4
        %v448 = vshll.u32 %v238, 16
        %v450 = vrot.slane %v448, 5
        %v451 = vor.u32 %v447, %v450
        %v452 = vrot.slane %v451, 4
        %v454 = vshll.u32 %v239, 16
        %v456 = vrot.slane %v454, 5
        %v457 = vsel %vm275, %v452, %v456
        %v458 = vshrl.u32 %v239, 16
        %v460 = vrot.slane %v458, 4
        %v461 = vor.u32 %v460, %v456
        %v462 = vrot.slane %v461, 4
        %v464 = vshll.u32 %v264, 16
        %v466 = vrot.slane %v464, 5
        %v467 = vsel %vm275, %v462, %v466
        %v469 = vshrl.u32 %v240, 16
        %v471 = vrot.slane %v469, 4
        %v472 = vshll.u32 %v240, 16
        %v474 = vrot.slane %v472, 5
        %v475 = vor.u32 %v471, %v474
        %v476 = vrot.slane %v475, 4
        %v478 = vshll.u32 %v241, 16
        %v480 = vrot.slane %v478, 5
        %v481 = vsel %vm275, %v476, %v480
        %v482 = vshrl.u32 %v241, 16
        %v484 = vrot.slane %v482, 4
        %v485 = vor.u32 %v484, %v480
        %v486 = vrot.slane %v485, 4
        %v488 = vshll.u32 %v265, 16
        %v490 = vrot.slane %v488, 5
        %v491 = vsel %vm275, %v486, %v490
        %v493 = vshrl.u32 %v242, 16
        %v495 = vrot.slane %v493, 4
        %v496 = vshll.u32 %v242, 16
        %v498 = vrot.slane %v496, 5
        %v499 = vor.u32 %v495, %v498
        %v500 = vrot.slane %v499, 4
        %v502 = vshll.u32 %v243, 16
        %v504 = vrot.slane %v502, 5
        %v505 = vsel %vm275, %v500, %v504
        %v506 = vshrl.u32 %v243, 16
        %v508 = vrot.slane %v506, 4
        %v509 = vor.u32 %v508, %v504
        %v510 = vrot.slane %v509, 4
        %v512 = vshll.u32 %v266, 16
        %v514 = vrot.slane %v512, 5
        %v515 = vsel %vm275, %v510, %v514
        %v517 = vshrl.u32 %v244, 16
        %v519 = vrot.slane %v517, 4
        %v520 = vshll.u32 %v244, 16
        %v522 = vrot.slane %v520, 5
        %v523 = vor.u32 %v519, %v522
        %v524 = vrot.slane %v523, 4
        %v526 = vshll.u32 %v245, 16
        %v528 = vrot.slane %v526, 5
        %v529 = vsel %vm275, %v524, %v528
        %v530 = vshrl.u32 %v245, 16
        %v532 = vrot.slane %v530, 4
        %v533 = vor.u32 %v532, %v528
        %v534 = vrot.slane %v533, 4
        %v536 = vshll.u32 %v267, 16
        %v538 = vrot.slane %v536, 5
        %v539 = vsel %vm275, %v534, %v538
        %v541 = vshrl.u32 %v246, 16
        %v543 = vrot.slane %v541, 4
        %v544 = vshll.u32 %v246, 16
        %v546 = vrot.slane %v544, 5
        %v547 = vor.u32 %v543, %v546
        %v548 = vrot.slane %v547, 4
        %v550 = vshll.u32 %v247, 16
        %v552 = vrot.slane %v550, 5
        %v553 = vsel %vm275, %v548, %v552
        %v554 = vshrl.u32 %v247, 16
        %v556 = vrot.slane %v554, 4
        %v557 = vor.u32 %v556, %v552
        %v558 = vrot.slane %v557, 4
        %v560 = vshll.u32 %v268, 16
        %v562 = vrot.slane %v560, 5
        %v563 = vsel %vm275, %v558, %v562
        %v565 = vshrl.u32 %v248, 16
        %v567 = vrot.slane %v565, 4
        %v568 = vshll.u32 %v248, 16
        %v570 = vrot.slane %v568, 5
        %v571 = vor.u32 %v567, %v570
        %v572 = vrot.slane %v571, 4
        %v574 = vshll.u32 %v249, 16
        %v576 = vrot.slane %v574, 5
        %v577 = vsel %vm275, %v572, %v576
        %v578 = vshrl.u32 %v249, 16
        %v580 = vrot.slane %v578, 4
        %v581 = vor.u32 %v580, %v576
        %v582 = vrot.slane %v581, 4
        %v584 = vshll.u32 %v269, 16
        %v586 = vrot.slane %v584, 5
        %v587 = vsel %vm275, %v582, %v586
        %v589 = vshrl.u32 %v250, 16
        %v591 = vrot.slane %v589, 4
        %v592 = vshll.u32 %v250, 16
        %v594 = vrot.slane %v592, 5
        %v595 = vor.u32 %v591, %v594
        %v596 = vrot.slane %v595, 4
        %v598 = vshll.u32 %v251, 16
        %v600 = vrot.slane %v598, 5
        %v601 = vsel %vm275, %v596, %v600
        %v602 = vshrl.u32 %v251, 16
        %v604 = vrot.slane %v602, 4
        %v605 = vor.u32 %v604, %v600
        %v606 = vrot.slane %v605, 4
        %v608 = vshll.u32 %v270, 16
        %v610 = vrot.slane %v608, 5
        %v611 = vsel %vm275, %v606, %v610
        %v613 = vshrl.u32 %v252, 16
        %v615 = vrot.slane %v613, 4
        %v616 = vshll.u32 %v252, 16
        %v618 = vrot.slane %v616, 5
        %v619 = vor.u32 %v615, %v618
        %v620 = vrot.slane %v619, 4
        %v622 = vshll.u32 %v253, 16
        %v624 = vrot.slane %v622, 5
        %v625 = vsel %vm275, %v620, %v624
        %v626 = vshrl.u32 %v253, 16
        %v628 = vrot.slane %v626, 4
        %v629 = vor.u32 %v628, %v624
        %v630 = vrot.slane %v629, 4
        %v632 = vshll.u32 %v271, 16
        %v634 = vrot.slane %v632, 5
        %v635 = vsel %vm275, %v630, %v634
        %v637 = vshrl.u32 %v254, 16
        %v639 = vrot.slane %v637, 4
        %v640 = vshll.u32 %v254, 16
        %v642 = vrot.slane %v640, 5
        %v643 = vor.u32 %v639, %v642
        %v644 = vrot.slane %v643, 4
        %v646 = vshll.u32 %v255, 16
        %v648 = vrot.slane %v646, 5
        %v649 = vsel %vm275, %v644, %v648
        %v650 = vshrl.u32 %v255, 16
        %v652 = vrot.slane %v650, 4
        %v653 = vor.u32 %v652, %v648
        %v654 = vrot.slane %v653, 4
        %v656 = vshll.u32 %v272, 16
        %v658 = vrot.slane %v656, 5
        %v659 = vsel %vm275, %v654, %v658
        %s660 = scalar_lea.vmem %s1, 2
        %v661 = vld [vmem:[%s660] sm:$0x3]
        %v662 = vunpack.c.l.b16 %v289
        %v663 = vunpack.c.l.b16 %v299
        %v664 = vunpack.c.l.b16 %v313
        %v665 = vunpack.c.l.b16 %v323
        %v666 = vunpack.c.l.b16 %v337
        %v667 = vunpack.c.l.b16 %v347
        %v668 = vunpack.c.l.b16 %v361
        %v669 = vunpack.c.l.b16 %v371
        %v670 = vunpack.c.l.b16 %v385
        %v671 = vunpack.c.l.b16 %v395
        %v672 = vunpack.c.l.b16 %v409
        %v673 = vunpack.c.l.b16 %v419
        %v674 = vunpack.c.l.b16 %v433
        %v675 = vunpack.c.l.b16 %v443
        %v676 = vunpack.c.l.b16 %v457
        %v677 = vunpack.c.l.b16 %v467
        %v678 = vunpack.c.l.b16 %v481
        %v679 = vunpack.c.l.b16 %v491
        %v680 = vunpack.c.l.b16 %v505
        %v681 = vunpack.c.l.b16 %v515
        %v682 = vunpack.c.l.b16 %v529
        %v683 = vunpack.c.l.b16 %v539
        %v684 = vunpack.c.l.b16 %v553
        %v685 = vunpack.c.l.b16 %v563
        %v686 = vunpack.c.l.b16 %v577
        %v687 = vunpack.c.l.b16 %v587
        %v688 = vunpack.c.l.b16 %v601
        %v689 = vunpack.c.l.b16 %v611
        %v690 = vunpack.c.l.b16 %v625
        %v691 = vunpack.c.l.b16 %v635
        %v692 = vunpack.c.l.b16 %v649
        %v693 = vunpack.c.l.b16 %v659
        %v694 = vpack.c.b16 %v663, %v662
        %v695 = vpack.c.b16 %v665, %v664
        %v696 = vpack.c.b16 %v667, %v666
        %v697 = vpack.c.b16 %v669, %v668
        %v698 = vpack.c.b16 %v671, %v670
        %v699 = vpack.c.b16 %v673, %v672
        %v700 = vpack.c.b16 %v675, %v674
        %v701 = vpack.c.b16 %v677, %v676
        %v702 = vpack.c.b16 %v679, %v678
        %v703 = vpack.c.b16 %v681, %v680
        %v704 = vpack.c.b16 %v683, %v682
        %v705 = vpack.c.b16 %v685, %v684
        %v706 = vpack.c.b16 %v687, %v686
        %v707 = vpack.c.b16 %v689, %v688
        %v708 = vpack.c.b16 %v691, %v690
        %v709 = vpack.c.b16 %v693, %v692
        %vm710 = vcmask 31744
        %v712 = vsel %vm710, %v694, 0
        %v715 = vsel %vm710, %v695, 0
        %v718 = vsel %vm710, %v696, 0
        %v721 = vsel %vm710, %v697, 0
        %v724 = vsel %vm710, %v698, 0
        %v727 = vsel %vm710, %v699, 0
        %v730 = vsel %vm710, %v700, 0
        %v733 = vsel %vm710, %v701, 0
        %v736 = vsel %vm710, %v702, 0
        %v739 = vsel %vm710, %v703, 0
        %v742 = vsel %vm710, %v704, 0
        %v745 = vsel %vm710, %v705, 0
        %v748 = vsel %vm710, %v706, 0
        %v751 = vsel %vm710, %v707, 0
        %v754 = vsel %vm710, %v708, 0
        %v757 = vsel %vm710, %v709, 0
        %vm759 = vcmask 1041408
        %v761 = vsel %vm759, %v661, 0
        %763 = vmatprep.subr.bf16.mxu0 0
        %764 = vmatpush1.bf16.msra.mxu0 %v761
        %765 = vmatprep.subr.bf16.mxu0 0
        %766 = vmatpush1.bf16.msra.mxu0 0
        %767 = vmatprep.subr.bf16.mxu0 0
        %768 = vmatpush1.bf16.msra.mxu0 0
        %769 = vmatprep.subr.bf16.mxu0 0
        %770 = vmatpush1.bf16.msra.mxu0 0
        %771 = vmatprep.subr.bf16.mxu0 0
        %772 = vmatpush1.bf16.msra.mxu0 0
        %773 = vmatprep.subr.bf16.mxu0 0
        %774 = vmatpush1.bf16.msra.mxu0 0
        %775 = vmatprep.subr.bf16.mxu0 0
        %776 = vmatpush1.bf16.msra.mxu0 0
        %777 = vmatprep.subr.bf16.mxu0 0
        %778 = vmatpush1.bf16.msra.mxu0 0
        %779 = vmatprep.subr.bf16.mxu0 0
        %780 = vmatpush1.bf16.msra.mxu0 0
        %781 = vmatprep.subr.bf16.mxu0 0
        %782 = vmatpush1.bf16.msra.mxu0 0
        %783 = vmatprep.subr.bf16.mxu0 0
        %784 = vmatpush1.bf16.msra.mxu0 0
        %785 = vmatprep.subr.bf16.mxu0 0
        %786 = vmatpush1.bf16.msra.mxu0 0
        %787 = vmatprep.subr.bf16.mxu0 0
        %788 = vmatpush1.bf16.msra.mxu0 0
        %789 = vmatprep.subr.bf16.mxu0 0
        %790 = vmatpush1.bf16.msra.mxu0 0
        %791 = vmatprep.subr.bf16.mxu0 0
        %792 = vmatpush1.bf16.msra.mxu0 0
        %793 = vmatprep.subr.bf16.mxu0 0
        %794 = vmatpush1.bf16.msra.mxu0 0
        %795 = vmatprep.mubr.bf16.mxu0 0
        %796 = vmatmul.mubr.bf16.gmra.mrb[0].mxu0 %v712
        %v797 = vpop.f32.mrb[0].mxu0
        %v798 = vadd.f32 0.0, %v797
        %v799 = vpop.f32.mrb[0].mxu0
        %v800 = vpop.f32.mrb[0].mxu0
        %v801 = vadd.f32 0.0, %v800
        %v802 = vpop.f32.mrb[0].mxu0
        %803 = vmatprep.mubr.bf16.mxu0 0
        %804 = vmatmul.mubr.bf16.gmra.mrb[0].mxu0 %v715
        %v805 = vpop.f32.mrb[0].mxu0
        %v806 = vadd.f32 0.0, %v805
        %v807 = vpop.f32.mrb[0].mxu0
        %v808 = vpop.f32.mrb[0].mxu0
        %v809 = vadd.f32 0.0, %v808
        %v810 = vpop.f32.mrb[0].mxu0
        %811 = vmatprep.mubr.bf16.mxu0 0
        %812 = vmatmul.mubr.bf16.gmra.mrb[0].mxu0 %v718
        %v813 = vpop.f32.mrb[0].mxu0
        %v814 = vadd.f32 0.0, %v813
        %v815 = vpop.f32.mrb[0].mxu0
        %v816 = vpop.f32.mrb[0].mxu0
        %v817 = vadd.f32 0.0, %v816
        %v818 = vpop.f32.mrb[0].mxu0
        %819 = vmatprep.mubr.bf16.mxu0 0
        %820 = vmatmul.mubr.bf16.gmra.mrb[0].mxu0 %v721
        %v821 = vpop.f32.mrb[0].mxu0
        %v822 = vadd.f32 0.0, %v821
        %v823 = vpop.f32.mrb[0].mxu0
        %v824 = vpop.f32.mrb[0].mxu0
        %v825 = vadd.f32 0.0, %v824
        %v826 = vpop.f32.mrb[0].mxu0
        %827 = vmatprep.mubr.bf16.mxu0 0
        %828 = vmatmul.mubr.bf16.gmra.mrb[0].mxu0 %v724
        %v829 = vpop.f32.mrb[0].mxu0
        %v830 = vadd.f32 0.0, %v829
        %v831 = vpop.f32.mrb[0].mxu0
        %v832 = vpop.f32.mrb[0].mxu0
        %v833 = vadd.f32 0.0, %v832
        %v834 = vpop.f32.mrb[0].mxu0
        %835 = vmatprep.mubr.bf16.mxu0 0
        %836 = vmatmul.mubr.bf16.gmra.mrb[0].mxu0 %v727
        %v837 = vpop.f32.mrb[0].mxu0
        %v838 = vadd.f32 0.0, %v837
        %v839 = vpop.f32.mrb[0].mxu0
        %v840 = vpop.f32.mrb[0].mxu0
        %v841 = vadd.f32 0.0, %v840
        %v842 = vpop.f32.mrb[0].mxu0
        %843 = vmatprep.mubr.bf16.mxu0 0
        %844 = vmatmul.mubr.bf16.gmra.mrb[0].mxu0 %v730
        %v845 = vpop.f32.mrb[0].mxu0
        %v846 = vadd.f32 0.0, %v845
        %v847 = vpop.f32.mrb[0].mxu0
        %v848 = vpop.f32.mrb[0].mxu0
        %v849 = vadd.f32 0.0, %v848
        %v850 = vpop.f32.mrb[0].mxu0
        %851 = vmatprep.mubr.bf16.mxu0 0
        %852 = vmatmul.mubr.bf16.gmra.mrb[0].mxu0 %v733
        %v853 = vpop.f32.mrb[0].mxu0
        %v854 = vadd.f32 0.0, %v853
        %v855 = vpop.f32.mrb[0].mxu0
        %v856 = vpop.f32.mrb[0].mxu0
        %v857 = vadd.f32 0.0, %v856
        %v858 = vpop.f32.mrb[0].mxu0
        %859 = vmatprep.mubr.bf16.mxu0 0
        %860 = vmatmul.mubr.bf16.gmra.mrb[0].mxu0 %v736
        %v861 = vpop.f32.mrb[0].mxu0
        %v862 = vadd.f32 0.0, %v861
        %v863 = vpop.f32.mrb[0].mxu0
        %v864 = vpop.f32.mrb[0].mxu0
        %v865 = vadd.f32 0.0, %v864
        %v866 = vpop.f32.mrb[0].mxu0
        %867 = vmatprep.mubr.bf16.mxu0 0
        %868 = vmatmul.mubr.bf16.gmra.mrb[0].mxu0 %v739
        %v869 = vpop.f32.mrb[0].mxu0
        %v870 = vadd.f32 0.0, %v869
        %v871 = vpop.f32.mrb[0].mxu0
        %v872 = vpop.f32.mrb[0].mxu0
        %v873 = vadd.f32 0.0, %v872
        %v874 = vpop.f32.mrb[0].mxu0
        %875 = vmatprep.mubr.bf16.mxu0 0
        %876 = vmatmul.mubr.bf16.gmra.mrb[0].mxu0 %v742
        %v877 = vpop.f32.mrb[0].mxu0
        %v878 = vadd.f32 0.0, %v877
        %v879 = vpop.f32.mrb[0].mxu0
        %v880 = vpop.f32.mrb[0].mxu0
        %v881 = vadd.f32 0.0, %v880
        %v882 = vpop.f32.mrb[0].mxu0
        %883 = vmatprep.mubr.bf16.mxu0 0
        %884 = vmatmul.mubr.bf16.gmra.mrb[0].mxu0 %v745
        %v885 = vpop.f32.mrb[0].mxu0
        %v886 = vadd.f32 0.0, %v885
        %v887 = vpop.f32.mrb[0].mxu0
        %v888 = vpop.f32.mrb[0].mxu0
        %v889 = vadd.f32 0.0, %v888
        %v890 = vpop.f32.mrb[0].mxu0
        %891 = vmatprep.mubr.bf16.mxu0 0
        %892 = vmatmul.mubr.bf16.gmra.mrb[0].mxu0 %v748
        %v893 = vpop.f32.mrb[0].mxu0
        %v894 = vadd.f32 0.0, %v893
        %v895 = vpop.f32.mrb[0].mxu0
        %v896 = vpop.f32.mrb[0].mxu0
        %v897 = vadd.f32 0.0, %v896
        %v898 = vpop.f32.mrb[0].mxu0
        %899 = vmatprep.mubr.bf16.mxu0 0
        %900 = vmatmul.mubr.bf16.gmra.mrb[0].mxu0 %v751
        %v901 = vpop.f32.mrb[0].mxu0
        %v902 = vadd.f32 0.0, %v901
        %v903 = vpop.f32.mrb[0].mxu0
        %v904 = vpop.f32.mrb[0].mxu0
        %v905 = vadd.f32 0.0, %v904
        %v906 = vpop.f32.mrb[0].mxu0
        %907 = vmatprep.mubr.bf16.mxu0 0
        %908 = vmatmul.mubr.bf16.gmra.mrb[0].mxu0 %v754
        %v909 = vpop.f32.mrb[0].mxu0
        %v910 = vadd.f32 0.0, %v909
        %v911 = vpop.f32.mrb[0].mxu0
        %v912 = vpop.f32.mrb[0].mxu0
        %v913 = vadd.f32 0.0, %v912
        %v914 = vpop.f32.mrb[0].mxu0
        %915 = vmatprep.mubr.bf16.mxu0 0
        %916 = vmatmul.mubr.bf16.gmra.mrb[0].mxu0 %v757
        %v917 = vpop.f32.mrb[0].mxu0
        %v918 = vadd.f32 0.0, %v917
        %v919 = vpop.f32.mrb[0].mxu0
        %v920 = vpop.f32.mrb[0].mxu0
        %v921 = vadd.f32 0.0, %v920
        %v922 = vpop.f32.mrb[0].mxu0
        %923 = vdwg.mxu0
        %v956 = vunpack.c.l.b16 %v224
        %v957 = vunpack.c.l.b16 %v225
        %v958 = vunpack.c.l.b16 %v226
        %v959 = vunpack.c.l.b16 %v227
        %v960 = vunpack.c.l.b16 %v228
        %v961 = vunpack.c.l.b16 %v229
        %v962 = vunpack.c.l.b16 %v230
        %v963 = vunpack.c.l.b16 %v231
        %v964 = vunpack.c.l.b16 %v232
        %v965 = vunpack.c.l.b16 %v233
        %v966 = vunpack.c.l.b16 %v234
        %v967 = vunpack.c.l.b16 %v235
        %v968 = vunpack.c.l.b16 %v236
        %v969 = vunpack.c.l.b16 %v237
        %v970 = vunpack.c.l.b16 %v238
        %v971 = vunpack.c.l.b16 %v239
        %v972 = vunpack.c.l.b16 %v240
        %v973 = vunpack.c.l.b16 %v241
        %v974 = vunpack.c.l.b16 %v242
        %v975 = vunpack.c.l.b16 %v243
        %v976 = vunpack.c.l.b16 %v244
        %v977 = vunpack.c.l.b16 %v245
        %v978 = vunpack.c.l.b16 %v246
        %v979 = vunpack.c.l.b16 %v247
        %v980 = vunpack.c.l.b16 %v248
        %v981 = vunpack.c.l.b16 %v249
        %v982 = vunpack.c.l.b16 %v250
        %v983 = vunpack.c.l.b16 %v251
        %v984 = vunpack.c.l.b16 %v252
        %v985 = vunpack.c.l.b16 %v253
        %v986 = vunpack.c.l.b16 %v254
        %v987 = vunpack.c.l.b16 %v255
        %v988 = vpack.c.b16 %v957, %v956
        %v989 = vpack.c.b16 %v959, %v958
        %v990 = vpack.c.b16 %v961, %v960
        %v991 = vpack.c.b16 %v963, %v962
        %v992 = vpack.c.b16 %v965, %v964
        %v993 = vpack.c.b16 %v967, %v966
        %v994 = vpack.c.b16 %v969, %v968
        %v995 = vpack.c.b16 %v971, %v970
        %v996 = vpack.c.b16 %v973, %v972
        %v997 = vpack.c.b16 %v975, %v974
        %v998 = vpack.c.b16 %v977, %v976
        %v999 = vpack.c.b16 %v979, %v978
        %v1000 = vpack.c.b16 %v981, %v980
        %v1001 = vpack.c.b16 %v983, %v982
        %v1002 = vpack.c.b16 %v985, %v984
        %v1003 = vpack.c.b16 %v987, %v986
        %v1005 = vsel %vm710, %v988, 0
        %v1008 = vsel %vm710, %v989, 0
        %v1011 = vsel %vm710, %v990, 0
        %v1014 = vsel %vm710, %v991, 0
        %v1017 = vsel %vm710, %v992, 0
        %v1020 = vsel %vm710, %v993, 0
        %v1023 = vsel %vm710, %v994, 0
        %v1026 = vsel %vm710, %v995, 0
        %v1029 = vsel %vm710, %v996, 0
        %v1032 = vsel %vm710, %v997, 0
        %v1035 = vsel %vm710, %v998, 0
        %v1038 = vsel %vm710, %v999, 0
        %v1041 = vsel %vm710, %v1000, 0
        %v1044 = vsel %vm710, %v1001, 0
        %v1047 = vsel %vm710, %v1002, 0
        %v1050 = vsel %vm710, %v1003, 0
        %v1053 = vsel %vm759, %v256, 0
        %1055 = vmatprep.subr.bf16.mxu0 0
        %1056 = vmatpush1.bf16.msra.mxu0 %v1053
        %1057 = vmatprep.subr.bf16.mxu0 0
        %1058 = vmatpush1.bf16.msra.mxu0 0
        %1059 = vmatprep.subr.bf16.mxu0 0
        %1060 = vmatpush1.bf16.msra.mxu0 0
        %1061 = vmatprep.subr.bf16.mxu0 0
        %1062 = vmatpush1.bf16.msra.mxu0 0
        %1063 = vmatprep.subr.bf16.mxu0 0
        %1064 = vmatpush1.bf16.msra.mxu0 0
        %1065 = vmatprep.subr.bf16.mxu0 0
        %1066 = vmatpush1.bf16.msra.mxu0 0
        %1067 = vmatprep.subr.bf16.mxu0 0
        %1068 = vmatpush1.bf16.msra.mxu0 0
        %1069 = vmatprep.subr.bf16.mxu0 0
        %1070 = vmatpush1.bf16.msra.mxu0 0
        %1071 = vmatprep.subr.bf16.mxu0 0
        %1072 = vmatpush1.bf16.msra.mxu0 0
        %1073 = vmatprep.subr.bf16.mxu0 0
        %1074 = vmatpush1.bf16.msra.mxu0 0
        %1075 = vmatprep.subr.bf16.mxu0 0
        %1076 = vmatpush1.bf16.msra.mxu0 0
        %1077 = vmatprep.subr.bf16.mxu0 0
        %1078 = vmatpush1.bf16.msra.mxu0 0
        %1079 = vmatprep.subr.bf16.mxu0 0
        %1080 = vmatpush1.bf16.msra.mxu0 0
        %1081 = vmatprep.subr.bf16.mxu0 0
        %1082 = vmatpush1.bf16.msra.mxu0 0
        %1083 = vmatprep.subr.bf16.mxu0 0
        %1084 = vmatpush1.bf16.msra.mxu0 0
        %1085 = vmatprep.subr.bf16.mxu0 0
        %1086 = vmatpush1.bf16.msra.mxu0 0
        %1087 = vmatprep.mubr.bf16.mxu0 0
        %1088 = vmatmul.mubr.bf16.gmra.mrb[0].mxu0 %v1005
        %v1089 = vpop.f32.mrb[0].mxu0
        %v1090 = vadd.f32 %v798, %v1089
        %v1091 = vpop.f32.mrb[0].mxu0
        %v1092 = vpop.f32.mrb[0].mxu0
        %v1093 = vadd.f32 %v801, %v1092
        %v1094 = vpop.f32.mrb[0].mxu0
        %1095 = vmatprep.mubr.bf16.mxu0 0
        %1096 = vmatmul.mubr.bf16.gmra.mrb[0].mxu0 %v1008
        %v1097 = vpop.f32.mrb[0].mxu0
        %v1098 = vadd.f32 %v806, %v1097
        %v1099 = vpop.f32.mrb[0].mxu0
        %v1100 = vpop.f32.mrb[0].mxu0
        %v1101 = vadd.f32 %v809, %v1100
        %v1102 = vpop.f32.mrb[0].mxu0
        %1103 = vmatprep.mubr.bf16.mxu0 0
        %1104 = vmatmul.mubr.bf16.gmra.mrb[0].mxu0 %v1011
        %v1105 = vpop.f32.mrb[0].mxu0
        %v1106 = vadd.f32 %v814, %v1105
        %v1107 = vpop.f32.mrb[0].mxu0
        %v1108 = vpop.f32.mrb[0].mxu0
        %v1109 = vadd.f32 %v817, %v1108
        %v1110 = vpop.f32.mrb[0].mxu0
        %1111 = vmatprep.mubr.bf16.mxu0 0
        %1112 = vmatmul.mubr.bf16.gmra.mrb[0].mxu0 %v1014
        %v1113 = vpop.f32.mrb[0].mxu0
        %v1114 = vadd.f32 %v822, %v1113
        %v1115 = vpop.f32.mrb[0].mxu0
        %v1116 = vpop.f32.mrb[0].mxu0
        %v1117 = vadd.f32 %v825, %v1116
        %v1118 = vpop.f32.mrb[0].mxu0
        %1119 = vmatprep.mubr.bf16.mxu0 0
        %1120 = vmatmul.mubr.bf16.gmra.mrb[0].mxu0 %v1017
        %v1121 = vpop.f32.mrb[0].mxu0
        %v1122 = vadd.f32 %v830, %v1121
        %v1123 = vpop.f32.mrb[0].mxu0
        %v1124 = vpop.f32.mrb[0].mxu0
        %v1125 = vadd.f32 %v833, %v1124
        %v1126 = vpop.f32.mrb[0].mxu0
        %1127 = vmatprep.mubr.bf16.mxu0 0
        %1128 = vmatmul.mubr.bf16.gmra.mrb[0].mxu0 %v1020
        %v1129 = vpop.f32.mrb[0].mxu0
        %v1130 = vadd.f32 %v838, %v1129
        %v1131 = vpop.f32.mrb[0].mxu0
        %v1132 = vpop.f32.mrb[0].mxu0
        %v1133 = vadd.f32 %v841, %v1132
        %v1134 = vpop.f32.mrb[0].mxu0
        %1135 = vmatprep.mubr.bf16.mxu0 0
        %1136 = vmatmul.mubr.bf16.gmra.mrb[0].mxu0 %v1023
        %v1137 = vpop.f32.mrb[0].mxu0
        %v1138 = vadd.f32 %v846, %v1137
        %v1139 = vpop.f32.mrb[0].mxu0
        %v1140 = vpop.f32.mrb[0].mxu0
        %v1141 = vadd.f32 %v849, %v1140
        %v1142 = vpop.f32.mrb[0].mxu0
        %1143 = vmatprep.mubr.bf16.mxu0 0
        %1144 = vmatmul.mubr.bf16.gmra.mrb[0].mxu0 %v1026
        %v1145 = vpop.f32.mrb[0].mxu0
        %v1146 = vadd.f32 %v854, %v1145
        %v1147 = vpop.f32.mrb[0].mxu0
        %v1148 = vpop.f32.mrb[0].mxu0
        %v1149 = vadd.f32 %v857, %v1148
        %v1150 = vpop.f32.mrb[0].mxu0
        %1151 = vmatprep.mubr.bf16.mxu0 0
        %1152 = vmatmul.mubr.bf16.gmra.mrb[0].mxu0 %v1029
        %v1153 = vpop.f32.mrb[0].mxu0
        %v1154 = vadd.f32 %v862, %v1153
        %v1155 = vpop.f32.mrb[0].mxu0
        %v1156 = vpop.f32.mrb[0].mxu0
        %v1157 = vadd.f32 %v865, %v1156
        %v1158 = vpop.f32.mrb[0].mxu0
        %1159 = vmatprep.mubr.bf16.mxu0 0
        %1160 = vmatmul.mubr.bf16.gmra.mrb[0].mxu0 %v1032
        %v1161 = vpop.f32.mrb[0].mxu0
        %v1162 = vadd.f32 %v870, %v1161
        %v1163 = vpop.f32.mrb[0].mxu0
        %v1164 = vpop.f32.mrb[0].mxu0
        %v1165 = vadd.f32 %v873, %v1164
        %v1166 = vpop.f32.mrb[0].mxu0
        %1167 = vmatprep.mubr.bf16.mxu0 0
        %1168 = vmatmul.mubr.bf16.gmra.mrb[0].mxu0 %v1035
        %v1169 = vpop.f32.mrb[0].mxu0
        %v1170 = vadd.f32 %v878, %v1169
        %v1171 = vpop.f32.mrb[0].mxu0
        %v1172 = vpop.f32.mrb[0].mxu0
        %v1173 = vadd.f32 %v881, %v1172
        %v1174 = vpop.f32.mrb[0].mxu0
        %1175 = vmatprep.mubr.bf16.mxu0 0
        %1176 = vmatmul.mubr.bf16.gmra.mrb[0].mxu0 %v1038
        %v1177 = vpop.f32.mrb[0].mxu0
        %v1178 = vadd.f32 %v886, %v1177
        %v1179 = vpop.f32.mrb[0].mxu0
        %v1180 = vpop.f32.mrb[0].mxu0
        %v1181 = vadd.f32 %v889, %v1180
        %v1182 = vpop.f32.mrb[0].mxu0
        %1183 = vmatprep.mubr.bf16.mxu0 0
        %1184 = vmatmul.mubr.bf16.gmra.mrb[0].mxu0 %v1041
        %v1185 = vpop.f32.mrb[0].mxu0
        %v1186 = vadd.f32 %v894, %v1185
        %v1187 = vpop.f32.mrb[0].mxu0
        %v1188 = vpop.f32.mrb[0].mxu0
        %v1189 = vadd.f32 %v897, %v1188
        %v1190 = vpop.f32.mrb[0].mxu0
        %1191 = vmatprep.mubr.bf16.mxu0 0
        %1192 = vmatmul.mubr.bf16.gmra.mrb[0].mxu0 %v1044
        %v1193 = vpop.f32.mrb[0].mxu0
        %v1194 = vadd.f32 %v902, %v1193
        %v1195 = vpop.f32.mrb[0].mxu0
        %v1196 = vpop.f32.mrb[0].mxu0
        %v1197 = vadd.f32 %v905, %v1196
        %v1198 = vpop.f32.mrb[0].mxu0
        %1199 = vmatprep.mubr.bf16.mxu0 0
        %1200 = vmatmul.mubr.bf16.gmra.mrb[0].mxu0 %v1047
        %v1201 = vpop.f32.mrb[0].mxu0
        %v1202 = vadd.f32 %v910, %v1201
        %v1203 = vpop.f32.mrb[0].mxu0
        %v1204 = vpop.f32.mrb[0].mxu0
        %v1205 = vadd.f32 %v913, %v1204
        %v1206 = vpop.f32.mrb[0].mxu0
        %1207 = vmatprep.mubr.bf16.mxu0 0
        %1208 = vmatmul.mubr.bf16.gmra.mrb[0].mxu0 %v1050
        %v1209 = vpop.f32.mrb[0].mxu0
        %v1210 = vadd.f32 %v918, %v1209
        %v1211 = vpop.f32.mrb[0].mxu0
        %v1212 = vpop.f32.mrb[0].mxu0
        %v1213 = vadd.f32 %v921, %v1212
        %v1214 = vpop.f32.mrb[0].mxu0
        %1215 = vdwg.mxu0
        %v1216 = vld [vmem:[%s222] sm:$0xe]
        %v1217 = vld [vmem:[%s222 + $0xc] sm:$0xe]
        %v1218 = vld [vmem:[%s222 + $0x18] sm:$0xe]
        %v1219 = vld [vmem:[%s222 + $0x24] sm:$0xe]
        %v1220 = vld [vmem:[%s222 + $0x30] sm:$0xe]
        %v1221 = vld [vmem:[%s222 + $0x3c] sm:$0xe]
        %v1222 = vld [vmem:[%s222 + $0x48] sm:$0xe]
        %v1223 = vld [vmem:[%s222 + $0x54] sm:$0xe]
        %v1224 = vld [vmem:[%s222 + $0x60] sm:$0xe]
        %v1225 = vld [vmem:[%s222 + $0x6c] sm:$0xe]
        %v1226 = vld [vmem:[%s222 + $0x78] sm:$0xe]
        %v1227 = vld [vmem:[%s222 + $0x84] sm:$0xe]
        %v1228 = vld [vmem:[%s222 + $0x90] sm:$0xe]
        %v1229 = vld [vmem:[%s222 + $0x9c] sm:$0xe]
        %v1230 = vld [vmem:[%s222 + $0xa8] sm:$0xe]
        %v1231 = vld [vmem:[%s222 + $0xb4] sm:$0xe]
        %vm1264 = vcmask 1042432
        %vm1265 = vcmask 1046532
        %vm1266 = vmor %vm1264, %vm1265
        %v1267 = vrot.slane %v1216, 5
        %v1268 = vrot.slane %v1267, 4
        %v1269 = vrot.slane %v225, 5
        %v1270 = vsel %vm1266, %v1268, %v1269
        %v1271 = vrot.slane %v1269, 4
        %v1272 = vrot.slane %v257, 5
        %v1273 = vsel %vm1266, %v1271, %v1272
        %v1274 = vrot.slane %v1217, 5
        %v1275 = vrot.slane %v1274, 4
        %v1276 = vrot.slane %v227, 5
        %v1277 = vsel %vm1266, %v1275, %v1276
        %v1278 = vrot.slane %v1276, 4
        %v1279 = vrot.slane %v258, 5
        %v1280 = vsel %vm1266, %v1278, %v1279
        %v1281 = vrot.slane %v1218, 5
        %v1282 = vrot.slane %v1281, 4
        %v1283 = vrot.slane %v229, 5
        %v1284 = vsel %vm1266, %v1282, %v1283
        %v1285 = vrot.slane %v1283, 4
        %v1286 = vrot.slane %v259, 5
        %v1287 = vsel %vm1266, %v1285, %v1286
        %v1288 = vrot.slane %v1219, 5
        %v1289 = vrot.slane %v1288, 4
        %v1290 = vrot.slane %v231, 5
        %v1291 = vsel %vm1266, %v1289, %v1290
        %v1292 = vrot.slane %v1290, 4
        %v1293 = vrot.slane %v260, 5
        %v1294 = vsel %vm1266, %v1292, %v1293
        %v1295 = vrot.slane %v1220, 5
        %v1296 = vrot.slane %v1295, 4
        %v1297 = vrot.slane %v233, 5
        %v1298 = vsel %vm1266, %v1296, %v1297
        %v1299 = vrot.slane %v1297, 4
        %v1300 = vrot.slane %v261, 5
        %v1301 = vsel %vm1266, %v1299, %v1300
        %v1302 = vrot.slane %v1221, 5
        %v1303 = vrot.slane %v1302, 4
        %v1304 = vrot.slane %v235, 5
        %v1305 = vsel %vm1266, %v1303, %v1304
        %v1306 = vrot.slane %v1304, 4
        %v1307 = vrot.slane %v262, 5
        %v1308 = vsel %vm1266, %v1306, %v1307
        %v1309 = vrot.slane %v1222, 5
        %v1310 = vrot.slane %v1309, 4
        %v1311 = vrot.slane %v237, 5
        %v1312 = vsel %vm1266, %v1310, %v1311
        %v1313 = vrot.slane %v1311, 4
        %v1314 = vrot.slane %v263, 5
        %v1315 = vsel %vm1266, %v1313, %v1314
        %v1316 = vrot.slane %v1223, 5
        %v1317 = vrot.slane %v1316, 4
        %v1318 = vrot.slane %v239, 5
        %v1319 = vsel %vm1266, %v1317, %v1318
        %v1320 = vrot.slane %v1318, 4
        %v1321 = vrot.slane %v264, 5
        %v1322 = vsel %vm1266, %v1320, %v1321
        %v1323 = vrot.slane %v1224, 5
        %v1324 = vrot.slane %v1323, 4
        %v1325 = vrot.slane %v241, 5
        %v1326 = vsel %vm1266, %v1324, %v1325
        %v1327 = vrot.slane %v1325, 4
        %v1328 = vrot.slane %v265, 5
        %v1329 = vsel %vm1266, %v1327, %v1328
        %v1330 = vrot.slane %v1225, 5
        %v1331 = vrot.slane %v1330, 4
        %v1332 = vrot.slane %v243, 5
        %v1333 = vsel %vm1266, %v1331, %v1332
        %v1334 = vrot.slane %v1332, 4
        %v1335 = vrot.slane %v266, 5
        %v1336 = vsel %vm1266, %v1334, %v1335
        %v1337 = vrot.slane %v1226, 5
        %v1338 = vrot.slane %v1337, 4
        %v1339 = vrot.slane %v245, 5
        %v1340 = vsel %vm1266, %v1338, %v1339
        %v1341 = vrot.slane %v1339, 4
        %v1342 = vrot.slane %v267, 5
        %v1343 = vsel %vm1266, %v1341, %v1342
        %v1344 = vrot.slane %v1227, 5
        %v1345 = vrot.slane %v1344, 4
        %v1346 = vrot.slane %v247, 5
        %v1347 = vsel %vm1266, %v1345, %v1346
        %v1348 = vrot.slane %v1346, 4
        %v1349 = vrot.slane %v268, 5
        %v1350 = vsel %vm1266, %v1348, %v1349
        %v1351 = vrot.slane %v1228, 5
        %v1352 = vrot.slane %v1351, 4
        %v1353 = vrot.slane %v249, 5
        %v1354 = vsel %vm1266, %v1352, %v1353
        %v1355 = vrot.slane %v1353, 4
        %v1356 = vrot.slane %v269, 5
        %v1357 = vsel %vm1266, %v1355, %v1356
        %v1358 = vrot.slane %v1229, 5
        %v1359 = vrot.slane %v1358, 4
        %v1360 = vrot.slane %v251, 5
        %v1361 = vsel %vm1266, %v1359, %v1360
        %v1362 = vrot.slane %v1360, 4
        %v1363 = vrot.slane %v270, 5
        %v1364 = vsel %vm1266, %v1362, %v1363
        %v1365 = vrot.slane %v1230, 5
        %v1366 = vrot.slane %v1365, 4
        %v1367 = vrot.slane %v253, 5
        %v1368 = vsel %vm1266, %v1366, %v1367
        %v1369 = vrot.slane %v1367, 4
        %v1370 = vrot.slane %v271, 5
        %v1371 = vsel %vm1266, %v1369, %v1370
        %v1372 = vrot.slane %v1231, 5
        %v1373 = vrot.slane %v1372, 4
        %v1374 = vrot.slane %v255, 5
        %v1375 = vsel %vm1266, %v1373, %v1374
        %v1376 = vrot.slane %v1374, 4
        %v1377 = vrot.slane %v272, 5
        %v1378 = vsel %vm1266, %v1376, %v1377
        %s1379 = scalar_lea.vmem %s1, 4
        %v1380 = vld [vmem:[%s1379] sm:$0x3]
        %v1381 = vunpack.c.l.b16 %v1270
        %v1382 = vunpack.c.l.b16 %v1273
        %v1383 = vunpack.c.l.b16 %v1277
        %v1384 = vunpack.c.l.b16 %v1280
        %v1385 = vunpack.c.l.b16 %v1284
        %v1386 = vunpack.c.l.b16 %v1287
        %v1387 = vunpack.c.l.b16 %v1291
        %v1388 = vunpack.c.l.b16 %v1294
        %v1389 = vunpack.c.l.b16 %v1298
        %v1390 = vunpack.c.l.b16 %v1301
        %v1391 = vunpack.c.l.b16 %v1305
        %v1392 = vunpack.c.l.b16 %v1308
        %v1393 = vunpack.c.l.b16 %v1312
        %v1394 = vunpack.c.l.b16 %v1315
        %v1395 = vunpack.c.l.b16 %v1319
        %v1396 = vunpack.c.l.b16 %v1322
        %v1397 = vunpack.c.l.b16 %v1326
        %v1398 = vunpack.c.l.b16 %v1329
        %v1399 = vunpack.c.l.b16 %v1333
        %v1400 = vunpack.c.l.b16 %v1336
        %v1401 = vunpack.c.l.b16 %v1340
        %v1402 = vunpack.c.l.b16 %v1343
        %v1403 = vunpack.c.l.b16 %v1347
        %v1404 = vunpack.c.l.b16 %v1350
        %v1405 = vunpack.c.l.b16 %v1354
        %v1406 = vunpack.c.l.b16 %v1357
        %v1407 = vunpack.c.l.b16 %v1361
        %v1408 = vunpack.c.l.b16 %v1364
        %v1409 = vunpack.c.l.b16 %v1368
        %v1410 = vunpack.c.l.b16 %v1371
        %v1411 = vunpack.c.l.b16 %v1375
        %v1412 = vunpack.c.l.b16 %v1378
        %v1413 = vpack.c.b16 %v1382, %v1381
        %v1414 = vpack.c.b16 %v1384, %v1383
        %v1415 = vpack.c.b16 %v1386, %v1385
        %v1416 = vpack.c.b16 %v1388, %v1387
        %v1417 = vpack.c.b16 %v1390, %v1389
        %v1418 = vpack.c.b16 %v1392, %v1391
        %v1419 = vpack.c.b16 %v1394, %v1393
        %v1420 = vpack.c.b16 %v1396, %v1395
        %v1421 = vpack.c.b16 %v1398, %v1397
        %v1422 = vpack.c.b16 %v1400, %v1399
        %v1423 = vpack.c.b16 %v1402, %v1401
        %v1424 = vpack.c.b16 %v1404, %v1403
        %v1425 = vpack.c.b16 %v1406, %v1405
        %v1426 = vpack.c.b16 %v1408, %v1407
        %v1427 = vpack.c.b16 %v1410, %v1409
        %v1428 = vpack.c.b16 %v1412, %v1411
        %v1430 = vsel %vm710, %v1413, 0
        %v1433 = vsel %vm710, %v1414, 0
        %v1436 = vsel %vm710, %v1415, 0
        %v1439 = vsel %vm710, %v1416, 0
        %v1442 = vsel %vm710, %v1417, 0
        %v1445 = vsel %vm710, %v1418, 0
        %v1448 = vsel %vm710, %v1419, 0
        %v1451 = vsel %vm710, %v1420, 0
        %v1454 = vsel %vm710, %v1421, 0
        %v1457 = vsel %vm710, %v1422, 0
        %v1460 = vsel %vm710, %v1423, 0
        %v1463 = vsel %vm710, %v1424, 0
        %v1466 = vsel %vm710, %v1425, 0
        %v1469 = vsel %vm710, %v1426, 0
        %v1472 = vsel %vm710, %v1427, 0
        %v1475 = vsel %vm710, %v1428, 0
        %v1478 = vsel %vm759, %v1380, 0
        %1480 = vmatprep.subr.bf16.mxu0 0
        %1481 = vmatpush1.bf16.msra.mxu0 %v1478
        %1482 = vmatprep.subr.bf16.mxu0 0
        %1483 = vmatpush1.bf16.msra.mxu0 0
        %1484 = vmatprep.subr.bf16.mxu0 0
        %1485 = vmatpush1.bf16.msra.mxu0 0
        %1486 = vmatprep.subr.bf16.mxu0 0
        %1487 = vmatpush1.bf16.msra.mxu0 0
        %1488 = vmatprep.subr.bf16.mxu0 0
        %1489 = vmatpush1.bf16.msra.mxu0 0
        %1490 = vmatprep.subr.bf16.mxu0 0
        %1491 = vmatpush1.bf16.msra.mxu0 0
        %1492 = vmatprep.subr.bf16.mxu0 0
        %1493 = vmatpush1.bf16.msra.mxu0 0
        %1494 = vmatprep.subr.bf16.mxu0 0
        %1495 = vmatpush1.bf16.msra.mxu0 0
        %1496 = vmatprep.subr.bf16.mxu0 0
        %1497 = vmatpush1.bf16.msra.mxu0 0
        %1498 = vmatprep.subr.bf16.mxu0 0
        %1499 = vmatpush1.bf16.msra.mxu0 0
        %1500 = vmatprep.subr.bf16.mxu0 0
        %1501 = vmatpush1.bf16.msra.mxu0 0
        %1502 = vmatprep.subr.bf16.mxu0 0
        %1503 = vmatpush1.bf16.msra.mxu0 0
        %1504 = vmatprep.subr.bf16.mxu0 0
        %1505 = vmatpush1.bf16.msra.mxu0 0
        %1506 = vmatprep.subr.bf16.mxu0 0
        %1507 = vmatpush1.bf16.msra.mxu0 0
        %1508 = vmatprep.subr.bf16.mxu0 0
        %1509 = vmatpush1.bf16.msra.mxu0 0
        %1510 = vmatprep.subr.bf16.mxu0 0
        %1511 = vmatpush1.bf16.msra.mxu0 0
        %1512 = vmatprep.mubr.bf16.mxu0 0
        %1513 = vmatmul.mubr.bf16.gmra.mrb[0].mxu0 %v1430
        %v1514 = vpop.f32.mrb[0].mxu0
        %v1515 = vadd.f32 0.0, %v1514
        %v1516 = vpop.f32.mrb[0].mxu0
        %v1517 = vpop.f32.mrb[0].mxu0
        %v1518 = vadd.f32 0.0, %v1517
        %v1519 = vpop.f32.mrb[0].mxu0
        %1520 = vmatprep.mubr.bf16.mxu0 0
        %1521 = vmatmul.mubr.bf16.gmra.mrb[0].mxu0 %v1433
        %v1522 = vpop.f32.mrb[0].mxu0
        %v1523 = vadd.f32 0.0, %v1522
        %v1524 = vpop.f32.mrb[0].mxu0
        %v1525 = vpop.f32.mrb[0].mxu0
        %v1526 = vadd.f32 0.0, %v1525
        %v1527 = vpop.f32.mrb[0].mxu0
        %1528 = vmatprep.mubr.bf16.mxu0 0
        %1529 = vmatmul.mubr.bf16.gmra.mrb[0].mxu0 %v1436
        %v1530 = vpop.f32.mrb[0].mxu0
        %v1531 = vadd.f32 0.0, %v1530
        %v1532 = vpop.f32.mrb[0].mxu0
        %v1533 = vpop.f32.mrb[0].mxu0
        %v1534 = vadd.f32 0.0, %v1533
        %v1535 = vpop.f32.mrb[0].mxu0
        %1536 = vmatprep.mubr.bf16.mxu0 0
        %1537 = vmatmul.mubr.bf16.gmra.mrb[0].mxu0 %v1439
        %v1538 = vpop.f32.mrb[0].mxu0
        %v1539 = vadd.f32 0.0, %v1538
        %v1540 = vpop.f32.mrb[0].mxu0
        %v1541 = vpop.f32.mrb[0].mxu0
        %v1542 = vadd.f32 0.0, %v1541
        %v1543 = vpop.f32.mrb[0].mxu0
        %1544 = vmatprep.mubr.bf16.mxu0 0
        %1545 = vmatmul.mubr.bf16.gmra.mrb[0].mxu0 %v1442
        %v1546 = vpop.f32.mrb[0].mxu0
        %v1547 = vadd.f32 0.0, %v1546
        %v1548 = vpop.f32.mrb[0].mxu0
        %v1549 = vpop.f32.mrb[0].mxu0
        %v1550 = vadd.f32 0.0, %v1549
        %v1551 = vpop.f32.mrb[0].mxu0
        %1552 = vmatprep.mubr.bf16.mxu0 0
        %1553 = vmatmul.mubr.bf16.gmra.mrb[0].mxu0 %v1445
        %v1554 = vpop.f32.mrb[0].mxu0
        %v1555 = vadd.f32 0.0, %v1554
        %v1556 = vpop.f32.mrb[0].mxu0
        %v1557 = vpop.f32.mrb[0].mxu0
        %v1558 = vadd.f32 0.0, %v1557
        %v1559 = vpop.f32.mrb[0].mxu0
        %1560 = vmatprep.mubr.bf16.mxu0 0
        %1561 = vmatmul.mubr.bf16.gmra.mrb[0].mxu0 %v1448
        %v1562 = vpop.f32.mrb[0].mxu0
        %v1563 = vadd.f32 0.0, %v1562
        %v1564 = vpop.f32.mrb[0].mxu0
        %v1565 = vpop.f32.mrb[0].mxu0
        %v1566 = vadd.f32 0.0, %v1565
        %v1567 = vpop.f32.mrb[0].mxu0
        %1568 = vmatprep.mubr.bf16.mxu0 0
        %1569 = vmatmul.mubr.bf16.gmra.mrb[0].mxu0 %v1451
        %v1570 = vpop.f32.mrb[0].mxu0
        %v1571 = vadd.f32 0.0, %v1570
        %v1572 = vpop.f32.mrb[0].mxu0
        %v1573 = vpop.f32.mrb[0].mxu0
        %v1574 = vadd.f32 0.0, %v1573
        %v1575 = vpop.f32.mrb[0].mxu0
        %1576 = vmatprep.mubr.bf16.mxu0 0
        %1577 = vmatmul.mubr.bf16.gmra.mrb[0].mxu0 %v1454
        %v1578 = vpop.f32.mrb[0].mxu0
        %v1579 = vadd.f32 0.0, %v1578
        %v1580 = vpop.f32.mrb[0].mxu0
        %v1581 = vpop.f32.mrb[0].mxu0
        %v1582 = vadd.f32 0.0, %v1581
        %v1583 = vpop.f32.mrb[0].mxu0
        %1584 = vmatprep.mubr.bf16.mxu0 0
        %1585 = vmatmul.mubr.bf16.gmra.mrb[0].mxu0 %v1457
        %v1586 = vpop.f32.mrb[0].mxu0
        %v1587 = vadd.f32 0.0, %v1586
        %v1588 = vpop.f32.mrb[0].mxu0
        %v1589 = vpop.f32.mrb[0].mxu0
        %v1590 = vadd.f32 0.0, %v1589
        %v1591 = vpop.f32.mrb[0].mxu0
        %1592 = vmatprep.mubr.bf16.mxu0 0
        %1593 = vmatmul.mubr.bf16.gmra.mrb[0].mxu0 %v1460
        %v1594 = vpop.f32.mrb[0].mxu0
        %v1595 = vadd.f32 0.0, %v1594
        %v1596 = vpop.f32.mrb[0].mxu0
        %v1597 = vpop.f32.mrb[0].mxu0
        %v1598 = vadd.f32 0.0, %v1597
        %v1599 = vpop.f32.mrb[0].mxu0
        %1600 = vmatprep.mubr.bf16.mxu0 0
        %1601 = vmatmul.mubr.bf16.gmra.mrb[0].mxu0 %v1463
        %v1602 = vpop.f32.mrb[0].mxu0
        %v1603 = vadd.f32 0.0, %v1602
        %v1604 = vpop.f32.mrb[0].mxu0
        %v1605 = vpop.f32.mrb[0].mxu0
        %v1606 = vadd.f32 0.0, %v1605
        %v1607 = vpop.f32.mrb[0].mxu0
        %1608 = vmatprep.mubr.bf16.mxu0 0
        %1609 = vmatmul.mubr.bf16.gmra.mrb[0].mxu0 %v1466
        %v1610 = vpop.f32.mrb[0].mxu0
        %v1611 = vadd.f32 0.0, %v1610
        %v1612 = vpop.f32.mrb[0].mxu0
        %v1613 = vpop.f32.mrb[0].mxu0
        %v1614 = vadd.f32 0.0, %v1613
        %v1615 = vpop.f32.mrb[0].mxu0
        %1616 = vmatprep.mubr.bf16.mxu0 0
        %1617 = vmatmul.mubr.bf16.gmra.mrb[0].mxu0 %v1469
        %v1618 = vpop.f32.mrb[0].mxu0
        %v1619 = vadd.f32 0.0, %v1618
        %v1620 = vpop.f32.mrb[0].mxu0
        %v1621 = vpop.f32.mrb[0].mxu0
        %v1622 = vadd.f32 0.0, %v1621
        %v1623 = vpop.f32.mrb[0].mxu0
        %1624 = vmatprep.mubr.bf16.mxu0 0
        %1625 = vmatmul.mubr.bf16.gmra.mrb[0].mxu0 %v1472
        %v1626 = vpop.f32.mrb[0].mxu0
        %v1627 = vadd.f32 0.0, %v1626
        %v1628 = vpop.f32.mrb[0].mxu0
        %v1629 = vpop.f32.mrb[0].mxu0
        %v1630 = vadd.f32 0.0, %v1629
        %v1631 = vpop.f32.mrb[0].mxu0
        %1632 = vmatprep.mubr.bf16.mxu0 0
        %1633 = vmatmul.mubr.bf16.gmra.mrb[0].mxu0 %v1475
        %v1634 = vpop.f32.mrb[0].mxu0
        %v1635 = vadd.f32 0.0, %v1634
        %v1636 = vpop.f32.mrb[0].mxu0
        %v1637 = vpop.f32.mrb[0].mxu0
        %v1638 = vadd.f32 0.0, %v1637
        %v1639 = vpop.f32.mrb[0].mxu0
        %1640 = vdwg.mxu0
        %v1641 = vadd.f32 %v1090, %v1515
        %v1642 = vadd.f32 %v1093, %v1518
        %v1643 = vadd.f32 %v1098, %v1523
        %v1644 = vadd.f32 %v1101, %v1526
        %v1645 = vadd.f32 %v1106, %v1531
        %v1646 = vadd.f32 %v1109, %v1534
        %v1647 = vadd.f32 %v1114, %v1539
        %v1648 = vadd.f32 %v1117, %v1542
        %v1649 = vadd.f32 %v1122, %v1547
        %v1650 = vadd.f32 %v1125, %v1550
        %v1651 = vadd.f32 %v1130, %v1555
        %v1652 = vadd.f32 %v1133, %v1558
        %v1653 = vadd.f32 %v1138, %v1563
        %v1654 = vadd.f32 %v1141, %v1566
        %v1655 = vadd.f32 %v1146, %v1571
        %v1656 = vadd.f32 %v1149, %v1574
        %v1657 = vadd.f32 %v1154, %v1579
        %v1658 = vadd.f32 %v1157, %v1582
        %v1659 = vadd.f32 %v1162, %v1587
        %v1660 = vadd.f32 %v1165, %v1590
        %v1661 = vadd.f32 %v1170, %v1595
        %v1662 = vadd.f32 %v1173, %v1598
        %v1663 = vadd.f32 %v1178, %v1603
        %v1664 = vadd.f32 %v1181, %v1606
        %v1665 = vadd.f32 %v1186, %v1611
        %v1666 = vadd.f32 %v1189, %v1614
        %v1667 = vadd.f32 %v1194, %v1619
        %v1668 = vadd.f32 %v1197, %v1622
        %v1669 = vadd.f32 %v1202, %v1627
        %v1670 = vadd.f32 %v1205, %v1630
        %v1671 = vadd.f32 %v1210, %v1635
        %v1672 = vadd.f32 %v1213, %v1638
        %s1673 = scalar_lea.vmem %s222, 12
        %v1674 = vld [vmem:[%s1673] sm:$0xf]
        %v1675 = vld [vmem:[%s1673 + $0x4] sm:$0xf]
        %v1676 = vld [vmem:[%s1673 + $0xc] sm:$0xf]
        %v1677 = vld [vmem:[%s1673 + $0x10] sm:$0xf]
        %v1678 = vld [vmem:[%s1673 + $0x18] sm:$0xf]
        %v1679 = vld [vmem:[%s1673 + $0x1c] sm:$0xf]
        %v1680 = vld [vmem:[%s1673 + $0x24] sm:$0xf]
        %v1681 = vld [vmem:[%s1673 + $0x28] sm:$0xf]
        %v1682 = vld [vmem:[%s1673 + $0x30] sm:$0xf]
        %v1683 = vld [vmem:[%s1673 + $0x34] sm:$0xf]
        %v1684 = vld [vmem:[%s1673 + $0x3c] sm:$0xf]
        %v1685 = vld [vmem:[%s1673 + $0x40] sm:$0xf]
        %v1686 = vld [vmem:[%s1673 + $0x48] sm:$0xf]
        %v1687 = vld [vmem:[%s1673 + $0x4c] sm:$0xf]
        %v1688 = vld [vmem:[%s1673 + $0x54] sm:$0xf]
        %v1689 = vld [vmem:[%s1673 + $0x58] sm:$0xf]
        %v1690 = vld [vmem:[%s1673 + $0x60] sm:$0xf]
        %v1691 = vld [vmem:[%s1673 + $0x64] sm:$0xf]
        %v1692 = vld [vmem:[%s1673 + $0x6c] sm:$0xf]
        %v1693 = vld [vmem:[%s1673 + $0x70] sm:$0xf]
        %v1694 = vld [vmem:[%s1673 + $0x78] sm:$0xf]
        %v1695 = vld [vmem:[%s1673 + $0x7c] sm:$0xf]
        %v1696 = vld [vmem:[%s1673 + $0x84] sm:$0xf]
        %v1697 = vld [vmem:[%s1673 + $0x88] sm:$0xf]
        %v1698 = vld [vmem:[%s1673 + $0x90] sm:$0xf]
        %v1699 = vld [vmem:[%s1673 + $0x94] sm:$0xf]
        %v1700 = vld [vmem:[%s1673 + $0x9c] sm:$0xf]
        %v1701 = vld [vmem:[%s1673 + $0xa0] sm:$0xf]
        %v1702 = vld [vmem:[%s1673 + $0xa8] sm:$0xf]
        %v1703 = vld [vmem:[%s1673 + $0xac] sm:$0xf]
        %v1704 = vld [vmem:[%s1673 + $0xb4] sm:$0xf]
        %v1705 = vld [vmem:[%s1673 + $0xb8] sm:$0xf]
        %s1706 = scalar_lea.vmem %s1, 6
        %v1707 = vld [vmem:[%s1706] sm:$0x3]
        %v1740 = vunpack.c.l.b16 %v1674
        %v1741 = vunpack.c.l.b16 %v1675
        %v1742 = vunpack.c.l.b16 %v1676
        %v1743 = vunpack.c.l.b16 %v1677
        %v1744 = vunpack.c.l.b16 %v1678
        %v1745 = vunpack.c.l.b16 %v1679
        %v1746 = vunpack.c.l.b16 %v1680
        %v1747 = vunpack.c.l.b16 %v1681
        %v1748 = vunpack.c.l.b16 %v1682
        %v1749 = vunpack.c.l.b16 %v1683
        %v1750 = vunpack.c.l.b16 %v1684
        %v1751 = vunpack.c.l.b16 %v1685
        %v1752 = vunpack.c.l.b16 %v1686
        %v1753 = vunpack.c.l.b16 %v1687
        %v1754 = vunpack.c.l.b16 %v1688
        %v1755 = vunpack.c.l.b16 %v1689
        %v1756 = vunpack.c.l.b16 %v1690
        %v1757 = vunpack.c.l.b16 %v1691
        %v1758 = vunpack.c.l.b16 %v1692
        %v1759 = vunpack.c.l.b16 %v1693
        %v1760 = vunpack.c.l.b16 %v1694
        %v1761 = vunpack.c.l.b16 %v1695
        %v1762 = vunpack.c.l.b16 %v1696
        %v1763 = vunpack.c.l.b16 %v1697
        %v1764 = vunpack.c.l.b16 %v1698
        %v1765 = vunpack.c.l.b16 %v1699
        %v1766 = vunpack.c.l.b16 %v1700
        %v1767 = vunpack.c.l.b16 %v1701
        %v1768 = vunpack.c.l.b16 %v1702
        %v1769 = vunpack.c.l.b16 %v1703
        %v1770 = vunpack.c.l.b16 %v1704
        %v1771 = vunpack.c.l.b16 %v1705
        %v1772 = vpack.c.b16 %v1741, %v1740
        %v1773 = vpack.c.b16 %v1743, %v1742
        %v1774 = vpack.c.b16 %v1745, %v1744
        %v1775 = vpack.c.b16 %v1747, %v1746
        %v1776 = vpack.c.b16 %v1749, %v1748
        %v1777 = vpack.c.b16 %v1751, %v1750
        %v1778 = vpack.c.b16 %v1753, %v1752
        %v1779 = vpack.c.b16 %v1755, %v1754
        %v1780 = vpack.c.b16 %v1757, %v1756
        %v1781 = vpack.c.b16 %v1759, %v1758
        %v1782 = vpack.c.b16 %v1761, %v1760
        %v1783 = vpack.c.b16 %v1763, %v1762
        %v1784 = vpack.c.b16 %v1765, %v1764
        %v1785 = vpack.c.b16 %v1767, %v1766
        %v1786 = vpack.c.b16 %v1769, %v1768
        %v1787 = vpack.c.b16 %v1771, %v1770
        %v1789 = vsel %vm710, %v1772, 0
        %v1792 = vsel %vm710, %v1773, 0
        %v1795 = vsel %vm710, %v1774, 0
        %v1798 = vsel %vm710, %v1775, 0
        %v1801 = vsel %vm710, %v1776, 0
        %v1804 = vsel %vm710, %v1777, 0
        %v1807 = vsel %vm710, %v1778, 0
        %v1810 = vsel %vm710, %v1779, 0
        %v1813 = vsel %vm710, %v1780, 0
        %v1816 = vsel %vm710, %v1781, 0
        %v1819 = vsel %vm710, %v1782, 0
        %v1822 = vsel %vm710, %v1783, 0
        %v1825 = vsel %vm710, %v1784, 0
        %v1828 = vsel %vm710, %v1785, 0
        %v1831 = vsel %vm710, %v1786, 0
        %v1834 = vsel %vm710, %v1787, 0
        %v1837 = vsel %vm759, %v1707, 0
        %1839 = vmatprep.subr.bf16.mxu0 0
        %1840 = vmatpush1.bf16.msra.mxu0 %v1837
        %1841 = vmatprep.subr.bf16.mxu0 0
        %1842 = vmatpush1.bf16.msra.mxu0 0
        %1843 = vmatprep.subr.bf16.mxu0 0
        %1844 = vmatpush1.bf16.msra.mxu0 0
        %1845 = vmatprep.subr.bf16.mxu0 0
        %1846 = vmatpush1.bf16.msra.mxu0 0
        %1847 = vmatprep.subr.bf16.mxu0 0
        %1848 = vmatpush1.bf16.msra.mxu0 0
        %1849 = vmatprep.subr.bf16.mxu0 0
        %1850 = vmatpush1.bf16.msra.mxu0 0
        %1851 = vmatprep.subr.bf16.mxu0 0
        %1852 = vmatpush1.bf16.msra.mxu0 0
        %1853 = vmatprep.subr.bf16.mxu0 0
        %1854 = vmatpush1.bf16.msra.mxu0 0
        %1855 = vmatprep.subr.bf16.mxu0 0
        %1856 = vmatpush1.bf16.msra.mxu0 0
        %1857 = vmatprep.subr.bf16.mxu0 0
        %1858 = vmatpush1.bf16.msra.mxu0 0
        %1859 = vmatprep.subr.bf16.mxu0 0
        %1860 = vmatpush1.bf16.msra.mxu0 0
        %1861 = vmatprep.subr.bf16.mxu0 0
        %1862 = vmatpush1.bf16.msra.mxu0 0
        %1863 = vmatprep.subr.bf16.mxu0 0
        %1864 = vmatpush1.bf16.msra.mxu0 0
        %1865 = vmatprep.subr.bf16.mxu0 0
        %1866 = vmatpush1.bf16.msra.mxu0 0
        %1867 = vmatprep.subr.bf16.mxu0 0
        %1868 = vmatpush1.bf16.msra.mxu0 0
        %1869 = vmatprep.subr.bf16.mxu0 0
        %1870 = vmatpush1.bf16.msra.mxu0 0
        %1871 = vmatprep.mubr.bf16.mxu0 0
        %1872 = vmatmul.mubr.bf16.gmra.mrb[0].mxu0 %v1789
        %v1873 = vpop.f32.mrb[0].mxu0
        %v1874 = vadd.f32 0.0, %v1873
        %v1875 = vpop.f32.mrb[0].mxu0
        %v1876 = vpop.f32.mrb[0].mxu0
        %v1877 = vadd.f32 0.0, %v1876
        %v1878 = vpop.f32.mrb[0].mxu0
        %1879 = vmatprep.mubr.bf16.mxu0 0
        %1880 = vmatmul.mubr.bf16.gmra.mrb[0].mxu0 %v1792
        %v1881 = vpop.f32.mrb[0].mxu0
        %v1882 = vadd.f32 0.0, %v1881
        %v1883 = vpop.f32.mrb[0].mxu0
        %v1884 = vpop.f32.mrb[0].mxu0
        %v1885 = vadd.f32 0.0, %v1884
        %v1886 = vpop.f32.mrb[0].mxu0
        %1887 = vmatprep.mubr.bf16.mxu0 0
        %1888 = vmatmul.mubr.bf16.gmra.mrb[0].mxu0 %v1795
        %v1889 = vpop.f32.mrb[0].mxu0
        %v1890 = vadd.f32 0.0, %v1889
        %v1891 = vpop.f32.mrb[0].mxu0
        %v1892 = vpop.f32.mrb[0].mxu0
        %v1893 = vadd.f32 0.0, %v1892
        %v1894 = vpop.f32.mrb[0].mxu0
        %1895 = vmatprep.mubr.bf16.mxu0 0
        %1896 = vmatmul.mubr.bf16.gmra.mrb[0].mxu0 %v1798
        %v1897 = vpop.f32.mrb[0].mxu0
        %v1898 = vadd.f32 0.0, %v1897
        %v1899 = vpop.f32.mrb[0].mxu0
        %v1900 = vpop.f32.mrb[0].mxu0
        %v1901 = vadd.f32 0.0, %v1900
        %v1902 = vpop.f32.mrb[0].mxu0
        %1903 = vmatprep.mubr.bf16.mxu0 0
        %1904 = vmatmul.mubr.bf16.gmra.mrb[0].mxu0 %v1801
        %v1905 = vpop.f32.mrb[0].mxu0
        %v1906 = vadd.f32 0.0, %v1905
        %v1907 = vpop.f32.mrb[0].mxu0
        %v1908 = vpop.f32.mrb[0].mxu0
        %v1909 = vadd.f32 0.0, %v1908
        %v1910 = vpop.f32.mrb[0].mxu0
        %1911 = vmatprep.mubr.bf16.mxu0 0
        %1912 = vmatmul.mubr.bf16.gmra.mrb[0].mxu0 %v1804
        %v1913 = vpop.f32.mrb[0].mxu0
        %v1914 = vadd.f32 0.0, %v1913
        %v1915 = vpop.f32.mrb[0].mxu0
        %v1916 = vpop.f32.mrb[0].mxu0
        %v1917 = vadd.f32 0.0, %v1916
        %v1918 = vpop.f32.mrb[0].mxu0
        %1919 = vmatprep.mubr.bf16.mxu0 0
        %1920 = vmatmul.mubr.bf16.gmra.mrb[0].mxu0 %v1807
        %v1921 = vpop.f32.mrb[0].mxu0
        %v1922 = vadd.f32 0.0, %v1921
        %v1923 = vpop.f32.mrb[0].mxu0
        %v1924 = vpop.f32.mrb[0].mxu0
        %v1925 = vadd.f32 0.0, %v1924
        %v1926 = vpop.f32.mrb[0].mxu0
        %1927 = vmatprep.mubr.bf16.mxu0 0
        %1928 = vmatmul.mubr.bf16.gmra.mrb[0].mxu0 %v1810
        %v1929 = vpop.f32.mrb[0].mxu0
        %v1930 = vadd.f32 0.0, %v1929
        %v1931 = vpop.f32.mrb[0].mxu0
        %v1932 = vpop.f32.mrb[0].mxu0
        %v1933 = vadd.f32 0.0, %v1932
        %v1934 = vpop.f32.mrb[0].mxu0
        %1935 = vmatprep.mubr.bf16.mxu0 0
        %1936 = vmatmul.mubr.bf16.gmra.mrb[0].mxu0 %v1813
        %v1937 = vpop.f32.mrb[0].mxu0
        %v1938 = vadd.f32 0.0, %v1937
        %v1939 = vpop.f32.mrb[0].mxu0
        %v1940 = vpop.f32.mrb[0].mxu0
        %v1941 = vadd.f32 0.0, %v1940
        %v1942 = vpop.f32.mrb[0].mxu0
        %1943 = vmatprep.mubr.bf16.mxu0 0
        %1944 = vmatmul.mubr.bf16.gmra.mrb[0].mxu0 %v1816
        %v1945 = vpop.f32.mrb[0].mxu0
        %v1946 = vadd.f32 0.0, %v1945
        %v1947 = vpop.f32.mrb[0].mxu0
        %v1948 = vpop.f32.mrb[0].mxu0
        %v1949 = vadd.f32 0.0, %v1948
        %v1950 = vpop.f32.mrb[0].mxu0
        %1951 = vmatprep.mubr.bf16.mxu0 0
        %1952 = vmatmul.mubr.bf16.gmra.mrb[0].mxu0 %v1819
        %v1953 = vpop.f32.mrb[0].mxu0
        %v1954 = vadd.f32 0.0, %v1953
        %v1955 = vpop.f32.mrb[0].mxu0
        %v1956 = vpop.f32.mrb[0].mxu0
        %v1957 = vadd.f32 0.0, %v1956
        %v1958 = vpop.f32.mrb[0].mxu0
        %1959 = vmatprep.mubr.bf16.mxu0 0
        %1960 = vmatmul.mubr.bf16.gmra.mrb[0].mxu0 %v1822
        %v1961 = vpop.f32.mrb[0].mxu0
        %v1962 = vadd.f32 0.0, %v1961
        %v1963 = vpop.f32.mrb[0].mxu0
        %v1964 = vpop.f32.mrb[0].mxu0
        %v1965 = vadd.f32 0.0, %v1964
        %v1966 = vpop.f32.mrb[0].mxu0
        %1967 = vmatprep.mubr.bf16.mxu0 0
        %1968 = vmatmul.mubr.bf16.gmra.mrb[0].mxu0 %v1825
        %v1969 = vpop.f32.mrb[0].mxu0
        %v1970 = vadd.f32 0.0, %v1969
        %v1971 = vpop.f32.mrb[0].mxu0
        %v1972 = vpop.f32.mrb[0].mxu0
        %v1973 = vadd.f32 0.0, %v1972
        %v1974 = vpop.f32.mrb[0].mxu0
        %1975 = vmatprep.mubr.bf16.mxu0 0
        %1976 = vmatmul.mubr.bf16.gmra.mrb[0].mxu0 %v1828
        %v1977 = vpop.f32.mrb[0].mxu0
        %v1978 = vadd.f32 0.0, %v1977
        %v1979 = vpop.f32.mrb[0].mxu0
        %v1980 = vpop.f32.mrb[0].mxu0
        %v1981 = vadd.f32 0.0, %v1980
        %v1982 = vpop.f32.mrb[0].mxu0
        %1983 = vmatprep.mubr.bf16.mxu0 0
        %1984 = vmatmul.mubr.bf16.gmra.mrb[0].mxu0 %v1831
        %v1985 = vpop.f32.mrb[0].mxu0
        %v1986 = vadd.f32 0.0, %v1985
        %v1987 = vpop.f32.mrb[0].mxu0
        %v1988 = vpop.f32.mrb[0].mxu0
        %v1989 = vadd.f32 0.0, %v1988
        %v1990 = vpop.f32.mrb[0].mxu0
        %1991 = vmatprep.mubr.bf16.mxu0 0
        %1992 = vmatmul.mubr.bf16.gmra.mrb[0].mxu0 %v1834
        %v1993 = vpop.f32.mrb[0].mxu0
        %v1994 = vadd.f32 0.0, %v1993
        %v1995 = vpop.f32.mrb[0].mxu0
        %v1996 = vpop.f32.mrb[0].mxu0
        %v1997 = vadd.f32 0.0, %v1996
        %v1998 = vpop.f32.mrb[0].mxu0
        %1999 = vdwg.mxu0
        %v2000 = vadd.f32 %v1641, %v1874
        %v2001 = vadd.f32 %v1642, %v1877
        %v2002 = vadd.f32 %v1643, %v1882
        %v2003 = vadd.f32 %v1644, %v1885
        %v2004 = vadd.f32 %v1645, %v1890
        %v2005 = vadd.f32 %v1646, %v1893
        %v2006 = vadd.f32 %v1647, %v1898
        %v2007 = vadd.f32 %v1648, %v1901
        %v2008 = vadd.f32 %v1649, %v1906
        %v2009 = vadd.f32 %v1650, %v1909
        %v2010 = vadd.f32 %v1651, %v1914
        %v2011 = vadd.f32 %v1652, %v1917
        %v2012 = vadd.f32 %v1653, %v1922
        %v2013 = vadd.f32 %v1654, %v1925
        %v2014 = vadd.f32 %v1655, %v1930
        %v2015 = vadd.f32 %v1656, %v1933
        %v2016 = vadd.f32 %v1657, %v1938
        %v2017 = vadd.f32 %v1658, %v1941
        %v2018 = vadd.f32 %v1659, %v1946
        %v2019 = vadd.f32 %v1660, %v1949
        %v2020 = vadd.f32 %v1661, %v1954
        %v2021 = vadd.f32 %v1662, %v1957
        %v2022 = vadd.f32 %v1663, %v1962
        %v2023 = vadd.f32 %v1664, %v1965
        %v2024 = vadd.f32 %v1665, %v1970
        %v2025 = vadd.f32 %v1666, %v1973
        %v2026 = vadd.f32 %v1667, %v1978
        %v2027 = vadd.f32 %v1668, %v1981
        %v2028 = vadd.f32 %v1669, %v1986
        %v2029 = vadd.f32 %v1670, %v1989
        %v2030 = vadd.f32 %v1671, %v1994
        %v2031 = vadd.f32 %v1672, %v1997
        %v2032 = vld [vmem:[%s1673] sm:$0xf]
        %v2033 = vld [vmem:[%s1673 + $0x4] sm:$0xf]
        %v2034 = vld [vmem:[%s1673 + $0x8] sm:$0x1]
        %v2035 = vld [vmem:[%s1673 + $0xc] sm:$0xf]
        %v2036 = vld [vmem:[%s1673 + $0x10] sm:$0xf]
        %v2037 = vld [vmem:[%s1673 + $0x14] sm:$0x1]
        %v2038 = vld [vmem:[%s1673 + $0x18] sm:$0xf]
        %v2039 = vld [vmem:[%s1673 + $0x1c] sm:$0xf]
        %v2040 = vld [vmem:[%s1673 + $0x20] sm:$0x1]
        %v2041 = vld [vmem:[%s1673 + $0x24] sm:$0xf]
        %v2042 = vld [vmem:[%s1673 + $0x28] sm:$0xf]
        %v2043 = vld [vmem:[%s1673 + $0x2c] sm:$0x1]
        %v2044 = vld [vmem:[%s1673 + $0x30] sm:$0xf]
        %v2045 = vld [vmem:[%s1673 + $0x34] sm:$0xf]
        %v2046 = vld [vmem:[%s1673 + $0x38] sm:$0x1]
        %v2047 = vld [vmem:[%s1673 + $0x3c] sm:$0xf]
        %v2048 = vld [vmem:[%s1673 + $0x40] sm:$0xf]
        %v2049 = vld [vmem:[%s1673 + $0x44] sm:$0x1]
        %v2050 = vld [vmem:[%s1673 + $0x48] sm:$0xf]
        %v2051 = vld [vmem:[%s1673 + $0x4c] sm:$0xf]
        %v2052 = vld [vmem:[%s1673 + $0x50] sm:$0x1]
        %v2053 = vld [vmem:[%s1673 + $0x54] sm:$0xf]
        %v2054 = vld [vmem:[%s1673 + $0x58] sm:$0xf]
        %v2055 = vld [vmem:[%s1673 + $0x5c] sm:$0x1]
        %v2056 = vld [vmem:[%s1673 + $0x60] sm:$0xf]
        %v2057 = vld [vmem:[%s1673 + $0x64] sm:$0xf]
        %v2058 = vld [vmem:[%s1673 + $0x68] sm:$0x1]
        %v2059 = vld [vmem:[%s1673 + $0x6c] sm:$0xf]
        %v2060 = vld [vmem:[%s1673 + $0x70] sm:$0xf]
        %v2061 = vld [vmem:[%s1673 + $0x74] sm:$0x1]
        %v2062 = vld [vmem:[%s1673 + $0x78] sm:$0xf]
        %v2063 = vld [vmem:[%s1673 + $0x7c] sm:$0xf]
        %v2064 = vld [vmem:[%s1673 + $0x80] sm:$0x1]
        %v2065 = vld [vmem:[%s1673 + $0x84] sm:$0xf]
        %v2066 = vld [vmem:[%s1673 + $0x88] sm:$0xf]
        %v2067 = vld [vmem:[%s1673 + $0x8c] sm:$0x1]
        %v2068 = vld [vmem:[%s1673 + $0x90] sm:$0xf]
        %v2069 = vld [vmem:[%s1673 + $0x94] sm:$0xf]
        %v2070 = vld [vmem:[%s1673 + $0x98] sm:$0x1]
        %v2071 = vld [vmem:[%s1673 + $0x9c] sm:$0xf]
        %v2072 = vld [vmem:[%s1673 + $0xa0] sm:$0xf]
        %v2073 = vld [vmem:[%s1673 + $0xa4] sm:$0x1]
        %v2074 = vld [vmem:[%s1673 + $0xa8] sm:$0xf]
        %v2075 = vld [vmem:[%s1673 + $0xac] sm:$0xf]
        %v2076 = vld [vmem:[%s1673 + $0xb0] sm:$0x1]
        %v2077 = vld [vmem:[%s1673 + $0xb4] sm:$0xf]
        %v2078 = vld [vmem:[%s1673 + $0xb8] sm:$0xf]
        %v2079 = vld [vmem:[%s1673 + $0xbc] sm:$0x1]
        %v2081 = vshrl.u32 %v2032, 16
        %v2083 = vrot.slane %v2081, 4
        %v2084 = vshll.u32 %v2032, 16
        %v2086 = vrot.slane %v2084, 5
        %v2087 = vor.u32 %v2083, %v2086
        %v2088 = vrot.slane %v2087, 4
        %v2090 = vshll.u32 %v2033, 16
        %v2092 = vrot.slane %v2090, 5
        %v2093 = vsel %vm275, %v2088, %v2092
        %v2094 = vshrl.u32 %v2033, 16
        %v2096 = vrot.slane %v2094, 4
        %v2097 = vor.u32 %v2096, %v2092
        %v2098 = vrot.slane %v2097, 4
        %v2100 = vshll.u32 %v2034, 16
        %v2102 = vrot.slane %v2100, 5
        %v2103 = vsel %vm275, %v2098, %v2102
        %v2105 = vshrl.u32 %v2035, 16
        %v2107 = vrot.slane %v2105, 4
        %v2108 = vshll.u32 %v2035, 16
        %v2110 = vrot.slane %v2108, 5
        %v2111 = vor.u32 %v2107, %v2110
        %v2112 = vrot.slane %v2111, 4
        %v2114 = vshll.u32 %v2036, 16
        %v2116 = vrot.slane %v2114, 5
        %v2117 = vsel %vm275, %v2112, %v2116
        %v2118 = vshrl.u32 %v2036, 16
        %v2120 = vrot.slane %v2118, 4
        %v2121 = vor.u32 %v2120, %v2116
        %v2122 = vrot.slane %v2121, 4
        %v2124 = vshll.u32 %v2037, 16
        %v2126 = vrot.slane %v2124, 5
        %v2127 = vsel %vm275, %v2122, %v2126
        %v2129 = vshrl.u32 %v2038, 16
        %v2131 = vrot.slane %v2129, 4
        %v2132 = vshll.u32 %v2038, 16
        %v2134 = vrot.slane %v2132, 5
        %v2135 = vor.u32 %v2131, %v2134
        %v2136 = vrot.slane %v2135, 4
        %v2138 = vshll.u32 %v2039, 16
        %v2140 = vrot.slane %v2138, 5
        %v2141 = vsel %vm275, %v2136, %v2140
        %v2142 = vshrl.u32 %v2039, 16
        %v2144 = vrot.slane %v2142, 4
        %v2145 = vor.u32 %v2144, %v2140
        %v2146 = vrot.slane %v2145, 4
        %v2148 = vshll.u32 %v2040, 16
        %v2150 = vrot.slane %v2148, 5
        %v2151 = vsel %vm275, %v2146, %v2150
        %v2153 = vshrl.u32 %v2041, 16
        %v2155 = vrot.slane %v2153, 4
        %v2156 = vshll.u32 %v2041, 16
        %v2158 = vrot.slane %v2156, 5
        %v2159 = vor.u32 %v2155, %v2158
        %v2160 = vrot.slane %v2159, 4
        %v2162 = vshll.u32 %v2042, 16
        %v2164 = vrot.slane %v2162, 5
        %v2165 = vsel %vm275, %v2160, %v2164
        %v2166 = vshrl.u32 %v2042, 16
        %v2168 = vrot.slane %v2166, 4
        %v2169 = vor.u32 %v2168, %v2164
        %v2170 = vrot.slane %v2169, 4
        %v2172 = vshll.u32 %v2043, 16
        %v2174 = vrot.slane %v2172, 5
        %v2175 = vsel %vm275, %v2170, %v2174
        %v2177 = vshrl.u32 %v2044, 16
        %v2179 = vrot.slane %v2177, 4
        %v2180 = vshll.u32 %v2044, 16
        %v2182 = vrot.slane %v2180, 5
        %v2183 = vor.u32 %v2179, %v2182
        %v2184 = vrot.slane %v2183, 4
        %v2186 = vshll.u32 %v2045, 16
        %v2188 = vrot.slane %v2186, 5
        %v2189 = vsel %vm275, %v2184, %v2188
        %v2190 = vshrl.u32 %v2045, 16
        %v2192 = vrot.slane %v2190, 4
        %v2193 = vor.u32 %v2192, %v2188
        %v2194 = vrot.slane %v2193, 4
        %v2196 = vshll.u32 %v2046, 16
        %v2198 = vrot.slane %v2196, 5
        %v2199 = vsel %vm275, %v2194, %v2198
        %v2201 = vshrl.u32 %v2047, 16
        %v2203 = vrot.slane %v2201, 4
        %v2204 = vshll.u32 %v2047, 16
        %v2206 = vrot.slane %v2204, 5
        %v2207 = vor.u32 %v2203, %v2206
        %v2208 = vrot.slane %v2207, 4
        %v2210 = vshll.u32 %v2048, 16
        %v2212 = vrot.slane %v2210, 5
        %v2213 = vsel %vm275, %v2208, %v2212
        %v2214 = vshrl.u32 %v2048, 16
        %v2216 = vrot.slane %v2214, 4
        %v2217 = vor.u32 %v2216, %v2212
        %v2218 = vrot.slane %v2217, 4
        %v2220 = vshll.u32 %v2049, 16
        %v2222 = vrot.slane %v2220, 5
        %v2223 = vsel %vm275, %v2218, %v2222
        %v2225 = vshrl.u32 %v2050, 16
        %v2227 = vrot.slane %v2225, 4
        %v2228 = vshll.u32 %v2050, 16
        %v2230 = vrot.slane %v2228, 5
        %v2231 = vor.u32 %v2227, %v2230
        %v2232 = vrot.slane %v2231, 4
        %v2234 = vshll.u32 %v2051, 16
        %v2236 = vrot.slane %v2234, 5
        %v2237 = vsel %vm275, %v2232, %v2236
        %v2238 = vshrl.u32 %v2051, 16
        %v2240 = vrot.slane %v2238, 4
        %v2241 = vor.u32 %v2240, %v2236
        %v2242 = vrot.slane %v2241, 4
        %v2244 = vshll.u32 %v2052, 16
        %v2246 = vrot.slane %v2244, 5
        %v2247 = vsel %vm275, %v2242, %v2246
        %v2249 = vshrl.u32 %v2053, 16
        %v2251 = vrot.slane %v2249, 4
        %v2252 = vshll.u32 %v2053, 16
        %v2254 = vrot.slane %v2252, 5
        %v2255 = vor.u32 %v2251, %v2254
        %v2256 = vrot.slane %v2255, 4
        %v2258 = vshll.u32 %v2054, 16
        %v2260 = vrot.slane %v2258, 5
        %v2261 = vsel %vm275, %v2256, %v2260
        %v2262 = vshrl.u32 %v2054, 16
        %v2264 = vrot.slane %v2262, 4
        %v2265 = vor.u32 %v2264, %v2260
        %v2266 = vrot.slane %v2265, 4
        %v2268 = vshll.u32 %v2055, 16
        %v2270 = vrot.slane %v2268, 5
        %v2271 = vsel %vm275, %v2266, %v2270
        %v2273 = vshrl.u32 %v2056, 16
        %v2275 = vrot.slane %v2273, 4
        %v2276 = vshll.u32 %v2056, 16
        %v2278 = vrot.slane %v2276, 5
        %v2279 = vor.u32 %v2275, %v2278
        %v2280 = vrot.slane %v2279, 4
        %v2282 = vshll.u32 %v2057, 16
        %v2284 = vrot.slane %v2282, 5
        %v2285 = vsel %vm275, %v2280, %v2284
        %v2286 = vshrl.u32 %v2057, 16
        %v2288 = vrot.slane %v2286, 4
        %v2289 = vor.u32 %v2288, %v2284
        %v2290 = vrot.slane %v2289, 4
        %v2292 = vshll.u32 %v2058, 16
        %v2294 = vrot.slane %v2292, 5
        %v2295 = vsel %vm275, %v2290, %v2294
        %v2297 = vshrl.u32 %v2059, 16
        %v2299 = vrot.slane %v2297, 4
        %v2300 = vshll.u32 %v2059, 16
        %v2302 = vrot.slane %v2300, 5
        %v2303 = vor.u32 %v2299, %v2302
        %v2304 = vrot.slane %v2303, 4
        %v2306 = vshll.u32 %v2060, 16
        %v2308 = vrot.slane %v2306, 5
        %v2309 = vsel %vm275, %v2304, %v2308
        %v2310 = vshrl.u32 %v2060, 16
        %v2312 = vrot.slane %v2310, 4
        %v2313 = vor.u32 %v2312, %v2308
        %v2314 = vrot.slane %v2313, 4
        %v2316 = vshll.u32 %v2061, 16
        %v2318 = vrot.slane %v2316, 5
        %v2319 = vsel %vm275, %v2314, %v2318
        %v2321 = vshrl.u32 %v2062, 16
        %v2323 = vrot.slane %v2321, 4
        %v2324 = vshll.u32 %v2062, 16
        %v2326 = vrot.slane %v2324, 5
        %v2327 = vor.u32 %v2323, %v2326
        %v2328 = vrot.slane %v2327, 4
        %v2330 = vshll.u32 %v2063, 16
        %v2332 = vrot.slane %v2330, 5
        %v2333 = vsel %vm275, %v2328, %v2332
        %v2334 = vshrl.u32 %v2063, 16
        %v2336 = vrot.slane %v2334, 4
        %v2337 = vor.u32 %v2336, %v2332
        %v2338 = vrot.slane %v2337, 4
        %v2340 = vshll.u32 %v2064, 16
        %v2342 = vrot.slane %v2340, 5
        %v2343 = vsel %vm275, %v2338, %v2342
        %v2345 = vshrl.u32 %v2065, 16
        %v2347 = vrot.slane %v2345, 4
        %v2348 = vshll.u32 %v2065, 16
        %v2350 = vrot.slane %v2348, 5
        %v2351 = vor.u32 %v2347, %v2350
        %v2352 = vrot.slane %v2351, 4
        %v2354 = vshll.u32 %v2066, 16
        %v2356 = vrot.slane %v2354, 5
        %v2357 = vsel %vm275, %v2352, %v2356
        %v2358 = vshrl.u32 %v2066, 16
        %v2360 = vrot.slane %v2358, 4
        %v2361 = vor.u32 %v2360, %v2356
        %v2362 = vrot.slane %v2361, 4
        %v2364 = vshll.u32 %v2067, 16
        %v2366 = vrot.slane %v2364, 5
        %v2367 = vsel %vm275, %v2362, %v2366
        %v2369 = vshrl.u32 %v2068, 16
        %v2371 = vrot.slane %v2369, 4
        %v2372 = vshll.u32 %v2068, 16
        %v2374 = vrot.slane %v2372, 5
        %v2375 = vor.u32 %v2371, %v2374
        %v2376 = vrot.slane %v2375, 4
        %v2378 = vshll.u32 %v2069, 16
        %v2380 = vrot.slane %v2378, 5
        %v2381 = vsel %vm275, %v2376, %v2380
        %v2382 = vshrl.u32 %v2069, 16
        %v2384 = vrot.slane %v2382, 4
        %v2385 = vor.u32 %v2384, %v2380
        %v2386 = vrot.slane %v2385, 4
        %v2388 = vshll.u32 %v2070, 16
        %v2390 = vrot.slane %v2388, 5
        %v2391 = vsel %vm275, %v2386, %v2390
        %v2393 = vshrl.u32 %v2071, 16
        %v2395 = vrot.slane %v2393, 4
        %v2396 = vshll.u32 %v2071, 16
        %v2398 = vrot.slane %v2396, 5
        %v2399 = vor.u32 %v2395, %v2398
        %v2400 = vrot.slane %v2399, 4
        %v2402 = vshll.u32 %v2072, 16
        %v2404 = vrot.slane %v2402, 5
        %v2405 = vsel %vm275, %v2400, %v2404
        %v2406 = vshrl.u32 %v2072, 16
        %v2408 = vrot.slane %v2406, 4
        %v2409 = vor.u32 %v2408, %v2404
        %v2410 = vrot.slane %v2409, 4
        %v2412 = vshll.u32 %v2073, 16
        %v2414 = vrot.slane %v2412, 5
        %v2415 = vsel %vm275, %v2410, %v2414
        %v2417 = vshrl.u32 %v2074, 16
        %v2419 = vrot.slane %v2417, 4
        %v2420 = vshll.u32 %v2074, 16
        %v2422 = vrot.slane %v2420, 5
        %v2423 = vor.u32 %v2419, %v2422
        %v2424 = vrot.slane %v2423, 4
        %v2426 = vshll.u32 %v2075, 16
        %v2428 = vrot.slane %v2426, 5
        %v2429 = vsel %vm275, %v2424, %v2428
        %v2430 = vshrl.u32 %v2075, 16
        %v2432 = vrot.slane %v2430, 4
        %v2433 = vor.u32 %v2432, %v2428
        %v2434 = vrot.slane %v2433, 4
        %v2436 = vshll.u32 %v2076, 16
        %v2438 = vrot.slane %v2436, 5
        %v2439 = vsel %vm275, %v2434, %v2438
        %v2441 = vshrl.u32 %v2077, 16
        %v2443 = vrot.slane %v2441, 4
        %v2444 = vshll.u32 %v2077, 16
        %v2446 = vrot.slane %v2444, 5
        %v2447 = vor.u32 %v2443, %v2446
        %v2448 = vrot.slane %v2447, 4
        %v2450 = vshll.u32 %v2078, 16
        %v2452 = vrot.slane %v2450, 5
        %v2453 = vsel %vm275, %v2448, %v2452
        %v2454 = vshrl.u32 %v2078, 16
        %v2456 = vrot.slane %v2454, 4
        %v2457 = vor.u32 %v2456, %v2452
        %v2458 = vrot.slane %v2457, 4
        %v2460 = vshll.u32 %v2079, 16
        %v2462 = vrot.slane %v2460, 5
        %v2463 = vsel %vm275, %v2458, %v2462
        %s2464 = scalar_lea.vmem %s1, 8
        %v2465 = vld [vmem:[%s2464] sm:$0x3]
        %v2466 = vunpack.c.l.b16 %v2093
        %v2467 = vunpack.c.l.b16 %v2103
        %v2468 = vunpack.c.l.b16 %v2117
        %v2469 = vunpack.c.l.b16 %v2127
        %v2470 = vunpack.c.l.b16 %v2141
        %v2471 = vunpack.c.l.b16 %v2151
        %v2472 = vunpack.c.l.b16 %v2165
        %v2473 = vunpack.c.l.b16 %v2175
        %v2474 = vunpack.c.l.b16 %v2189
        %v2475 = vunpack.c.l.b16 %v2199
        %v2476 = vunpack.c.l.b16 %v2213
        %v2477 = vunpack.c.l.b16 %v2223
        %v2478 = vunpack.c.l.b16 %v2237
        %v2479 = vunpack.c.l.b16 %v2247
        %v2480 = vunpack.c.l.b16 %v2261
        %v2481 = vunpack.c.l.b16 %v2271
        %v2482 = vunpack.c.l.b16 %v2285
        %v2483 = vunpack.c.l.b16 %v2295
        %v2484 = vunpack.c.l.b16 %v2309
        %v2485 = vunpack.c.l.b16 %v2319
        %v2486 = vunpack.c.l.b16 %v2333
        %v2487 = vunpack.c.l.b16 %v2343
        %v2488 = vunpack.c.l.b16 %v2357
        %v2489 = vunpack.c.l.b16 %v2367
        %v2490 = vunpack.c.l.b16 %v2381
        %v2491 = vunpack.c.l.b16 %v2391
        %v2492 = vunpack.c.l.b16 %v2405
        %v2493 = vunpack.c.l.b16 %v2415
        %v2494 = vunpack.c.l.b16 %v2429
        %v2495 = vunpack.c.l.b16 %v2439
        %v2496 = vunpack.c.l.b16 %v2453
        %v2497 = vunpack.c.l.b16 %v2463
        %v2498 = vpack.c.b16 %v2467, %v2466
        %v2499 = vpack.c.b16 %v2469, %v2468
        %v2500 = vpack.c.b16 %v2471, %v2470
        %v2501 = vpack.c.b16 %v2473, %v2472
        %v2502 = vpack.c.b16 %v2475, %v2474
        %v2503 = vpack.c.b16 %v2477, %v2476
        %v2504 = vpack.c.b16 %v2479, %v2478
        %v2505 = vpack.c.b16 %v2481, %v2480
        %v2506 = vpack.c.b16 %v2483, %v2482
        %v2507 = vpack.c.b16 %v2485, %v2484
        %v2508 = vpack.c.b16 %v2487, %v2486
        %v2509 = vpack.c.b16 %v2489, %v2488
        %v2510 = vpack.c.b16 %v2491, %v2490
        %v2511 = vpack.c.b16 %v2493, %v2492
        %v2512 = vpack.c.b16 %v2495, %v2494
        %v2513 = vpack.c.b16 %v2497, %v2496
        %v2515 = vsel %vm710, %v2498, 0
        %v2518 = vsel %vm710, %v2499, 0
        %v2521 = vsel %vm710, %v2500, 0
        %v2524 = vsel %vm710, %v2501, 0
        %v2527 = vsel %vm710, %v2502, 0
        %v2530 = vsel %vm710, %v2503, 0
        %v2533 = vsel %vm710, %v2504, 0
        %v2536 = vsel %vm710, %v2505, 0
        %v2539 = vsel %vm710, %v2506, 0
        %v2542 = vsel %vm710, %v2507, 0
        %v2545 = vsel %vm710, %v2508, 0
        %v2548 = vsel %vm710, %v2509, 0
        %v2551 = vsel %vm710, %v2510, 0
        %v2554 = vsel %vm710, %v2511, 0
        %v2557 = vsel %vm710, %v2512, 0
        %v2560 = vsel %vm710, %v2513, 0
        %v2563 = vsel %vm759, %v2465, 0
        %2565 = vmatprep.subr.bf16.mxu0 0
        %2566 = vmatpush1.bf16.msra.mxu0 %v2563
        %2567 = vmatprep.subr.bf16.mxu0 0
        %2568 = vmatpush1.bf16.msra.mxu0 0
        %2569 = vmatprep.subr.bf16.mxu0 0
        %2570 = vmatpush1.bf16.msra.mxu0 0
        %2571 = vmatprep.subr.bf16.mxu0 0
        %2572 = vmatpush1.bf16.msra.mxu0 0
        %2573 = vmatprep.subr.bf16.mxu0 0
        %2574 = vmatpush1.bf16.msra.mxu0 0
        %2575 = vmatprep.subr.bf16.mxu0 0
        %2576 = vmatpush1.bf16.msra.mxu0 0
        %2577 = vmatprep.subr.bf16.mxu0 0
        %2578 = vmatpush1.bf16.msra.mxu0 0
        %2579 = vmatprep.subr.bf16.mxu0 0
        %2580 = vmatpush1.bf16.msra.mxu0 0
        %2581 = vmatprep.subr.bf16.mxu0 0
        %2582 = vmatpush1.bf16.msra.mxu0 0
        %2583 = vmatprep.subr.bf16.mxu0 0
        %2584 = vmatpush1.bf16.msra.mxu0 0
        %2585 = vmatprep.subr.bf16.mxu0 0
        %2586 = vmatpush1.bf16.msra.mxu0 0
        %2587 = vmatprep.subr.bf16.mxu0 0
        %2588 = vmatpush1.bf16.msra.mxu0 0
        %2589 = vmatprep.subr.bf16.mxu0 0
        %2590 = vmatpush1.bf16.msra.mxu0 0
        %2591 = vmatprep.subr.bf16.mxu0 0
        %2592 = vmatpush1.bf16.msra.mxu0 0
        %2593 = vmatprep.subr.bf16.mxu0 0
        %2594 = vmatpush1.bf16.msra.mxu0 0
        %2595 = vmatprep.subr.bf16.mxu0 0
        %2596 = vmatpush1.bf16.msra.mxu0 0
        %2597 = vmatprep.mubr.bf16.mxu0 0
        %2598 = vmatmul.mubr.bf16.gmra.mrb[0].mxu0 %v2515
        %v2599 = vpop.f32.mrb[0].mxu0
        %v2600 = vadd.f32 0.0, %v2599
        %v2601 = vpop.f32.mrb[0].mxu0
        %v2602 = vpop.f32.mrb[0].mxu0
        %v2603 = vadd.f32 0.0, %v2602
        %v2604 = vpop.f32.mrb[0].mxu0
        %2605 = vmatprep.mubr.bf16.mxu0 0
        %2606 = vmatmul.mubr.bf16.gmra.mrb[0].mxu0 %v2518
        %v2607 = vpop.f32.mrb[0].mxu0
        %v2608 = vadd.f32 0.0, %v2607
        %v2609 = vpop.f32.mrb[0].mxu0
        %v2610 = vpop.f32.mrb[0].mxu0
        %v2611 = vadd.f32 0.0, %v2610
        %v2612 = vpop.f32.mrb[0].mxu0
        %2613 = vmatprep.mubr.bf16.mxu0 0
        %2614 = vmatmul.mubr.bf16.gmra.mrb[0].mxu0 %v2521
        %v2615 = vpop.f32.mrb[0].mxu0
        %v2616 = vadd.f32 0.0, %v2615
        %v2617 = vpop.f32.mrb[0].mxu0
        %v2618 = vpop.f32.mrb[0].mxu0
        %v2619 = vadd.f32 0.0, %v2618
        %v2620 = vpop.f32.mrb[0].mxu0
        %2621 = vmatprep.mubr.bf16.mxu0 0
        %2622 = vmatmul.mubr.bf16.gmra.mrb[0].mxu0 %v2524
        %v2623 = vpop.f32.mrb[0].mxu0
        %v2624 = vadd.f32 0.0, %v2623
        %v2625 = vpop.f32.mrb[0].mxu0
        %v2626 = vpop.f32.mrb[0].mxu0
        %v2627 = vadd.f32 0.0, %v2626
        %v2628 = vpop.f32.mrb[0].mxu0
        %2629 = vmatprep.mubr.bf16.mxu0 0
        %2630 = vmatmul.mubr.bf16.gmra.mrb[0].mxu0 %v2527
        %v2631 = vpop.f32.mrb[0].mxu0
        %v2632 = vadd.f32 0.0, %v2631
        %v2633 = vpop.f32.mrb[0].mxu0
        %v2634 = vpop.f32.mrb[0].mxu0
        %v2635 = vadd.f32 0.0, %v2634
        %v2636 = vpop.f32.mrb[0].mxu0
        %2637 = vmatprep.mubr.bf16.mxu0 0
        %2638 = vmatmul.mubr.bf16.gmra.mrb[0].mxu0 %v2530
        %v2639 = vpop.f32.mrb[0].mxu0
        %v2640 = vadd.f32 0.0, %v2639
        %v2641 = vpop.f32.mrb[0].mxu0
        %v2642 = vpop.f32.mrb[0].mxu0
        %v2643 = vadd.f32 0.0, %v2642
        %v2644 = vpop.f32.mrb[0].mxu0
        %2645 = vmatprep.mubr.bf16.mxu0 0
        %2646 = vmatmul.mubr.bf16.gmra.mrb[0].mxu0 %v2533
        %v2647 = vpop.f32.mrb[0].mxu0
        %v2648 = vadd.f32 0.0, %v2647
        %v2649 = vpop.f32.mrb[0].mxu0
        %v2650 = vpop.f32.mrb[0].mxu0
        %v2651 = vadd.f32 0.0, %v2650
        %v2652 = vpop.f32.mrb[0].mxu0
        %2653 = vmatprep.mubr.bf16.mxu0 0
        %2654 = vmatmul.mubr.bf16.gmra.mrb[0].mxu0 %v2536
        %v2655 = vpop.f32.mrb[0].mxu0
        %v2656 = vadd.f32 0.0, %v2655
        %v2657 = vpop.f32.mrb[0].mxu0
        %v2658 = vpop.f32.mrb[0].mxu0
        %v2659 = vadd.f32 0.0, %v2658
        %v2660 = vpop.f32.mrb[0].mxu0
        %2661 = vmatprep.mubr.bf16.mxu0 0
        %2662 = vmatmul.mubr.bf16.gmra.mrb[0].mxu0 %v2539
        %v2663 = vpop.f32.mrb[0].mxu0
        %v2664 = vadd.f32 0.0, %v2663
        %v2665 = vpop.f32.mrb[0].mxu0
        %v2666 = vpop.f32.mrb[0].mxu0
        %v2667 = vadd.f32 0.0, %v2666
        %v2668 = vpop.f32.mrb[0].mxu0
        %2669 = vmatprep.mubr.bf16.mxu0 0
        %2670 = vmatmul.mubr.bf16.gmra.mrb[0].mxu0 %v2542
        %v2671 = vpop.f32.mrb[0].mxu0
        %v2672 = vadd.f32 0.0, %v2671
        %v2673 = vpop.f32.mrb[0].mxu0
        %v2674 = vpop.f32.mrb[0].mxu0
        %v2675 = vadd.f32 0.0, %v2674
        %v2676 = vpop.f32.mrb[0].mxu0
        %2677 = vmatprep.mubr.bf16.mxu0 0
        %2678 = vmatmul.mubr.bf16.gmra.mrb[0].mxu0 %v2545
        %v2679 = vpop.f32.mrb[0].mxu0
        %v2680 = vadd.f32 0.0, %v2679
        %v2681 = vpop.f32.mrb[0].mxu0
        %v2682 = vpop.f32.mrb[0].mxu0
        %v2683 = vadd.f32 0.0, %v2682
        %v2684 = vpop.f32.mrb[0].mxu0
        %2685 = vmatprep.mubr.bf16.mxu0 0
        %2686 = vmatmul.mubr.bf16.gmra.mrb[0].mxu0 %v2548
        %v2687 = vpop.f32.mrb[0].mxu0
        %v2688 = vadd.f32 0.0, %v2687
        %v2689 = vpop.f32.mrb[0].mxu0
        %v2690 = vpop.f32.mrb[0].mxu0
        %v2691 = vadd.f32 0.0, %v2690
        %v2692 = vpop.f32.mrb[0].mxu0
        %2693 = vmatprep.mubr.bf16.mxu0 0
        %2694 = vmatmul.mubr.bf16.gmra.mrb[0].mxu0 %v2551
        %v2695 = vpop.f32.mrb[0].mxu0
        %v2696 = vadd.f32 0.0, %v2695
        %v2697 = vpop.f32.mrb[0].mxu0
        %v2698 = vpop.f32.mrb[0].mxu0
        %v2699 = vadd.f32 0.0, %v2698
        %v2700 = vpop.f32.mrb[0].mxu0
        %2701 = vmatprep.mubr.bf16.mxu0 0
        %2702 = vmatmul.mubr.bf16.gmra.mrb[0].mxu0 %v2554
        %v2703 = vpop.f32.mrb[0].mxu0
        %v2704 = vadd.f32 0.0, %v2703
        %v2705 = vpop.f32.mrb[0].mxu0
        %v2706 = vpop.f32.mrb[0].mxu0
        %v2707 = vadd.f32 0.0, %v2706
        %v2708 = vpop.f32.mrb[0].mxu0
        %2709 = vmatprep.mubr.bf16.mxu0 0
        %2710 = vmatmul.mubr.bf16.gmra.mrb[0].mxu0 %v2557
        %v2711 = vpop.f32.mrb[0].mxu0
        %v2712 = vadd.f32 0.0, %v2711
        %v2713 = vpop.f32.mrb[0].mxu0
        %v2714 = vpop.f32.mrb[0].mxu0
        %v2715 = vadd.f32 0.0, %v2714
        %v2716 = vpop.f32.mrb[0].mxu0
        %2717 = vmatprep.mubr.bf16.mxu0 0
        %2718 = vmatmul.mubr.bf16.gmra.mrb[0].mxu0 %v2560
        %v2719 = vpop.f32.mrb[0].mxu0
        %v2720 = vadd.f32 0.0, %v2719
        %v2721 = vpop.f32.mrb[0].mxu0
        %v2722 = vpop.f32.mrb[0].mxu0
        %v2723 = vadd.f32 0.0, %v2722
        %v2724 = vpop.f32.mrb[0].mxu0
        %2725 = vdwg.mxu0
        %v2726 = vadd.f32 %v2000, %v2600
        %v2727 = vadd.f32 %v2001, %v2603
        %v2728 = vadd.f32 %v2002, %v2608
        %v2729 = vadd.f32 %v2003, %v2611
        %v2730 = vadd.f32 %v2004, %v2616
        %v2731 = vadd.f32 %v2005, %v2619
        %v2732 = vadd.f32 %v2006, %v2624
        %v2733 = vadd.f32 %v2007, %v2627
        %v2734 = vadd.f32 %v2008, %v2632
        %v2735 = vadd.f32 %v2009, %v2635
        %v2736 = vadd.f32 %v2010, %v2640
        %v2737 = vadd.f32 %v2011, %v2643
        %v2738 = vadd.f32 %v2012, %v2648
        %v2739 = vadd.f32 %v2013, %v2651
        %v2740 = vadd.f32 %v2014, %v2656
        %v2741 = vadd.f32 %v2015, %v2659
        %v2742 = vadd.f32 %v2016, %v2664
        %v2743 = vadd.f32 %v2017, %v2667
        %v2744 = vadd.f32 %v2018, %v2672
        %v2745 = vadd.f32 %v2019, %v2675
        %v2746 = vadd.f32 %v2020, %v2680
        %v2747 = vadd.f32 %v2021, %v2683
        %v2748 = vadd.f32 %v2022, %v2688
        %v2749 = vadd.f32 %v2023, %v2691
        %v2750 = vadd.f32 %v2024, %v2696
        %v2751 = vadd.f32 %v2025, %v2699
        %v2752 = vadd.f32 %v2026, %v2704
        %v2753 = vadd.f32 %v2027, %v2707
        %v2754 = vadd.f32 %v2028, %v2712
        %v2755 = vadd.f32 %v2029, %v2715
        %v2756 = vadd.f32 %v2030, %v2720
        %v2757 = vadd.f32 %v2031, %v2723
        %v2758 = vld [vmem:[%s1673] sm:$0xe]
        %v2759 = vld [vmem:[%s1673 + $0xc] sm:$0xe]
        %v2760 = vld [vmem:[%s1673 + $0x18] sm:$0xe]
        %v2761 = vld [vmem:[%s1673 + $0x24] sm:$0xe]
        %v2762 = vld [vmem:[%s1673 + $0x30] sm:$0xe]
        %v2763 = vld [vmem:[%s1673 + $0x3c] sm:$0xe]
        %v2764 = vld [vmem:[%s1673 + $0x48] sm:$0xe]
        %v2765 = vld [vmem:[%s1673 + $0x54] sm:$0xe]
        %v2766 = vld [vmem:[%s1673 + $0x60] sm:$0xe]
        %v2767 = vld [vmem:[%s1673 + $0x6c] sm:$0xe]
        %v2768 = vld [vmem:[%s1673 + $0x78] sm:$0xe]
        %v2769 = vld [vmem:[%s1673 + $0x84] sm:$0xe]
        %v2770 = vld [vmem:[%s1673 + $0x90] sm:$0xe]
        %v2771 = vld [vmem:[%s1673 + $0x9c] sm:$0xe]
        %v2772 = vld [vmem:[%s1673 + $0xa8] sm:$0xe]
        %v2773 = vld [vmem:[%s1673 + $0xb4] sm:$0xe]
        %v2822 = vrot.slane %v2758, 5
        %v2823 = vrot.slane %v2822, 4
        %v2824 = vrot.slane %v2033, 5
        %v2825 = vsel %vm1266, %v2823, %v2824
        %v2826 = vrot.slane %v2824, 4
        %v2827 = vrot.slane %v2034, 5
        %v2828 = vsel %vm1266, %v2826, %v2827
        %v2829 = vrot.slane %v2759, 5
        %v2830 = vrot.slane %v2829, 4
        %v2831 = vrot.slane %v2036, 5
        %v2832 = vsel %vm1266, %v2830, %v2831
        %v2833 = vrot.slane %v2831, 4
        %v2834 = vrot.slane %v2037, 5
        %v2835 = vsel %vm1266, %v2833, %v2834
        %v2836 = vrot.slane %v2760, 5
        %v2837 = vrot.slane %v2836, 4
        %v2838 = vrot.slane %v2039, 5
        %v2839 = vsel %vm1266, %v2837, %v2838
        %v2840 = vrot.slane %v2838, 4
        %v2841 = vrot.slane %v2040, 5
        %v2842 = vsel %vm1266, %v2840, %v2841
        %v2843 = vrot.slane %v2761, 5
        %v2844 = vrot.slane %v2843, 4
        %v2845 = vrot.slane %v2042, 5
        %v2846 = vsel %vm1266, %v2844, %v2845
        %v2847 = vrot.slane %v2845, 4
        %v2848 = vrot.slane %v2043, 5
        %v2849 = vsel %vm1266, %v2847, %v2848
        %v2850 = vrot.slane %v2762, 5
        %v2851 = vrot.slane %v2850, 4
        %v2852 = vrot.slane %v2045, 5
        %v2853 = vsel %vm1266, %v2851, %v2852
        %v2854 = vrot.slane %v2852, 4
        %v2855 = vrot.slane %v2046, 5
        %v2856 = vsel %vm1266, %v2854, %v2855
        %v2857 = vrot.slane %v2763, 5
        %v2858 = vrot.slane %v2857, 4
        %v2859 = vrot.slane %v2048, 5
        %v2860 = vsel %vm1266, %v2858, %v2859
        %v2861 = vrot.slane %v2859, 4
        %v2862 = vrot.slane %v2049, 5
        %v2863 = vsel %vm1266, %v2861, %v2862
        %v2864 = vrot.slane %v2764, 5
        %v2865 = vrot.slane %v2864, 4
        %v2866 = vrot.slane %v2051, 5
        %v2867 = vsel %vm1266, %v2865, %v2866
        %v2868 = vrot.slane %v2866, 4
        %v2869 = vrot.slane %v2052, 5
        %v2870 = vsel %vm1266, %v2868, %v2869
        %v2871 = vrot.slane %v2765, 5
        %v2872 = vrot.slane %v2871, 4
        %v2873 = vrot.slane %v2054, 5
        %v2874 = vsel %vm1266, %v2872, %v2873
        %v2875 = vrot.slane %v2873, 4
        %v2876 = vrot.slane %v2055, 5
        %v2877 = vsel %vm1266, %v2875, %v2876
        %v2878 = vrot.slane %v2766, 5
        %v2879 = vrot.slane %v2878, 4
        %v2880 = vrot.slane %v2057, 5
        %v2881 = vsel %vm1266, %v2879, %v2880
        %v2882 = vrot.slane %v2880, 4
        %v2883 = vrot.slane %v2058, 5
        %v2884 = vsel %vm1266, %v2882, %v2883
        %v2885 = vrot.slane %v2767, 5
        %v2886 = vrot.slane %v2885, 4
        %v2887 = vrot.slane %v2060, 5
        %v2888 = vsel %vm1266, %v2886, %v2887
        %v2889 = vrot.slane %v2887, 4
        %v2890 = vrot.slane %v2061, 5
        %v2891 = vsel %vm1266, %v2889, %v2890
        %v2892 = vrot.slane %v2768, 5
        %v2893 = vrot.slane %v2892, 4
        %v2894 = vrot.slane %v2063, 5
        %v2895 = vsel %vm1266, %v2893, %v2894
        %v2896 = vrot.slane %v2894, 4
        %v2897 = vrot.slane %v2064, 5
        %v2898 = vsel %vm1266, %v2896, %v2897
        %v2899 = vrot.slane %v2769, 5
        %v2900 = vrot.slane %v2899, 4
        %v2901 = vrot.slane %v2066, 5
        %v2902 = vsel %vm1266, %v2900, %v2901
        %v2903 = vrot.slane %v2901, 4
        %v2904 = vrot.slane %v2067, 5
        %v2905 = vsel %vm1266, %v2903, %v2904
        %v2906 = vrot.slane %v2770, 5
        %v2907 = vrot.slane %v2906, 4
        %v2908 = vrot.slane %v2069, 5
        %v2909 = vsel %vm1266, %v2907, %v2908
        %v2910 = vrot.slane %v2908, 4
        %v2911 = vrot.slane %v2070, 5
        %v2912 = vsel %vm1266, %v2910, %v2911
        %v2913 = vrot.slane %v2771, 5
        %v2914 = vrot.slane %v2913, 4
        %v2915 = vrot.slane %v2072, 5
        %v2916 = vsel %vm1266, %v2914, %v2915
        %v2917 = vrot.slane %v2915, 4
        %v2918 = vrot.slane %v2073, 5
        %v2919 = vsel %vm1266, %v2917, %v2918
        %v2920 = vrot.slane %v2772, 5
        %v2921 = vrot.slane %v2920, 4
        %v2922 = vrot.slane %v2075, 5
        %v2923 = vsel %vm1266, %v2921, %v2922
        %v2924 = vrot.slane %v2922, 4
        %v2925 = vrot.slane %v2076, 5
        %v2926 = vsel %vm1266, %v2924, %v2925
        %v2927 = vrot.slane %v2773, 5
        %v2928 = vrot.slane %v2927, 4
        %v2929 = vrot.slane %v2078, 5
        %v2930 = vsel %vm1266, %v2928, %v2929
        %v2931 = vrot.slane %v2929, 4
        %v2932 = vrot.slane %v2079, 5
        %v2933 = vsel %vm1266, %v2931, %v2932
        %s2934 = scalar_lea.vmem %s1, 10
        %v2935 = vld [vmem:[%s2934] sm:$0x3]
        %v2936 = vunpack.c.l.b16 %v2825
        %v2937 = vunpack.c.l.b16 %v2828
        %v2938 = vunpack.c.l.b16 %v2832
        %v2939 = vunpack.c.l.b16 %v2835
        %v2940 = vunpack.c.l.b16 %v2839
        %v2941 = vunpack.c.l.b16 %v2842
        %v2942 = vunpack.c.l.b16 %v2846
        %v2943 = vunpack.c.l.b16 %v2849
        %v2944 = vunpack.c.l.b16 %v2853
        %v2945 = vunpack.c.l.b16 %v2856
        %v2946 = vunpack.c.l.b16 %v2860
        %v2947 = vunpack.c.l.b16 %v2863
        %v2948 = vunpack.c.l.b16 %v2867
        %v2949 = vunpack.c.l.b16 %v2870
        %v2950 = vunpack.c.l.b16 %v2874
        %v2951 = vunpack.c.l.b16 %v2877
        %v2952 = vunpack.c.l.b16 %v2881
        %v2953 = vunpack.c.l.b16 %v2884
        %v2954 = vunpack.c.l.b16 %v2888
        %v2955 = vunpack.c.l.b16 %v2891
        %v2956 = vunpack.c.l.b16 %v2895
        %v2957 = vunpack.c.l.b16 %v2898
        %v2958 = vunpack.c.l.b16 %v2902
        %v2959 = vunpack.c.l.b16 %v2905
        %v2960 = vunpack.c.l.b16 %v2909
        %v2961 = vunpack.c.l.b16 %v2912
        %v2962 = vunpack.c.l.b16 %v2916
        %v2963 = vunpack.c.l.b16 %v2919
        %v2964 = vunpack.c.l.b16 %v2923
        %v2965 = vunpack.c.l.b16 %v2926
        %v2966 = vunpack.c.l.b16 %v2930
        %v2967 = vunpack.c.l.b16 %v2933
        %v2968 = vpack.c.b16 %v2937, %v2936
        %v2969 = vpack.c.b16 %v2939, %v2938
        %v2970 = vpack.c.b16 %v2941, %v2940
        %v2971 = vpack.c.b16 %v2943, %v2942
        %v2972 = vpack.c.b16 %v2945, %v2944
        %v2973 = vpack.c.b16 %v2947, %v2946
        %v2974 = vpack.c.b16 %v2949, %v2948
        %v2975 = vpack.c.b16 %v2951, %v2950
        %v2976 = vpack.c.b16 %v2953, %v2952
        %v2977 = vpack.c.b16 %v2955, %v2954
        %v2978 = vpack.c.b16 %v2957, %v2956
        %v2979 = vpack.c.b16 %v2959, %v2958
        %v2980 = vpack.c.b16 %v2961, %v2960
        %v2981 = vpack.c.b16 %v2963, %v2962
        %v2982 = vpack.c.b16 %v2965, %v2964
        %v2983 = vpack.c.b16 %v2967, %v2966
        %v2985 = vsel %vm710, %v2968, 0
        %v2988 = vsel %vm710, %v2969, 0
        %v2991 = vsel %vm710, %v2970, 0
        %v2994 = vsel %vm710, %v2971, 0
        %v2997 = vsel %vm710, %v2972, 0
        %v3000 = vsel %vm710, %v2973, 0
        %v3003 = vsel %vm710, %v2974, 0
        %v3006 = vsel %vm710, %v2975, 0
        %v3009 = vsel %vm710, %v2976, 0
        %v3012 = vsel %vm710, %v2977, 0
        %v3015 = vsel %vm710, %v2978, 0
        %v3018 = vsel %vm710, %v2979, 0
        %v3021 = vsel %vm710, %v2980, 0
        %v3024 = vsel %vm710, %v2981, 0
        %v3027 = vsel %vm710, %v2982, 0
        %v3030 = vsel %vm710, %v2983, 0
        %v3033 = vsel %vm759, %v2935, 0
        %3035 = vmatprep.subr.bf16.mxu0 0
        %3036 = vmatpush1.bf16.msra.mxu0 %v3033
        %3037 = vmatprep.subr.bf16.mxu0 0
        %3038 = vmatpush1.bf16.msra.mxu0 0
        %3039 = vmatprep.subr.bf16.mxu0 0
        %3040 = vmatpush1.bf16.msra.mxu0 0
        %3041 = vmatprep.subr.bf16.mxu0 0
        %3042 = vmatpush1.bf16.msra.mxu0 0
        %3043 = vmatprep.subr.bf16.mxu0 0
        %3044 = vmatpush1.bf16.msra.mxu0 0
        %3045 = vmatprep.subr.bf16.mxu0 0
        %3046 = vmatpush1.bf16.msra.mxu0 0
        %3047 = vmatprep.subr.bf16.mxu0 0
        %3048 = vmatpush1.bf16.msra.mxu0 0
        %3049 = vmatprep.subr.bf16.mxu0 0
        %3050 = vmatpush1.bf16.msra.mxu0 0
        %3051 = vmatprep.subr.bf16.mxu0 0
        %3052 = vmatpush1.bf16.msra.mxu0 0
        %3053 = vmatprep.subr.bf16.mxu0 0
        %3054 = vmatpush1.bf16.msra.mxu0 0
        %3055 = vmatprep.subr.bf16.mxu0 0
        %3056 = vmatpush1.bf16.msra.mxu0 0
        %3057 = vmatprep.subr.bf16.mxu0 0
        %3058 = vmatpush1.bf16.msra.mxu0 0
        %3059 = vmatprep.subr.bf16.mxu0 0
        %3060 = vmatpush1.bf16.msra.mxu0 0
        %3061 = vmatprep.subr.bf16.mxu0 0
        %3062 = vmatpush1.bf16.msra.mxu0 0
        %3063 = vmatprep.subr.bf16.mxu0 0
        %3064 = vmatpush1.bf16.msra.mxu0 0
        %3065 = vmatprep.subr.bf16.mxu0 0
        %3066 = vmatpush1.bf16.msra.mxu0 0
        %3067 = vmatprep.mubr.bf16.mxu0 0
        %3068 = vmatmul.mubr.bf16.gmra.mrb[0].mxu0 %v2985
        %v3069 = vpop.f32.mrb[0].mxu0
        %v3070 = vadd.f32 0.0, %v3069
        %v3071 = vpop.f32.mrb[0].mxu0
        %v3072 = vpop.f32.mrb[0].mxu0
        %v3073 = vadd.f32 0.0, %v3072
        %v3074 = vpop.f32.mrb[0].mxu0
        %3075 = vmatprep.mubr.bf16.mxu0 0
        %3076 = vmatmul.mubr.bf16.gmra.mrb[0].mxu0 %v2988
        %v3077 = vpop.f32.mrb[0].mxu0
        %v3078 = vadd.f32 0.0, %v3077
        %v3079 = vpop.f32.mrb[0].mxu0
        %v3080 = vpop.f32.mrb[0].mxu0
        %v3081 = vadd.f32 0.0, %v3080
        %v3082 = vpop.f32.mrb[0].mxu0
        %3083 = vmatprep.mubr.bf16.mxu0 0
        %3084 = vmatmul.mubr.bf16.gmra.mrb[0].mxu0 %v2991
        %v3085 = vpop.f32.mrb[0].mxu0
        %v3086 = vadd.f32 0.0, %v3085
        %v3087 = vpop.f32.mrb[0].mxu0
        %v3088 = vpop.f32.mrb[0].mxu0
        %v3089 = vadd.f32 0.0, %v3088
        %v3090 = vpop.f32.mrb[0].mxu0
        %3091 = vmatprep.mubr.bf16.mxu0 0
        %3092 = vmatmul.mubr.bf16.gmra.mrb[0].mxu0 %v2994
        %v3093 = vpop.f32.mrb[0].mxu0
        %v3094 = vadd.f32 0.0, %v3093
        %v3095 = vpop.f32.mrb[0].mxu0
        %v3096 = vpop.f32.mrb[0].mxu0
        %v3097 = vadd.f32 0.0, %v3096
        %v3098 = vpop.f32.mrb[0].mxu0
        %3099 = vmatprep.mubr.bf16.mxu0 0
        %3100 = vmatmul.mubr.bf16.gmra.mrb[0].mxu0 %v2997
        %v3101 = vpop.f32.mrb[0].mxu0
        %v3102 = vadd.f32 0.0, %v3101
        %v3103 = vpop.f32.mrb[0].mxu0
        %v3104 = vpop.f32.mrb[0].mxu0
        %v3105 = vadd.f32 0.0, %v3104
        %v3106 = vpop.f32.mrb[0].mxu0
        %3107 = vmatprep.mubr.bf16.mxu0 0
        %3108 = vmatmul.mubr.bf16.gmra.mrb[0].mxu0 %v3000
        %v3109 = vpop.f32.mrb[0].mxu0
        %v3110 = vadd.f32 0.0, %v3109
        %v3111 = vpop.f32.mrb[0].mxu0
        %v3112 = vpop.f32.mrb[0].mxu0
        %v3113 = vadd.f32 0.0, %v3112
        %v3114 = vpop.f32.mrb[0].mxu0
        %3115 = vmatprep.mubr.bf16.mxu0 0
        %3116 = vmatmul.mubr.bf16.gmra.mrb[0].mxu0 %v3003
        %v3117 = vpop.f32.mrb[0].mxu0
        %v3118 = vadd.f32 0.0, %v3117
        %v3119 = vpop.f32.mrb[0].mxu0
        %v3120 = vpop.f32.mrb[0].mxu0
        %v3121 = vadd.f32 0.0, %v3120
        %v3122 = vpop.f32.mrb[0].mxu0
        %3123 = vmatprep.mubr.bf16.mxu0 0
        %3124 = vmatmul.mubr.bf16.gmra.mrb[0].mxu0 %v3006
        %v3125 = vpop.f32.mrb[0].mxu0
        %v3126 = vadd.f32 0.0, %v3125
        %v3127 = vpop.f32.mrb[0].mxu0
        %v3128 = vpop.f32.mrb[0].mxu0
        %v3129 = vadd.f32 0.0, %v3128
        %v3130 = vpop.f32.mrb[0].mxu0
        %3131 = vmatprep.mubr.bf16.mxu0 0
        %3132 = vmatmul.mubr.bf16.gmra.mrb[0].mxu0 %v3009
        %v3133 = vpop.f32.mrb[0].mxu0
        %v3134 = vadd.f32 0.0, %v3133
        %v3135 = vpop.f32.mrb[0].mxu0
        %v3136 = vpop.f32.mrb[0].mxu0
        %v3137 = vadd.f32 0.0, %v3136
        %v3138 = vpop.f32.mrb[0].mxu0
        %3139 = vmatprep.mubr.bf16.mxu0 0
        %3140 = vmatmul.mubr.bf16.gmra.mrb[0].mxu0 %v3012
        %v3141 = vpop.f32.mrb[0].mxu0
        %v3142 = vadd.f32 0.0, %v3141
        %v3143 = vpop.f32.mrb[0].mxu0
        %v3144 = vpop.f32.mrb[0].mxu0
        %v3145 = vadd.f32 0.0, %v3144
        %v3146 = vpop.f32.mrb[0].mxu0
        %3147 = vmatprep.mubr.bf16.mxu0 0
        %3148 = vmatmul.mubr.bf16.gmra.mrb[0].mxu0 %v3015
        %v3149 = vpop.f32.mrb[0].mxu0
        %v3150 = vadd.f32 0.0, %v3149
        %v3151 = vpop.f32.mrb[0].mxu0
        %v3152 = vpop.f32.mrb[0].mxu0
        %v3153 = vadd.f32 0.0, %v3152
        %v3154 = vpop.f32.mrb[0].mxu0
        %3155 = vmatprep.mubr.bf16.mxu0 0
        %3156 = vmatmul.mubr.bf16.gmra.mrb[0].mxu0 %v3018
        %v3157 = vpop.f32.mrb[0].mxu0
        %v3158 = vadd.f32 0.0, %v3157
        %v3159 = vpop.f32.mrb[0].mxu0
        %v3160 = vpop.f32.mrb[0].mxu0
        %v3161 = vadd.f32 0.0, %v3160
        %v3162 = vpop.f32.mrb[0].mxu0
        %3163 = vmatprep.mubr.bf16.mxu0 0
        %3164 = vmatmul.mubr.bf16.gmra.mrb[0].mxu0 %v3021
        %v3165 = vpop.f32.mrb[0].mxu0
        %v3166 = vadd.f32 0.0, %v3165
        %v3167 = vpop.f32.mrb[0].mxu0
        %v3168 = vpop.f32.mrb[0].mxu0
        %v3169 = vadd.f32 0.0, %v3168
        %v3170 = vpop.f32.mrb[0].mxu0
        %3171 = vmatprep.mubr.bf16.mxu0 0
        %3172 = vmatmul.mubr.bf16.gmra.mrb[0].mxu0 %v3024
        %v3173 = vpop.f32.mrb[0].mxu0
        %v3174 = vadd.f32 0.0, %v3173
        %v3175 = vpop.f32.mrb[0].mxu0
        %v3176 = vpop.f32.mrb[0].mxu0
        %v3177 = vadd.f32 0.0, %v3176
        %v3178 = vpop.f32.mrb[0].mxu0
        %3179 = vmatprep.mubr.bf16.mxu0 0
        %3180 = vmatmul.mubr.bf16.gmra.mrb[0].mxu0 %v3027
        %v3181 = vpop.f32.mrb[0].mxu0
        %v3182 = vadd.f32 0.0, %v3181
        %v3183 = vpop.f32.mrb[0].mxu0
        %v3184 = vpop.f32.mrb[0].mxu0
        %v3185 = vadd.f32 0.0, %v3184
        %v3186 = vpop.f32.mrb[0].mxu0
        %3187 = vmatprep.mubr.bf16.mxu0 0
        %3188 = vmatmul.mubr.bf16.gmra.mrb[0].mxu0 %v3030
        %v3189 = vpop.f32.mrb[0].mxu0
        %v3190 = vadd.f32 0.0, %v3189
        %v3191 = vpop.f32.mrb[0].mxu0
        %v3192 = vpop.f32.mrb[0].mxu0
        %v3193 = vadd.f32 0.0, %v3192
        %v3194 = vpop.f32.mrb[0].mxu0
        %3195 = vdwg.mxu0
        %v3196 = vadd.f32 %v2726, %v3070
        %v3197 = vadd.f32 %v2727, %v3073
        %v3198 = vadd.f32 %v2728, %v3078
        %v3199 = vadd.f32 %v2729, %v3081
        %v3200 = vadd.f32 %v2730, %v3086
        %v3201 = vadd.f32 %v2731, %v3089
        %v3202 = vadd.f32 %v2732, %v3094
        %v3203 = vadd.f32 %v2733, %v3097
        %v3204 = vadd.f32 %v2734, %v3102
        %v3205 = vadd.f32 %v2735, %v3105
        %v3206 = vadd.f32 %v2736, %v3110
        %v3207 = vadd.f32 %v2737, %v3113
        %v3208 = vadd.f32 %v2738, %v3118
        %v3209 = vadd.f32 %v2739, %v3121
        %v3210 = vadd.f32 %v2740, %v3126
        %v3211 = vadd.f32 %v2741, %v3129
        %v3212 = vadd.f32 %v2742, %v3134
        %v3213 = vadd.f32 %v2743, %v3137
        %v3214 = vadd.f32 %v2744, %v3142
        %v3215 = vadd.f32 %v2745, %v3145
        %v3216 = vadd.f32 %v2746, %v3150
        %v3217 = vadd.f32 %v2747, %v3153
        %v3218 = vadd.f32 %v2748, %v3158
        %v3219 = vadd.f32 %v2749, %v3161
        %v3220 = vadd.f32 %v2750, %v3166
        %v3221 = vadd.f32 %v2751, %v3169
        %v3222 = vadd.f32 %v2752, %v3174
        %v3223 = vadd.f32 %v2753, %v3177
        %v3224 = vadd.f32 %v2754, %v3182
        %v3225 = vadd.f32 %v2755, %v3185
        %v3226 = vadd.f32 %v2756, %v3190
        %v3227 = vadd.f32 %v2757, %v3193
        %s3228 = scalar_lea.vmem %s222, 24
        %v3229 = vld [vmem:[%s3228] sm:$0xf]
        %v3230 = vld [vmem:[%s3228 + $0x4] sm:$0xf]
        %v3231 = vld [vmem:[%s3228 + $0xc] sm:$0xf]
        %v3232 = vld [vmem:[%s3228 + $0x10] sm:$0xf]
        %v3233 = vld [vmem:[%s3228 + $0x18] sm:$0xf]
        %v3234 = vld [vmem:[%s3228 + $0x1c] sm:$0xf]
        %v3235 = vld [vmem:[%s3228 + $0x24] sm:$0xf]
        %v3236 = vld [vmem:[%s3228 + $0x28] sm:$0xf]
        %v3237 = vld [vmem:[%s3228 + $0x30] sm:$0xf]
        %v3238 = vld [vmem:[%s3228 + $0x34] sm:$0xf]
        %v3239 = vld [vmem:[%s3228 + $0x3c] sm:$0xf]
        %v3240 = vld [vmem:[%s3228 + $0x40] sm:$0xf]
        %v3241 = vld [vmem:[%s3228 + $0x48] sm:$0xf]
        %v3242 = vld [vmem:[%s3228 + $0x4c] sm:$0xf]
        %v3243 = vld [vmem:[%s3228 + $0x54] sm:$0xf]
        %v3244 = vld [vmem:[%s3228 + $0x58] sm:$0xf]
        %v3245 = vld [vmem:[%s3228 + $0x60] sm:$0xf]
        %v3246 = vld [vmem:[%s3228 + $0x64] sm:$0xf]
        %v3247 = vld [vmem:[%s3228 + $0x6c] sm:$0xf]
        %v3248 = vld [vmem:[%s3228 + $0x70] sm:$0xf]
        %v3249 = vld [vmem:[%s3228 + $0x78] sm:$0xf]
        %v3250 = vld [vmem:[%s3228 + $0x7c] sm:$0xf]
        %v3251 = vld [vmem:[%s3228 + $0x84] sm:$0xf]
        %v3252 = vld [vmem:[%s3228 + $0x88] sm:$0xf]
        %v3253 = vld [vmem:[%s3228 + $0x90] sm:$0xf]
        %v3254 = vld [vmem:[%s3228 + $0x94] sm:$0xf]
        %v3255 = vld [vmem:[%s3228 + $0x9c] sm:$0xf]
        %v3256 = vld [vmem:[%s3228 + $0xa0] sm:$0xf]
        %v3257 = vld [vmem:[%s3228 + $0xa8] sm:$0xf]
        %v3258 = vld [vmem:[%s3228 + $0xac] sm:$0xf]
        %v3259 = vld [vmem:[%s3228 + $0xb4] sm:$0xf]
        %v3260 = vld [vmem:[%s3228 + $0xb8] sm:$0xf]
        %s3261 = scalar_lea.vmem %s1, 12
        %v3262 = vld [vmem:[%s3261] sm:$0x3]
        %v3295 = vunpack.c.l.b16 %v3229
        %v3296 = vunpack.c.l.b16 %v3230
        %v3297 = vunpack.c.l.b16 %v3231
        %v3298 = vunpack.c.l.b16 %v3232
        %v3299 = vunpack.c.l.b16 %v3233
        %v3300 = vunpack.c.l.b16 %v3234
        %v3301 = vunpack.c.l.b16 %v3235
        %v3302 = vunpack.c.l.b16 %v3236
        %v3303 = vunpack.c.l.b16 %v3237
        %v3304 = vunpack.c.l.b16 %v3238
        %v3305 = vunpack.c.l.b16 %v3239
        %v3306 = vunpack.c.l.b16 %v3240
        %v3307 = vunpack.c.l.b16 %v3241
        %v3308 = vunpack.c.l.b16 %v3242
        %v3309 = vunpack.c.l.b16 %v3243
        %v3310 = vunpack.c.l.b16 %v3244
        %v3311 = vunpack.c.l.b16 %v3245
        %v3312 = vunpack.c.l.b16 %v3246
        %v3313 = vunpack.c.l.b16 %v3247
        %v3314 = vunpack.c.l.b16 %v3248
        %v3315 = vunpack.c.l.b16 %v3249
        %v3316 = vunpack.c.l.b16 %v3250
        %v3317 = vunpack.c.l.b16 %v3251
        %v3318 = vunpack.c.l.b16 %v3252
        %v3319 = vunpack.c.l.b16 %v3253
        %v3320 = vunpack.c.l.b16 %v3254
        %v3321 = vunpack.c.l.b16 %v3255
        %v3322 = vunpack.c.l.b16 %v3256
        %v3323 = vunpack.c.l.b16 %v3257
        %v3324 = vunpack.c.l.b16 %v3258
        %v3325 = vunpack.c.l.b16 %v3259
        %v3326 = vunpack.c.l.b16 %v3260
        %v3327 = vpack.c.b16 %v3296, %v3295
        %v3328 = vpack.c.b16 %v3298, %v3297
        %v3329 = vpack.c.b16 %v3300, %v3299
        %v3330 = vpack.c.b16 %v3302, %v3301
        %v3331 = vpack.c.b16 %v3304, %v3303
        %v3332 = vpack.c.b16 %v3306, %v3305
        %v3333 = vpack.c.b16 %v3308, %v3307
        %v3334 = vpack.c.b16 %v3310, %v3309
        %v3335 = vpack.c.b16 %v3312, %v3311
        %v3336 = vpack.c.b16 %v3314, %v3313
        %v3337 = vpack.c.b16 %v3316, %v3315
        %v3338 = vpack.c.b16 %v3318, %v3317
        %v3339 = vpack.c.b16 %v3320, %v3319
        %v3340 = vpack.c.b16 %v3322, %v3321
        %v3341 = vpack.c.b16 %v3324, %v3323
        %v3342 = vpack.c.b16 %v3326, %v3325
        %v3344 = vsel %vm710, %v3327, 0
        %v3347 = vsel %vm710, %v3328, 0
        %v3350 = vsel %vm710, %v3329, 0
        %v3353 = vsel %vm710, %v3330, 0
        %v3356 = vsel %vm710, %v3331, 0
        %v3359 = vsel %vm710, %v3332, 0
        %v3362 = vsel %vm710, %v3333, 0
        %v3365 = vsel %vm710, %v3334, 0
        %v3368 = vsel %vm710, %v3335, 0
        %v3371 = vsel %vm710, %v3336, 0
        %v3374 = vsel %vm710, %v3337, 0
        %v3377 = vsel %vm710, %v3338, 0
        %v3380 = vsel %vm710, %v3339, 0
        %v3383 = vsel %vm710, %v3340, 0
        %v3386 = vsel %vm710, %v3341, 0
        %v3389 = vsel %vm710, %v3342, 0
        %v3392 = vsel %vm759, %v3262, 0
        %3394 = vmatprep.subr.bf16.mxu0 0
        %3395 = vmatpush1.bf16.msra.mxu0 %v3392
        %3396 = vmatprep.subr.bf16.mxu0 0
        %3397 = vmatpush1.bf16.msra.mxu0 0
        %3398 = vmatprep.subr.bf16.mxu0 0
        %3399 = vmatpush1.bf16.msra.mxu0 0
        %3400 = vmatprep.subr.bf16.mxu0 0
        %3401 = vmatpush1.bf16.msra.mxu0 0
        %3402 = vmatprep.subr.bf16.mxu0 0
        %3403 = vmatpush1.bf16.msra.mxu0 0
        %3404 = vmatprep.subr.bf16.mxu0 0
        %3405 = vmatpush1.bf16.msra.mxu0 0
        %3406 = vmatprep.subr.bf16.mxu0 0
        %3407 = vmatpush1.bf16.msra.mxu0 0
        %3408 = vmatprep.subr.bf16.mxu0 0
        %3409 = vmatpush1.bf16.msra.mxu0 0
        %3410 = vmatprep.subr.bf16.mxu0 0
        %3411 = vmatpush1.bf16.msra.mxu0 0
        %3412 = vmatprep.subr.bf16.mxu0 0
        %3413 = vmatpush1.bf16.msra.mxu0 0
        %3414 = vmatprep.subr.bf16.mxu0 0
        %3415 = vmatpush1.bf16.msra.mxu0 0
        %3416 = vmatprep.subr.bf16.mxu0 0
        %3417 = vmatpush1.bf16.msra.mxu0 0
        %3418 = vmatprep.subr.bf16.mxu0 0
        %3419 = vmatpush1.bf16.msra.mxu0 0
        %3420 = vmatprep.subr.bf16.mxu0 0
        %3421 = vmatpush1.bf16.msra.mxu0 0
        %3422 = vmatprep.subr.bf16.mxu0 0
        %3423 = vmatpush1.bf16.msra.mxu0 0
        %3424 = vmatprep.subr.bf16.mxu0 0
        %3425 = vmatpush1.bf16.msra.mxu0 0
        %3426 = vmatprep.mubr.bf16.mxu0 0
        %3427 = vmatmul.mubr.bf16.gmra.mrb[0].mxu0 %v3344
        %v3428 = vpop.f32.mrb[0].mxu0
        %v3429 = vadd.f32 0.0, %v3428
        %v3430 = vpop.f32.mrb[0].mxu0
        %v3431 = vpop.f32.mrb[0].mxu0
        %v3432 = vadd.f32 0.0, %v3431
        %v3433 = vpop.f32.mrb[0].mxu0
        %3434 = vmatprep.mubr.bf16.mxu0 0
        %3435 = vmatmul.mubr.bf16.gmra.mrb[0].mxu0 %v3347
        %v3436 = vpop.f32.mrb[0].mxu0
        %v3437 = vadd.f32 0.0, %v3436
        %v3438 = vpop.f32.mrb[0].mxu0
        %v3439 = vpop.f32.mrb[0].mxu0
        %v3440 = vadd.f32 0.0, %v3439
        %v3441 = vpop.f32.mrb[0].mxu0
        %3442 = vmatprep.mubr.bf16.mxu0 0
        %3443 = vmatmul.mubr.bf16.gmra.mrb[0].mxu0 %v3350
        %v3444 = vpop.f32.mrb[0].mxu0
        %v3445 = vadd.f32 0.0, %v3444
        %v3446 = vpop.f32.mrb[0].mxu0
        %v3447 = vpop.f32.mrb[0].mxu0
        %v3448 = vadd.f32 0.0, %v3447
        %v3449 = vpop.f32.mrb[0].mxu0
        %3450 = vmatprep.mubr.bf16.mxu0 0
        %3451 = vmatmul.mubr.bf16.gmra.mrb[0].mxu0 %v3353
        %v3452 = vpop.f32.mrb[0].mxu0
        %v3453 = vadd.f32 0.0, %v3452
        %v3454 = vpop.f32.mrb[0].mxu0
        %v3455 = vpop.f32.mrb[0].mxu0
        %v3456 = vadd.f32 0.0, %v3455
        %v3457 = vpop.f32.mrb[0].mxu0
        %3458 = vmatprep.mubr.bf16.mxu0 0
        %3459 = vmatmul.mubr.bf16.gmra.mrb[0].mxu0 %v3356
        %v3460 = vpop.f32.mrb[0].mxu0
        %v3461 = vadd.f32 0.0, %v3460
        %v3462 = vpop.f32.mrb[0].mxu0
        %v3463 = vpop.f32.mrb[0].mxu0
        %v3464 = vadd.f32 0.0, %v3463
        %v3465 = vpop.f32.mrb[0].mxu0
        %3466 = vmatprep.mubr.bf16.mxu0 0
        %3467 = vmatmul.mubr.bf16.gmra.mrb[0].mxu0 %v3359
        %v3468 = vpop.f32.mrb[0].mxu0
        %v3469 = vadd.f32 0.0, %v3468
        %v3470 = vpop.f32.mrb[0].mxu0
        %v3471 = vpop.f32.mrb[0].mxu0
        %v3472 = vadd.f32 0.0, %v3471
        %v3473 = vpop.f32.mrb[0].mxu0
        %3474 = vmatprep.mubr.bf16.mxu0 0
        %3475 = vmatmul.mubr.bf16.gmra.mrb[0].mxu0 %v3362
        %v3476 = vpop.f32.mrb[0].mxu0
        %v3477 = vadd.f32 0.0, %v3476
        %v3478 = vpop.f32.mrb[0].mxu0
        %v3479 = vpop.f32.mrb[0].mxu0
        %v3480 = vadd.f32 0.0, %v3479
        %v3481 = vpop.f32.mrb[0].mxu0
        %3482 = vmatprep.mubr.bf16.mxu0 0
        %3483 = vmatmul.mubr.bf16.gmra.mrb[0].mxu0 %v3365
        %v3484 = vpop.f32.mrb[0].mxu0
        %v3485 = vadd.f32 0.0, %v3484
        %v3486 = vpop.f32.mrb[0].mxu0
        %v3487 = vpop.f32.mrb[0].mxu0
        %v3488 = vadd.f32 0.0, %v3487
        %v3489 = vpop.f32.mrb[0].mxu0
        %3490 = vmatprep.mubr.bf16.mxu0 0
        %3491 = vmatmul.mubr.bf16.gmra.mrb[0].mxu0 %v3368
        %v3492 = vpop.f32.mrb[0].mxu0
        %v3493 = vadd.f32 0.0, %v3492
        %v3494 = vpop.f32.mrb[0].mxu0
        %v3495 = vpop.f32.mrb[0].mxu0
        %v3496 = vadd.f32 0.0, %v3495
        %v3497 = vpop.f32.mrb[0].mxu0
        %3498 = vmatprep.mubr.bf16.mxu0 0
        %3499 = vmatmul.mubr.bf16.gmra.mrb[0].mxu0 %v3371
        %v3500 = vpop.f32.mrb[0].mxu0
        %v3501 = vadd.f32 0.0, %v3500
        %v3502 = vpop.f32.mrb[0].mxu0
        %v3503 = vpop.f32.mrb[0].mxu0
        %v3504 = vadd.f32 0.0, %v3503
        %v3505 = vpop.f32.mrb[0].mxu0
        %3506 = vmatprep.mubr.bf16.mxu0 0
        %3507 = vmatmul.mubr.bf16.gmra.mrb[0].mxu0 %v3374
        %v3508 = vpop.f32.mrb[0].mxu0
        %v3509 = vadd.f32 0.0, %v3508
        %v3510 = vpop.f32.mrb[0].mxu0
        %v3511 = vpop.f32.mrb[0].mxu0
        %v3512 = vadd.f32 0.0, %v3511
        %v3513 = vpop.f32.mrb[0].mxu0
        %3514 = vmatprep.mubr.bf16.mxu0 0
        %3515 = vmatmul.mubr.bf16.gmra.mrb[0].mxu0 %v3377
        %v3516 = vpop.f32.mrb[0].mxu0
        %v3517 = vadd.f32 0.0, %v3516
        %v3518 = vpop.f32.mrb[0].mxu0
        %v3519 = vpop.f32.mrb[0].mxu0
        %v3520 = vadd.f32 0.0, %v3519
        %v3521 = vpop.f32.mrb[0].mxu0
        %3522 = vmatprep.mubr.bf16.mxu0 0
        %3523 = vmatmul.mubr.bf16.gmra.mrb[0].mxu0 %v3380
        %v3524 = vpop.f32.mrb[0].mxu0
        %v3525 = vadd.f32 0.0, %v3524
        %v3526 = vpop.f32.mrb[0].mxu0
        %v3527 = vpop.f32.mrb[0].mxu0
        %v3528 = vadd.f32 0.0, %v3527
        %v3529 = vpop.f32.mrb[0].mxu0
        %3530 = vmatprep.mubr.bf16.mxu0 0
        %3531 = vmatmul.mubr.bf16.gmra.mrb[0].mxu0 %v3383
        %v3532 = vpop.f32.mrb[0].mxu0
        %v3533 = vadd.f32 0.0, %v3532
        %v3534 = vpop.f32.mrb[0].mxu0
        %v3535 = vpop.f32.mrb[0].mxu0
        %v3536 = vadd.f32 0.0, %v3535
        %v3537 = vpop.f32.mrb[0].mxu0
        %3538 = vmatprep.mubr.bf16.mxu0 0
        %3539 = vmatmul.mubr.bf16.gmra.mrb[0].mxu0 %v3386
        %v3540 = vpop.f32.mrb[0].mxu0
        %v3541 = vadd.f32 0.0, %v3540
        %v3542 = vpop.f32.mrb[0].mxu0
        %v3543 = vpop.f32.mrb[0].mxu0
        %v3544 = vadd.f32 0.0, %v3543
        %v3545 = vpop.f32.mrb[0].mxu0
        %3546 = vmatprep.mubr.bf16.mxu0 0
        %3547 = vmatmul.mubr.bf16.gmra.mrb[0].mxu0 %v3389
        %v3548 = vpop.f32.mrb[0].mxu0
        %v3549 = vadd.f32 0.0, %v3548
        %v3550 = vpop.f32.mrb[0].mxu0
        %v3551 = vpop.f32.mrb[0].mxu0
        %v3552 = vadd.f32 0.0, %v3551
        %v3553 = vpop.f32.mrb[0].mxu0
        %3554 = vdwg.mxu0
        %v3555 = vadd.f32 %v3196, %v3429
        %v3556 = vadd.f32 %v3197, %v3432
        %v3557 = vadd.f32 %v3198, %v3437
        %v3558 = vadd.f32 %v3199, %v3440
        %v3559 = vadd.f32 %v3200, %v3445
        %v3560 = vadd.f32 %v3201, %v3448
        %v3561 = vadd.f32 %v3202, %v3453
        %v3562 = vadd.f32 %v3203, %v3456
        %v3563 = vadd.f32 %v3204, %v3461
        %v3564 = vadd.f32 %v3205, %v3464
        %v3565 = vadd.f32 %v3206, %v3469
        %v3566 = vadd.f32 %v3207, %v3472
        %v3567 = vadd.f32 %v3208, %v3477
        %v3568 = vadd.f32 %v3209, %v3480
        %v3569 = vadd.f32 %v3210, %v3485
        %v3570 = vadd.f32 %v3211, %v3488
        %v3571 = vadd.f32 %v3212, %v3493
        %v3572 = vadd.f32 %v3213, %v3496
        %v3573 = vadd.f32 %v3214, %v3501
        %v3574 = vadd.f32 %v3215, %v3504
        %v3575 = vadd.f32 %v3216, %v3509
        %v3576 = vadd.f32 %v3217, %v3512
        %v3577 = vadd.f32 %v3218, %v3517
        %v3578 = vadd.f32 %v3219, %v3520
        %v3579 = vadd.f32 %v3220, %v3525
        %v3580 = vadd.f32 %v3221, %v3528
        %v3581 = vadd.f32 %v3222, %v3533
        %v3582 = vadd.f32 %v3223, %v3536
        %v3583 = vadd.f32 %v3224, %v3541
        %v3584 = vadd.f32 %v3225, %v3544
        %v3585 = vadd.f32 %v3226, %v3549
        %v3586 = vadd.f32 %v3227, %v3552
        %v3587 = vld [vmem:[%s3228] sm:$0xf]
        %v3588 = vld [vmem:[%s3228 + $0x4] sm:$0xf]
        %v3589 = vld [vmem:[%s3228 + $0x8] sm:$0x1]
        %v3590 = vld [vmem:[%s3228 + $0xc] sm:$0xf]
        %v3591 = vld [vmem:[%s3228 + $0x10] sm:$0xf]
        %v3592 = vld [vmem:[%s3228 + $0x14] sm:$0x1]
        %v3593 = vld [vmem:[%s3228 + $0x18] sm:$0xf]
        %v3594 = vld [vmem:[%s3228 + $0x1c] sm:$0xf]
        %v3595 = vld [vmem:[%s3228 + $0x20] sm:$0x1]
        %v3596 = vld [vmem:[%s3228 + $0x24] sm:$0xf]
        %v3597 = vld [vmem:[%s3228 + $0x28] sm:$0xf]
        %v3598 = vld [vmem:[%s3228 + $0x2c] sm:$0x1]
        %v3599 = vld [vmem:[%s3228 + $0x30] sm:$0xf]
        %v3600 = vld [vmem:[%s3228 + $0x34] sm:$0xf]
        %v3601 = vld [vmem:[%s3228 + $0x38] sm:$0x1]
        %v3602 = vld [vmem:[%s3228 + $0x3c] sm:$0xf]
        %v3603 = vld [vmem:[%s3228 + $0x40] sm:$0xf]
        %v3604 = vld [vmem:[%s3228 + $0x44] sm:$0x1]
        %v3605 = vld [vmem:[%s3228 + $0x48] sm:$0xf]
        %v3606 = vld [vmem:[%s3228 + $0x4c] sm:$0xf]
        %v3607 = vld [vmem:[%s3228 + $0x50] sm:$0x1]
        %v3608 = vld [vmem:[%s3228 + $0x54] sm:$0xf]
        %v3609 = vld [vmem:[%s3228 + $0x58] sm:$0xf]
        %v3610 = vld [vmem:[%s3228 + $0x5c] sm:$0x1]
        %v3611 = vld [vmem:[%s3228 + $0x60] sm:$0xf]
        %v3612 = vld [vmem:[%s3228 + $0x64] sm:$0xf]
        %v3613 = vld [vmem:[%s3228 + $0x68] sm:$0x1]
        %v3614 = vld [vmem:[%s3228 + $0x6c] sm:$0xf]
        %v3615 = vld [vmem:[%s3228 + $0x70] sm:$0xf]
        %v3616 = vld [vmem:[%s3228 + $0x74] sm:$0x1]
        %v3617 = vld [vmem:[%s3228 + $0x78] sm:$0xf]
        %v3618 = vld [vmem:[%s3228 + $0x7c] sm:$0xf]
        %v3619 = vld [vmem:[%s3228 + $0x80] sm:$0x1]
        %v3620 = vld [vmem:[%s3228 + $0x84] sm:$0xf]
        %v3621 = vld [vmem:[%s3228 + $0x88] sm:$0xf]
        %v3622 = vld [vmem:[%s3228 + $0x8c] sm:$0x1]
        %v3623 = vld [vmem:[%s3228 + $0x90] sm:$0xf]
        %v3624 = vld [vmem:[%s3228 + $0x94] sm:$0xf]
        %v3625 = vld [vmem:[%s3228 + $0x98] sm:$0x1]
        %v3626 = vld [vmem:[%s3228 + $0x9c] sm:$0xf]
        %v3627 = vld [vmem:[%s3228 + $0xa0] sm:$0xf]
        %v3628 = vld [vmem:[%s3228 + $0xa4] sm:$0x1]
        %v3629 = vld [vmem:[%s3228 + $0xa8] sm:$0xf]
        %v3630 = vld [vmem:[%s3228 + $0xac] sm:$0xf]
        %v3631 = vld [vmem:[%s3228 + $0xb0] sm:$0x1]
        %v3632 = vld [vmem:[%s3228 + $0xb4] sm:$0xf]
        %v3633 = vld [vmem:[%s3228 + $0xb8] sm:$0xf]
        %v3634 = vld [vmem:[%s3228 + $0xbc] sm:$0x1]
        %v3636 = vshrl.u32 %v3587, 16
        %v3638 = vrot.slane %v3636, 4
        %v3639 = vshll.u32 %v3587, 16
        %v3641 = vrot.slane %v3639, 5
        %v3642 = vor.u32 %v3638, %v3641
        %v3643 = vrot.slane %v3642, 4
        %v3645 = vshll.u32 %v3588, 16
        %v3647 = vrot.slane %v3645, 5
        %v3648 = vsel %vm275, %v3643, %v3647
        %v3649 = vshrl.u32 %v3588, 16
        %v3651 = vrot.slane %v3649, 4
        %v3652 = vor.u32 %v3651, %v3647
        %v3653 = vrot.slane %v3652, 4
        %v3655 = vshll.u32 %v3589, 16
        %v3657 = vrot.slane %v3655, 5
        %v3658 = vsel %vm275, %v3653, %v3657
        %v3660 = vshrl.u32 %v3590, 16
        %v3662 = vrot.slane %v3660, 4
        %v3663 = vshll.u32 %v3590, 16
        %v3665 = vrot.slane %v3663, 5
        %v3666 = vor.u32 %v3662, %v3665
        %v3667 = vrot.slane %v3666, 4
        %v3669 = vshll.u32 %v3591, 16
        %v3671 = vrot.slane %v3669, 5
        %v3672 = vsel %vm275, %v3667, %v3671
        %v3673 = vshrl.u32 %v3591, 16
        %v3675 = vrot.slane %v3673, 4
        %v3676 = vor.u32 %v3675, %v3671
        %v3677 = vrot.slane %v3676, 4
        %v3679 = vshll.u32 %v3592, 16
        %v3681 = vrot.slane %v3679, 5
        %v3682 = vsel %vm275, %v3677, %v3681
        %v3684 = vshrl.u32 %v3593, 16
        %v3686 = vrot.slane %v3684, 4
        %v3687 = vshll.u32 %v3593, 16
        %v3689 = vrot.slane %v3687, 5
        %v3690 = vor.u32 %v3686, %v3689
        %v3691 = vrot.slane %v3690, 4
        %v3693 = vshll.u32 %v3594, 16
        %v3695 = vrot.slane %v3693, 5
        %v3696 = vsel %vm275, %v3691, %v3695
        %v3697 = vshrl.u32 %v3594, 16
        %v3699 = vrot.slane %v3697, 4
        %v3700 = vor.u32 %v3699, %v3695
        %v3701 = vrot.slane %v3700, 4
        %v3703 = vshll.u32 %v3595, 16
        %v3705 = vrot.slane %v3703, 5
        %v3706 = vsel %vm275, %v3701, %v3705
        %v3708 = vshrl.u32 %v3596, 16
        %v3710 = vrot.slane %v3708, 4
        %v3711 = vshll.u32 %v3596, 16
        %v3713 = vrot.slane %v3711, 5
        %v3714 = vor.u32 %v3710, %v3713
        %v3715 = vrot.slane %v3714, 4
        %v3717 = vshll.u32 %v3597, 16
        %v3719 = vrot.slane %v3717, 5
        %v3720 = vsel %vm275, %v3715, %v3719
        %v3721 = vshrl.u32 %v3597, 16
        %v3723 = vrot.slane %v3721, 4
        %v3724 = vor.u32 %v3723, %v3719
        %v3725 = vrot.slane %v3724, 4
        %v3727 = vshll.u32 %v3598, 16
        %v3729 = vrot.slane %v3727, 5
        %v3730 = vsel %vm275, %v3725, %v3729
        %v3732 = vshrl.u32 %v3599, 16
        %v3734 = vrot.slane %v3732, 4
        %v3735 = vshll.u32 %v3599, 16
        %v3737 = vrot.slane %v3735, 5
        %v3738 = vor.u32 %v3734, %v3737
        %v3739 = vrot.slane %v3738, 4
        %v3741 = vshll.u32 %v3600, 16
        %v3743 = vrot.slane %v3741, 5
        %v3744 = vsel %vm275, %v3739, %v3743
        %v3745 = vshrl.u32 %v3600, 16
        %v3747 = vrot.slane %v3745, 4
        %v3748 = vor.u32 %v3747, %v3743
        %v3749 = vrot.slane %v3748, 4
        %v3751 = vshll.u32 %v3601, 16
        %v3753 = vrot.slane %v3751, 5
        %v3754 = vsel %vm275, %v3749, %v3753
        %v3756 = vshrl.u32 %v3602, 16
        %v3758 = vrot.slane %v3756, 4
        %v3759 = vshll.u32 %v3602, 16
        %v3761 = vrot.slane %v3759, 5
        %v3762 = vor.u32 %v3758, %v3761
        %v3763 = vrot.slane %v3762, 4
        %v3765 = vshll.u32 %v3603, 16
        %v3767 = vrot.slane %v3765, 5
        %v3768 = vsel %vm275, %v3763, %v3767
        %v3769 = vshrl.u32 %v3603, 16
        %v3771 = vrot.slane %v3769, 4
        %v3772 = vor.u32 %v3771, %v3767
        %v3773 = vrot.slane %v3772, 4
        %v3775 = vshll.u32 %v3604, 16
        %v3777 = vrot.slane %v3775, 5
        %v3778 = vsel %vm275, %v3773, %v3777
        %v3780 = vshrl.u32 %v3605, 16
        %v3782 = vrot.slane %v3780, 4
        %v3783 = vshll.u32 %v3605, 16
        %v3785 = vrot.slane %v3783, 5
        %v3786 = vor.u32 %v3782, %v3785
        %v3787 = vrot.slane %v3786, 4
        %v3789 = vshll.u32 %v3606, 16
        %v3791 = vrot.slane %v3789, 5
        %v3792 = vsel %vm275, %v3787, %v3791
        %v3793 = vshrl.u32 %v3606, 16
        %v3795 = vrot.slane %v3793, 4
        %v3796 = vor.u32 %v3795, %v3791
        %v3797 = vrot.slane %v3796, 4
        %v3799 = vshll.u32 %v3607, 16
        %v3801 = vrot.slane %v3799, 5
        %v3802 = vsel %vm275, %v3797, %v3801
        %v3804 = vshrl.u32 %v3608, 16
        %v3806 = vrot.slane %v3804, 4
        %v3807 = vshll.u32 %v3608, 16
        %v3809 = vrot.slane %v3807, 5
        %v3810 = vor.u32 %v3806, %v3809
        %v3811 = vrot.slane %v3810, 4
        %v3813 = vshll.u32 %v3609, 16
        %v3815 = vrot.slane %v3813, 5
        %v3816 = vsel %vm275, %v3811, %v3815
        %v3817 = vshrl.u32 %v3609, 16
        %v3819 = vrot.slane %v3817, 4
        %v3820 = vor.u32 %v3819, %v3815
        %v3821 = vrot.slane %v3820, 4
        %v3823 = vshll.u32 %v3610, 16
        %v3825 = vrot.slane %v3823, 5
        %v3826 = vsel %vm275, %v3821, %v3825
        %v3828 = vshrl.u32 %v3611, 16
        %v3830 = vrot.slane %v3828, 4
        %v3831 = vshll.u32 %v3611, 16
        %v3833 = vrot.slane %v3831, 5
        %v3834 = vor.u32 %v3830, %v3833
        %v3835 = vrot.slane %v3834, 4
        %v3837 = vshll.u32 %v3612, 16
        %v3839 = vrot.slane %v3837, 5
        %v3840 = vsel %vm275, %v3835, %v3839
        %v3841 = vshrl.u32 %v3612, 16
        %v3843 = vrot.slane %v3841, 4
        %v3844 = vor.u32 %v3843, %v3839
        %v3845 = vrot.slane %v3844, 4
        %v3847 = vshll.u32 %v3613, 16
        %v3849 = vrot.slane %v3847, 5
        %v3850 = vsel %vm275, %v3845, %v3849
        %v3852 = vshrl.u32 %v3614, 16
        %v3854 = vrot.slane %v3852, 4
        %v3855 = vshll.u32 %v3614, 16
        %v3857 = vrot.slane %v3855, 5
        %v3858 = vor.u32 %v3854, %v3857
        %v3859 = vrot.slane %v3858, 4
        %v3861 = vshll.u32 %v3615, 16
        %v3863 = vrot.slane %v3861, 5
        %v3864 = vsel %vm275, %v3859, %v3863
        %v3865 = vshrl.u32 %v3615, 16
        %v3867 = vrot.slane %v3865, 4
        %v3868 = vor.u32 %v3867, %v3863
        %v3869 = vrot.slane %v3868, 4
        %v3871 = vshll.u32 %v3616, 16
        %v3873 = vrot.slane %v3871, 5
        %v3874 = vsel %vm275, %v3869, %v3873
        %v3876 = vshrl.u32 %v3617, 16
        %v3878 = vrot.slane %v3876, 4
        %v3879 = vshll.u32 %v3617, 16
        %v3881 = vrot.slane %v3879, 5
        %v3882 = vor.u32 %v3878, %v3881
        %v3883 = vrot.slane %v3882, 4
        %v3885 = vshll.u32 %v3618, 16
        %v3887 = vrot.slane %v3885, 5
        %v3888 = vsel %vm275, %v3883, %v3887
        %v3889 = vshrl.u32 %v3618, 16
        %v3891 = vrot.slane %v3889, 4
        %v3892 = vor.u32 %v3891, %v3887
        %v3893 = vrot.slane %v3892, 4
        %v3895 = vshll.u32 %v3619, 16
        %v3897 = vrot.slane %v3895, 5
        %v3898 = vsel %vm275, %v3893, %v3897
        %v3900 = vshrl.u32 %v3620, 16
        %v3902 = vrot.slane %v3900, 4
        %v3903 = vshll.u32 %v3620, 16
        %v3905 = vrot.slane %v3903, 5
        %v3906 = vor.u32 %v3902, %v3905
        %v3907 = vrot.slane %v3906, 4
        %v3909 = vshll.u32 %v3621, 16
        %v3911 = vrot.slane %v3909, 5
        %v3912 = vsel %vm275, %v3907, %v3911
        %v3913 = vshrl.u32 %v3621, 16
        %v3915 = vrot.slane %v3913, 4
        %v3916 = vor.u32 %v3915, %v3911
        %v3917 = vrot.slane %v3916, 4
        %v3919 = vshll.u32 %v3622, 16
        %v3921 = vrot.slane %v3919, 5
        %v3922 = vsel %vm275, %v3917, %v3921
        %v3924 = vshrl.u32 %v3623, 16
        %v3926 = vrot.slane %v3924, 4
        %v3927 = vshll.u32 %v3623, 16
        %v3929 = vrot.slane %v3927, 5
        %v3930 = vor.u32 %v3926, %v3929
        %v3931 = vrot.slane %v3930, 4
        %v3933 = vshll.u32 %v3624, 16
        %v3935 = vrot.slane %v3933, 5
        %v3936 = vsel %vm275, %v3931, %v3935
        %v3937 = vshrl.u32 %v3624, 16
        %v3939 = vrot.slane %v3937, 4
        %v3940 = vor.u32 %v3939, %v3935
        %v3941 = vrot.slane %v3940, 4
        %v3943 = vshll.u32 %v3625, 16
        %v3945 = vrot.slane %v3943, 5
        %v3946 = vsel %vm275, %v3941, %v3945
        %v3948 = vshrl.u32 %v3626, 16
        %v3950 = vrot.slane %v3948, 4
        %v3951 = vshll.u32 %v3626, 16
        %v3953 = vrot.slane %v3951, 5
        %v3954 = vor.u32 %v3950, %v3953
        %v3955 = vrot.slane %v3954, 4
        %v3957 = vshll.u32 %v3627, 16
        %v3959 = vrot.slane %v3957, 5
        %v3960 = vsel %vm275, %v3955, %v3959
        %v3961 = vshrl.u32 %v3627, 16
        %v3963 = vrot.slane %v3961, 4
        %v3964 = vor.u32 %v3963, %v3959
        %v3965 = vrot.slane %v3964, 4
        %v3967 = vshll.u32 %v3628, 16
        %v3969 = vrot.slane %v3967, 5
        %v3970 = vsel %vm275, %v3965, %v3969
        %v3972 = vshrl.u32 %v3629, 16
        %v3974 = vrot.slane %v3972, 4
        %v3975 = vshll.u32 %v3629, 16
        %v3977 = vrot.slane %v3975, 5
        %v3978 = vor.u32 %v3974, %v3977
        %v3979 = vrot.slane %v3978, 4
        %v3981 = vshll.u32 %v3630, 16
        %v3983 = vrot.slane %v3981, 5
        %v3984 = vsel %vm275, %v3979, %v3983
        %v3985 = vshrl.u32 %v3630, 16
        %v3987 = vrot.slane %v3985, 4
        %v3988 = vor.u32 %v3987, %v3983
        %v3989 = vrot.slane %v3988, 4
        %v3991 = vshll.u32 %v3631, 16
        %v3993 = vrot.slane %v3991, 5
        %v3994 = vsel %vm275, %v3989, %v3993
        %v3996 = vshrl.u32 %v3632, 16
        %v3998 = vrot.slane %v3996, 4
        %v3999 = vshll.u32 %v3632, 16
        %v4001 = vrot.slane %v3999, 5
        %v4002 = vor.u32 %v3998, %v4001
        %v4003 = vrot.slane %v4002, 4
        %v4005 = vshll.u32 %v3633, 16
        %v4007 = vrot.slane %v4005, 5
        %v4008 = vsel %vm275, %v4003, %v4007
        %v4009 = vshrl.u32 %v3633, 16
        %v4011 = vrot.slane %v4009, 4
        %v4012 = vor.u32 %v4011, %v4007
        %v4013 = vrot.slane %v4012, 4
        %v4015 = vshll.u32 %v3634, 16
        %v4017 = vrot.slane %v4015, 5
        %v4018 = vsel %vm275, %v4013, %v4017
        %s4019 = scalar_lea.vmem %s1, 14
        %v4020 = vld [vmem:[%s4019] sm:$0x3]
        %v4021 = vunpack.c.l.b16 %v3648
        %v4022 = vunpack.c.l.b16 %v3658
        %v4023 = vunpack.c.l.b16 %v3672
        %v4024 = vunpack.c.l.b16 %v3682
        %v4025 = vunpack.c.l.b16 %v3696
        %v4026 = vunpack.c.l.b16 %v3706
        %v4027 = vunpack.c.l.b16 %v3720
        %v4028 = vunpack.c.l.b16 %v3730
        %v4029 = vunpack.c.l.b16 %v3744
        %v4030 = vunpack.c.l.b16 %v3754
        %v4031 = vunpack.c.l.b16 %v3768
        %v4032 = vunpack.c.l.b16 %v3778
        %v4033 = vunpack.c.l.b16 %v3792
        %v4034 = vunpack.c.l.b16 %v3802
        %v4035 = vunpack.c.l.b16 %v3816
        %v4036 = vunpack.c.l.b16 %v3826
        %v4037 = vunpack.c.l.b16 %v3840
        %v4038 = vunpack.c.l.b16 %v3850
        %v4039 = vunpack.c.l.b16 %v3864
        %v4040 = vunpack.c.l.b16 %v3874
        %v4041 = vunpack.c.l.b16 %v3888
        %v4042 = vunpack.c.l.b16 %v3898
        %v4043 = vunpack.c.l.b16 %v3912
        %v4044 = vunpack.c.l.b16 %v3922
        %v4045 = vunpack.c.l.b16 %v3936
        %v4046 = vunpack.c.l.b16 %v3946
        %v4047 = vunpack.c.l.b16 %v3960
        %v4048 = vunpack.c.l.b16 %v3970
        %v4049 = vunpack.c.l.b16 %v3984
        %v4050 = vunpack.c.l.b16 %v3994
        %v4051 = vunpack.c.l.b16 %v4008
        %v4052 = vunpack.c.l.b16 %v4018
        %v4053 = vpack.c.b16 %v4022, %v4021
        %v4054 = vpack.c.b16 %v4024, %v4023
        %v4055 = vpack.c.b16 %v4026, %v4025
        %v4056 = vpack.c.b16 %v4028, %v4027
        %v4057 = vpack.c.b16 %v4030, %v4029
        %v4058 = vpack.c.b16 %v4032, %v4031
        %v4059 = vpack.c.b16 %v4034, %v4033
        %v4060 = vpack.c.b16 %v4036, %v4035
        %v4061 = vpack.c.b16 %v4038, %v4037
        %v4062 = vpack.c.b16 %v4040, %v4039
        %v4063 = vpack.c.b16 %v4042, %v4041
        %v4064 = vpack.c.b16 %v4044, %v4043
        %v4065 = vpack.c.b16 %v4046, %v4045
        %v4066 = vpack.c.b16 %v4048, %v4047
        %v4067 = vpack.c.b16 %v4050, %v4049
        %v4068 = vpack.c.b16 %v4052, %v4051
        %v4070 = vsel %vm710, %v4053, 0
        %v4073 = vsel %vm710, %v4054, 0
        %v4076 = vsel %vm710, %v4055, 0
        %v4079 = vsel %vm710, %v4056, 0
        %v4082 = vsel %vm710, %v4057, 0
        %v4085 = vsel %vm710, %v4058, 0
        %v4088 = vsel %vm710, %v4059, 0
        %v4091 = vsel %vm710, %v4060, 0
        %v4094 = vsel %vm710, %v4061, 0
        %v4097 = vsel %vm710, %v4062, 0
        %v4100 = vsel %vm710, %v4063, 0
        %v4103 = vsel %vm710, %v4064, 0
        %v4106 = vsel %vm710, %v4065, 0
        %v4109 = vsel %vm710, %v4066, 0
        %v4112 = vsel %vm710, %v4067, 0
        %v4115 = vsel %vm710, %v4068, 0
        %v4118 = vsel %vm759, %v4020, 0
        %4120 = vmatprep.subr.bf16.mxu0 0
        %4121 = vmatpush1.bf16.msra.mxu0 %v4118
        %4122 = vmatprep.subr.bf16.mxu0 0
        %4123 = vmatpush1.bf16.msra.mxu0 0
        %4124 = vmatprep.subr.bf16.mxu0 0
        %4125 = vmatpush1.bf16.msra.mxu0 0
        %4126 = vmatprep.subr.bf16.mxu0 0
        %4127 = vmatpush1.bf16.msra.mxu0 0
        %4128 = vmatprep.subr.bf16.mxu0 0
        %4129 = vmatpush1.bf16.msra.mxu0 0
        %4130 = vmatprep.subr.bf16.mxu0 0
        %4131 = vmatpush1.bf16.msra.mxu0 0
        %4132 = vmatprep.subr.bf16.mxu0 0
        %4133 = vmatpush1.bf16.msra.mxu0 0
        %4134 = vmatprep.subr.bf16.mxu0 0
        %4135 = vmatpush1.bf16.msra.mxu0 0
        %4136 = vmatprep.subr.bf16.mxu0 0
        %4137 = vmatpush1.bf16.msra.mxu0 0
        %4138 = vmatprep.subr.bf16.mxu0 0
        %4139 = vmatpush1.bf16.msra.mxu0 0
        %4140 = vmatprep.subr.bf16.mxu0 0
        %4141 = vmatpush1.bf16.msra.mxu0 0
        %4142 = vmatprep.subr.bf16.mxu0 0
        %4143 = vmatpush1.bf16.msra.mxu0 0
        %4144 = vmatprep.subr.bf16.mxu0 0
        %4145 = vmatpush1.bf16.msra.mxu0 0
        %4146 = vmatprep.subr.bf16.mxu0 0
        %4147 = vmatpush1.bf16.msra.mxu0 0
        %4148 = vmatprep.subr.bf16.mxu0 0
        %4149 = vmatpush1.bf16.msra.mxu0 0
        %4150 = vmatprep.subr.bf16.mxu0 0
        %4151 = vmatpush1.bf16.msra.mxu0 0
        %4152 = vmatprep.mubr.bf16.mxu0 0
        %4153 = vmatmul.mubr.bf16.gmra.mrb[0].mxu0 %v4070
        %v4154 = vpop.f32.mrb[0].mxu0
        %v4155 = vadd.f32 0.0, %v4154
        %v4156 = vpop.f32.mrb[0].mxu0
        %v4157 = vpop.f32.mrb[0].mxu0
        %v4158 = vadd.f32 0.0, %v4157
        %v4159 = vpop.f32.mrb[0].mxu0
        %4160 = vmatprep.mubr.bf16.mxu0 0
        %4161 = vmatmul.mubr.bf16.gmra.mrb[0].mxu0 %v4073
        %v4162 = vpop.f32.mrb[0].mxu0
        %v4163 = vadd.f32 0.0, %v4162
        %v4164 = vpop.f32.mrb[0].mxu0
        %v4165 = vpop.f32.mrb[0].mxu0
        %v4166 = vadd.f32 0.0, %v4165
        %v4167 = vpop.f32.mrb[0].mxu0
        %4168 = vmatprep.mubr.bf16.mxu0 0
        %4169 = vmatmul.mubr.bf16.gmra.mrb[0].mxu0 %v4076
        %v4170 = vpop.f32.mrb[0].mxu0
        %v4171 = vadd.f32 0.0, %v4170
        %v4172 = vpop.f32.mrb[0].mxu0
        %v4173 = vpop.f32.mrb[0].mxu0
        %v4174 = vadd.f32 0.0, %v4173
        %v4175 = vpop.f32.mrb[0].mxu0
        %4176 = vmatprep.mubr.bf16.mxu0 0
        %4177 = vmatmul.mubr.bf16.gmra.mrb[0].mxu0 %v4079
        %v4178 = vpop.f32.mrb[0].mxu0
        %v4179 = vadd.f32 0.0, %v4178
        %v4180 = vpop.f32.mrb[0].mxu0
        %v4181 = vpop.f32.mrb[0].mxu0
        %v4182 = vadd.f32 0.0, %v4181
        %v4183 = vpop.f32.mrb[0].mxu0
        %4184 = vmatprep.mubr.bf16.mxu0 0
        %4185 = vmatmul.mubr.bf16.gmra.mrb[0].mxu0 %v4082
        %v4186 = vpop.f32.mrb[0].mxu0
        %v4187 = vadd.f32 0.0, %v4186
        %v4188 = vpop.f32.mrb[0].mxu0
        %v4189 = vpop.f32.mrb[0].mxu0
        %v4190 = vadd.f32 0.0, %v4189
        %v4191 = vpop.f32.mrb[0].mxu0
        %4192 = vmatprep.mubr.bf16.mxu0 0
        %4193 = vmatmul.mubr.bf16.gmra.mrb[0].mxu0 %v4085
        %v4194 = vpop.f32.mrb[0].mxu0
        %v4195 = vadd.f32 0.0, %v4194
        %v4196 = vpop.f32.mrb[0].mxu0
        %v4197 = vpop.f32.mrb[0].mxu0
        %v4198 = vadd.f32 0.0, %v4197
        %v4199 = vpop.f32.mrb[0].mxu0
        %4200 = vmatprep.mubr.bf16.mxu0 0
        %4201 = vmatmul.mubr.bf16.gmra.mrb[0].mxu0 %v4088
        %v4202 = vpop.f32.mrb[0].mxu0
        %v4203 = vadd.f32 0.0, %v4202
        %v4204 = vpop.f32.mrb[0].mxu0
        %v4205 = vpop.f32.mrb[0].mxu0
        %v4206 = vadd.f32 0.0, %v4205
        %v4207 = vpop.f32.mrb[0].mxu0
        %4208 = vmatprep.mubr.bf16.mxu0 0
        %4209 = vmatmul.mubr.bf16.gmra.mrb[0].mxu0 %v4091
        %v4210 = vpop.f32.mrb[0].mxu0
        %v4211 = vadd.f32 0.0, %v4210
        %v4212 = vpop.f32.mrb[0].mxu0
        %v4213 = vpop.f32.mrb[0].mxu0
        %v4214 = vadd.f32 0.0, %v4213
        %v4215 = vpop.f32.mrb[0].mxu0
        %4216 = vmatprep.mubr.bf16.mxu0 0
        %4217 = vmatmul.mubr.bf16.gmra.mrb[0].mxu0 %v4094
        %v4218 = vpop.f32.mrb[0].mxu0
        %v4219 = vadd.f32 0.0, %v4218
        %v4220 = vpop.f32.mrb[0].mxu0
        %v4221 = vpop.f32.mrb[0].mxu0
        %v4222 = vadd.f32 0.0, %v4221
        %v4223 = vpop.f32.mrb[0].mxu0
        %4224 = vmatprep.mubr.bf16.mxu0 0
        %4225 = vmatmul.mubr.bf16.gmra.mrb[0].mxu0 %v4097
        %v4226 = vpop.f32.mrb[0].mxu0
        %v4227 = vadd.f32 0.0, %v4226
        %v4228 = vpop.f32.mrb[0].mxu0
        %v4229 = vpop.f32.mrb[0].mxu0
        %v4230 = vadd.f32 0.0, %v4229
        %v4231 = vpop.f32.mrb[0].mxu0
        %4232 = vmatprep.mubr.bf16.mxu0 0
        %4233 = vmatmul.mubr.bf16.gmra.mrb[0].mxu0 %v4100
        %v4234 = vpop.f32.mrb[0].mxu0
        %v4235 = vadd.f32 0.0, %v4234
        %v4236 = vpop.f32.mrb[0].mxu0
        %v4237 = vpop.f32.mrb[0].mxu0
        %v4238 = vadd.f32 0.0, %v4237
        %v4239 = vpop.f32.mrb[0].mxu0
        %4240 = vmatprep.mubr.bf16.mxu0 0
        %4241 = vmatmul.mubr.bf16.gmra.mrb[0].mxu0 %v4103
        %v4242 = vpop.f32.mrb[0].mxu0
        %v4243 = vadd.f32 0.0, %v4242
        %v4244 = vpop.f32.mrb[0].mxu0
        %v4245 = vpop.f32.mrb[0].mxu0
        %v4246 = vadd.f32 0.0, %v4245
        %v4247 = vpop.f32.mrb[0].mxu0
        %4248 = vmatprep.mubr.bf16.mxu0 0
        %4249 = vmatmul.mubr.bf16.gmra.mrb[0].mxu0 %v4106
        %v4250 = vpop.f32.mrb[0].mxu0
        %v4251 = vadd.f32 0.0, %v4250
        %v4252 = vpop.f32.mrb[0].mxu0
        %v4253 = vpop.f32.mrb[0].mxu0
        %v4254 = vadd.f32 0.0, %v4253
        %v4255 = vpop.f32.mrb[0].mxu0
        %4256 = vmatprep.mubr.bf16.mxu0 0
        %4257 = vmatmul.mubr.bf16.gmra.mrb[0].mxu0 %v4109
        %v4258 = vpop.f32.mrb[0].mxu0
        %v4259 = vadd.f32 0.0, %v4258
        %v4260 = vpop.f32.mrb[0].mxu0
        %v4261 = vpop.f32.mrb[0].mxu0
        %v4262 = vadd.f32 0.0, %v4261
        %v4263 = vpop.f32.mrb[0].mxu0
        %4264 = vmatprep.mubr.bf16.mxu0 0
        %4265 = vmatmul.mubr.bf16.gmra.mrb[0].mxu0 %v4112
        %v4266 = vpop.f32.mrb[0].mxu0
        %v4267 = vadd.f32 0.0, %v4266
        %v4268 = vpop.f32.mrb[0].mxu0
        %v4269 = vpop.f32.mrb[0].mxu0
        %v4270 = vadd.f32 0.0, %v4269
        %v4271 = vpop.f32.mrb[0].mxu0
        %4272 = vmatprep.mubr.bf16.mxu0 0
        %4273 = vmatmul.mubr.bf16.gmra.mrb[0].mxu0 %v4115
        %v4274 = vpop.f32.mrb[0].mxu0
        %v4275 = vadd.f32 0.0, %v4274
        %v4276 = vpop.f32.mrb[0].mxu0
        %v4277 = vpop.f32.mrb[0].mxu0
        %v4278 = vadd.f32 0.0, %v4277
        %v4279 = vpop.f32.mrb[0].mxu0
        %4280 = vdwg.mxu0
        %v4281 = vadd.f32 %v3555, %v4155
        %v4282 = vadd.f32 %v3556, %v4158
        %v4283 = vadd.f32 %v3557, %v4163
        %v4284 = vadd.f32 %v3558, %v4166
        %v4285 = vadd.f32 %v3559, %v4171
        %v4286 = vadd.f32 %v3560, %v4174
        %v4287 = vadd.f32 %v3561, %v4179
        %v4288 = vadd.f32 %v3562, %v4182
        %v4289 = vadd.f32 %v3563, %v4187
        %v4290 = vadd.f32 %v3564, %v4190
        %v4291 = vadd.f32 %v3565, %v4195
        %v4292 = vadd.f32 %v3566, %v4198
        %v4293 = vadd.f32 %v3567, %v4203
        %v4294 = vadd.f32 %v3568, %v4206
        %v4295 = vadd.f32 %v3569, %v4211
        %v4296 = vadd.f32 %v3570, %v4214
        %v4297 = vadd.f32 %v3571, %v4219
        %v4298 = vadd.f32 %v3572, %v4222
        %v4299 = vadd.f32 %v3573, %v4227
        %v4300 = vadd.f32 %v3574, %v4230
        %v4301 = vadd.f32 %v3575, %v4235
        %v4302 = vadd.f32 %v3576, %v4238
        %v4303 = vadd.f32 %v3577, %v4243
        %v4304 = vadd.f32 %v3578, %v4246
        %v4305 = vadd.f32 %v3579, %v4251
        %v4306 = vadd.f32 %v3580, %v4254
        %v4307 = vadd.f32 %v3581, %v4259
        %v4308 = vadd.f32 %v3582, %v4262
        %v4309 = vadd.f32 %v3583, %v4267
        %v4310 = vadd.f32 %v3584, %v4270
        %v4311 = vadd.f32 %v3585, %v4275
        %v4312 = vadd.f32 %v3586, %v4278
        %v4313 = vld [vmem:[%s3228] sm:$0xe]
        %v4314 = vld [vmem:[%s3228 + $0xc] sm:$0xe]
        %v4315 = vld [vmem:[%s3228 + $0x18] sm:$0xe]
        %v4316 = vld [vmem:[%s3228 + $0x24] sm:$0xe]
        %v4317 = vld [vmem:[%s3228 + $0x30] sm:$0xe]
        %v4318 = vld [vmem:[%s3228 + $0x3c] sm:$0xe]
        %v4319 = vld [vmem:[%s3228 + $0x48] sm:$0xe]
        %v4320 = vld [vmem:[%s3228 + $0x54] sm:$0xe]
        %v4321 = vld [vmem:[%s3228 + $0x60] sm:$0xe]
        %v4322 = vld [vmem:[%s3228 + $0x6c] sm:$0xe]
        %v4323 = vld [vmem:[%s3228 + $0x78] sm:$0xe]
        %v4324 = vld [vmem:[%s3228 + $0x84] sm:$0xe]
        %v4325 = vld [vmem:[%s3228 + $0x90] sm:$0xe]
        %v4326 = vld [vmem:[%s3228 + $0x9c] sm:$0xe]
        %v4327 = vld [vmem:[%s3228 + $0xa8] sm:$0xe]
        %v4328 = vld [vmem:[%s3228 + $0xb4] sm:$0xe]
        %v4377 = vrot.slane %v4313, 5
        %v4378 = vrot.slane %v4377, 4
        %v4379 = vrot.slane %v3588, 5
        %v4380 = vsel %vm1266, %v4378, %v4379
        %v4381 = vrot.slane %v4379, 4
        %v4382 = vrot.slane %v3589, 5
        %v4383 = vsel %vm1266, %v4381, %v4382
        %v4384 = vrot.slane %v4314, 5
        %v4385 = vrot.slane %v4384, 4
        %v4386 = vrot.slane %v3591, 5
        %v4387 = vsel %vm1266, %v4385, %v4386
        %v4388 = vrot.slane %v4386, 4
        %v4389 = vrot.slane %v3592, 5
        %v4390 = vsel %vm1266, %v4388, %v4389
        %v4391 = vrot.slane %v4315, 5
        %v4392 = vrot.slane %v4391, 4
        %v4393 = vrot.slane %v3594, 5
        %v4394 = vsel %vm1266, %v4392, %v4393
        %v4395 = vrot.slane %v4393, 4
        %v4396 = vrot.slane %v3595, 5
        %v4397 = vsel %vm1266, %v4395, %v4396
        %v4398 = vrot.slane %v4316, 5
        %v4399 = vrot.slane %v4398, 4
        %v4400 = vrot.slane %v3597, 5
        %v4401 = vsel %vm1266, %v4399, %v4400
        %v4402 = vrot.slane %v4400, 4
        %v4403 = vrot.slane %v3598, 5
        %v4404 = vsel %vm1266, %v4402, %v4403
        %v4405 = vrot.slane %v4317, 5
        %v4406 = vrot.slane %v4405, 4
        %v4407 = vrot.slane %v3600, 5
        %v4408 = vsel %vm1266, %v4406, %v4407
        %v4409 = vrot.slane %v4407, 4
        %v4410 = vrot.slane %v3601, 5
        %v4411 = vsel %vm1266, %v4409, %v4410
        %v4412 = vrot.slane %v4318, 5
        %v4413 = vrot.slane %v4412, 4
        %v4414 = vrot.slane %v3603, 5
        %v4415 = vsel %vm1266, %v4413, %v4414
        %v4416 = vrot.slane %v4414, 4
        %v4417 = vrot.slane %v3604, 5
        %v4418 = vsel %vm1266, %v4416, %v4417
        %v4419 = vrot.slane %v4319, 5
        %v4420 = vrot.slane %v4419, 4
        %v4421 = vrot.slane %v3606, 5
        %v4422 = vsel %vm1266, %v4420, %v4421
        %v4423 = vrot.slane %v4421, 4
        %v4424 = vrot.slane %v3607, 5
        %v4425 = vsel %vm1266, %v4423, %v4424
        %v4426 = vrot.slane %v4320, 5
        %v4427 = vrot.slane %v4426, 4
        %v4428 = vrot.slane %v3609, 5
        %v4429 = vsel %vm1266, %v4427, %v4428
        %v4430 = vrot.slane %v4428, 4
        %v4431 = vrot.slane %v3610, 5
        %v4432 = vsel %vm1266, %v4430, %v4431
        %v4433 = vrot.slane %v4321, 5
        %v4434 = vrot.slane %v4433, 4
        %v4435 = vrot.slane %v3612, 5
        %v4436 = vsel %vm1266, %v4434, %v4435
        %v4437 = vrot.slane %v4435, 4
        %v4438 = vrot.slane %v3613, 5
        %v4439 = vsel %vm1266, %v4437, %v4438
        %v4440 = vrot.slane %v4322, 5
        %v4441 = vrot.slane %v4440, 4
        %v4442 = vrot.slane %v3615, 5
        %v4443 = vsel %vm1266, %v4441, %v4442
        %v4444 = vrot.slane %v4442, 4
        %v4445 = vrot.slane %v3616, 5
        %v4446 = vsel %vm1266, %v4444, %v4445
        %v4447 = vrot.slane %v4323, 5
        %v4448 = vrot.slane %v4447, 4
        %v4449 = vrot.slane %v3618, 5
        %v4450 = vsel %vm1266, %v4448, %v4449
        %v4451 = vrot.slane %v4449, 4
        %v4452 = vrot.slane %v3619, 5
        %v4453 = vsel %vm1266, %v4451, %v4452
        %v4454 = vrot.slane %v4324, 5
        %v4455 = vrot.slane %v4454, 4
        %v4456 = vrot.slane %v3621, 5
        %v4457 = vsel %vm1266, %v4455, %v4456
        %v4458 = vrot.slane %v4456, 4
        %v4459 = vrot.slane %v3622, 5
        %v4460 = vsel %vm1266, %v4458, %v4459
        %v4461 = vrot.slane %v4325, 5
        %v4462 = vrot.slane %v4461, 4
        %v4463 = vrot.slane %v3624, 5
        %v4464 = vsel %vm1266, %v4462, %v4463
        %v4465 = vrot.slane %v4463, 4
        %v4466 = vrot.slane %v3625, 5
        %v4467 = vsel %vm1266, %v4465, %v4466
        %v4468 = vrot.slane %v4326, 5
        %v4469 = vrot.slane %v4468, 4
        %v4470 = vrot.slane %v3627, 5
        %v4471 = vsel %vm1266, %v4469, %v4470
        %v4472 = vrot.slane %v4470, 4
        %v4473 = vrot.slane %v3628, 5
        %v4474 = vsel %vm1266, %v4472, %v4473
        %v4475 = vrot.slane %v4327, 5
        %v4476 = vrot.slane %v4475, 4
        %v4477 = vrot.slane %v3630, 5
        %v4478 = vsel %vm1266, %v4476, %v4477
        %v4479 = vrot.slane %v4477, 4
        %v4480 = vrot.slane %v3631, 5
        %v4481 = vsel %vm1266, %v4479, %v4480
        %v4482 = vrot.slane %v4328, 5
        %v4483 = vrot.slane %v4482, 4
        %v4484 = vrot.slane %v3633, 5
        %v4485 = vsel %vm1266, %v4483, %v4484
        %v4486 = vrot.slane %v4484, 4
        %v4487 = vrot.slane %v3634, 5
        %v4488 = vsel %vm1266, %v4486, %v4487
        %s4489 = scalar_lea.vmem %s1, 16
        %v4490 = vld [vmem:[%s4489] sm:$0x3]
        %v4491 = vunpack.c.l.b16 %v4380
        %v4492 = vunpack.c.l.b16 %v4383
        %v4493 = vunpack.c.l.b16 %v4387
        %v4494 = vunpack.c.l.b16 %v4390
        %v4495 = vunpack.c.l.b16 %v4394
        %v4496 = vunpack.c.l.b16 %v4397
        %v4497 = vunpack.c.l.b16 %v4401
        %v4498 = vunpack.c.l.b16 %v4404
        %v4499 = vunpack.c.l.b16 %v4408
        %v4500 = vunpack.c.l.b16 %v4411
        %v4501 = vunpack.c.l.b16 %v4415
        %v4502 = vunpack.c.l.b16 %v4418
        %v4503 = vunpack.c.l.b16 %v4422
        %v4504 = vunpack.c.l.b16 %v4425
        %v4505 = vunpack.c.l.b16 %v4429
        %v4506 = vunpack.c.l.b16 %v4432
        %v4507 = vunpack.c.l.b16 %v4436
        %v4508 = vunpack.c.l.b16 %v4439
        %v4509 = vunpack.c.l.b16 %v4443
        %v4510 = vunpack.c.l.b16 %v4446
        %v4511 = vunpack.c.l.b16 %v4450
        %v4512 = vunpack.c.l.b16 %v4453
        %v4513 = vunpack.c.l.b16 %v4457
        %v4514 = vunpack.c.l.b16 %v4460
        %v4515 = vunpack.c.l.b16 %v4464
        %v4516 = vunpack.c.l.b16 %v4467
        %v4517 = vunpack.c.l.b16 %v4471
        %v4518 = vunpack.c.l.b16 %v4474
        %v4519 = vunpack.c.l.b16 %v4478
        %v4520 = vunpack.c.l.b16 %v4481
        %v4521 = vunpack.c.l.b16 %v4485
        %v4522 = vunpack.c.l.b16 %v4488
        %v4523 = vpack.c.b16 %v4492, %v4491
        %v4524 = vpack.c.b16 %v4494, %v4493
        %v4525 = vpack.c.b16 %v4496, %v4495
        %v4526 = vpack.c.b16 %v4498, %v4497
        %v4527 = vpack.c.b16 %v4500, %v4499
        %v4528 = vpack.c.b16 %v4502, %v4501
        %v4529 = vpack.c.b16 %v4504, %v4503
        %v4530 = vpack.c.b16 %v4506, %v4505
        %v4531 = vpack.c.b16 %v4508, %v4507
        %v4532 = vpack.c.b16 %v4510, %v4509
        %v4533 = vpack.c.b16 %v4512, %v4511
        %v4534 = vpack.c.b16 %v4514, %v4513
        %v4535 = vpack.c.b16 %v4516, %v4515
        %v4536 = vpack.c.b16 %v4518, %v4517
        %v4537 = vpack.c.b16 %v4520, %v4519
        %v4538 = vpack.c.b16 %v4522, %v4521
        %v4540 = vsel %vm710, %v4523, 0
        %v4543 = vsel %vm710, %v4524, 0
        %v4546 = vsel %vm710, %v4525, 0
        %v4549 = vsel %vm710, %v4526, 0
        %v4552 = vsel %vm710, %v4527, 0
        %v4555 = vsel %vm710, %v4528, 0
        %v4558 = vsel %vm710, %v4529, 0
        %v4561 = vsel %vm710, %v4530, 0
        %v4564 = vsel %vm710, %v4531, 0
        %v4567 = vsel %vm710, %v4532, 0
        %v4570 = vsel %vm710, %v4533, 0
        %v4573 = vsel %vm710, %v4534, 0
        %v4576 = vsel %vm710, %v4535, 0
        %v4579 = vsel %vm710, %v4536, 0
        %v4582 = vsel %vm710, %v4537, 0
        %v4585 = vsel %vm710, %v4538, 0
        %v4588 = vsel %vm759, %v4490, 0
        %4590 = vmatprep.subr.bf16.mxu0 0
        %4591 = vmatpush1.bf16.msra.mxu0 %v4588
        %4592 = vmatprep.subr.bf16.mxu0 0
        %4593 = vmatpush1.bf16.msra.mxu0 0
        %4594 = vmatprep.subr.bf16.mxu0 0
        %4595 = vmatpush1.bf16.msra.mxu0 0
        %4596 = vmatprep.subr.bf16.mxu0 0
        %4597 = vmatpush1.bf16.msra.mxu0 0
        %4598 = vmatprep.subr.bf16.mxu0 0
        %4599 = vmatpush1.bf16.msra.mxu0 0
        %4600 = vmatprep.subr.bf16.mxu0 0
        %4601 = vmatpush1.bf16.msra.mxu0 0
        %4602 = vmatprep.subr.bf16.mxu0 0
        %4603 = vmatpush1.bf16.msra.mxu0 0
        %4604 = vmatprep.subr.bf16.mxu0 0
        %4605 = vmatpush1.bf16.msra.mxu0 0
        %4606 = vmatprep.subr.bf16.mxu0 0
        %4607 = vmatpush1.bf16.msra.mxu0 0
        %4608 = vmatprep.subr.bf16.mxu0 0
        %4609 = vmatpush1.bf16.msra.mxu0 0
        %4610 = vmatprep.subr.bf16.mxu0 0
        %4611 = vmatpush1.bf16.msra.mxu0 0
        %4612 = vmatprep.subr.bf16.mxu0 0
        %4613 = vmatpush1.bf16.msra.mxu0 0
        %4614 = vmatprep.subr.bf16.mxu0 0
        %4615 = vmatpush1.bf16.msra.mxu0 0
        %4616 = vmatprep.subr.bf16.mxu0 0
        %4617 = vmatpush1.bf16.msra.mxu0 0
        %4618 = vmatprep.subr.bf16.mxu0 0
        %4619 = vmatpush1.bf16.msra.mxu0 0
        %4620 = vmatprep.subr.bf16.mxu0 0
        %4621 = vmatpush1.bf16.msra.mxu0 0
        %4622 = vmatprep.mubr.bf16.mxu0 0
        %4623 = vmatmul.mubr.bf16.gmra.mrb[0].mxu0 %v4540
        %v4624 = vpop.f32.mrb[0].mxu0
        %v4625 = vadd.f32 0.0, %v4624
        %v4626 = vpop.f32.mrb[0].mxu0
        %v4627 = vpop.f32.mrb[0].mxu0
        %v4628 = vadd.f32 0.0, %v4627
        %v4629 = vpop.f32.mrb[0].mxu0
        %4630 = vmatprep.mubr.bf16.mxu0 0
        %4631 = vmatmul.mubr.bf16.gmra.mrb[0].mxu0 %v4543
        %v4632 = vpop.f32.mrb[0].mxu0
        %v4633 = vadd.f32 0.0, %v4632
        %v4634 = vpop.f32.mrb[0].mxu0
        %v4635 = vpop.f32.mrb[0].mxu0
        %v4636 = vadd.f32 0.0, %v4635
        %v4637 = vpop.f32.mrb[0].mxu0
        %4638 = vmatprep.mubr.bf16.mxu0 0
        %4639 = vmatmul.mubr.bf16.gmra.mrb[0].mxu0 %v4546
        %v4640 = vpop.f32.mrb[0].mxu0
        %v4641 = vadd.f32 0.0, %v4640
        %v4642 = vpop.f32.mrb[0].mxu0
        %v4643 = vpop.f32.mrb[0].mxu0
        %v4644 = vadd.f32 0.0, %v4643
        %v4645 = vpop.f32.mrb[0].mxu0
        %4646 = vmatprep.mubr.bf16.mxu0 0
        %4647 = vmatmul.mubr.bf16.gmra.mrb[0].mxu0 %v4549
        %v4648 = vpop.f32.mrb[0].mxu0
        %v4649 = vadd.f32 0.0, %v4648
        %v4650 = vpop.f32.mrb[0].mxu0
        %v4651 = vpop.f32.mrb[0].mxu0
        %v4652 = vadd.f32 0.0, %v4651
        %v4653 = vpop.f32.mrb[0].mxu0
        %4654 = vmatprep.mubr.bf16.mxu0 0
        %4655 = vmatmul.mubr.bf16.gmra.mrb[0].mxu0 %v4552
        %v4656 = vpop.f32.mrb[0].mxu0
        %v4657 = vadd.f32 0.0, %v4656
        %v4658 = vpop.f32.mrb[0].mxu0
        %v4659 = vpop.f32.mrb[0].mxu0
        %v4660 = vadd.f32 0.0, %v4659
        %v4661 = vpop.f32.mrb[0].mxu0
        %4662 = vmatprep.mubr.bf16.mxu0 0
        %4663 = vmatmul.mubr.bf16.gmra.mrb[0].mxu0 %v4555
        %v4664 = vpop.f32.mrb[0].mxu0
        %v4665 = vadd.f32 0.0, %v4664
        %v4666 = vpop.f32.mrb[0].mxu0
        %v4667 = vpop.f32.mrb[0].mxu0
        %v4668 = vadd.f32 0.0, %v4667
        %v4669 = vpop.f32.mrb[0].mxu0
        %4670 = vmatprep.mubr.bf16.mxu0 0
        %4671 = vmatmul.mubr.bf16.gmra.mrb[0].mxu0 %v4558
        %v4672 = vpop.f32.mrb[0].mxu0
        %v4673 = vadd.f32 0.0, %v4672
        %v4674 = vpop.f32.mrb[0].mxu0
        %v4675 = vpop.f32.mrb[0].mxu0
        %v4676 = vadd.f32 0.0, %v4675
        %v4677 = vpop.f32.mrb[0].mxu0
        %4678 = vmatprep.mubr.bf16.mxu0 0
        %4679 = vmatmul.mubr.bf16.gmra.mrb[0].mxu0 %v4561
        %v4680 = vpop.f32.mrb[0].mxu0
        %v4681 = vadd.f32 0.0, %v4680
        %v4682 = vpop.f32.mrb[0].mxu0
        %v4683 = vpop.f32.mrb[0].mxu0
        %v4684 = vadd.f32 0.0, %v4683
        %v4685 = vpop.f32.mrb[0].mxu0
        %4686 = vmatprep.mubr.bf16.mxu0 0
        %4687 = vmatmul.mubr.bf16.gmra.mrb[0].mxu0 %v4564
        %v4688 = vpop.f32.mrb[0].mxu0
        %v4689 = vadd.f32 0.0, %v4688
        %v4690 = vpop.f32.mrb[0].mxu0
        %v4691 = vpop.f32.mrb[0].mxu0
        %v4692 = vadd.f32 0.0, %v4691
        %v4693 = vpop.f32.mrb[0].mxu0
        %4694 = vmatprep.mubr.bf16.mxu0 0
        %4695 = vmatmul.mubr.bf16.gmra.mrb[0].mxu0 %v4567
        %v4696 = vpop.f32.mrb[0].mxu0
        %v4697 = vadd.f32 0.0, %v4696
        %v4698 = vpop.f32.mrb[0].mxu0
        %v4699 = vpop.f32.mrb[0].mxu0
        %v4700 = vadd.f32 0.0, %v4699
        %v4701 = vpop.f32.mrb[0].mxu0
        %4702 = vmatprep.mubr.bf16.mxu0 0
        %4703 = vmatmul.mubr.bf16.gmra.mrb[0].mxu0 %v4570
        %v4704 = vpop.f32.mrb[0].mxu0
        %v4705 = vadd.f32 0.0, %v4704
        %v4706 = vpop.f32.mrb[0].mxu0
        %v4707 = vpop.f32.mrb[0].mxu0
        %v4708 = vadd.f32 0.0, %v4707
        %v4709 = vpop.f32.mrb[0].mxu0
        %4710 = vmatprep.mubr.bf16.mxu0 0
        %4711 = vmatmul.mubr.bf16.gmra.mrb[0].mxu0 %v4573
        %v4712 = vpop.f32.mrb[0].mxu0
        %v4713 = vadd.f32 0.0, %v4712
        %v4714 = vpop.f32.mrb[0].mxu0
        %v4715 = vpop.f32.mrb[0].mxu0
        %v4716 = vadd.f32 0.0, %v4715
        %v4717 = vpop.f32.mrb[0].mxu0
        %4718 = vmatprep.mubr.bf16.mxu0 0
        %4719 = vmatmul.mubr.bf16.gmra.mrb[0].mxu0 %v4576
        %v4720 = vpop.f32.mrb[0].mxu0
        %v4721 = vadd.f32 0.0, %v4720
        %v4722 = vpop.f32.mrb[0].mxu0
        %v4723 = vpop.f32.mrb[0].mxu0
        %v4724 = vadd.f32 0.0, %v4723
        %v4725 = vpop.f32.mrb[0].mxu0
        %4726 = vmatprep.mubr.bf16.mxu0 0
        %4727 = vmatmul.mubr.bf16.gmra.mrb[0].mxu0 %v4579
        %v4728 = vpop.f32.mrb[0].mxu0
        %v4729 = vadd.f32 0.0, %v4728
        %v4730 = vpop.f32.mrb[0].mxu0
        %v4731 = vpop.f32.mrb[0].mxu0
        %v4732 = vadd.f32 0.0, %v4731
        %v4733 = vpop.f32.mrb[0].mxu0
        %4734 = vmatprep.mubr.bf16.mxu0 0
        %4735 = vmatmul.mubr.bf16.gmra.mrb[0].mxu0 %v4582
        %v4736 = vpop.f32.mrb[0].mxu0
        %v4737 = vadd.f32 0.0, %v4736
        %v4738 = vpop.f32.mrb[0].mxu0
        %v4739 = vpop.f32.mrb[0].mxu0
        %v4740 = vadd.f32 0.0, %v4739
        %v4741 = vpop.f32.mrb[0].mxu0
        %4742 = vmatprep.mubr.bf16.mxu0 0
        %4743 = vmatmul.mubr.bf16.gmra.mrb[0].mxu0 %v4585
        %v4744 = vpop.f32.mrb[0].mxu0
        %v4745 = vadd.f32 0.0, %v4744
        %v4746 = vpop.f32.mrb[0].mxu0
        %v4747 = vpop.f32.mrb[0].mxu0
        %v4748 = vadd.f32 0.0, %v4747
        %v4749 = vpop.f32.mrb[0].mxu0
        %4750 = vdwg.mxu0
        %v4751 = vadd.f32 %v4281, %v4625
        %v4752 = vadd.f32 %v4282, %v4628
        %v4753 = vadd.f32 %v4283, %v4633
        %v4754 = vadd.f32 %v4284, %v4636
        %v4755 = vadd.f32 %v4285, %v4641
        %v4756 = vadd.f32 %v4286, %v4644
        %v4757 = vadd.f32 %v4287, %v4649
        %v4758 = vadd.f32 %v4288, %v4652
        %v4759 = vadd.f32 %v4289, %v4657
        %v4760 = vadd.f32 %v4290, %v4660
        %v4761 = vadd.f32 %v4291, %v4665
        %v4762 = vadd.f32 %v4292, %v4668
        %v4763 = vadd.f32 %v4293, %v4673
        %v4764 = vadd.f32 %v4294, %v4676
        %v4765 = vadd.f32 %v4295, %v4681
        %v4766 = vadd.f32 %v4296, %v4684
        %v4767 = vadd.f32 %v4297, %v4689
        %v4768 = vadd.f32 %v4298, %v4692
        %v4769 = vadd.f32 %v4299, %v4697
        %v4770 = vadd.f32 %v4300, %v4700
        %v4771 = vadd.f32 %v4301, %v4705
        %v4772 = vadd.f32 %v4302, %v4708
        %v4773 = vadd.f32 %v4303, %v4713
        %v4774 = vadd.f32 %v4304, %v4716
        %v4775 = vadd.f32 %v4305, %v4721
        %v4776 = vadd.f32 %v4306, %v4724
        %v4777 = vadd.f32 %v4307, %v4729
        %v4778 = vadd.f32 %v4308, %v4732
        %v4779 = vadd.f32 %v4309, %v4737
        %v4780 = vadd.f32 %v4310, %v4740
        %v4781 = vadd.f32 %v4311, %v4745
        %v4782 = vadd.f32 %v4312, %v4748
        %v4783 = vld [vmem:[%s2] sm:$0x1]
        %v4785 = vlaneseq
        %v4786 = vshrl.u32 %v4785, 7
        %v4787 = vsub.s32 0, %v4786
        %v4788 = vrot.slane %v4783, %v4787
        %v4790 = vadd.f32 %v4751, %v4788
        %v4791 = vadd.f32 %v4752, %v4788
        %v4792 = vadd.f32 %v4753, %v4788
        %v4793 = vadd.f32 %v4754, %v4788
        %v4794 = vadd.f32 %v4755, %v4788
        %v4795 = vadd.f32 %v4756, %v4788
        %v4796 = vadd.f32 %v4757, %v4788
        %v4797 = vadd.f32 %v4758, %v4788
        %v4798 = vadd.f32 %v4759, %v4788
        %v4799 = vadd.f32 %v4760, %v4788
        %v4800 = vadd.f32 %v4761, %v4788
        %v4801 = vadd.f32 %v4762, %v4788
        %v4802 = vadd.f32 %v4763, %v4788
        %v4803 = vadd.f32 %v4764, %v4788
        %v4804 = vadd.f32 %v4765, %v4788
        %v4805 = vadd.f32 %v4766, %v4788
        %v4806 = vadd.f32 %v4767, %v4788
        %v4807 = vadd.f32 %v4768, %v4788
        %v4808 = vadd.f32 %v4769, %v4788
        %v4809 = vadd.f32 %v4770, %v4788
        %v4810 = vadd.f32 %v4771, %v4788
        %v4811 = vadd.f32 %v4772, %v4788
        %v4812 = vadd.f32 %v4773, %v4788
        %v4813 = vadd.f32 %v4774, %v4788
        %v4814 = vadd.f32 %v4775, %v4788
        %v4815 = vadd.f32 %v4776, %v4788
        %v4816 = vadd.f32 %v4777, %v4788
        %v4817 = vadd.f32 %v4778, %v4788
        %v4818 = vadd.f32 %v4779, %v4788
        %v4819 = vadd.f32 %v4780, %v4788
        %v4820 = vadd.f32 %v4781, %v4788
        %v4821 = vadd.f32 %v4782, %v4788
        %vm4822 = vcmask 523264
        %v4823 = vsel %vm4822, %v4790, 0.0
        %v4824 = vsel %vm4822, %v4791, 0.0
        %v4825 = vadd.f32 %v4823, %v4824
        %v4826 = vsel %vm4822, %v4792, 0.0
        %v4827 = vadd.f32 %v4825, %v4826
        %v4828 = vsel %vm4822, %v4793, 0.0
        %v4829 = vadd.f32 %v4827, %v4828
        %v4830 = vsel %vm4822, %v4794, 0.0
        %v4831 = vadd.f32 %v4829, %v4830
        %v4832 = vsel %vm4822, %v4795, 0.0
        %v4833 = vadd.f32 %v4831, %v4832
        %v4834 = vsel %vm4822, %v4796, 0.0
        %v4835 = vadd.f32 %v4833, %v4834
        %v4836 = vsel %vm4822, %v4797, 0.0
        %v4837 = vadd.f32 %v4835, %v4836
        %v4838 = vsel %vm4822, %v4798, 0.0
        %v4839 = vadd.f32 %v4837, %v4838
        %v4840 = vsel %vm4822, %v4799, 0.0
        %v4841 = vadd.f32 %v4839, %v4840
        %v4842 = vsel %vm4822, %v4800, 0.0
        %v4843 = vadd.f32 %v4841, %v4842
        %v4844 = vsel %vm4822, %v4801, 0.0
        %v4845 = vadd.f32 %v4843, %v4844
        %v4846 = vsel %vm4822, %v4802, 0.0
        %v4847 = vadd.f32 %v4845, %v4846
        %v4848 = vsel %vm4822, %v4803, 0.0
        %v4849 = vadd.f32 %v4847, %v4848
        %v4850 = vsel %vm4822, %v4804, 0.0
        %v4851 = vadd.f32 %v4849, %v4850
        %v4852 = vsel %vm4822, %v4805, 0.0
        %v4853 = vadd.f32 %v4851, %v4852
        %v4854 = vsel %vm4822, %v4806, 0.0
        %v4855 = vadd.f32 %v4853, %v4854
        %v4856 = vsel %vm4822, %v4807, 0.0
        %v4857 = vadd.f32 %v4855, %v4856
        %v4858 = vsel %vm4822, %v4808, 0.0
        %v4859 = vadd.f32 %v4857, %v4858
        %v4860 = vsel %vm4822, %v4809, 0.0
        %v4861 = vadd.f32 %v4859, %v4860
        %v4862 = vsel %vm4822, %v4810, 0.0
        %v4863 = vadd.f32 %v4861, %v4862
        %v4864 = vsel %vm4822, %v4811, 0.0
        %v4865 = vadd.f32 %v4863, %v4864
        %v4866 = vsel %vm4822, %v4812, 0.0
        %v4867 = vadd.f32 %v4865, %v4866
        %v4868 = vsel %vm4822, %v4813, 0.0
        %v4869 = vadd.f32 %v4867, %v4868
        %v4870 = vsel %vm4822, %v4814, 0.0
        %v4871 = vadd.f32 %v4869, %v4870
        %v4872 = vsel %vm4822, %v4815, 0.0
        %v4873 = vadd.f32 %v4871, %v4872
        %v4874 = vsel %vm4822, %v4816, 0.0
        %v4875 = vadd.f32 %v4873, %v4874
        %v4876 = vsel %vm4822, %v4817, 0.0
        %v4877 = vadd.f32 %v4875, %v4876
        %v4878 = vsel %vm4822, %v4818, 0.0
        %v4879 = vadd.f32 %v4877, %v4878
        %v4880 = vsel %vm4822, %v4819, 0.0
        %v4881 = vadd.f32 %v4879, %v4880
        %v4882 = vsel %vm4822, %v4820, 0.0
        %v4883 = vadd.f32 %v4881, %v4882
        %v4884 = vsel %vm4822, %v4821, 0.0
        %v4885 = vadd.f32 %v4883, %v4884
        %v4886 = vrot.slane %v4885, 4
        %v4887 = vadd.f32 %v4885, %v4886
        %v4888 = vrot.slane %v4887, 2
        %v4889 = vadd.f32 %v4887, %v4888
        %v4890 = vrot.slane %v4889, 1
        %v4891 = vadd.f32 %v4889, %v4890
        %v4892 = vrcp.pop 256.0
        %v4893 = vmul.f32 %v4891, %v4892
        %v4894 = vsub.f32 %v4790, %v4893
        %v4895 = vsub.f32 %v4791, %v4893
        %v4896 = vsub.f32 %v4792, %v4893
        %v4897 = vsub.f32 %v4793, %v4893
        %v4898 = vsub.f32 %v4794, %v4893
        %v4899 = vsub.f32 %v4795, %v4893
        %v4900 = vsub.f32 %v4796, %v4893
        %v4901 = vsub.f32 %v4797, %v4893
        %v4902 = vsub.f32 %v4798, %v4893
        %v4903 = vsub.f32 %v4799, %v4893
        %v4904 = vsub.f32 %v4800, %v4893
        %v4905 = vsub.f32 %v4801, %v4893
        %v4906 = vsub.f32 %v4802, %v4893
        %v4907 = vsub.f32 %v4803, %v4893
        %v4908 = vsub.f32 %v4804, %v4893
        %v4909 = vsub.f32 %v4805, %v4893
        %v4910 = vsub.f32 %v4806, %v4893
        %v4911 = vsub.f32 %v4807, %v4893
        %v4912 = vsub.f32 %v4808, %v4893
        %v4913 = vsub.f32 %v4809, %v4893
        %v4914 = vsub.f32 %v4810, %v4893
        %v4915 = vsub.f32 %v4811, %v4893
        %v4916 = vsub.f32 %v4812, %v4893
        %v4917 = vsub.f32 %v4813, %v4893
        %v4918 = vsub.f32 %v4814, %v4893
        %v4919 = vsub.f32 %v4815, %v4893
        %v4920 = vsub.f32 %v4816, %v4893
        %v4921 = vsub.f32 %v4817, %v4893
        %v4922 = vsub.f32 %v4818, %v4893
        %v4923 = vsub.f32 %v4819, %v4893
        %v4924 = vsub.f32 %v4820, %v4893
        %v4925 = vsub.f32 %v4821, %v4893
        %v4926 = vmul.f32 %v4894, %v4894
        %v4927 = vmul.f32 %v4895, %v4895
        %v4928 = vmul.f32 %v4896, %v4896
        %v4929 = vmul.f32 %v4897, %v4897
        %v4930 = vmul.f32 %v4898, %v4898
        %v4931 = vmul.f32 %v4899, %v4899
        %v4932 = vmul.f32 %v4900, %v4900
        %v4933 = vmul.f32 %v4901, %v4901
        %v4934 = vmul.f32 %v4902, %v4902
        %v4935 = vmul.f32 %v4903, %v4903
        %v4936 = vmul.f32 %v4904, %v4904
        %v4937 = vmul.f32 %v4905, %v4905
        %v4938 = vmul.f32 %v4906, %v4906
        %v4939 = vmul.f32 %v4907, %v4907
        %v4940 = vmul.f32 %v4908, %v4908
        %v4941 = vmul.f32 %v4909, %v4909
        %v4942 = vmul.f32 %v4910, %v4910
        %v4943 = vmul.f32 %v4911, %v4911
        %v4944 = vmul.f32 %v4912, %v4912
        %v4945 = vmul.f32 %v4913, %v4913
        %v4946 = vmul.f32 %v4914, %v4914
        %v4947 = vmul.f32 %v4915, %v4915
        %v4948 = vmul.f32 %v4916, %v4916
        %v4949 = vmul.f32 %v4917, %v4917
        %v4950 = vmul.f32 %v4918, %v4918
        %v4951 = vmul.f32 %v4919, %v4919
        %v4952 = vmul.f32 %v4920, %v4920
        %v4953 = vmul.f32 %v4921, %v4921
        %v4954 = vmul.f32 %v4922, %v4922
        %v4955 = vmul.f32 %v4923, %v4923
        %v4956 = vmul.f32 %v4924, %v4924
        %v4957 = vmul.f32 %v4925, %v4925
        %v4958 = vsel %vm4822, %v4926, 0.0
        %v4959 = vsel %vm4822, %v4927, 0.0
        %v4960 = vadd.f32 %v4958, %v4959
        %v4961 = vsel %vm4822, %v4928, 0.0
        %v4962 = vadd.f32 %v4960, %v4961
        %v4963 = vsel %vm4822, %v4929, 0.0
        %v4964 = vadd.f32 %v4962, %v4963
        %v4965 = vsel %vm4822, %v4930, 0.0
        %v4966 = vadd.f32 %v4964, %v4965
        %v4967 = vsel %vm4822, %v4931, 0.0
        %v4968 = vadd.f32 %v4966, %v4967
        %v4969 = vsel %vm4822, %v4932, 0.0
        %v4970 = vadd.f32 %v4968, %v4969
        %v4971 = vsel %vm4822, %v4933, 0.0
        %v4972 = vadd.f32 %v4970, %v4971
        %v4973 = vsel %vm4822, %v4934, 0.0
        %v4974 = vadd.f32 %v4972, %v4973
        %v4975 = vsel %vm4822, %v4935, 0.0
        %v4976 = vadd.f32 %v4974, %v4975
        %v4977 = vsel %vm4822, %v4936, 0.0
        %v4978 = vadd.f32 %v4976, %v4977
        %v4979 = vsel %vm4822, %v4937, 0.0
        %v4980 = vadd.f32 %v4978, %v4979
        %v4981 = vsel %vm4822, %v4938, 0.0
        %v4982 = vadd.f32 %v4980, %v4981
        %v4983 = vsel %vm4822, %v4939, 0.0
        %v4984 = vadd.f32 %v4982, %v4983
        %v4985 = vsel %vm4822, %v4940, 0.0
        %v4986 = vadd.f32 %v4984, %v4985
        %v4987 = vsel %vm4822, %v4941, 0.0
        %v4988 = vadd.f32 %v4986, %v4987
        %v4989 = vsel %vm4822, %v4942, 0.0
        %v4990 = vadd.f32 %v4988, %v4989
        %v4991 = vsel %vm4822, %v4943, 0.0
        %v4992 = vadd.f32 %v4990, %v4991
        %v4993 = vsel %vm4822, %v4944, 0.0
        %v4994 = vadd.f32 %v4992, %v4993
        %v4995 = vsel %vm4822, %v4945, 0.0
        %v4996 = vadd.f32 %v4994, %v4995
        %v4997 = vsel %vm4822, %v4946, 0.0
        %v4998 = vadd.f32 %v4996, %v4997
        %v4999 = vsel %vm4822, %v4947, 0.0
        %v5000 = vadd.f32 %v4998, %v4999
        %v5001 = vsel %vm4822, %v4948, 0.0
        %v5002 = vadd.f32 %v5000, %v5001
        %v5003 = vsel %vm4822, %v4949, 0.0
        %v5004 = vadd.f32 %v5002, %v5003
        %v5005 = vsel %vm4822, %v4950, 0.0
        %v5006 = vadd.f32 %v5004, %v5005
        %v5007 = vsel %vm4822, %v4951, 0.0
        %v5008 = vadd.f32 %v5006, %v5007
        %v5009 = vsel %vm4822, %v4952, 0.0
        %v5010 = vadd.f32 %v5008, %v5009
        %v5011 = vsel %vm4822, %v4953, 0.0
        %v5012 = vadd.f32 %v5010, %v5011
        %v5013 = vsel %vm4822, %v4954, 0.0
        %v5014 = vadd.f32 %v5012, %v5013
        %v5015 = vsel %vm4822, %v4955, 0.0
        %v5016 = vadd.f32 %v5014, %v5015
        %v5017 = vsel %vm4822, %v4956, 0.0
        %v5018 = vadd.f32 %v5016, %v5017
        %v5019 = vsel %vm4822, %v4957, 0.0
        %v5020 = vadd.f32 %v5018, %v5019
        %v5021 = vrot.slane %v5020, 4
        %v5022 = vadd.f32 %v5020, %v5021
        %v5023 = vrot.slane %v5022, 2
        %v5024 = vadd.f32 %v5022, %v5023
        %v5025 = vrot.slane %v5024, 1
        %v5026 = vadd.f32 %v5024, %v5025
        %v5027 = vmul.f32 %v5026, %v4892
        %v5028 = vadd.f32 %v5027, 1e-05
        %v5029 = vrsqrt.pop %v5028
        %v5030 = vmul.f32 %v4894, %v5029
        %v5031 = vmul.f32 %v4895, %v5029
        %v5032 = vmul.f32 %v4896, %v5029
        %v5033 = vmul.f32 %v4897, %v5029
        %v5034 = vmul.f32 %v4898, %v5029
        %v5035 = vmul.f32 %v4899, %v5029
        %v5036 = vmul.f32 %v4900, %v5029
        %v5037 = vmul.f32 %v4901, %v5029
        %v5038 = vmul.f32 %v4902, %v5029
        %v5039 = vmul.f32 %v4903, %v5029
        %v5040 = vmul.f32 %v4904, %v5029
        %v5041 = vmul.f32 %v4905, %v5029
        %v5042 = vmul.f32 %v4906, %v5029
        %v5043 = vmul.f32 %v4907, %v5029
        %v5044 = vmul.f32 %v4908, %v5029
        %v5045 = vmul.f32 %v4909, %v5029
        %v5046 = vmul.f32 %v4910, %v5029
        %v5047 = vmul.f32 %v4911, %v5029
        %v5048 = vmul.f32 %v4912, %v5029
        %v5049 = vmul.f32 %v4913, %v5029
        %v5050 = vmul.f32 %v4914, %v5029
        %v5051 = vmul.f32 %v4915, %v5029
        %v5052 = vmul.f32 %v4916, %v5029
        %v5053 = vmul.f32 %v4917, %v5029
        %v5054 = vmul.f32 %v4918, %v5029
        %v5055 = vmul.f32 %v4919, %v5029
        %v5056 = vmul.f32 %v4920, %v5029
        %v5057 = vmul.f32 %v4921, %v5029
        %v5058 = vmul.f32 %v4922, %v5029
        %v5059 = vmul.f32 %v4923, %v5029
        %v5060 = vmul.f32 %v4924, %v5029
        %v5061 = vmul.f32 %v4925, %v5029
        %v5062 = vmax.f32 %v5030, 0.0
        %v5063 = vmax.f32 %v5031, 0.0
        %v5064 = vmax.f32 %v5032, 0.0
        %v5065 = vmax.f32 %v5033, 0.0
        %v5066 = vmax.f32 %v5034, 0.0
        %v5067 = vmax.f32 %v5035, 0.0
        %v5068 = vmax.f32 %v5036, 0.0
        %v5069 = vmax.f32 %v5037, 0.0
        %v5070 = vmax.f32 %v5038, 0.0
        %v5071 = vmax.f32 %v5039, 0.0
        %v5072 = vmax.f32 %v5040, 0.0
        %v5073 = vmax.f32 %v5041, 0.0
        %v5074 = vmax.f32 %v5042, 0.0
        %v5075 = vmax.f32 %v5043, 0.0
        %v5076 = vmax.f32 %v5044, 0.0
        %v5077 = vmax.f32 %v5045, 0.0
        %v5078 = vmax.f32 %v5046, 0.0
        %v5079 = vmax.f32 %v5047, 0.0
        %v5080 = vmax.f32 %v5048, 0.0
        %v5081 = vmax.f32 %v5049, 0.0
        %v5082 = vmax.f32 %v5050, 0.0
        %v5083 = vmax.f32 %v5051, 0.0
        %v5084 = vmax.f32 %v5052, 0.0
        %v5085 = vmax.f32 %v5053, 0.0
        %v5086 = vmax.f32 %v5054, 0.0
        %v5087 = vmax.f32 %v5055, 0.0
        %v5088 = vmax.f32 %v5056, 0.0
        %v5089 = vmax.f32 %v5057, 0.0
        %v5090 = vmax.f32 %v5058, 0.0
        %v5091 = vmax.f32 %v5059, 0.0
        %v5092 = vmax.f32 %v5060, 0.0
        %v5093 = vmax.f32 %v5061, 0.0
        %5094 = vst.msk [vmem:[#allocation2] sm:$0xff] %vm4822, 0.0
        %5095 = vst.msk [vmem:[#allocation2 + $0x8] sm:$0xff] %vm4822, 0.0
        %vm5096 = vcmask 517120
        %5097 = vst.msk [vmem:[#allocation2 + $0x10] sm:$0x3] %vm5096, 0.0
        %5098 = vst.msk [vmem:[#allocation2 + $0x18] sm:$0xff] %vm4822, 0.0
        %5099 = vst.msk [vmem:[#allocation2 + $0x20] sm:$0xff] %vm4822, 0.0
        %5100 = vst.msk [vmem:[#allocation2 + $0x28] sm:$0x3] %vm5096, 0.0
        %5101 = vst.msk [vmem:[#allocation2 + $0x30] sm:$0xff] %vm4822, 0.0
        %5102 = vst.msk [vmem:[#allocation2 + $0x38] sm:$0xff] %vm4822, 0.0
        %5103 = vst.msk [vmem:[#allocation2 + $0x40] sm:$0x3] %vm5096, 0.0
        %5104 = vst.msk [vmem:[#allocation2 + $0x48] sm:$0xff] %vm4822, 0.0
        %5105 = vst.msk [vmem:[#allocation2 + $0x50] sm:$0xff] %vm4822, 0.0
        %5106 = vst.msk [vmem:[#allocation2 + $0x58] sm:$0x3] %vm5096, 0.0
        %5107 = vst.msk [vmem:[#allocation2 + $0x60] sm:$0xff] %vm4822, 0.0
        %5108 = vst.msk [vmem:[#allocation2 + $0x68] sm:$0xff] %vm4822, 0.0
        %5109 = vst.msk [vmem:[#allocation2 + $0x70] sm:$0x3] %vm5096, 0.0
        %5110 = vst.msk [vmem:[#allocation2 + $0x78] sm:$0xff] %vm4822, 0.0
        %5111 = vst.msk [vmem:[#allocation2 + $0x80] sm:$0xff] %vm4822, 0.0
        %5112 = vst.msk [vmem:[#allocation2 + $0x88] sm:$0x3] %vm5096, 0.0
        %5113 = vst.msk [vmem:[#allocation2 + $0x90] sm:$0xff] %vm4822, 0.0
        %5114 = vst.msk [vmem:[#allocation2 + $0x98] sm:$0xff] %vm4822, 0.0
        %5115 = vst.msk [vmem:[#allocation2 + $0xa0] sm:$0x3] %vm5096, 0.0
        %5116 = vst.msk [vmem:[#allocation2 + $0xa8] sm:$0xff] %vm4822, 0.0
        %5117 = vst.msk [vmem:[#allocation2 + $0xb0] sm:$0xff] %vm4822, 0.0
        %5118 = vst.msk [vmem:[#allocation2 + $0xb8] sm:$0x3] %vm5096, 0.0
        %5119 = vst.msk [vmem:[#allocation2 + $0xc0] sm:$0xff] %vm4822, 0.0
        %5120 = vst.msk [vmem:[#allocation2 + $0xc8] sm:$0xff] %vm4822, 0.0
        %5121 = vst.msk [vmem:[#allocation2 + $0xd0] sm:$0x3] %vm5096, 0.0
        %5122 = vst.msk [vmem:[#allocation2 + $0xd8] sm:$0xff] %vm4822, 0.0
        %5123 = vst.msk [vmem:[#allocation2 + $0xe0] sm:$0xff] %vm4822, 0.0
        %5124 = vst.msk [vmem:[#allocation2 + $0xe8] sm:$0x3] %vm5096, 0.0
        %5125 = vst.msk [vmem:[#allocation2 + $0xf0] sm:$0xff] %vm4822, 0.0
        %5126 = vst.msk [vmem:[#allocation2 + $0xf8] sm:$0xff] %vm4822, 0.0
        %5127 = vst.msk [vmem:[#allocation2 + $0x100] sm:$0x3] %vm5096, 0.0
        %5128 = vst.msk [vmem:[#allocation2 + $0x108] sm:$0xff] %vm4822, 0.0
        %5129 = vst.msk [vmem:[#allocation2 + $0x110] sm:$0xff] %vm4822, 0.0
        %5130 = vst.msk [vmem:[#allocation2 + $0x118] sm:$0x3] %vm5096, 0.0
        %5131 = vst.msk [vmem:[#allocation2 + $0x120] sm:$0xff] %vm4822, 0.0
        %5132 = vst.msk [vmem:[#allocation2 + $0x128] sm:$0xff] %vm4822, 0.0
        %5133 = vst.msk [vmem:[#allocation2 + $0x130] sm:$0x3] %vm5096, 0.0
        %5134 = vst.msk [vmem:[#allocation2 + $0x138] sm:$0xff] %vm4822, 0.0
        %5135 = vst.msk [vmem:[#allocation2 + $0x140] sm:$0xff] %vm4822, 0.0
        %5136 = vst.msk [vmem:[#allocation2 + $0x148] sm:$0x3] %vm5096, 0.0
        %5137 = vst.msk [vmem:[#allocation2 + $0x150] sm:$0xff] %vm4822, 0.0
        %5138 = vst.msk [vmem:[#allocation2 + $0x158] sm:$0xff] %vm4822, 0.0
        %5139 = vst.msk [vmem:[#allocation2 + $0x160] sm:$0x3] %vm5096, 0.0
        %5140 = vst.msk [vmem:[#allocation2 + $0x168] sm:$0xff] %vm4822, 0.0
        %5141 = vst.msk [vmem:[#allocation2 + $0x170] sm:$0xff] %vm4822, 0.0
        %5142 = vst.msk [vmem:[#allocation2 + $0x178] sm:$0x3] %vm5096, 0.0
        %5143 = vst.msk [vmem:[#allocation2 + $0x180] sm:$0xff] %vm4822, 0.0
        %5144 = vst.msk [vmem:[#allocation2 + $0x188] sm:$0xff] %vm4822, 0.0
        %5145 = vst.msk [vmem:[#allocation2 + $0x190] sm:$0x3] %vm5096, 0.0
        %5146 = vst.msk [vmem:[#allocation2 + $0x198] sm:$0xff] %vm4822, 0.0
        %5147 = vst.msk [vmem:[#allocation2 + $0x1a0] sm:$0xff] %vm4822, 0.0
        %5148 = vst.msk [vmem:[#allocation2 + $0x1a8] sm:$0x3] %vm5096, 0.0
        %s5149 = scalar_lea.vmem [#allocation2], 24
        %5150 = vst.msk [vmem:[%s5149 + $0x1] sm:$0xff] %vm4822, %v5062
        %5151 = vst.msk [vmem:[%s5149 + $0x9] sm:$0xff] %vm4822, %v5063
        %5152 = vst.msk [vmem:[%s5149 + $0x19] sm:$0xff] %vm4822, %v5064
        %5153 = vst.msk [vmem:[%s5149 + $0x21] sm:$0xff] %vm4822, %v5065
        %5154 = vst.msk [vmem:[%s5149 + $0x31] sm:$0xff] %vm4822, %v5066
        %5155 = vst.msk [vmem:[%s5149 + $0x39] sm:$0xff] %vm4822, %v5067
        %5156 = vst.msk [vmem:[%s5149 + $0x49] sm:$0xff] %vm4822, %v5068
        %5157 = vst.msk [vmem:[%s5149 + $0x51] sm:$0xff] %vm4822, %v5069
        %5158 = vst.msk [vmem:[%s5149 + $0x61] sm:$0xff] %vm4822, %v5070
        %5159 = vst.msk [vmem:[%s5149 + $0x69] sm:$0xff] %vm4822, %v5071
        %5160 = vst.msk [vmem:[%s5149 + $0x79] sm:$0xff] %vm4822, %v5072
        %5161 = vst.msk [vmem:[%s5149 + $0x81] sm:$0xff] %vm4822, %v5073
        %5162 = vst.msk [vmem:[%s5149 + $0x91] sm:$0xff] %vm4822, %v5074
        %5163 = vst.msk [vmem:[%s5149 + $0x99] sm:$0xff] %vm4822, %v5075
        %5164 = vst.msk [vmem:[%s5149 + $0xa9] sm:$0xff] %vm4822, %v5076
        %5165 = vst.msk [vmem:[%s5149 + $0xb1] sm:$0xff] %vm4822, %v5077
        %5166 = vst.msk [vmem:[%s5149 + $0xc1] sm:$0xff] %vm4822, %v5078
        %5167 = vst.msk [vmem:[%s5149 + $0xc9] sm:$0xff] %vm4822, %v5079
        %5168 = vst.msk [vmem:[%s5149 + $0xd9] sm:$0xff] %vm4822, %v5080
        %5169 = vst.msk [vmem:[%s5149 + $0xe1] sm:$0xff] %vm4822, %v5081
        %5170 = vst.msk [vmem:[%s5149 + $0xf1] sm:$0xff] %vm4822, %v5082
        %5171 = vst.msk [vmem:[%s5149 + $0xf9] sm:$0xff] %vm4822, %v5083
        %5172 = vst.msk [vmem:[%s5149 + $0x109] sm:$0xff] %vm4822, %v5084
        %5173 = vst.msk [vmem:[%s5149 + $0x111] sm:$0xff] %vm4822, %v5085
        %5174 = vst.msk [vmem:[%s5149 + $0x121] sm:$0xff] %vm4822, %v5086
        %5175 = vst.msk [vmem:[%s5149 + $0x129] sm:$0xff] %vm4822, %v5087
        %5176 = vst.msk [vmem:[%s5149 + $0x139] sm:$0xff] %vm4822, %v5088
        %5177 = vst.msk [vmem:[%s5149 + $0x141] sm:$0xff] %vm4822, %v5089
        %5178 = vst.msk [vmem:[%s5149 + $0x151] sm:$0xff] %vm4822, %v5090
        %5179 = vst.msk [vmem:[%s5149 + $0x159] sm:$0xff] %vm4822, %v5091
        %5180 = vst.msk [vmem:[%s5149 + $0x169] sm:$0xff] %vm4822, %v5092
        %5181 = vst.msk [vmem:[%s5149 + $0x171] sm:$0xff] %vm4822, %v5093
        %v5182 = vld [vmem:[#allocation2] sm:$0xff]
        %v5183 = vld [vmem:[#allocation2 + $0x8] sm:$0xff]
        %v5184 = vld [vmem:[#allocation2 + $0x18] sm:$0xff]
        %v5185 = vld [vmem:[#allocation2 + $0x20] sm:$0xff]
        %v5186 = vld [vmem:[#allocation2 + $0x30] sm:$0xff]
        %v5187 = vld [vmem:[#allocation2 + $0x38] sm:$0xff]
        %v5188 = vld [vmem:[#allocation2 + $0x48] sm:$0xff]
        %v5189 = vld [vmem:[#allocation2 + $0x50] sm:$0xff]
        %v5190 = vld [vmem:[#allocation2 + $0x60] sm:$0xff]
        %v5191 = vld [vmem:[#allocation2 + $0x68] sm:$0xff]
        %v5192 = vld [vmem:[#allocation2 + $0x78] sm:$0xff]
        %v5193 = vld [vmem:[#allocation2 + $0x80] sm:$0xff]
        %v5194 = vld [vmem:[#allocation2 + $0x90] sm:$0xff]
        %v5195 = vld [vmem:[#allocation2 + $0x98] sm:$0xff]
        %v5196 = vld [vmem:[#allocation2 + $0xa8] sm:$0xff]
        %v5197 = vld [vmem:[#allocation2 + $0xb0] sm:$0xff]
        %v5198 = vld [vmem:[#allocation2 + $0xc0] sm:$0xff]
        %v5199 = vld [vmem:[#allocation2 + $0xc8] sm:$0xff]
        %v5200 = vld [vmem:[#allocation2 + $0xd8] sm:$0xff]
        %v5201 = vld [vmem:[#allocation2 + $0xe0] sm:$0xff]
        %v5202 = vld [vmem:[#allocation2 + $0xf0] sm:$0xff]
        %v5203 = vld [vmem:[#allocation2 + $0xf8] sm:$0xff]
        %v5204 = vld [vmem:[#allocation2 + $0x108] sm:$0xff]
        %v5205 = vld [vmem:[#allocation2 + $0x110] sm:$0xff]
        %v5206 = vld [vmem:[#allocation2 + $0x120] sm:$0xff]
        %v5207 = vld [vmem:[#allocation2 + $0x128] sm:$0xff]
        %v5208 = vld [vmem:[#allocation2 + $0x138] sm:$0xff]
        %v5209 = vld [vmem:[#allocation2 + $0x140] sm:$0xff]
        %v5210 = vld [vmem:[#allocation2 + $0x150] sm:$0xff]
        %v5211 = vld [vmem:[#allocation2 + $0x158] sm:$0xff]
        %v5212 = vld [vmem:[#allocation2 + $0x168] sm:$0xff]
        %v5213 = vld [vmem:[#allocation2 + $0x170] sm:$0xff]
        %v5214 = vpack.c.bf16 %v5183, %v5182
        %v5215 = vpack.c.bf16 %v5185, %v5184
        %v5216 = vpack.c.bf16 %v5187, %v5186
        %v5217 = vpack.c.bf16 %v5189, %v5188
        %v5218 = vpack.c.bf16 %v5191, %v5190
        %v5219 = vpack.c.bf16 %v5193, %v5192
        %v5220 = vpack.c.bf16 %v5195, %v5194
        %v5221 = vpack.c.bf16 %v5197, %v5196
        %v5222 = vpack.c.bf16 %v5199, %v5198
        %v5223 = vpack.c.bf16 %v5201, %v5200
        %v5224 = vpack.c.bf16 %v5203, %v5202
        %v5225 = vpack.c.bf16 %v5205, %v5204
        %v5226 = vpack.c.bf16 %v5207, %v5206
        %v5227 = vpack.c.bf16 %v5209, %v5208
        %v5228 = vpack.c.bf16 %v5211, %v5210
        %v5229 = vpack.c.bf16 %v5213, %v5212
        %v5230 = vld [vmem:[%s3] sm:$0xf]
        %v5231 = vld [vmem:[%s3 + $0x4] sm:$0xf]
        %v5232 = vld [vmem:[%s3 + $0x8] sm:$0xf]
        %v5233 = vld [vmem:[%s3 + $0xc] sm:$0xf]
        %v5234 = vld [vmem:[%s3 + $0x10] sm:$0xf]
        %v5235 = vld [vmem:[%s3 + $0x14] sm:$0xf]
        %v5236 = vld [vmem:[%s3 + $0x18] sm:$0xf]
        %v5237 = vld [vmem:[%s3 + $0x1c] sm:$0xf]
        %v5238 = vld [vmem:[#allocation2 + $0x1] sm:$0xff]
        %v5239 = vld [vmem:[#allocation2 + $0x9] sm:$0xff]
        %v5240 = vld [vmem:[#allocation2 + $0x19] sm:$0xff]
        %v5241 = vld [vmem:[#allocation2 + $0x21] sm:$0xff]
        %v5242 = vld [vmem:[#allocation2 + $0x31] sm:$0xff]
        %v5243 = vld [vmem:[#allocation2 + $0x39] sm:$0xff]
        %v5244 = vld [vmem:[#allocation2 + $0x49] sm:$0xff]
        %v5245 = vld [vmem:[#allocation2 + $0x51] sm:$0xff]
        %v5246 = vld [vmem:[#allocation2 + $0x61] sm:$0xff]
        %v5247 = vld [vmem:[#allocation2 + $0x69] sm:$0xff]
        %v5248 = vld [vmem:[#allocation2 + $0x79] sm:$0xff]
        %v5249 = vld [vmem:[#allocation2 + $0x81] sm:$0xff]
        %v5250 = vld [vmem:[#allocation2 + $0x91] sm:$0xff]
        %v5251 = vld [vmem:[#allocation2 + $0x99] sm:$0xff]
        %v5252 = vld [vmem:[#allocation2 + $0xa9] sm:$0xff]
        %v5253 = vld [vmem:[#allocation2 + $0xb1] sm:$0xff]
        %v5254 = vld [vmem:[#allocation2 + $0xc1] sm:$0xff]
        %v5255 = vld [vmem:[#allocation2 + $0xc9] sm:$0xff]
        %v5256 = vld [vmem:[#allocation2 + $0xd9] sm:$0xff]
        %v5257 = vld [vmem:[#allocation2 + $0xe1] sm:$0xff]
        %v5258 = vld [vmem:[#allocation2 + $0xf1] sm:$0xff]
        %v5259 = vld [vmem:[#allocation2 + $0xf9] sm:$0xff]
        %v5260 = vld [vmem:[#allocation2 + $0x109] sm:$0xff]
        %v5261 = vld [vmem:[#allocation2 + $0x111] sm:$0xff]
        %v5262 = vld [vmem:[#allocation2 + $0x121] sm:$0xff]
        %v5263 = vld [vmem:[#allocation2 + $0x129] sm:$0xff]
        %v5264 = vld [vmem:[#allocation2 + $0x139] sm:$0xff]
        %v5265 = vld [vmem:[#allocation2 + $0x141] sm:$0xff]
        %v5266 = vld [vmem:[#allocation2 + $0x151] sm:$0xff]
        %v5267 = vld [vmem:[#allocation2 + $0x159] sm:$0xff]
        %v5268 = vld [vmem:[#allocation2 + $0x169] sm:$0xff]
        %v5269 = vld [vmem:[#allocation2 + $0x171] sm:$0xff]
        %v5270 = vpack.c.bf16 %v5239, %v5238
        %v5271 = vpack.c.bf16 %v5241, %v5240
        %v5272 = vpack.c.bf16 %v5243, %v5242
        %v5273 = vpack.c.bf16 %v5245, %v5244
        %v5274 = vpack.c.bf16 %v5247, %v5246
        %v5275 = vpack.c.bf16 %v5249, %v5248
        %v5276 = vpack.c.bf16 %v5251, %v5250
        %v5277 = vpack.c.bf16 %v5253, %v5252
        %v5278 = vpack.c.bf16 %v5255, %v5254
        %v5279 = vpack.c.bf16 %v5257, %v5256
        %v5280 = vpack.c.bf16 %v5259, %v5258
        %v5281 = vpack.c.bf16 %v5261, %v5260
        %v5282 = vpack.c.bf16 %v5263, %v5262
        %v5283 = vpack.c.bf16 %v5265, %v5264
        %v5284 = vpack.c.bf16 %v5267, %v5266
        %v5285 = vpack.c.bf16 %v5269, %v5268
        %s5286 = scalar_lea.vmem %s3, 32
        %v5287 = vld [vmem:[%s5286] sm:$0xf]
        %v5288 = vld [vmem:[%s5286 + $0x4] sm:$0xf]
        %v5289 = vld [vmem:[%s5286 + $0x8] sm:$0xf]
        %v5290 = vld [vmem:[%s5286 + $0xc] sm:$0xf]
        %v5291 = vld [vmem:[%s5286 + $0x10] sm:$0xf]
        %v5292 = vld [vmem:[%s5286 + $0x14] sm:$0xf]
        %v5293 = vld [vmem:[%s5286 + $0x18] sm:$0xf]
        %v5294 = vld [vmem:[%s5286 + $0x1c] sm:$0xf]
        %v5303 = vunpack.c.l.b16 %v5287
        %v5304 = vunpack.c.l.b16 %v5288
        %v5305 = vunpack.c.l.b16 %v5289
        %v5306 = vunpack.c.l.b16 %v5290
        %v5307 = vunpack.c.l.b16 %v5291
        %v5308 = vunpack.c.l.b16 %v5292
        %v5309 = vunpack.c.l.b16 %v5293
        %v5310 = vunpack.c.l.b16 %v5294
        %v5311 = vpack.c.b16 %v5304, %v5303
        %v5312 = vpack.c.b16 %v5306, %v5305
        %v5313 = vpack.c.b16 %v5308, %v5307
        %v5314 = vpack.c.b16 %v5310, %v5309
        %v5320 = vsel %vm4822, %v5270, 0
        %v5323 = vsel %vm4822, %v5271, 0
        %v5326 = vsel %vm4822, %v5272, 0
        %v5329 = vsel %vm4822, %v5273, 0
        %v5332 = vsel %vm4822, %v5274, 0
        %v5335 = vsel %vm4822, %v5275, 0
        %v5338 = vsel %vm4822, %v5276, 0
        %v5341 = vsel %vm4822, %v5277, 0
        %v5344 = vsel %vm4822, %v5278, 0
        %v5347 = vsel %vm4822, %v5279, 0
        %v5350 = vsel %vm4822, %v5280, 0
        %v5353 = vsel %vm4822, %v5281, 0
        %v5356 = vsel %vm4822, %v5282, 0
        %v5359 = vsel %vm4822, %v5283, 0
        %v5362 = vsel %vm4822, %v5284, 0
        %v5365 = vsel %vm4822, %v5285, 0
        %5367 = vmatprep.subr.bf16.mxu0 0
        %5368 = vmatpush1.bf16.msra.mxu0 %v5311
        %5369 = vmatprep.subr.bf16.mxu0 0
        %5370 = vmatpush1.bf16.msra.mxu0 %v5312
        %5371 = vmatprep.subr.bf16.mxu0 0
        %5372 = vmatpush1.bf16.msra.mxu0 %v5313
        %5373 = vmatprep.subr.bf16.mxu0 0
        %5374 = vmatpush1.bf16.msra.mxu0 %v5314
        %5375 = vmatprep.subr.bf16.mxu0 0
        %5376 = vmatpush1.bf16.msra.mxu0 0
        %5377 = vmatprep.subr.bf16.mxu0 0
        %5378 = vmatpush1.bf16.msra.mxu0 0
        %5379 = vmatprep.subr.bf16.mxu0 0
        %5380 = vmatpush1.bf16.msra.mxu0 0
        %5381 = vmatprep.subr.bf16.mxu0 0
        %5382 = vmatpush1.bf16.msra.mxu0 0
        %5383 = vmatprep.subr.bf16.mxu0 0
        %5384 = vmatpush1.bf16.msra.mxu0 0
        %5385 = vmatprep.subr.bf16.mxu0 0
        %5386 = vmatpush1.bf16.msra.mxu0 0
        %5387 = vmatprep.subr.bf16.mxu0 0
        %5388 = vmatpush1.bf16.msra.mxu0 0
        %5389 = vmatprep.subr.bf16.mxu0 0
        %5390 = vmatpush1.bf16.msra.mxu0 0
        %5391 = vmatprep.subr.bf16.mxu0 0
        %5392 = vmatpush1.bf16.msra.mxu0 0
        %5393 = vmatprep.subr.bf16.mxu0 0
        %5394 = vmatpush1.bf16.msra.mxu0 0
        %5395 = vmatprep.subr.bf16.mxu0 0
        %5396 = vmatpush1.bf16.msra.mxu0 0
        %5397 = vmatprep.subr.bf16.mxu0 0
        %5398 = vmatpush1.bf16.msra.mxu0 0
        %5399 = vmatprep.mubr.bf16.mxu0 0
        %5400 = vmatmul.mubr.bf16.gmra.mrb[0].mxu0 %v5320
        %v5401 = vpop.f32.mrb[0].mxu0
        %v5402 = vadd.f32 0.0, %v5401
        %v5403 = vpop.f32.mrb[0].mxu0
        %v5404 = vpop.f32.mrb[0].mxu0
        %v5405 = vadd.f32 0.0, %v5404
        %v5406 = vpop.f32.mrb[0].mxu0
        %5407 = vmatprep.mubr.bf16.mxu0 0
        %5408 = vmatmul.mubr.bf16.gmra.mrb[0].mxu0 %v5323
        %v5409 = vpop.f32.mrb[0].mxu0
        %v5410 = vadd.f32 0.0, %v5409
        %v5411 = vpop.f32.mrb[0].mxu0
        %v5412 = vpop.f32.mrb[0].mxu0
        %v5413 = vadd.f32 0.0, %v5412
        %v5414 = vpop.f32.mrb[0].mxu0
        %5415 = vmatprep.mubr.bf16.mxu0 0
        %5416 = vmatmul.mubr.bf16.gmra.mrb[0].mxu0 %v5326
        %v5417 = vpop.f32.mrb[0].mxu0
        %v5418 = vadd.f32 0.0, %v5417
        %v5419 = vpop.f32.mrb[0].mxu0
        %v5420 = vpop.f32.mrb[0].mxu0
        %v5421 = vadd.f32 0.0, %v5420
        %v5422 = vpop.f32.mrb[0].mxu0
        %5423 = vmatprep.mubr.bf16.mxu0 0
        %5424 = vmatmul.mubr.bf16.gmra.mrb[0].mxu0 %v5329
        %v5425 = vpop.f32.mrb[0].mxu0
        %v5426 = vadd.f32 0.0, %v5425
        %v5427 = vpop.f32.mrb[0].mxu0
        %v5428 = vpop.f32.mrb[0].mxu0
        %v5429 = vadd.f32 0.0, %v5428
        %v5430 = vpop.f32.mrb[0].mxu0
        %5431 = vmatprep.mubr.bf16.mxu0 0
        %5432 = vmatmul.mubr.bf16.gmra.mrb[0].mxu0 %v5332
        %v5433 = vpop.f32.mrb[0].mxu0
        %v5434 = vadd.f32 0.0, %v5433
        %v5435 = vpop.f32.mrb[0].mxu0
        %v5436 = vpop.f32.mrb[0].mxu0
        %v5437 = vadd.f32 0.0, %v5436
        %v5438 = vpop.f32.mrb[0].mxu0
        %5439 = vmatprep.mubr.bf16.mxu0 0
        %5440 = vmatmul.mubr.bf16.gmra.mrb[0].mxu0 %v5335
        %v5441 = vpop.f32.mrb[0].mxu0
        %v5442 = vadd.f32 0.0, %v5441
        %v5443 = vpop.f32.mrb[0].mxu0
        %v5444 = vpop.f32.mrb[0].mxu0
        %v5445 = vadd.f32 0.0, %v5444
        %v5446 = vpop.f32.mrb[0].mxu0
        %5447 = vmatprep.mubr.bf16.mxu0 0
        %5448 = vmatmul.mubr.bf16.gmra.mrb[0].mxu0 %v5338
        %v5449 = vpop.f32.mrb[0].mxu0
        %v5450 = vadd.f32 0.0, %v5449
        %v5451 = vpop.f32.mrb[0].mxu0
        %v5452 = vpop.f32.mrb[0].mxu0
        %v5453 = vadd.f32 0.0, %v5452
        %v5454 = vpop.f32.mrb[0].mxu0
        %5455 = vmatprep.mubr.bf16.mxu0 0
        %5456 = vmatmul.mubr.bf16.gmra.mrb[0].mxu0 %v5341
        %v5457 = vpop.f32.mrb[0].mxu0
        %v5458 = vadd.f32 0.0, %v5457
        %v5459 = vpop.f32.mrb[0].mxu0
        %v5460 = vpop.f32.mrb[0].mxu0
        %v5461 = vadd.f32 0.0, %v5460
        %v5462 = vpop.f32.mrb[0].mxu0
        %5463 = vmatprep.mubr.bf16.mxu0 0
        %5464 = vmatmul.mubr.bf16.gmra.mrb[0].mxu0 %v5344
        %v5465 = vpop.f32.mrb[0].mxu0
        %v5466 = vadd.f32 0.0, %v5465
        %v5467 = vpop.f32.mrb[0].mxu0
        %v5468 = vpop.f32.mrb[0].mxu0
        %v5469 = vadd.f32 0.0, %v5468
        %v5470 = vpop.f32.mrb[0].mxu0
        %5471 = vmatprep.mubr.bf16.mxu0 0
        %5472 = vmatmul.mubr.bf16.gmra.mrb[0].mxu0 %v5347
        %v5473 = vpop.f32.mrb[0].mxu0
        %v5474 = vadd.f32 0.0, %v5473
        %v5475 = vpop.f32.mrb[0].mxu0
        %v5476 = vpop.f32.mrb[0].mxu0
        %v5477 = vadd.f32 0.0, %v5476
        %v5478 = vpop.f32.mrb[0].mxu0
        %5479 = vmatprep.mubr.bf16.mxu0 0
        %5480 = vmatmul.mubr.bf16.gmra.mrb[0].mxu0 %v5350
        %v5481 = vpop.f32.mrb[0].mxu0
        %v5482 = vadd.f32 0.0, %v5481
        %v5483 = vpop.f32.mrb[0].mxu0
        %v5484 = vpop.f32.mrb[0].mxu0
        %v5485 = vadd.f32 0.0, %v5484
        %v5486 = vpop.f32.mrb[0].mxu0
        %5487 = vmatprep.mubr.bf16.mxu0 0
        %5488 = vmatmul.mubr.bf16.gmra.mrb[0].mxu0 %v5353
        %v5489 = vpop.f32.mrb[0].mxu0
        %v5490 = vadd.f32 0.0, %v5489
        %v5491 = vpop.f32.mrb[0].mxu0
        %v5492 = vpop.f32.mrb[0].mxu0
        %v5493 = vadd.f32 0.0, %v5492
        %v5494 = vpop.f32.mrb[0].mxu0
        %5495 = vmatprep.mubr.bf16.mxu0 0
        %5496 = vmatmul.mubr.bf16.gmra.mrb[0].mxu0 %v5356
        %v5497 = vpop.f32.mrb[0].mxu0
        %v5498 = vadd.f32 0.0, %v5497
        %v5499 = vpop.f32.mrb[0].mxu0
        %v5500 = vpop.f32.mrb[0].mxu0
        %v5501 = vadd.f32 0.0, %v5500
        %v5502 = vpop.f32.mrb[0].mxu0
        %5503 = vmatprep.mubr.bf16.mxu0 0
        %5504 = vmatmul.mubr.bf16.gmra.mrb[0].mxu0 %v5359
        %v5505 = vpop.f32.mrb[0].mxu0
        %v5506 = vadd.f32 0.0, %v5505
        %v5507 = vpop.f32.mrb[0].mxu0
        %v5508 = vpop.f32.mrb[0].mxu0
        %v5509 = vadd.f32 0.0, %v5508
        %v5510 = vpop.f32.mrb[0].mxu0
        %5511 = vmatprep.mubr.bf16.mxu0 0
        %5512 = vmatmul.mubr.bf16.gmra.mrb[0].mxu0 %v5362
        %v5513 = vpop.f32.mrb[0].mxu0
        %v5514 = vadd.f32 0.0, %v5513
        %v5515 = vpop.f32.mrb[0].mxu0
        %v5516 = vpop.f32.mrb[0].mxu0
        %v5517 = vadd.f32 0.0, %v5516
        %v5518 = vpop.f32.mrb[0].mxu0
        %5519 = vmatprep.mubr.bf16.mxu0 0
        %5520 = vmatmul.mubr.bf16.gmra.mrb[0].mxu0 %v5365
        %v5521 = vpop.f32.mrb[0].mxu0
        %v5522 = vadd.f32 0.0, %v5521
        %v5523 = vpop.f32.mrb[0].mxu0
        %v5524 = vpop.f32.mrb[0].mxu0
        %v5525 = vadd.f32 0.0, %v5524
        %v5526 = vpop.f32.mrb[0].mxu0
        %5527 = vdwg.mxu0
        %v5536 = vunpack.c.l.b16 %v5230
        %v5537 = vunpack.c.l.b16 %v5231
        %v5538 = vunpack.c.l.b16 %v5232
        %v5539 = vunpack.c.l.b16 %v5233
        %v5540 = vunpack.c.l.b16 %v5234
        %v5541 = vunpack.c.l.b16 %v5235
        %v5542 = vunpack.c.l.b16 %v5236
        %v5543 = vunpack.c.l.b16 %v5237
        %v5544 = vpack.c.b16 %v5537, %v5536
        %v5545 = vpack.c.b16 %v5539, %v5538
        %v5546 = vpack.c.b16 %v5541, %v5540
        %v5547 = vpack.c.b16 %v5543, %v5542
        %v5553 = vsel %vm4822, %v5214, 0
        %v5556 = vsel %vm4822, %v5215, 0
        %v5559 = vsel %vm4822, %v5216, 0
        %v5562 = vsel %vm4822, %v5217, 0
        %v5565 = vsel %vm4822, %v5218, 0
        %v5568 = vsel %vm4822, %v5219, 0
        %v5571 = vsel %vm4822, %v5220, 0
        %v5574 = vsel %vm4822, %v5221, 0
        %v5577 = vsel %vm4822, %v5222, 0
        %v5580 = vsel %vm4822, %v5223, 0
        %v5583 = vsel %vm4822, %v5224, 0
        %v5586 = vsel %vm4822, %v5225, 0
        %v5589 = vsel %vm4822, %v5226, 0
        %v5592 = vsel %vm4822, %v5227, 0
        %v5595 = vsel %vm4822, %v5228, 0
        %v5598 = vsel %vm4822, %v5229, 0
        %5600 = vmatprep.subr.bf16.mxu0 0
        %5601 = vmatpush1.bf16.msra.mxu0 %v5544
        %5602 = vmatprep.subr.bf16.mxu0 0
        %5603 = vmatpush1.bf16.msra.mxu0 %v5545
        %5604 = vmatprep.subr.bf16.mxu0 0
        %5605 = vmatpush1.bf16.msra.mxu0 %v5546
        %5606 = vmatprep.subr.bf16.mxu0 0
        %5607 = vmatpush1.bf16.msra.mxu0 %v5547
        %5608 = vmatprep.subr.bf16.mxu0 0
        %5609 = vmatpush1.bf16.msra.mxu0 0
        %5610 = vmatprep.subr.bf16.mxu0 0
        %5611 = vmatpush1.bf16.msra.mxu0 0
        %5612 = vmatprep.subr.bf16.mxu0 0
        %5613 = vmatpush1.bf16.msra.mxu0 0
        %5614 = vmatprep.subr.bf16.mxu0 0
        %5615 = vmatpush1.bf16.msra.mxu0 0
        %5616 = vmatprep.subr.bf16.mxu0 0
        %5617 = vmatpush1.bf16.msra.mxu0 0
        %5618 = vmatprep.subr.bf16.mxu0 0
        %5619 = vmatpush1.bf16.msra.mxu0 0
        %5620 = vmatprep.subr.bf16.mxu0 0
        %5621 = vmatpush1.bf16.msra.mxu0 0
        %5622 = vmatprep.subr.bf16.mxu0 0
        %5623 = vmatpush1.bf16.msra.mxu0 0
        %5624 = vmatprep.subr.bf16.mxu0 0
        %5625 = vmatpush1.bf16.msra.mxu0 0
        %5626 = vmatprep.subr.bf16.mxu0 0
        %5627 = vmatpush1.bf16.msra.mxu0 0
        %5628 = vmatprep.subr.bf16.mxu0 0
        %5629 = vmatpush1.bf16.msra.mxu0 0
        %5630 = vmatprep.subr.bf16.mxu0 0
        %5631 = vmatpush1.bf16.msra.mxu0 0
        %5632 = vmatprep.mubr.bf16.mxu0 0
        %5633 = vmatmul.mubr.bf16.gmra.mrb[0].mxu0 %v5553
        %v5634 = vpop.f32.mrb[0].mxu0
        %v5635 = vadd.f32 %v5402, %v5634
        %v5636 = vpop.f32.mrb[0].mxu0
        %v5637 = vpop.f32.mrb[0].mxu0
        %v5638 = vadd.f32 %v5405, %v5637
        %v5639 = vpop.f32.mrb[0].mxu0
        %5640 = vmatprep.mubr.bf16.mxu0 0
        %5641 = vmatmul.mubr.bf16.gmra.mrb[0].mxu0 %v5556
        %v5642 = vpop.f32.mrb[0].mxu0
        %v5643 = vadd.f32 %v5410, %v5642
        %v5644 = vpop.f32.mrb[0].mxu0
        %v5645 = vpop.f32.mrb[0].mxu0
        %v5646 = vadd.f32 %v5413, %v5645
        %v5647 = vpop.f32.mrb[0].mxu0
        %5648 = vmatprep.mubr.bf16.mxu0 0
        %5649 = vmatmul.mubr.bf16.gmra.mrb[0].mxu0 %v5559
        %v5650 = vpop.f32.mrb[0].mxu0
        %v5651 = vadd.f32 %v5418, %v5650
        %v5652 = vpop.f32.mrb[0].mxu0
        %v5653 = vpop.f32.mrb[0].mxu0
        %v5654 = vadd.f32 %v5421, %v5653
        %v5655 = vpop.f32.mrb[0].mxu0
        %5656 = vmatprep.mubr.bf16.mxu0 0
        %5657 = vmatmul.mubr.bf16.gmra.mrb[0].mxu0 %v5562
        %v5658 = vpop.f32.mrb[0].mxu0
        %v5659 = vadd.f32 %v5426, %v5658
        %v5660 = vpop.f32.mrb[0].mxu0
        %v5661 = vpop.f32.mrb[0].mxu0
        %v5662 = vadd.f32 %v5429, %v5661
        %v5663 = vpop.f32.mrb[0].mxu0
        %5664 = vmatprep.mubr.bf16.mxu0 0
        %5665 = vmatmul.mubr.bf16.gmra.mrb[0].mxu0 %v5565
        %v5666 = vpop.f32.mrb[0].mxu0
        %v5667 = vadd.f32 %v5434, %v5666
        %v5668 = vpop.f32.mrb[0].mxu0
        %v5669 = vpop.f32.mrb[0].mxu0
        %v5670 = vadd.f32 %v5437, %v5669
        %v5671 = vpop.f32.mrb[0].mxu0
        %5672 = vmatprep.mubr.bf16.mxu0 0
        %5673 = vmatmul.mubr.bf16.gmra.mrb[0].mxu0 %v5568
        %v5674 = vpop.f32.mrb[0].mxu0
        %v5675 = vadd.f32 %v5442, %v5674
        %v5676 = vpop.f32.mrb[0].mxu0
        %v5677 = vpop.f32.mrb[0].mxu0
        %v5678 = vadd.f32 %v5445, %v5677
        %v5679 = vpop.f32.mrb[0].mxu0
        %5680 = vmatprep.mubr.bf16.mxu0 0
        %5681 = vmatmul.mubr.bf16.gmra.mrb[0].mxu0 %v5571
        %v5682 = vpop.f32.mrb[0].mxu0
        %v5683 = vadd.f32 %v5450, %v5682
        %v5684 = vpop.f32.mrb[0].mxu0
        %v5685 = vpop.f32.mrb[0].mxu0
        %v5686 = vadd.f32 %v5453, %v5685
        %v5687 = vpop.f32.mrb[0].mxu0
        %5688 = vmatprep.mubr.bf16.mxu0 0
        %5689 = vmatmul.mubr.bf16.gmra.mrb[0].mxu0 %v5574
        %v5690 = vpop.f32.mrb[0].mxu0
        %v5691 = vadd.f32 %v5458, %v5690
        %v5692 = vpop.f32.mrb[0].mxu0
        %v5693 = vpop.f32.mrb[0].mxu0
        %v5694 = vadd.f32 %v5461, %v5693
        %v5695 = vpop.f32.mrb[0].mxu0
        %5696 = vmatprep.mubr.bf16.mxu0 0
        %5697 = vmatmul.mubr.bf16.gmra.mrb[0].mxu0 %v5577
        %v5698 = vpop.f32.mrb[0].mxu0
        %v5699 = vadd.f32 %v5466, %v5698
        %v5700 = vpop.f32.mrb[0].mxu0
        %v5701 = vpop.f32.mrb[0].mxu0
        %v5702 = vadd.f32 %v5469, %v5701
        %v5703 = vpop.f32.mrb[0].mxu0
        %5704 = vmatprep.mubr.bf16.mxu0 0
        %5705 = vmatmul.mubr.bf16.gmra.mrb[0].mxu0 %v5580
        %v5706 = vpop.f32.mrb[0].mxu0
        %v5707 = vadd.f32 %v5474, %v5706
        %v5708 = vpop.f32.mrb[0].mxu0
        %v5709 = vpop.f32.mrb[0].mxu0
        %v5710 = vadd.f32 %v5477, %v5709
        %v5711 = vpop.f32.mrb[0].mxu0
        %5712 = vmatprep.mubr.bf16.mxu0 0
        %5713 = vmatmul.mubr.bf16.gmra.mrb[0].mxu0 %v5583
        %v5714 = vpop.f32.mrb[0].mxu0
        %v5715 = vadd.f32 %v5482, %v5714
        %v5716 = vpop.f32.mrb[0].mxu0
        %v5717 = vpop.f32.mrb[0].mxu0
        %v5718 = vadd.f32 %v5485, %v5717
        %v5719 = vpop.f32.mrb[0].mxu0
        %5720 = vmatprep.mubr.bf16.mxu0 0
        %5721 = vmatmul.mubr.bf16.gmra.mrb[0].mxu0 %v5586
        %v5722 = vpop.f32.mrb[0].mxu0
        %v5723 = vadd.f32 %v5490, %v5722
        %v5724 = vpop.f32.mrb[0].mxu0
        %v5725 = vpop.f32.mrb[0].mxu0
        %v5726 = vadd.f32 %v5493, %v5725
        %v5727 = vpop.f32.mrb[0].mxu0
        %5728 = vmatprep.mubr.bf16.mxu0 0
        %5729 = vmatmul.mubr.bf16.gmra.mrb[0].mxu0 %v5589
        %v5730 = vpop.f32.mrb[0].mxu0
        %v5731 = vadd.f32 %v5498, %v5730
        %v5732 = vpop.f32.mrb[0].mxu0
        %v5733 = vpop.f32.mrb[0].mxu0
        %v5734 = vadd.f32 %v5501, %v5733
        %v5735 = vpop.f32.mrb[0].mxu0
        %5736 = vmatprep.mubr.bf16.mxu0 0
        %5737 = vmatmul.mubr.bf16.gmra.mrb[0].mxu0 %v5592
        %v5738 = vpop.f32.mrb[0].mxu0
        %v5739 = vadd.f32 %v5506, %v5738
        %v5740 = vpop.f32.mrb[0].mxu0
        %v5741 = vpop.f32.mrb[0].mxu0
        %v5742 = vadd.f32 %v5509, %v5741
        %v5743 = vpop.f32.mrb[0].mxu0
        %5744 = vmatprep.mubr.bf16.mxu0 0
        %5745 = vmatmul.mubr.bf16.gmra.mrb[0].mxu0 %v5595
        %v5746 = vpop.f32.mrb[0].mxu0
        %v5747 = vadd.f32 %v5514, %v5746
        %v5748 = vpop.f32.mrb[0].mxu0
        %v5749 = vpop.f32.mrb[0].mxu0
        %v5750 = vadd.f32 %v5517, %v5749
        %v5751 = vpop.f32.mrb[0].mxu0
        %5752 = vmatprep.mubr.bf16.mxu0 0
        %5753 = vmatmul.mubr.bf16.gmra.mrb[0].mxu0 %v5598
        %v5754 = vpop.f32.mrb[0].mxu0
        %v5755 = vadd.f32 %v5522, %v5754
        %v5756 = vpop.f32.mrb[0].mxu0
        %v5757 = vpop.f32.mrb[0].mxu0
        %v5758 = vadd.f32 %v5525, %v5757
        %v5759 = vpop.f32.mrb[0].mxu0
        %5760 = vdwg.mxu0
        %v5761 = vld [vmem:[#allocation2 + $0x2] sm:$0xff]
        %v5762 = vld [vmem:[#allocation2 + $0xa] sm:$0xff]
        %v5763 = vld [vmem:[#allocation2 + $0x1a] sm:$0xff]
        %v5764 = vld [vmem:[#allocation2 + $0x22] sm:$0xff]
        %v5765 = vld [vmem:[#allocation2 + $0x32] sm:$0xff]
        %v5766 = vld [vmem:[#allocation2 + $0x3a] sm:$0xff]
        %v5767 = vld [vmem:[#allocation2 + $0x4a] sm:$0xff]
        %v5768 = vld [vmem:[#allocation2 + $0x52] sm:$0xff]
        %v5769 = vld [vmem:[#allocation2 + $0x62] sm:$0xff]
        %v5770 = vld [vmem:[#allocation2 + $0x6a] sm:$0xff]
        %v5771 = vld [vmem:[#allocation2 + $0x7a] sm:$0xff]
        %v5772 = vld [vmem:[#allocation2 + $0x82] sm:$0xff]
        %v5773 = vld [vmem:[#allocation2 + $0x92] sm:$0xff]
        %v5774 = vld [vmem:[#allocation2 + $0x9a] sm:$0xff]
        %v5775 = vld [vmem:[#allocation2 + $0xaa] sm:$0xff]
        %v5776 = vld [vmem:[#allocation2 + $0xb2] sm:$0xff]
        %v5777 = vld [vmem:[#allocation2 + $0xc2] sm:$0xff]
        %v5778 = vld [vmem:[#allocation2 + $0xca] sm:$0xff]
        %v5779 = vld [vmem:[#allocation2 + $0xda] sm:$0xff]
        %v5780 = vld [vmem:[#allocation2 + $0xe2] sm:$0xff]
        %v5781 = vld [vmem:[#allocation2 + $0xf2] sm:$0xff]
        %v5782 = vld [vmem:[#allocation2 + $0xfa] sm:$0xff]
        %v5783 = vld [vmem:[#allocation2 + $0x10a] sm:$0xff]
        %v5784 = vld [vmem:[#allocation2 + $0x112] sm:$0xff]
        %v5785 = vld [vmem:[#allocation2 + $0x122] sm:$0xff]
        %v5786 = vld [vmem:[#allocation2 + $0x12a] sm:$0xff]
        %v5787 = vld [vmem:[#allocation2 + $0x13a] sm:$0xff]
        %v5788 = vld [vmem:[#allocation2 + $0x142] sm:$0xff]
        %v5789 = vld [vmem:[#allocation2 + $0x152] sm:$0xff]
        %v5790 = vld [vmem:[#allocation2 + $0x15a] sm:$0xff]
        %v5791 = vld [vmem:[#allocation2 + $0x16a] sm:$0xff]
        %v5792 = vld [vmem:[#allocation2 + $0x172] sm:$0xff]
        %v5793 = vpack.c.bf16 %v5762, %v5761
        %v5794 = vpack.c.bf16 %v5764, %v5763
        %v5795 = vpack.c.bf16 %v5766, %v5765
        %v5796 = vpack.c.bf16 %v5768, %v5767
        %v5797 = vpack.c.bf16 %v5770, %v5769
        %v5798 = vpack.c.bf16 %v5772, %v5771
        %v5799 = vpack.c.bf16 %v5774, %v5773
        %v5800 = vpack.c.bf16 %v5776, %v5775
        %v5801 = vpack.c.bf16 %v5778, %v5777
        %v5802 = vpack.c.bf16 %v5780, %v5779
        %v5803 = vpack.c.bf16 %v5782, %v5781
        %v5804 = vpack.c.bf16 %v5784, %v5783
        %v5805 = vpack.c.bf16 %v5786, %v5785
        %v5806 = vpack.c.bf16 %v5788, %v5787
        %v5807 = vpack.c.bf16 %v5790, %v5789
        %v5808 = vpack.c.bf16 %v5792, %v5791
        %s5809 = scalar_lea.vmem %s3, 64
        %v5810 = vld [vmem:[%s5809] sm:$0xf]
        %v5811 = vld [vmem:[%s5809 + $0x4] sm:$0xf]
        %v5812 = vld [vmem:[%s5809 + $0x8] sm:$0xf]
        %v5813 = vld [vmem:[%s5809 + $0xc] sm:$0xf]
        %v5814 = vld [vmem:[%s5809 + $0x10] sm:$0xf]
        %v5815 = vld [vmem:[%s5809 + $0x14] sm:$0xf]
        %v5816 = vld [vmem:[%s5809 + $0x18] sm:$0xf]
        %v5817 = vld [vmem:[%s5809 + $0x1c] sm:$0xf]
        %v5826 = vunpack.c.l.b16 %v5810
        %v5827 = vunpack.c.l.b16 %v5811
        %v5828 = vunpack.c.l.b16 %v5812
        %v5829 = vunpack.c.l.b16 %v5813
        %v5830 = vunpack.c.l.b16 %v5814
        %v5831 = vunpack.c.l.b16 %v5815
        %v5832 = vunpack.c.l.b16 %v5816
        %v5833 = vunpack.c.l.b16 %v5817
        %v5834 = vpack.c.b16 %v5827, %v5826
        %v5835 = vpack.c.b16 %v5829, %v5828
        %v5836 = vpack.c.b16 %v5831, %v5830
        %v5837 = vpack.c.b16 %v5833, %v5832
        %v5843 = vsel %vm4822, %v5793, 0
        %v5846 = vsel %vm4822, %v5794, 0
        %v5849 = vsel %vm4822, %v5795, 0
        %v5852 = vsel %vm4822, %v5796, 0
        %v5855 = vsel %vm4822, %v5797, 0
        %v5858 = vsel %vm4822, %v5798, 0
        %v5861 = vsel %vm4822, %v5799, 0
        %v5864 = vsel %vm4822, %v5800, 0
        %v5867 = vsel %vm4822, %v5801, 0
        %v5870 = vsel %vm4822, %v5802, 0
        %v5873 = vsel %vm4822, %v5803, 0
        %v5876 = vsel %vm4822, %v5804, 0
        %v5879 = vsel %vm4822, %v5805, 0
        %v5882 = vsel %vm4822, %v5806, 0
        %v5885 = vsel %vm4822, %v5807, 0
        %v5888 = vsel %vm4822, %v5808, 0
        %5890 = vmatprep.subr.bf16.mxu0 0
        %5891 = vmatpush1.bf16.msra.mxu0 %v5834
        %5892 = vmatprep.subr.bf16.mxu0 0
        %5893 = vmatpush1.bf16.msra.mxu0 %v5835
        %5894 = vmatprep.subr.bf16.mxu0 0
        %5895 = vmatpush1.bf16.msra.mxu0 %v5836
        %5896 = vmatprep.subr.bf16.mxu0 0
        %5897 = vmatpush1.bf16.msra.mxu0 %v5837
        %5898 = vmatprep.subr.bf16.mxu0 0
        %5899 = vmatpush1.bf16.msra.mxu0 0
        %5900 = vmatprep.subr.bf16.mxu0 0
        %5901 = vmatpush1.bf16.msra.mxu0 0
        %5902 = vmatprep.subr.bf16.mxu0 0
        %5903 = vmatpush1.bf16.msra.mxu0 0
        %5904 = vmatprep.subr.bf16.mxu0 0
        %5905 = vmatpush1.bf16.msra.mxu0 0
        %5906 = vmatprep.subr.bf16.mxu0 0
        %5907 = vmatpush1.bf16.msra.mxu0 0
        %5908 = vmatprep.subr.bf16.mxu0 0
        %5909 = vmatpush1.bf16.msra.mxu0 0
        %5910 = vmatprep.subr.bf16.mxu0 0
        %5911 = vmatpush1.bf16.msra.mxu0 0
        %5912 = vmatprep.subr.bf16.mxu0 0
        %5913 = vmatpush1.bf16.msra.mxu0 0
        %5914 = vmatprep.subr.bf16.mxu0 0
        %5915 = vmatpush1.bf16.msra.mxu0 0
        %5916 = vmatprep.subr.bf16.mxu0 0
        %5917 = vmatpush1.bf16.msra.mxu0 0
        %5918 = vmatprep.subr.bf16.mxu0 0
        %5919 = vmatpush1.bf16.msra.mxu0 0
        %5920 = vmatprep.subr.bf16.mxu0 0
        %5921 = vmatpush1.bf16.msra.mxu0 0
        %5922 = vmatprep.mubr.bf16.mxu0 0
        %5923 = vmatmul.mubr.bf16.gmra.mrb[0].mxu0 %v5843
        %v5924 = vpop.f32.mrb[0].mxu0
        %v5925 = vadd.f32 0.0, %v5924
        %v5926 = vpop.f32.mrb[0].mxu0
        %v5927 = vpop.f32.mrb[0].mxu0
        %v5928 = vadd.f32 0.0, %v5927
        %v5929 = vpop.f32.mrb[0].mxu0
        %5930 = vmatprep.mubr.bf16.mxu0 0
        %5931 = vmatmul.mubr.bf16.gmra.mrb[0].mxu0 %v5846
        %v5932 = vpop.f32.mrb[0].mxu0
        %v5933 = vadd.f32 0.0, %v5932
        %v5934 = vpop.f32.mrb[0].mxu0
        %v5935 = vpop.f32.mrb[0].mxu0
        %v5936 = vadd.f32 0.0, %v5935
        %v5937 = vpop.f32.mrb[0].mxu0
        %5938 = vmatprep.mubr.bf16.mxu0 0
        %5939 = vmatmul.mubr.bf16.gmra.mrb[0].mxu0 %v5849
        %v5940 = vpop.f32.mrb[0].mxu0
        %v5941 = vadd.f32 0.0, %v5940
        %v5942 = vpop.f32.mrb[0].mxu0
        %v5943 = vpop.f32.mrb[0].mxu0
        %v5944 = vadd.f32 0.0, %v5943
        %v5945 = vpop.f32.mrb[0].mxu0
        %5946 = vmatprep.mubr.bf16.mxu0 0
        %5947 = vmatmul.mubr.bf16.gmra.mrb[0].mxu0 %v5852
        %v5948 = vpop.f32.mrb[0].mxu0
        %v5949 = vadd.f32 0.0, %v5948
        %v5950 = vpop.f32.mrb[0].mxu0
        %v5951 = vpop.f32.mrb[0].mxu0
        %v5952 = vadd.f32 0.0, %v5951
        %v5953 = vpop.f32.mrb[0].mxu0
        %5954 = vmatprep.mubr.bf16.mxu0 0
        %5955 = vmatmul.mubr.bf16.gmra.mrb[0].mxu0 %v5855
        %v5956 = vpop.f32.mrb[0].mxu0
        %v5957 = vadd.f32 0.0, %v5956
        %v5958 = vpop.f32.mrb[0].mxu0
        %v5959 = vpop.f32.mrb[0].mxu0
        %v5960 = vadd.f32 0.0, %v5959
        %v5961 = vpop.f32.mrb[0].mxu0
        %5962 = vmatprep.mubr.bf16.mxu0 0
        %5963 = vmatmul.mubr.bf16.gmra.mrb[0].mxu0 %v5858
        %v5964 = vpop.f32.mrb[0].mxu0
        %v5965 = vadd.f32 0.0, %v5964
        %v5966 = vpop.f32.mrb[0].mxu0
        %v5967 = vpop.f32.mrb[0].mxu0
        %v5968 = vadd.f32 0.0, %v5967
        %v5969 = vpop.f32.mrb[0].mxu0
        %5970 = vmatprep.mubr.bf16.mxu0 0
        %5971 = vmatmul.mubr.bf16.gmra.mrb[0].mxu0 %v5861
        %v5972 = vpop.f32.mrb[0].mxu0
        %v5973 = vadd.f32 0.0, %v5972
        %v5974 = vpop.f32.mrb[0].mxu0
        %v5975 = vpop.f32.mrb[0].mxu0
        %v5976 = vadd.f32 0.0, %v5975
        %v5977 = vpop.f32.mrb[0].mxu0
        %5978 = vmatprep.mubr.bf16.mxu0 0
        %5979 = vmatmul.mubr.bf16.gmra.mrb[0].mxu0 %v5864
        %v5980 = vpop.f32.mrb[0].mxu0
        %v5981 = vadd.f32 0.0, %v5980
        %v5982 = vpop.f32.mrb[0].mxu0
        %v5983 = vpop.f32.mrb[0].mxu0
        %v5984 = vadd.f32 0.0, %v5983
        %v5985 = vpop.f32.mrb[0].mxu0
        %5986 = vmatprep.mubr.bf16.mxu0 0
        %5987 = vmatmul.mubr.bf16.gmra.mrb[0].mxu0 %v5867
        %v5988 = vpop.f32.mrb[0].mxu0
        %v5989 = vadd.f32 0.0, %v5988
        %v5990 = vpop.f32.mrb[0].mxu0
        %v5991 = vpop.f32.mrb[0].mxu0
        %v5992 = vadd.f32 0.0, %v5991
        %v5993 = vpop.f32.mrb[0].mxu0
        %5994 = vmatprep.mubr.bf16.mxu0 0
        %5995 = vmatmul.mubr.bf16.gmra.mrb[0].mxu0 %v5870
        %v5996 = vpop.f32.mrb[0].mxu0
        %v5997 = vadd.f32 0.0, %v5996
        %v5998 = vpop.f32.mrb[0].mxu0
        %v5999 = vpop.f32.mrb[0].mxu0
        %v6000 = vadd.f32 0.0, %v5999
        %v6001 = vpop.f32.mrb[0].mxu0
        %6002 = vmatprep.mubr.bf16.mxu0 0
        %6003 = vmatmul.mubr.bf16.gmra.mrb[0].mxu0 %v5873
        %v6004 = vpop.f32.mrb[0].mxu0
        %v6005 = vadd.f32 0.0, %v6004
        %v6006 = vpop.f32.mrb[0].mxu0
        %v6007 = vpop.f32.mrb[0].mxu0
        %v6008 = vadd.f32 0.0, %v6007
        %v6009 = vpop.f32.mrb[0].mxu0
        %6010 = vmatprep.mubr.bf16.mxu0 0
        %6011 = vmatmul.mubr.bf16.gmra.mrb[0].mxu0 %v5876
        %v6012 = vpop.f32.mrb[0].mxu0
        %v6013 = vadd.f32 0.0, %v6012
        %v6014 = vpop.f32.mrb[0].mxu0
        %v6015 = vpop.f32.mrb[0].mxu0
        %v6016 = vadd.f32 0.0, %v6015
        %v6017 = vpop.f32.mrb[0].mxu0
        %6018 = vmatprep.mubr.bf16.mxu0 0
        %6019 = vmatmul.mubr.bf16.gmra.mrb[0].mxu0 %v5879
        %v6020 = vpop.f32.mrb[0].mxu0
        %v6021 = vadd.f32 0.0, %v6020
        %v6022 = vpop.f32.mrb[0].mxu0
        %v6023 = vpop.f32.mrb[0].mxu0
        %v6024 = vadd.f32 0.0, %v6023
        %v6025 = vpop.f32.mrb[0].mxu0
        %6026 = vmatprep.mubr.bf16.mxu0 0
        %6027 = vmatmul.mubr.bf16.gmra.mrb[0].mxu0 %v5882
        %v6028 = vpop.f32.mrb[0].mxu0
        %v6029 = vadd.f32 0.0, %v6028
        %v6030 = vpop.f32.mrb[0].mxu0
        %v6031 = vpop.f32.mrb[0].mxu0
        %v6032 = vadd.f32 0.0, %v6031
        %v6033 = vpop.f32.mrb[0].mxu0
        %6034 = vmatprep.mubr.bf16.mxu0 0
        %6035 = vmatmul.mubr.bf16.gmra.mrb[0].mxu0 %v5885
        %v6036 = vpop.f32.mrb[0].mxu0
        %v6037 = vadd.f32 0.0, %v6036
        %v6038 = vpop.f32.mrb[0].mxu0
        %v6039 = vpop.f32.mrb[0].mxu0
        %v6040 = vadd.f32 0.0, %v6039
        %v6041 = vpop.f32.mrb[0].mxu0
        %6042 = vmatprep.mubr.bf16.mxu0 0
        %6043 = vmatmul.mubr.bf16.gmra.mrb[0].mxu0 %v5888
        %v6044 = vpop.f32.mrb[0].mxu0
        %v6045 = vadd.f32 0.0, %v6044
        %v6046 = vpop.f32.mrb[0].mxu0
        %v6047 = vpop.f32.mrb[0].mxu0
        %v6048 = vadd.f32 0.0, %v6047
        %v6049 = vpop.f32.mrb[0].mxu0
        %6050 = vdwg.mxu0
        %v6051 = vadd.f32 %v5635, %v5925
        %v6052 = vadd.f32 %v5638, %v5928
        %v6053 = vadd.f32 %v5643, %v5933
        %v6054 = vadd.f32 %v5646, %v5936
        %v6055 = vadd.f32 %v5651, %v5941
        %v6056 = vadd.f32 %v5654, %v5944
        %v6057 = vadd.f32 %v5659, %v5949
        %v6058 = vadd.f32 %v5662, %v5952
        %v6059 = vadd.f32 %v5667, %v5957
        %v6060 = vadd.f32 %v5670, %v5960
        %v6061 = vadd.f32 %v5675, %v5965
        %v6062 = vadd.f32 %v5678, %v5968
        %v6063 = vadd.f32 %v5683, %v5973
        %v6064 = vadd.f32 %v5686, %v5976
        %v6065 = vadd.f32 %v5691, %v5981
        %v6066 = vadd.f32 %v5694, %v5984
        %v6067 = vadd.f32 %v5699, %v5989
        %v6068 = vadd.f32 %v5702, %v5992
        %v6069 = vadd.f32 %v5707, %v5997
        %v6070 = vadd.f32 %v5710, %v6000
        %v6071 = vadd.f32 %v5715, %v6005
        %v6072 = vadd.f32 %v5718, %v6008
        %v6073 = vadd.f32 %v5723, %v6013
        %v6074 = vadd.f32 %v5726, %v6016
        %v6075 = vadd.f32 %v5731, %v6021
        %v6076 = vadd.f32 %v5734, %v6024
        %v6077 = vadd.f32 %v5739, %v6029
        %v6078 = vadd.f32 %v5742, %v6032
        %v6079 = vadd.f32 %v5747, %v6037
        %v6080 = vadd.f32 %v5750, %v6040
        %v6081 = vadd.f32 %v5755, %v6045
        %v6082 = vadd.f32 %v5758, %v6048
        %v6083 = vld [vmem:[%s5149] sm:$0xff]
        %v6084 = vld [vmem:[%s5149 + $0x8] sm:$0xff]
        %v6085 = vld [vmem:[%s5149 + $0x18] sm:$0xff]
        %v6086 = vld [vmem:[%s5149 + $0x20] sm:$0xff]
        %v6087 = vld [vmem:[%s5149 + $0x30] sm:$0xff]
        %v6088 = vld [vmem:[%s5149 + $0x38] sm:$0xff]
        %v6089 = vld [vmem:[%s5149 + $0x48] sm:$0xff]
        %v6090 = vld [vmem:[%s5149 + $0x50] sm:$0xff]
        %v6091 = vld [vmem:[%s5149 + $0x60] sm:$0xff]
        %v6092 = vld [vmem:[%s5149 + $0x68] sm:$0xff]
        %v6093 = vld [vmem:[%s5149 + $0x78] sm:$0xff]
        %v6094 = vld [vmem:[%s5149 + $0x80] sm:$0xff]
        %v6095 = vld [vmem:[%s5149 + $0x90] sm:$0xff]
        %v6096 = vld [vmem:[%s5149 + $0x98] sm:$0xff]
        %v6097 = vld [vmem:[%s5149 + $0xa8] sm:$0xff]
        %v6098 = vld [vmem:[%s5149 + $0xb0] sm:$0xff]
        %v6099 = vld [vmem:[%s5149 + $0xc0] sm:$0xff]
        %v6100 = vld [vmem:[%s5149 + $0xc8] sm:$0xff]
        %v6101 = vld [vmem:[%s5149 + $0xd8] sm:$0xff]
        %v6102 = vld [vmem:[%s5149 + $0xe0] sm:$0xff]
        %v6103 = vld [vmem:[%s5149 + $0xf0] sm:$0xff]
        %v6104 = vld [vmem:[%s5149 + $0xf8] sm:$0xff]
        %v6105 = vld [vmem:[%s5149 + $0x108] sm:$0xff]
        %v6106 = vld [vmem:[%s5149 + $0x110] sm:$0xff]
        %v6107 = vld [vmem:[%s5149 + $0x120] sm:$0xff]
        %v6108 = vld [vmem:[%s5149 + $0x128] sm:$0xff]
        %v6109 = vld [vmem:[%s5149 + $0x138] sm:$0xff]
        %v6110 = vld [vmem:[%s5149 + $0x140] sm:$0xff]
        %v6111 = vld [vmem:[%s5149 + $0x150] sm:$0xff]
        %v6112 = vld [vmem:[%s5149 + $0x158] sm:$0xff]
        %v6113 = vld [vmem:[%s5149 + $0x168] sm:$0xff]
        %v6114 = vld [vmem:[%s5149 + $0x170] sm:$0xff]
        %v6115 = vpack.c.bf16 %v6084, %v6083
        %v6116 = vpack.c.bf16 %v6086, %v6085
        %v6117 = vpack.c.bf16 %v6088, %v6087
        %v6118 = vpack.c.bf16 %v6090, %v6089
        %v6119 = vpack.c.bf16 %v6092, %v6091
        %v6120 = vpack.c.bf16 %v6094, %v6093
        %v6121 = vpack.c.bf16 %v6096, %v6095
        %v6122 = vpack.c.bf16 %v6098, %v6097
        %v6123 = vpack.c.bf16 %v6100, %v6099
        %v6124 = vpack.c.bf16 %v6102, %v6101
        %v6125 = vpack.c.bf16 %v6104, %v6103
        %v6126 = vpack.c.bf16 %v6106, %v6105
        %v6127 = vpack.c.bf16 %v6108, %v6107
        %v6128 = vpack.c.bf16 %v6110, %v6109
        %v6129 = vpack.c.bf16 %v6112, %v6111
        %v6130 = vpack.c.bf16 %v6114, %v6113
        %s6131 = scalar_lea.vmem %s3, 96
        %v6132 = vld [vmem:[%s6131] sm:$0xf]
        %v6133 = vld [vmem:[%s6131 + $0x4] sm:$0xf]
        %v6134 = vld [vmem:[%s6131 + $0x8] sm:$0xf]
        %v6135 = vld [vmem:[%s6131 + $0xc] sm:$0xf]
        %v6136 = vld [vmem:[%s6131 + $0x10] sm:$0xf]
        %v6137 = vld [vmem:[%s6131 + $0x14] sm:$0xf]
        %v6138 = vld [vmem:[%s6131 + $0x18] sm:$0xf]
        %v6139 = vld [vmem:[%s6131 + $0x1c] sm:$0xf]
        %v6148 = vunpack.c.l.b16 %v6132
        %v6149 = vunpack.c.l.b16 %v6133
        %v6150 = vunpack.c.l.b16 %v6134
        %v6151 = vunpack.c.l.b16 %v6135
        %v6152 = vunpack.c.l.b16 %v6136
        %v6153 = vunpack.c.l.b16 %v6137
        %v6154 = vunpack.c.l.b16 %v6138
        %v6155 = vunpack.c.l.b16 %v6139
        %v6156 = vpack.c.b16 %v6149, %v6148
        %v6157 = vpack.c.b16 %v6151, %v6150
        %v6158 = vpack.c.b16 %v6153, %v6152
        %v6159 = vpack.c.b16 %v6155, %v6154
        %v6165 = vsel %vm4822, %v6115, 0
        %v6168 = vsel %vm4822, %v6116, 0
        %v6171 = vsel %vm4822, %v6117, 0
        %v6174 = vsel %vm4822, %v6118, 0
        %v6177 = vsel %vm4822, %v6119, 0
        %v6180 = vsel %vm4822, %v6120, 0
        %v6183 = vsel %vm4822, %v6121, 0
        %v6186 = vsel %vm4822, %v6122, 0
        %v6189 = vsel %vm4822, %v6123, 0
        %v6192 = vsel %vm4822, %v6124, 0
        %v6195 = vsel %vm4822, %v6125, 0
        %v6198 = vsel %vm4822, %v6126, 0
        %v6201 = vsel %vm4822, %v6127, 0
        %v6204 = vsel %vm4822, %v6128, 0
        %v6207 = vsel %vm4822, %v6129, 0
        %v6210 = vsel %vm4822, %v6130, 0
        %6212 = vmatprep.subr.bf16.mxu0 0
        %6213 = vmatpush1.bf16.msra.mxu0 %v6156
        %6214 = vmatprep.subr.bf16.mxu0 0
        %6215 = vmatpush1.bf16.msra.mxu0 %v6157
        %6216 = vmatprep.subr.bf16.mxu0 0
        %6217 = vmatpush1.bf16.msra.mxu0 %v6158
        %6218 = vmatprep.subr.bf16.mxu0 0
        %6219 = vmatpush1.bf16.msra.mxu0 %v6159
        %6220 = vmatprep.subr.bf16.mxu0 0
        %6221 = vmatpush1.bf16.msra.mxu0 0
        %6222 = vmatprep.subr.bf16.mxu0 0
        %6223 = vmatpush1.bf16.msra.mxu0 0
        %6224 = vmatprep.subr.bf16.mxu0 0
        %6225 = vmatpush1.bf16.msra.mxu0 0
        %6226 = vmatprep.subr.bf16.mxu0 0
        %6227 = vmatpush1.bf16.msra.mxu0 0
        %6228 = vmatprep.subr.bf16.mxu0 0
        %6229 = vmatpush1.bf16.msra.mxu0 0
        %6230 = vmatprep.subr.bf16.mxu0 0
        %6231 = vmatpush1.bf16.msra.mxu0 0
        %6232 = vmatprep.subr.bf16.mxu0 0
        %6233 = vmatpush1.bf16.msra.mxu0 0
        %6234 = vmatprep.subr.bf16.mxu0 0
        %6235 = vmatpush1.bf16.msra.mxu0 0
        %6236 = vmatprep.subr.bf16.mxu0 0
        %6237 = vmatpush1.bf16.msra.mxu0 0
        %6238 = vmatprep.subr.bf16.mxu0 0
        %6239 = vmatpush1.bf16.msra.mxu0 0
        %6240 = vmatprep.subr.bf16.mxu0 0
        %6241 = vmatpush1.bf16.msra.mxu0 0
        %6242 = vmatprep.subr.bf16.mxu0 0
        %6243 = vmatpush1.bf16.msra.mxu0 0
        %6244 = vmatprep.mubr.bf16.mxu0 0
        %6245 = vmatmul.mubr.bf16.gmra.mrb[0].mxu0 %v6165
        %v6246 = vpop.f32.mrb[0].mxu0
        %v6247 = vadd.f32 0.0, %v6246
        %v6248 = vpop.f32.mrb[0].mxu0
        %v6249 = vpop.f32.mrb[0].mxu0
        %v6250 = vadd.f32 0.0, %v6249
        %v6251 = vpop.f32.mrb[0].mxu0
        %6252 = vmatprep.mubr.bf16.mxu0 0
        %6253 = vmatmul.mubr.bf16.gmra.mrb[0].mxu0 %v6168
        %v6254 = vpop.f32.mrb[0].mxu0
        %v6255 = vadd.f32 0.0, %v6254
        %v6256 = vpop.f32.mrb[0].mxu0
        %v6257 = vpop.f32.mrb[0].mxu0
        %v6258 = vadd.f32 0.0, %v6257
        %v6259 = vpop.f32.mrb[0].mxu0
        %6260 = vmatprep.mubr.bf16.mxu0 0
        %6261 = vmatmul.mubr.bf16.gmra.mrb[0].mxu0 %v6171
        %v6262 = vpop.f32.mrb[0].mxu0
        %v6263 = vadd.f32 0.0, %v6262
        %v6264 = vpop.f32.mrb[0].mxu0
        %v6265 = vpop.f32.mrb[0].mxu0
        %v6266 = vadd.f32 0.0, %v6265
        %v6267 = vpop.f32.mrb[0].mxu0
        %6268 = vmatprep.mubr.bf16.mxu0 0
        %6269 = vmatmul.mubr.bf16.gmra.mrb[0].mxu0 %v6174
        %v6270 = vpop.f32.mrb[0].mxu0
        %v6271 = vadd.f32 0.0, %v6270
        %v6272 = vpop.f32.mrb[0].mxu0
        %v6273 = vpop.f32.mrb[0].mxu0
        %v6274 = vadd.f32 0.0, %v6273
        %v6275 = vpop.f32.mrb[0].mxu0
        %6276 = vmatprep.mubr.bf16.mxu0 0
        %6277 = vmatmul.mubr.bf16.gmra.mrb[0].mxu0 %v6177
        %v6278 = vpop.f32.mrb[0].mxu0
        %v6279 = vadd.f32 0.0, %v6278
        %v6280 = vpop.f32.mrb[0].mxu0
        %v6281 = vpop.f32.mrb[0].mxu0
        %v6282 = vadd.f32 0.0, %v6281
        %v6283 = vpop.f32.mrb[0].mxu0
        %6284 = vmatprep.mubr.bf16.mxu0 0
        %6285 = vmatmul.mubr.bf16.gmra.mrb[0].mxu0 %v6180
        %v6286 = vpop.f32.mrb[0].mxu0
        %v6287 = vadd.f32 0.0, %v6286
        %v6288 = vpop.f32.mrb[0].mxu0
        %v6289 = vpop.f32.mrb[0].mxu0
        %v6290 = vadd.f32 0.0, %v6289
        %v6291 = vpop.f32.mrb[0].mxu0
        %6292 = vmatprep.mubr.bf16.mxu0 0
        %6293 = vmatmul.mubr.bf16.gmra.mrb[0].mxu0 %v6183
        %v6294 = vpop.f32.mrb[0].mxu0
        %v6295 = vadd.f32 0.0, %v6294
        %v6296 = vpop.f32.mrb[0].mxu0
        %v6297 = vpop.f32.mrb[0].mxu0
        %v6298 = vadd.f32 0.0, %v6297
        %v6299 = vpop.f32.mrb[0].mxu0
        %6300 = vmatprep.mubr.bf16.mxu0 0
        %6301 = vmatmul.mubr.bf16.gmra.mrb[0].mxu0 %v6186
        %v6302 = vpop.f32.mrb[0].mxu0
        %v6303 = vadd.f32 0.0, %v6302
        %v6304 = vpop.f32.mrb[0].mxu0
        %v6305 = vpop.f32.mrb[0].mxu0
        %v6306 = vadd.f32 0.0, %v6305
        %v6307 = vpop.f32.mrb[0].mxu0
        %6308 = vmatprep.mubr.bf16.mxu0 0
        %6309 = vmatmul.mubr.bf16.gmra.mrb[0].mxu0 %v6189
        %v6310 = vpop.f32.mrb[0].mxu0
        %v6311 = vadd.f32 0.0, %v6310
        %v6312 = vpop.f32.mrb[0].mxu0
        %v6313 = vpop.f32.mrb[0].mxu0
        %v6314 = vadd.f32 0.0, %v6313
        %v6315 = vpop.f32.mrb[0].mxu0
        %6316 = vmatprep.mubr.bf16.mxu0 0
        %6317 = vmatmul.mubr.bf16.gmra.mrb[0].mxu0 %v6192
        %v6318 = vpop.f32.mrb[0].mxu0
        %v6319 = vadd.f32 0.0, %v6318
        %v6320 = vpop.f32.mrb[0].mxu0
        %v6321 = vpop.f32.mrb[0].mxu0
        %v6322 = vadd.f32 0.0, %v6321
        %v6323 = vpop.f32.mrb[0].mxu0
        %6324 = vmatprep.mubr.bf16.mxu0 0
        %6325 = vmatmul.mubr.bf16.gmra.mrb[0].mxu0 %v6195
        %v6326 = vpop.f32.mrb[0].mxu0
        %v6327 = vadd.f32 0.0, %v6326
        %v6328 = vpop.f32.mrb[0].mxu0
        %v6329 = vpop.f32.mrb[0].mxu0
        %v6330 = vadd.f32 0.0, %v6329
        %v6331 = vpop.f32.mrb[0].mxu0
        %6332 = vmatprep.mubr.bf16.mxu0 0
        %6333 = vmatmul.mubr.bf16.gmra.mrb[0].mxu0 %v6198
        %v6334 = vpop.f32.mrb[0].mxu0
        %v6335 = vadd.f32 0.0, %v6334
        %v6336 = vpop.f32.mrb[0].mxu0
        %v6337 = vpop.f32.mrb[0].mxu0
        %v6338 = vadd.f32 0.0, %v6337
        %v6339 = vpop.f32.mrb[0].mxu0
        %6340 = vmatprep.mubr.bf16.mxu0 0
        %6341 = vmatmul.mubr.bf16.gmra.mrb[0].mxu0 %v6201
        %v6342 = vpop.f32.mrb[0].mxu0
        %v6343 = vadd.f32 0.0, %v6342
        %v6344 = vpop.f32.mrb[0].mxu0
        %v6345 = vpop.f32.mrb[0].mxu0
        %v6346 = vadd.f32 0.0, %v6345
        %v6347 = vpop.f32.mrb[0].mxu0
        %6348 = vmatprep.mubr.bf16.mxu0 0
        %6349 = vmatmul.mubr.bf16.gmra.mrb[0].mxu0 %v6204
        %v6350 = vpop.f32.mrb[0].mxu0
        %v6351 = vadd.f32 0.0, %v6350
        %v6352 = vpop.f32.mrb[0].mxu0
        %v6353 = vpop.f32.mrb[0].mxu0
        %v6354 = vadd.f32 0.0, %v6353
        %v6355 = vpop.f32.mrb[0].mxu0
        %6356 = vmatprep.mubr.bf16.mxu0 0
        %6357 = vmatmul.mubr.bf16.gmra.mrb[0].mxu0 %v6207
        %v6358 = vpop.f32.mrb[0].mxu0
        %v6359 = vadd.f32 0.0, %v6358
        %v6360 = vpop.f32.mrb[0].mxu0
        %v6361 = vpop.f32.mrb[0].mxu0
        %v6362 = vadd.f32 0.0, %v6361
        %v6363 = vpop.f32.mrb[0].mxu0
        %6364 = vmatprep.mubr.bf16.mxu0 0
        %6365 = vmatmul.mubr.bf16.gmra.mrb[0].mxu0 %v6210
        %v6366 = vpop.f32.mrb[0].mxu0
        %v6367 = vadd.f32 0.0, %v6366
        %v6368 = vpop.f32.mrb[0].mxu0
        %v6369 = vpop.f32.mrb[0].mxu0
        %v6370 = vadd.f32 0.0, %v6369
        %v6371 = vpop.f32.mrb[0].mxu0
        %6372 = vdwg.mxu0
        %v6373 = vadd.f32 %v6051, %v6247
        %v6374 = vadd.f32 %v6052, %v6250
        %v6375 = vadd.f32 %v6053, %v6255
        %v6376 = vadd.f32 %v6054, %v6258
        %v6377 = vadd.f32 %v6055, %v6263
        %v6378 = vadd.f32 %v6056, %v6266
        %v6379 = vadd.f32 %v6057, %v6271
        %v6380 = vadd.f32 %v6058, %v6274
        %v6381 = vadd.f32 %v6059, %v6279
        %v6382 = vadd.f32 %v6060, %v6282
        %v6383 = vadd.f32 %v6061, %v6287
        %v6384 = vadd.f32 %v6062, %v6290
        %v6385 = vadd.f32 %v6063, %v6295
        %v6386 = vadd.f32 %v6064, %v6298
        %v6387 = vadd.f32 %v6065, %v6303
        %v6388 = vadd.f32 %v6066, %v6306
        %v6389 = vadd.f32 %v6067, %v6311
        %v6390 = vadd.f32 %v6068, %v6314
        %v6391 = vadd.f32 %v6069, %v6319
        %v6392 = vadd.f32 %v6070, %v6322
        %v6393 = vadd.f32 %v6071, %v6327
        %v6394 = vadd.f32 %v6072, %v6330
        %v6395 = vadd.f32 %v6073, %v6335
        %v6396 = vadd.f32 %v6074, %v6338
        %v6397 = vadd.f32 %v6075, %v6343
        %v6398 = vadd.f32 %v6076, %v6346
        %v6399 = vadd.f32 %v6077, %v6351
        %v6400 = vadd.f32 %v6078, %v6354
        %v6401 = vadd.f32 %v6079, %v6359
        %v6402 = vadd.f32 %v6080, %v6362
        %v6403 = vadd.f32 %v6081, %v6367
        %v6404 = vadd.f32 %v6082, %v6370
        %v6405 = vld [vmem:[%s5149 + $0x1] sm:$0xff]
        %v6406 = vld [vmem:[%s5149 + $0x9] sm:$0xff]
        %v6407 = vld [vmem:[%s5149 + $0x19] sm:$0xff]
        %v6408 = vld [vmem:[%s5149 + $0x21] sm:$0xff]
        %v6409 = vld [vmem:[%s5149 + $0x31] sm:$0xff]
        %v6410 = vld [vmem:[%s5149 + $0x39] sm:$0xff]
        %v6411 = vld [vmem:[%s5149 + $0x49] sm:$0xff]
        %v6412 = vld [vmem:[%s5149 + $0x51] sm:$0xff]
        %v6413 = vld [vmem:[%s5149 + $0x61] sm:$0xff]
        %v6414 = vld [vmem:[%s5149 + $0x69] sm:$0xff]
        %v6415 = vld [vmem:[%s5149 + $0x79] sm:$0xff]
        %v6416 = vld [vmem:[%s5149 + $0x81] sm:$0xff]
        %v6417 = vld [vmem:[%s5149 + $0x91] sm:$0xff]
        %v6418 = vld [vmem:[%s5149 + $0x99] sm:$0xff]
        %v6419 = vld [vmem:[%s5149 + $0xa9] sm:$0xff]
        %v6420 = vld [vmem:[%s5149 + $0xb1] sm:$0xff]
        %v6421 = vld [vmem:[%s5149 + $0xc1] sm:$0xff]
        %v6422 = vld [vmem:[%s5149 + $0xc9] sm:$0xff]
        %v6423 = vld [vmem:[%s5149 + $0xd9] sm:$0xff]
        %v6424 = vld [vmem:[%s5149 + $0xe1] sm:$0xff]
        %v6425 = vld [vmem:[%s5149 + $0xf1] sm:$0xff]
        %v6426 = vld [vmem:[%s5149 + $0xf9] sm:$0xff]
        %v6427 = vld [vmem:[%s5149 + $0x109] sm:$0xff]
        %v6428 = vld [vmem:[%s5149 + $0x111] sm:$0xff]
        %v6429 = vld [vmem:[%s5149 + $0x121] sm:$0xff]
        %v6430 = vld [vmem:[%s5149 + $0x129] sm:$0xff]
        %v6431 = vld [vmem:[%s5149 + $0x139] sm:$0xff]
        %v6432 = vld [vmem:[%s5149 + $0x141] sm:$0xff]
        %v6433 = vld [vmem:[%s5149 + $0x151] sm:$0xff]
        %v6434 = vld [vmem:[%s5149 + $0x159] sm:$0xff]
        %v6435 = vld [vmem:[%s5149 + $0x169] sm:$0xff]
        %v6436 = vld [vmem:[%s5149 + $0x171] sm:$0xff]
        %v6437 = vpack.c.bf16 %v6406, %v6405
        %v6438 = vpack.c.bf16 %v6408, %v6407
        %v6439 = vpack.c.bf16 %v6410, %v6409
        %v6440 = vpack.c.bf16 %v6412, %v6411
        %v6441 = vpack.c.bf16 %v6414, %v6413
        %v6442 = vpack.c.bf16 %v6416, %v6415
        %v6443 = vpack.c.bf16 %v6418, %v6417
        %v6444 = vpack.c.bf16 %v6420, %v6419
        %v6445 = vpack.c.bf16 %v6422, %v6421
        %v6446 = vpack.c.bf16 %v6424, %v6423
        %v6447 = vpack.c.bf16 %v6426, %v6425
        %v6448 = vpack.c.bf16 %v6428, %v6427
        %v6449 = vpack.c.bf16 %v6430, %v6429
        %v6450 = vpack.c.bf16 %v6432, %v6431
        %v6451 = vpack.c.bf16 %v6434, %v6433
        %v6452 = vpack.c.bf16 %v6436, %v6435
        %s6453 = scalar_lea.vmem %s3, 128
        %v6454 = vld [vmem:[%s6453] sm:$0xf]
        %v6455 = vld [vmem:[%s6453 + $0x4] sm:$0xf]
        %v6456 = vld [vmem:[%s6453 + $0x8] sm:$0xf]
        %v6457 = vld [vmem:[%s6453 + $0xc] sm:$0xf]
        %v6458 = vld [vmem:[%s6453 + $0x10] sm:$0xf]
        %v6459 = vld [vmem:[%s6453 + $0x14] sm:$0xf]
        %v6460 = vld [vmem:[%s6453 + $0x18] sm:$0xf]
        %v6461 = vld [vmem:[%s6453 + $0x1c] sm:$0xf]
        %v6470 = vunpack.c.l.b16 %v6454
        %v6471 = vunpack.c.l.b16 %v6455
        %v6472 = vunpack.c.l.b16 %v6456
        %v6473 = vunpack.c.l.b16 %v6457
        %v6474 = vunpack.c.l.b16 %v6458
        %v6475 = vunpack.c.l.b16 %v6459
        %v6476 = vunpack.c.l.b16 %v6460
        %v6477 = vunpack.c.l.b16 %v6461
        %v6478 = vpack.c.b16 %v6471, %v6470
        %v6479 = vpack.c.b16 %v6473, %v6472
        %v6480 = vpack.c.b16 %v6475, %v6474
        %v6481 = vpack.c.b16 %v6477, %v6476
        %v6487 = vsel %vm4822, %v6437, 0
        %v6490 = vsel %vm4822, %v6438, 0
        %v6493 = vsel %vm4822, %v6439, 0
        %v6496 = vsel %vm4822, %v6440, 0
        %v6499 = vsel %vm4822, %v6441, 0
        %v6502 = vsel %vm4822, %v6442, 0
        %v6505 = vsel %vm4822, %v6443, 0
        %v6508 = vsel %vm4822, %v6444, 0
        %v6511 = vsel %vm4822, %v6445, 0
        %v6514 = vsel %vm4822, %v6446, 0
        %v6517 = vsel %vm4822, %v6447, 0
        %v6520 = vsel %vm4822, %v6448, 0
        %v6523 = vsel %vm4822, %v6449, 0
        %v6526 = vsel %vm4822, %v6450, 0
        %v6529 = vsel %vm4822, %v6451, 0
        %v6532 = vsel %vm4822, %v6452, 0
        %6534 = vmatprep.subr.bf16.mxu0 0
        %6535 = vmatpush1.bf16.msra.mxu0 %v6478
        %6536 = vmatprep.subr.bf16.mxu0 0
        %6537 = vmatpush1.bf16.msra.mxu0 %v6479
        %6538 = vmatprep.subr.bf16.mxu0 0
        %6539 = vmatpush1.bf16.msra.mxu0 %v6480
        %6540 = vmatprep.subr.bf16.mxu0 0
        %6541 = vmatpush1.bf16.msra.mxu0 %v6481
        %6542 = vmatprep.subr.bf16.mxu0 0
        %6543 = vmatpush1.bf16.msra.mxu0 0
        %6544 = vmatprep.subr.bf16.mxu0 0
        %6545 = vmatpush1.bf16.msra.mxu0 0
        %6546 = vmatprep.subr.bf16.mxu0 0
        %6547 = vmatpush1.bf16.msra.mxu0 0
        %6548 = vmatprep.subr.bf16.mxu0 0
        %6549 = vmatpush1.bf16.msra.mxu0 0
        %6550 = vmatprep.subr.bf16.mxu0 0
        %6551 = vmatpush1.bf16.msra.mxu0 0
        %6552 = vmatprep.subr.bf16.mxu0 0
        %6553 = vmatpush1.bf16.msra.mxu0 0
        %6554 = vmatprep.subr.bf16.mxu0 0
        %6555 = vmatpush1.bf16.msra.mxu0 0
        %6556 = vmatprep.subr.bf16.mxu0 0
        %6557 = vmatpush1.bf16.msra.mxu0 0
        %6558 = vmatprep.subr.bf16.mxu0 0
        %6559 = vmatpush1.bf16.msra.mxu0 0
        %6560 = vmatprep.subr.bf16.mxu0 0
        %6561 = vmatpush1.bf16.msra.mxu0 0
        %6562 = vmatprep.subr.bf16.mxu0 0
        %6563 = vmatpush1.bf16.msra.mxu0 0
        %6564 = vmatprep.subr.bf16.mxu0 0
        %6565 = vmatpush1.bf16.msra.mxu0 0
        %6566 = vmatprep.mubr.bf16.mxu0 0
        %6567 = vmatmul.mubr.bf16.gmra.mrb[0].mxu0 %v6487
        %v6568 = vpop.f32.mrb[0].mxu0
        %v6569 = vadd.f32 0.0, %v6568
        %v6570 = vpop.f32.mrb[0].mxu0
        %v6571 = vpop.f32.mrb[0].mxu0
        %v6572 = vadd.f32 0.0, %v6571
        %v6573 = vpop.f32.mrb[0].mxu0
        %6574 = vmatprep.mubr.bf16.mxu0 0
        %6575 = vmatmul.mubr.bf16.gmra.mrb[0].mxu0 %v6490
        %v6576 = vpop.f32.mrb[0].mxu0
        %v6577 = vadd.f32 0.0, %v6576
        %v6578 = vpop.f32.mrb[0].mxu0
        %v6579 = vpop.f32.mrb[0].mxu0
        %v6580 = vadd.f32 0.0, %v6579
        %v6581 = vpop.f32.mrb[0].mxu0
        %6582 = vmatprep.mubr.bf16.mxu0 0
        %6583 = vmatmul.mubr.bf16.gmra.mrb[0].mxu0 %v6493
        %v6584 = vpop.f32.mrb[0].mxu0
        %v6585 = vadd.f32 0.0, %v6584
        %v6586 = vpop.f32.mrb[0].mxu0
        %v6587 = vpop.f32.mrb[0].mxu0
        %v6588 = vadd.f32 0.0, %v6587
        %v6589 = vpop.f32.mrb[0].mxu0
        %6590 = vmatprep.mubr.bf16.mxu0 0
        %6591 = vmatmul.mubr.bf16.gmra.mrb[0].mxu0 %v6496
        %v6592 = vpop.f32.mrb[0].mxu0
        %v6593 = vadd.f32 0.0, %v6592
        %v6594 = vpop.f32.mrb[0].mxu0
        %v6595 = vpop.f32.mrb[0].mxu0
        %v6596 = vadd.f32 0.0, %v6595
        %v6597 = vpop.f32.mrb[0].mxu0
        %6598 = vmatprep.mubr.bf16.mxu0 0
        %6599 = vmatmul.mubr.bf16.gmra.mrb[0].mxu0 %v6499
        %v6600 = vpop.f32.mrb[0].mxu0
        %v6601 = vadd.f32 0.0, %v6600
        %v6602 = vpop.f32.mrb[0].mxu0
        %v6603 = vpop.f32.mrb[0].mxu0
        %v6604 = vadd.f32 0.0, %v6603
        %v6605 = vpop.f32.mrb[0].mxu0
        %6606 = vmatprep.mubr.bf16.mxu0 0
        %6607 = vmatmul.mubr.bf16.gmra.mrb[0].mxu0 %v6502
        %v6608 = vpop.f32.mrb[0].mxu0
        %v6609 = vadd.f32 0.0, %v6608
        %v6610 = vpop.f32.mrb[0].mxu0
        %v6611 = vpop.f32.mrb[0].mxu0
        %v6612 = vadd.f32 0.0, %v6611
        %v6613 = vpop.f32.mrb[0].mxu0
        %6614 = vmatprep.mubr.bf16.mxu0 0
        %6615 = vmatmul.mubr.bf16.gmra.mrb[0].mxu0 %v6505
        %v6616 = vpop.f32.mrb[0].mxu0
        %v6617 = vadd.f32 0.0, %v6616
        %v6618 = vpop.f32.mrb[0].mxu0
        %v6619 = vpop.f32.mrb[0].mxu0
        %v6620 = vadd.f32 0.0, %v6619
        %v6621 = vpop.f32.mrb[0].mxu0
        %6622 = vmatprep.mubr.bf16.mxu0 0
        %6623 = vmatmul.mubr.bf16.gmra.mrb[0].mxu0 %v6508
        %v6624 = vpop.f32.mrb[0].mxu0
        %v6625 = vadd.f32 0.0, %v6624
        %v6626 = vpop.f32.mrb[0].mxu0
        %v6627 = vpop.f32.mrb[0].mxu0
        %v6628 = vadd.f32 0.0, %v6627
        %v6629 = vpop.f32.mrb[0].mxu0
        %6630 = vmatprep.mubr.bf16.mxu0 0
        %6631 = vmatmul.mubr.bf16.gmra.mrb[0].mxu0 %v6511
        %v6632 = vpop.f32.mrb[0].mxu0
        %v6633 = vadd.f32 0.0, %v6632
        %v6634 = vpop.f32.mrb[0].mxu0
        %v6635 = vpop.f32.mrb[0].mxu0
        %v6636 = vadd.f32 0.0, %v6635
        %v6637 = vpop.f32.mrb[0].mxu0
        %6638 = vmatprep.mubr.bf16.mxu0 0
        %6639 = vmatmul.mubr.bf16.gmra.mrb[0].mxu0 %v6514
        %v6640 = vpop.f32.mrb[0].mxu0
        %v6641 = vadd.f32 0.0, %v6640
        %v6642 = vpop.f32.mrb[0].mxu0
        %v6643 = vpop.f32.mrb[0].mxu0
        %v6644 = vadd.f32 0.0, %v6643
        %v6645 = vpop.f32.mrb[0].mxu0
        %6646 = vmatprep.mubr.bf16.mxu0 0
        %6647 = vmatmul.mubr.bf16.gmra.mrb[0].mxu0 %v6517
        %v6648 = vpop.f32.mrb[0].mxu0
        %v6649 = vadd.f32 0.0, %v6648
        %v6650 = vpop.f32.mrb[0].mxu0
        %v6651 = vpop.f32.mrb[0].mxu0
        %v6652 = vadd.f32 0.0, %v6651
        %v6653 = vpop.f32.mrb[0].mxu0
        %6654 = vmatprep.mubr.bf16.mxu0 0
        %6655 = vmatmul.mubr.bf16.gmra.mrb[0].mxu0 %v6520
        %v6656 = vpop.f32.mrb[0].mxu0
        %v6657 = vadd.f32 0.0, %v6656
        %v6658 = vpop.f32.mrb[0].mxu0
        %v6659 = vpop.f32.mrb[0].mxu0
        %v6660 = vadd.f32 0.0, %v6659
        %v6661 = vpop.f32.mrb[0].mxu0
        %6662 = vmatprep.mubr.bf16.mxu0 0
        %6663 = vmatmul.mubr.bf16.gmra.mrb[0].mxu0 %v6523
        %v6664 = vpop.f32.mrb[0].mxu0
        %v6665 = vadd.f32 0.0, %v6664
        %v6666 = vpop.f32.mrb[0].mxu0
        %v6667 = vpop.f32.mrb[0].mxu0
        %v6668 = vadd.f32 0.0, %v6667
        %v6669 = vpop.f32.mrb[0].mxu0
        %6670 = vmatprep.mubr.bf16.mxu0 0
        %6671 = vmatmul.mubr.bf16.gmra.mrb[0].mxu0 %v6526
        %v6672 = vpop.f32.mrb[0].mxu0
        %v6673 = vadd.f32 0.0, %v6672
        %v6674 = vpop.f32.mrb[0].mxu0
        %v6675 = vpop.f32.mrb[0].mxu0
        %v6676 = vadd.f32 0.0, %v6675
        %v6677 = vpop.f32.mrb[0].mxu0
        %6678 = vmatprep.mubr.bf16.mxu0 0
        %6679 = vmatmul.mubr.bf16.gmra.mrb[0].mxu0 %v6529
        %v6680 = vpop.f32.mrb[0].mxu0
        %v6681 = vadd.f32 0.0, %v6680
        %v6682 = vpop.f32.mrb[0].mxu0
        %v6683 = vpop.f32.mrb[0].mxu0
        %v6684 = vadd.f32 0.0, %v6683
        %v6685 = vpop.f32.mrb[0].mxu0
        %6686 = vmatprep.mubr.bf16.mxu0 0
        %6687 = vmatmul.mubr.bf16.gmra.mrb[0].mxu0 %v6532
        %v6688 = vpop.f32.mrb[0].mxu0
        %v6689 = vadd.f32 0.0, %v6688
        %v6690 = vpop.f32.mrb[0].mxu0
        %v6691 = vpop.f32.mrb[0].mxu0
        %v6692 = vadd.f32 0.0, %v6691
        %v6693 = vpop.f32.mrb[0].mxu0
        %6694 = vdwg.mxu0
        %v6695 = vadd.f32 %v6373, %v6569
        %v6696 = vadd.f32 %v6374, %v6572
        %v6697 = vadd.f32 %v6375, %v6577
        %v6698 = vadd.f32 %v6376, %v6580
        %v6699 = vadd.f32 %v6377, %v6585
        %v6700 = vadd.f32 %v6378, %v6588
        %v6701 = vadd.f32 %v6379, %v6593
        %v6702 = vadd.f32 %v6380, %v6596
        %v6703 = vadd.f32 %v6381, %v6601
        %v6704 = vadd.f32 %v6382, %v6604
        %v6705 = vadd.f32 %v6383, %v6609
        %v6706 = vadd.f32 %v6384, %v6612
        %v6707 = vadd.f32 %v6385, %v6617
        %v6708 = vadd.f32 %v6386, %v6620
        %v6709 = vadd.f32 %v6387, %v6625
        %v6710 = vadd.f32 %v6388, %v6628
        %v6711 = vadd.f32 %v6389, %v6633
        %v6712 = vadd.f32 %v6390, %v6636
        %v6713 = vadd.f32 %v6391, %v6641
        %v6714 = vadd.f32 %v6392, %v6644
        %v6715 = vadd.f32 %v6393, %v6649
        %v6716 = vadd.f32 %v6394, %v6652
        %v6717 = vadd.f32 %v6395, %v6657
        %v6718 = vadd.f32 %v6396, %v6660
        %v6719 = vadd.f32 %v6397, %v6665
        %v6720 = vadd.f32 %v6398, %v6668
        %v6721 = vadd.f32 %v6399, %v6673
        %v6722 = vadd.f32 %v6400, %v6676
        %v6723 = vadd.f32 %v6401, %v6681
        %v6724 = vadd.f32 %v6402, %v6684
        %v6725 = vadd.f32 %v6403, %v6689
        %v6726 = vadd.f32 %v6404, %v6692
        %v6727 = vld [vmem:[%s5149 + $0x2] sm:$0xff]
        %v6728 = vld [vmem:[%s5149 + $0xa] sm:$0xff]
        %v6729 = vld [vmem:[%s5149 + $0x1a] sm:$0xff]
        %v6730 = vld [vmem:[%s5149 + $0x22] sm:$0xff]
        %v6731 = vld [vmem:[%s5149 + $0x32] sm:$0xff]
        %v6732 = vld [vmem:[%s5149 + $0x3a] sm:$0xff]
        %v6733 = vld [vmem:[%s5149 + $0x4a] sm:$0xff]
        %v6734 = vld [vmem:[%s5149 + $0x52] sm:$0xff]
        %v6735 = vld [vmem:[%s5149 + $0x62] sm:$0xff]
        %v6736 = vld [vmem:[%s5149 + $0x6a] sm:$0xff]
        %v6737 = vld [vmem:[%s5149 + $0x7a] sm:$0xff]
        %v6738 = vld [vmem:[%s5149 + $0x82] sm:$0xff]
        %v6739 = vld [vmem:[%s5149 + $0x92] sm:$0xff]
        %v6740 = vld [vmem:[%s5149 + $0x9a] sm:$0xff]
        %v6741 = vld [vmem:[%s5149 + $0xaa] sm:$0xff]
        %v6742 = vld [vmem:[%s5149 + $0xb2] sm:$0xff]
        %v6743 = vld [vmem:[%s5149 + $0xc2] sm:$0xff]
        %v6744 = vld [vmem:[%s5149 + $0xca] sm:$0xff]
        %v6745 = vld [vmem:[%s5149 + $0xda] sm:$0xff]
        %v6746 = vld [vmem:[%s5149 + $0xe2] sm:$0xff]
        %v6747 = vld [vmem:[%s5149 + $0xf2] sm:$0xff]
        %v6748 = vld [vmem:[%s5149 + $0xfa] sm:$0xff]
        %v6749 = vld [vmem:[%s5149 + $0x10a] sm:$0xff]
        %v6750 = vld [vmem:[%s5149 + $0x112] sm:$0xff]
        %v6751 = vld [vmem:[%s5149 + $0x122] sm:$0xff]
        %v6752 = vld [vmem:[%s5149 + $0x12a] sm:$0xff]
        %v6753 = vld [vmem:[%s5149 + $0x13a] sm:$0xff]
        %v6754 = vld [vmem:[%s5149 + $0x142] sm:$0xff]
        %v6755 = vld [vmem:[%s5149 + $0x152] sm:$0xff]
        %v6756 = vld [vmem:[%s5149 + $0x15a] sm:$0xff]
        %v6757 = vld [vmem:[%s5149 + $0x16a] sm:$0xff]
        %v6758 = vld [vmem:[%s5149 + $0x172] sm:$0xff]
        %v6759 = vpack.c.bf16 %v6728, %v6727
        %v6760 = vpack.c.bf16 %v6730, %v6729
        %v6761 = vpack.c.bf16 %v6732, %v6731
        %v6762 = vpack.c.bf16 %v6734, %v6733
        %v6763 = vpack.c.bf16 %v6736, %v6735
        %v6764 = vpack.c.bf16 %v6738, %v6737
        %v6765 = vpack.c.bf16 %v6740, %v6739
        %v6766 = vpack.c.bf16 %v6742, %v6741
        %v6767 = vpack.c.bf16 %v6744, %v6743
        %v6768 = vpack.c.bf16 %v6746, %v6745
        %v6769 = vpack.c.bf16 %v6748, %v6747
        %v6770 = vpack.c.bf16 %v6750, %v6749
        %v6771 = vpack.c.bf16 %v6752, %v6751
        %v6772 = vpack.c.bf16 %v6754, %v6753
        %v6773 = vpack.c.bf16 %v6756, %v6755
        %v6774 = vpack.c.bf16 %v6758, %v6757
        %s6775 = scalar_lea.vmem %s3, 160
        %v6776 = vld [vmem:[%s6775] sm:$0xf]
        %v6777 = vld [vmem:[%s6775 + $0x4] sm:$0xf]
        %v6778 = vld [vmem:[%s6775 + $0x8] sm:$0xf]
        %v6779 = vld [vmem:[%s6775 + $0xc] sm:$0xf]
        %v6780 = vld [vmem:[%s6775 + $0x10] sm:$0xf]
        %v6781 = vld [vmem:[%s6775 + $0x14] sm:$0xf]
        %v6782 = vld [vmem:[%s6775 + $0x18] sm:$0xf]
        %v6783 = vld [vmem:[%s6775 + $0x1c] sm:$0xf]
        %v6792 = vunpack.c.l.b16 %v6776
        %v6793 = vunpack.c.l.b16 %v6777
        %v6794 = vunpack.c.l.b16 %v6778
        %v6795 = vunpack.c.l.b16 %v6779
        %v6796 = vunpack.c.l.b16 %v6780
        %v6797 = vunpack.c.l.b16 %v6781
        %v6798 = vunpack.c.l.b16 %v6782
        %v6799 = vunpack.c.l.b16 %v6783
        %v6800 = vpack.c.b16 %v6793, %v6792
        %v6801 = vpack.c.b16 %v6795, %v6794
        %v6802 = vpack.c.b16 %v6797, %v6796
        %v6803 = vpack.c.b16 %v6799, %v6798
        %v6809 = vsel %vm4822, %v6759, 0
        %v6812 = vsel %vm4822, %v6760, 0
        %v6815 = vsel %vm4822, %v6761, 0
        %v6818 = vsel %vm4822, %v6762, 0
        %v6821 = vsel %vm4822, %v6763, 0
        %v6824 = vsel %vm4822, %v6764, 0
        %v6827 = vsel %vm4822, %v6765, 0
        %v6830 = vsel %vm4822, %v6766, 0
        %v6833 = vsel %vm4822, %v6767, 0
        %v6836 = vsel %vm4822, %v6768, 0
        %v6839 = vsel %vm4822, %v6769, 0
        %v6842 = vsel %vm4822, %v6770, 0
        %v6845 = vsel %vm4822, %v6771, 0
        %v6848 = vsel %vm4822, %v6772, 0
        %v6851 = vsel %vm4822, %v6773, 0
        %v6854 = vsel %vm4822, %v6774, 0
        %6856 = vmatprep.subr.bf16.mxu0 0
        %6857 = vmatpush1.bf16.msra.mxu0 %v6800
        %6858 = vmatprep.subr.bf16.mxu0 0
        %6859 = vmatpush1.bf16.msra.mxu0 %v6801
        %6860 = vmatprep.subr.bf16.mxu0 0
        %6861 = vmatpush1.bf16.msra.mxu0 %v6802
        %6862 = vmatprep.subr.bf16.mxu0 0
        %6863 = vmatpush1.bf16.msra.mxu0 %v6803
        %6864 = vmatprep.subr.bf16.mxu0 0
        %6865 = vmatpush1.bf16.msra.mxu0 0
        %6866 = vmatprep.subr.bf16.mxu0 0
        %6867 = vmatpush1.bf16.msra.mxu0 0
        %6868 = vmatprep.subr.bf16.mxu0 0
        %6869 = vmatpush1.bf16.msra.mxu0 0
        %6870 = vmatprep.subr.bf16.mxu0 0
        %6871 = vmatpush1.bf16.msra.mxu0 0
        %6872 = vmatprep.subr.bf16.mxu0 0
        %6873 = vmatpush1.bf16.msra.mxu0 0
        %6874 = vmatprep.subr.bf16.mxu0 0
        %6875 = vmatpush1.bf16.msra.mxu0 0
        %6876 = vmatprep.subr.bf16.mxu0 0
        %6877 = vmatpush1.bf16.msra.mxu0 0
        %6878 = vmatprep.subr.bf16.mxu0 0
        %6879 = vmatpush1.bf16.msra.mxu0 0
        %6880 = vmatprep.subr.bf16.mxu0 0
        %6881 = vmatpush1.bf16.msra.mxu0 0
        %6882 = vmatprep.subr.bf16.mxu0 0
        %6883 = vmatpush1.bf16.msra.mxu0 0
        %6884 = vmatprep.subr.bf16.mxu0 0
        %6885 = vmatpush1.bf16.msra.mxu0 0
        %6886 = vmatprep.subr.bf16.mxu0 0
        %6887 = vmatpush1.bf16.msra.mxu0 0
        %6888 = vmatprep.mubr.bf16.mxu0 0
        %6889 = vmatmul.mubr.bf16.gmra.mrb[0].mxu0 %v6809
        %v6890 = vpop.f32.mrb[0].mxu0
        %v6891 = vadd.f32 0.0, %v6890
        %v6892 = vpop.f32.mrb[0].mxu0
        %v6893 = vpop.f32.mrb[0].mxu0
        %v6894 = vadd.f32 0.0, %v6893
        %v6895 = vpop.f32.mrb[0].mxu0
        %6896 = vmatprep.mubr.bf16.mxu0 0
        %6897 = vmatmul.mubr.bf16.gmra.mrb[0].mxu0 %v6812
        %v6898 = vpop.f32.mrb[0].mxu0
        %v6899 = vadd.f32 0.0, %v6898
        %v6900 = vpop.f32.mrb[0].mxu0
        %v6901 = vpop.f32.mrb[0].mxu0
        %v6902 = vadd.f32 0.0, %v6901
        %v6903 = vpop.f32.mrb[0].mxu0
        %6904 = vmatprep.mubr.bf16.mxu0 0
        %6905 = vmatmul.mubr.bf16.gmra.mrb[0].mxu0 %v6815
        %v6906 = vpop.f32.mrb[0].mxu0
        %v6907 = vadd.f32 0.0, %v6906
        %v6908 = vpop.f32.mrb[0].mxu0
        %v6909 = vpop.f32.mrb[0].mxu0
        %v6910 = vadd.f32 0.0, %v6909
        %v6911 = vpop.f32.mrb[0].mxu0
        %6912 = vmatprep.mubr.bf16.mxu0 0
        %6913 = vmatmul.mubr.bf16.gmra.mrb[0].mxu0 %v6818
        %v6914 = vpop.f32.mrb[0].mxu0
        %v6915 = vadd.f32 0.0, %v6914
        %v6916 = vpop.f32.mrb[0].mxu0
        %v6917 = vpop.f32.mrb[0].mxu0
        %v6918 = vadd.f32 0.0, %v6917
        %v6919 = vpop.f32.mrb[0].mxu0
        %6920 = vmatprep.mubr.bf16.mxu0 0
        %6921 = vmatmul.mubr.bf16.gmra.mrb[0].mxu0 %v6821
        %v6922 = vpop.f32.mrb[0].mxu0
        %v6923 = vadd.f32 0.0, %v6922
        %v6924 = vpop.f32.mrb[0].mxu0
        %v6925 = vpop.f32.mrb[0].mxu0
        %v6926 = vadd.f32 0.0, %v6925
        %v6927 = vpop.f32.mrb[0].mxu0
        %6928 = vmatprep.mubr.bf16.mxu0 0
        %6929 = vmatmul.mubr.bf16.gmra.mrb[0].mxu0 %v6824
        %v6930 = vpop.f32.mrb[0].mxu0
        %v6931 = vadd.f32 0.0, %v6930
        %v6932 = vpop.f32.mrb[0].mxu0
        %v6933 = vpop.f32.mrb[0].mxu0
        %v6934 = vadd.f32 0.0, %v6933
        %v6935 = vpop.f32.mrb[0].mxu0
        %6936 = vmatprep.mubr.bf16.mxu0 0
        %6937 = vmatmul.mubr.bf16.gmra.mrb[0].mxu0 %v6827
        %v6938 = vpop.f32.mrb[0].mxu0
        %v6939 = vadd.f32 0.0, %v6938
        %v6940 = vpop.f32.mrb[0].mxu0
        %v6941 = vpop.f32.mrb[0].mxu0
        %v6942 = vadd.f32 0.0, %v6941
        %v6943 = vpop.f32.mrb[0].mxu0
        %6944 = vmatprep.mubr.bf16.mxu0 0
        %6945 = vmatmul.mubr.bf16.gmra.mrb[0].mxu0 %v6830
        %v6946 = vpop.f32.mrb[0].mxu0
        %v6947 = vadd.f32 0.0, %v6946
        %v6948 = vpop.f32.mrb[0].mxu0
        %v6949 = vpop.f32.mrb[0].mxu0
        %v6950 = vadd.f32 0.0, %v6949
        %v6951 = vpop.f32.mrb[0].mxu0
        %6952 = vmatprep.mubr.bf16.mxu0 0
        %6953 = vmatmul.mubr.bf16.gmra.mrb[0].mxu0 %v6833
        %v6954 = vpop.f32.mrb[0].mxu0
        %v6955 = vadd.f32 0.0, %v6954
        %v6956 = vpop.f32.mrb[0].mxu0
        %v6957 = vpop.f32.mrb[0].mxu0
        %v6958 = vadd.f32 0.0, %v6957
        %v6959 = vpop.f32.mrb[0].mxu0
        %6960 = vmatprep.mubr.bf16.mxu0 0
        %6961 = vmatmul.mubr.bf16.gmra.mrb[0].mxu0 %v6836
        %v6962 = vpop.f32.mrb[0].mxu0
        %v6963 = vadd.f32 0.0, %v6962
        %v6964 = vpop.f32.mrb[0].mxu0
        %v6965 = vpop.f32.mrb[0].mxu0
        %v6966 = vadd.f32 0.0, %v6965
        %v6967 = vpop.f32.mrb[0].mxu0
        %6968 = vmatprep.mubr.bf16.mxu0 0
        %6969 = vmatmul.mubr.bf16.gmra.mrb[0].mxu0 %v6839
        %v6970 = vpop.f32.mrb[0].mxu0
        %v6971 = vadd.f32 0.0, %v6970
        %v6972 = vpop.f32.mrb[0].mxu0
        %v6973 = vpop.f32.mrb[0].mxu0
        %v6974 = vadd.f32 0.0, %v6973
        %v6975 = vpop.f32.mrb[0].mxu0
        %6976 = vmatprep.mubr.bf16.mxu0 0
        %6977 = vmatmul.mubr.bf16.gmra.mrb[0].mxu0 %v6842
        %v6978 = vpop.f32.mrb[0].mxu0
        %v6979 = vadd.f32 0.0, %v6978
        %v6980 = vpop.f32.mrb[0].mxu0
        %v6981 = vpop.f32.mrb[0].mxu0
        %v6982 = vadd.f32 0.0, %v6981
        %v6983 = vpop.f32.mrb[0].mxu0
        %6984 = vmatprep.mubr.bf16.mxu0 0
        %6985 = vmatmul.mubr.bf16.gmra.mrb[0].mxu0 %v6845
        %v6986 = vpop.f32.mrb[0].mxu0
        %v6987 = vadd.f32 0.0, %v6986
        %v6988 = vpop.f32.mrb[0].mxu0
        %v6989 = vpop.f32.mrb[0].mxu0
        %v6990 = vadd.f32 0.0, %v6989
        %v6991 = vpop.f32.mrb[0].mxu0
        %6992 = vmatprep.mubr.bf16.mxu0 0
        %6993 = vmatmul.mubr.bf16.gmra.mrb[0].mxu0 %v6848
        %v6994 = vpop.f32.mrb[0].mxu0
        %v6995 = vadd.f32 0.0, %v6994
        %v6996 = vpop.f32.mrb[0].mxu0
        %v6997 = vpop.f32.mrb[0].mxu0
        %v6998 = vadd.f32 0.0, %v6997
        %v6999 = vpop.f32.mrb[0].mxu0
        %7000 = vmatprep.mubr.bf16.mxu0 0
        %7001 = vmatmul.mubr.bf16.gmra.mrb[0].mxu0 %v6851
        %v7002 = vpop.f32.mrb[0].mxu0
        %v7003 = vadd.f32 0.0, %v7002
        %v7004 = vpop.f32.mrb[0].mxu0
        %v7005 = vpop.f32.mrb[0].mxu0
        %v7006 = vadd.f32 0.0, %v7005
        %v7007 = vpop.f32.mrb[0].mxu0
        %7008 = vmatprep.mubr.bf16.mxu0 0
        %7009 = vmatmul.mubr.bf16.gmra.mrb[0].mxu0 %v6854
        %v7010 = vpop.f32.mrb[0].mxu0
        %v7011 = vadd.f32 0.0, %v7010
        %v7012 = vpop.f32.mrb[0].mxu0
        %v7013 = vpop.f32.mrb[0].mxu0
        %v7014 = vadd.f32 0.0, %v7013
        %v7015 = vpop.f32.mrb[0].mxu0
        %7016 = vdwg.mxu0
        %v7017 = vadd.f32 %v6695, %v6891
        %v7018 = vadd.f32 %v6696, %v6894
        %v7019 = vadd.f32 %v6697, %v6899
        %v7020 = vadd.f32 %v6698, %v6902
        %v7021 = vadd.f32 %v6699, %v6907
        %v7022 = vadd.f32 %v6700, %v6910
        %v7023 = vadd.f32 %v6701, %v6915
        %v7024 = vadd.f32 %v6702, %v6918
        %v7025 = vadd.f32 %v6703, %v6923
        %v7026 = vadd.f32 %v6704, %v6926
        %v7027 = vadd.f32 %v6705, %v6931
        %v7028 = vadd.f32 %v6706, %v6934
        %v7029 = vadd.f32 %v6707, %v6939
        %v7030 = vadd.f32 %v6708, %v6942
        %v7031 = vadd.f32 %v6709, %v6947
        %v7032 = vadd.f32 %v6710, %v6950
        %v7033 = vadd.f32 %v6711, %v6955
        %v7034 = vadd.f32 %v6712, %v6958
        %v7035 = vadd.f32 %v6713, %v6963
        %v7036 = vadd.f32 %v6714, %v6966
        %v7037 = vadd.f32 %v6715, %v6971
        %v7038 = vadd.f32 %v6716, %v6974
        %v7039 = vadd.f32 %v6717, %v6979
        %v7040 = vadd.f32 %v6718, %v6982
        %v7041 = vadd.f32 %v6719, %v6987
        %v7042 = vadd.f32 %v6720, %v6990
        %v7043 = vadd.f32 %v6721, %v6995
        %v7044 = vadd.f32 %v6722, %v6998
        %v7045 = vadd.f32 %v6723, %v7003
        %v7046 = vadd.f32 %v6724, %v7006
        %v7047 = vadd.f32 %v6725, %v7011
        %v7048 = vadd.f32 %v6726, %v7014
        %s7049 = scalar_lea.vmem [#allocation2], 48
        %v7050 = vld [vmem:[%s7049] sm:$0xff]
        %v7051 = vld [vmem:[%s7049 + $0x8] sm:$0xff]
        %v7052 = vld [vmem:[%s7049 + $0x18] sm:$0xff]
        %v7053 = vld [vmem:[%s7049 + $0x20] sm:$0xff]
        %v7054 = vld [vmem:[%s7049 + $0x30] sm:$0xff]
        %v7055 = vld [vmem:[%s7049 + $0x38] sm:$0xff]
        %v7056 = vld [vmem:[%s7049 + $0x48] sm:$0xff]
        %v7057 = vld [vmem:[%s7049 + $0x50] sm:$0xff]
        %v7058 = vld [vmem:[%s7049 + $0x60] sm:$0xff]
        %v7059 = vld [vmem:[%s7049 + $0x68] sm:$0xff]
        %v7060 = vld [vmem:[%s7049 + $0x78] sm:$0xff]
        %v7061 = vld [vmem:[%s7049 + $0x80] sm:$0xff]
        %v7062 = vld [vmem:[%s7049 + $0x90] sm:$0xff]
        %v7063 = vld [vmem:[%s7049 + $0x98] sm:$0xff]
        %v7064 = vld [vmem:[%s7049 + $0xa8] sm:$0xff]
        %v7065 = vld [vmem:[%s7049 + $0xb0] sm:$0xff]
        %v7066 = vld [vmem:[%s7049 + $0xc0] sm:$0xff]
        %v7067 = vld [vmem:[%s7049 + $0xc8] sm:$0xff]
        %v7068 = vld [vmem:[%s7049 + $0xd8] sm:$0xff]
        %v7069 = vld [vmem:[%s7049 + $0xe0] sm:$0xff]
        %v7070 = vld [vmem:[%s7049 + $0xf0] sm:$0xff]
        %v7071 = vld [vmem:[%s7049 + $0xf8] sm:$0xff]
        %v7072 = vld [vmem:[%s7049 + $0x108] sm:$0xff]
        %v7073 = vld [vmem:[%s7049 + $0x110] sm:$0xff]
        %v7074 = vld [vmem:[%s7049 + $0x120] sm:$0xff]
        %v7075 = vld [vmem:[%s7049 + $0x128] sm:$0xff]
        %v7076 = vld [vmem:[%s7049 + $0x138] sm:$0xff]
        %v7077 = vld [vmem:[%s7049 + $0x140] sm:$0xff]
        %v7078 = vld [vmem:[%s7049 + $0x150] sm:$0xff]
        %v7079 = vld [vmem:[%s7049 + $0x158] sm:$0xff]
        %v7080 = vld [vmem:[%s7049 + $0x168] sm:$0xff]
        %v7081 = vld [vmem:[%s7049 + $0x170] sm:$0xff]
        %v7082 = vpack.c.bf16 %v7051, %v7050
        %v7083 = vpack.c.bf16 %v7053, %v7052
        %v7084 = vpack.c.bf16 %v7055, %v7054
        %v7085 = vpack.c.bf16 %v7057, %v7056
        %v7086 = vpack.c.bf16 %v7059, %v7058
        %v7087 = vpack.c.bf16 %v7061, %v7060
        %v7088 = vpack.c.bf16 %v7063, %v7062
        %v7089 = vpack.c.bf16 %v7065, %v7064
        %v7090 = vpack.c.bf16 %v7067, %v7066
        %v7091 = vpack.c.bf16 %v7069, %v7068
        %v7092 = vpack.c.bf16 %v7071, %v7070
        %v7093 = vpack.c.bf16 %v7073, %v7072
        %v7094 = vpack.c.bf16 %v7075, %v7074
        %v7095 = vpack.c.bf16 %v7077, %v7076
        %v7096 = vpack.c.bf16 %v7079, %v7078
        %v7097 = vpack.c.bf16 %v7081, %v7080
        %s7098 = scalar_lea.vmem %s3, 192
        %v7099 = vld [vmem:[%s7098] sm:$0xf]
        %v7100 = vld [vmem:[%s7098 + $0x4] sm:$0xf]
        %v7101 = vld [vmem:[%s7098 + $0x8] sm:$0xf]
        %v7102 = vld [vmem:[%s7098 + $0xc] sm:$0xf]
        %v7103 = vld [vmem:[%s7098 + $0x10] sm:$0xf]
        %v7104 = vld [vmem:[%s7098 + $0x14] sm:$0xf]
        %v7105 = vld [vmem:[%s7098 + $0x18] sm:$0xf]
        %v7106 = vld [vmem:[%s7098 + $0x1c] sm:$0xf]
        %v7115 = vunpack.c.l.b16 %v7099
        %v7116 = vunpack.c.l.b16 %v7100
        %v7117 = vunpack.c.l.b16 %v7101
        %v7118 = vunpack.c.l.b16 %v7102
        %v7119 = vunpack.c.l.b16 %v7103
        %v7120 = vunpack.c.l.b16 %v7104
        %v7121 = vunpack.c.l.b16 %v7105
        %v7122 = vunpack.c.l.b16 %v7106
        %v7123 = vpack.c.b16 %v7116, %v7115
        %v7124 = vpack.c.b16 %v7118, %v7117
        %v7125 = vpack.c.b16 %v7120, %v7119
        %v7126 = vpack.c.b16 %v7122, %v7121
        %v7132 = vsel %vm4822, %v7082, 0
        %v7135 = vsel %vm4822, %v7083, 0
        %v7138 = vsel %vm4822, %v7084, 0
        %v7141 = vsel %vm4822, %v7085, 0
        %v7144 = vsel %vm4822, %v7086, 0
        %v7147 = vsel %vm4822, %v7087, 0
        %v7150 = vsel %vm4822, %v7088, 0
        %v7153 = vsel %vm4822, %v7089, 0
        %v7156 = vsel %vm4822, %v7090, 0
        %v7159 = vsel %vm4822, %v7091, 0
        %v7162 = vsel %vm4822, %v7092, 0
        %v7165 = vsel %vm4822, %v7093, 0
        %v7168 = vsel %vm4822, %v7094, 0
        %v7171 = vsel %vm4822, %v7095, 0
        %v7174 = vsel %vm4822, %v7096, 0
        %v7177 = vsel %vm4822, %v7097, 0
        %7179 = vmatprep.subr.bf16.mxu0 0
        %7180 = vmatpush1.bf16.msra.mxu0 %v7123
        %7181 = vmatprep.subr.bf16.mxu0 0
        %7182 = vmatpush1.bf16.msra.mxu0 %v7124
        %7183 = vmatprep.subr.bf16.mxu0 0
        %7184 = vmatpush1.bf16.msra.mxu0 %v7125
        %7185 = vmatprep.subr.bf16.mxu0 0
        %7186 = vmatpush1.bf16.msra.mxu0 %v7126
        %7187 = vmatprep.subr.bf16.mxu0 0
        %7188 = vmatpush1.bf16.msra.mxu0 0
        %7189 = vmatprep.subr.bf16.mxu0 0
        %7190 = vmatpush1.bf16.msra.mxu0 0
        %7191 = vmatprep.subr.bf16.mxu0 0
        %7192 = vmatpush1.bf16.msra.mxu0 0
        %7193 = vmatprep.subr.bf16.mxu0 0
        %7194 = vmatpush1.bf16.msra.mxu0 0
        %7195 = vmatprep.subr.bf16.mxu0 0
        %7196 = vmatpush1.bf16.msra.mxu0 0
        %7197 = vmatprep.subr.bf16.mxu0 0
        %7198 = vmatpush1.bf16.msra.mxu0 0
        %7199 = vmatprep.subr.bf16.mxu0 0
        %7200 = vmatpush1.bf16.msra.mxu0 0
        %7201 = vmatprep.subr.bf16.mxu0 0
        %7202 = vmatpush1.bf16.msra.mxu0 0
        %7203 = vmatprep.subr.bf16.mxu0 0
        %7204 = vmatpush1.bf16.msra.mxu0 0
        %7205 = vmatprep.subr.bf16.mxu0 0
        %7206 = vmatpush1.bf16.msra.mxu0 0
        %7207 = vmatprep.subr.bf16.mxu0 0
        %7208 = vmatpush1.bf16.msra.mxu0 0
        %7209 = vmatprep.subr.bf16.mxu0 0
        %7210 = vmatpush1.bf16.msra.mxu0 0
        %7211 = vmatprep.mubr.bf16.mxu0 0
        %7212 = vmatmul.mubr.bf16.gmra.mrb[0].mxu0 %v7132
        %v7213 = vpop.f32.mrb[0].mxu0
        %v7214 = vadd.f32 0.0, %v7213
        %v7215 = vpop.f32.mrb[0].mxu0
        %v7216 = vpop.f32.mrb[0].mxu0
        %v7217 = vadd.f32 0.0, %v7216
        %v7218 = vpop.f32.mrb[0].mxu0
        %7219 = vmatprep.mubr.bf16.mxu0 0
        %7220 = vmatmul.mubr.bf16.gmra.mrb[0].mxu0 %v7135
        %v7221 = vpop.f32.mrb[0].mxu0
        %v7222 = vadd.f32 0.0, %v7221
        %v7223 = vpop.f32.mrb[0].mxu0
        %v7224 = vpop.f32.mrb[0].mxu0
        %v7225 = vadd.f32 0.0, %v7224
        %v7226 = vpop.f32.mrb[0].mxu0
        %7227 = vmatprep.mubr.bf16.mxu0 0
        %7228 = vmatmul.mubr.bf16.gmra.mrb[0].mxu0 %v7138
        %v7229 = vpop.f32.mrb[0].mxu0
        %v7230 = vadd.f32 0.0, %v7229
        %v7231 = vpop.f32.mrb[0].mxu0
        %v7232 = vpop.f32.mrb[0].mxu0
        %v7233 = vadd.f32 0.0, %v7232
        %v7234 = vpop.f32.mrb[0].mxu0
        %7235 = vmatprep.mubr.bf16.mxu0 0
        %7236 = vmatmul.mubr.bf16.gmra.mrb[0].mxu0 %v7141
        %v7237 = vpop.f32.mrb[0].mxu0
        %v7238 = vadd.f32 0.0, %v7237
        %v7239 = vpop.f32.mrb[0].mxu0
        %v7240 = vpop.f32.mrb[0].mxu0
        %v7241 = vadd.f32 0.0, %v7240
        %v7242 = vpop.f32.mrb[0].mxu0
        %7243 = vmatprep.mubr.bf16.mxu0 0
        %7244 = vmatmul.mubr.bf16.gmra.mrb[0].mxu0 %v7144
        %v7245 = vpop.f32.mrb[0].mxu0
        %v7246 = vadd.f32 0.0, %v7245
        %v7247 = vpop.f32.mrb[0].mxu0
        %v7248 = vpop.f32.mrb[0].mxu0
        %v7249 = vadd.f32 0.0, %v7248
        %v7250 = vpop.f32.mrb[0].mxu0
        %7251 = vmatprep.mubr.bf16.mxu0 0
        %7252 = vmatmul.mubr.bf16.gmra.mrb[0].mxu0 %v7147
        %v7253 = vpop.f32.mrb[0].mxu0
        %v7254 = vadd.f32 0.0, %v7253
        %v7255 = vpop.f32.mrb[0].mxu0
        %v7256 = vpop.f32.mrb[0].mxu0
        %v7257 = vadd.f32 0.0, %v7256
        %v7258 = vpop.f32.mrb[0].mxu0
        %7259 = vmatprep.mubr.bf16.mxu0 0
        %7260 = vmatmul.mubr.bf16.gmra.mrb[0].mxu0 %v7150
        %v7261 = vpop.f32.mrb[0].mxu0
        %v7262 = vadd.f32 0.0, %v7261
        %v7263 = vpop.f32.mrb[0].mxu0
        %v7264 = vpop.f32.mrb[0].mxu0
        %v7265 = vadd.f32 0.0, %v7264
        %v7266 = vpop.f32.mrb[0].mxu0
        %7267 = vmatprep.mubr.bf16.mxu0 0
        %7268 = vmatmul.mubr.bf16.gmra.mrb[0].mxu0 %v7153
        %v7269 = vpop.f32.mrb[0].mxu0
        %v7270 = vadd.f32 0.0, %v7269
        %v7271 = vpop.f32.mrb[0].mxu0
        %v7272 = vpop.f32.mrb[0].mxu0
        %v7273 = vadd.f32 0.0, %v7272
        %v7274 = vpop.f32.mrb[0].mxu0
        %7275 = vmatprep.mubr.bf16.mxu0 0
        %7276 = vmatmul.mubr.bf16.gmra.mrb[0].mxu0 %v7156
        %v7277 = vpop.f32.mrb[0].mxu0
        %v7278 = vadd.f32 0.0, %v7277
        %v7279 = vpop.f32.mrb[0].mxu0
        %v7280 = vpop.f32.mrb[0].mxu0
        %v7281 = vadd.f32 0.0, %v7280
        %v7282 = vpop.f32.mrb[0].mxu0
        %7283 = vmatprep.mubr.bf16.mxu0 0
        %7284 = vmatmul.mubr.bf16.gmra.mrb[0].mxu0 %v7159
        %v7285 = vpop.f32.mrb[0].mxu0
        %v7286 = vadd.f32 0.0, %v7285
        %v7287 = vpop.f32.mrb[0].mxu0
        %v7288 = vpop.f32.mrb[0].mxu0
        %v7289 = vadd.f32 0.0, %v7288
        %v7290 = vpop.f32.mrb[0].mxu0
        %7291 = vmatprep.mubr.bf16.mxu0 0
        %7292 = vmatmul.mubr.bf16.gmra.mrb[0].mxu0 %v7162
        %v7293 = vpop.f32.mrb[0].mxu0
        %v7294 = vadd.f32 0.0, %v7293
        %v7295 = vpop.f32.mrb[0].mxu0
        %v7296 = vpop.f32.mrb[0].mxu0
        %v7297 = vadd.f32 0.0, %v7296
        %v7298 = vpop.f32.mrb[0].mxu0
        %7299 = vmatprep.mubr.bf16.mxu0 0
        %7300 = vmatmul.mubr.bf16.gmra.mrb[0].mxu0 %v7165
        %v7301 = vpop.f32.mrb[0].mxu0
        %v7302 = vadd.f32 0.0, %v7301
        %v7303 = vpop.f32.mrb[0].mxu0
        %v7304 = vpop.f32.mrb[0].mxu0
        %v7305 = vadd.f32 0.0, %v7304
        %v7306 = vpop.f32.mrb[0].mxu0
        %7307 = vmatprep.mubr.bf16.mxu0 0
        %7308 = vmatmul.mubr.bf16.gmra.mrb[0].mxu0 %v7168
        %v7309 = vpop.f32.mrb[0].mxu0
        %v7310 = vadd.f32 0.0, %v7309
        %v7311 = vpop.f32.mrb[0].mxu0
        %v7312 = vpop.f32.mrb[0].mxu0
        %v7313 = vadd.f32 0.0, %v7312
        %v7314 = vpop.f32.mrb[0].mxu0
        %7315 = vmatprep.mubr.bf16.mxu0 0
        %7316 = vmatmul.mubr.bf16.gmra.mrb[0].mxu0 %v7171
        %v7317 = vpop.f32.mrb[0].mxu0
        %v7318 = vadd.f32 0.0, %v7317
        %v7319 = vpop.f32.mrb[0].mxu0
        %v7320 = vpop.f32.mrb[0].mxu0
        %v7321 = vadd.f32 0.0, %v7320
        %v7322 = vpop.f32.mrb[0].mxu0
        %7323 = vmatprep.mubr.bf16.mxu0 0
        %7324 = vmatmul.mubr.bf16.gmra.mrb[0].mxu0 %v7174
        %v7325 = vpop.f32.mrb[0].mxu0
        %v7326 = vadd.f32 0.0, %v7325
        %v7327 = vpop.f32.mrb[0].mxu0
        %v7328 = vpop.f32.mrb[0].mxu0
        %v7329 = vadd.f32 0.0, %v7328
        %v7330 = vpop.f32.mrb[0].mxu0
        %7331 = vmatprep.mubr.bf16.mxu0 0
        %7332 = vmatmul.mubr.bf16.gmra.mrb[0].mxu0 %v7177
        %v7333 = vpop.f32.mrb[0].mxu0
        %v7334 = vadd.f32 0.0, %v7333
        %v7335 = vpop.f32.mrb[0].mxu0
        %v7336 = vpop.f32.mrb[0].mxu0
        %v7337 = vadd.f32 0.0, %v7336
        %v7338 = vpop.f32.mrb[0].mxu0
        %7339 = vdwg.mxu0
        %v7340 = vadd.f32 %v7017, %v7214
        %v7341 = vadd.f32 %v7018, %v7217
        %v7342 = vadd.f32 %v7019, %v7222
        %v7343 = vadd.f32 %v7020, %v7225
        %v7344 = vadd.f32 %v7021, %v7230
        %v7345 = vadd.f32 %v7022, %v7233
        %v7346 = vadd.f32 %v7023, %v7238
        %v7347 = vadd.f32 %v7024, %v7241
        %v7348 = vadd.f32 %v7025, %v7246
        %v7349 = vadd.f32 %v7026, %v7249
        %v7350 = vadd.f32 %v7027, %v7254
        %v7351 = vadd.f32 %v7028, %v7257
        %v7352 = vadd.f32 %v7029, %v7262
        %v7353 = vadd.f32 %v7030, %v7265
        %v7354 = vadd.f32 %v7031, %v7270
        %v7355 = vadd.f32 %v7032, %v7273
        %v7356 = vadd.f32 %v7033, %v7278
        %v7357 = vadd.f32 %v7034, %v7281
        %v7358 = vadd.f32 %v7035, %v7286
        %v7359 = vadd.f32 %v7036, %v7289
        %v7360 = vadd.f32 %v7037, %v7294
        %v7361 = vadd.f32 %v7038, %v7297
        %v7362 = vadd.f32 %v7039, %v7302
        %v7363 = vadd.f32 %v7040, %v7305
        %v7364 = vadd.f32 %v7041, %v7310
        %v7365 = vadd.f32 %v7042, %v7313
        %v7366 = vadd.f32 %v7043, %v7318
        %v7367 = vadd.f32 %v7044, %v7321
        %v7368 = vadd.f32 %v7045, %v7326
        %v7369 = vadd.f32 %v7046, %v7329
        %v7370 = vadd.f32 %v7047, %v7334
        %v7371 = vadd.f32 %v7048, %v7337
        %v7372 = vld [vmem:[%s7049 + $0x1] sm:$0xff]
        %v7373 = vld [vmem:[%s7049 + $0x9] sm:$0xff]
        %v7374 = vld [vmem:[%s7049 + $0x19] sm:$0xff]
        %v7375 = vld [vmem:[%s7049 + $0x21] sm:$0xff]
        %v7376 = vld [vmem:[%s7049 + $0x31] sm:$0xff]
        %v7377 = vld [vmem:[%s7049 + $0x39] sm:$0xff]
        %v7378 = vld [vmem:[%s7049 + $0x49] sm:$0xff]
        %v7379 = vld [vmem:[%s7049 + $0x51] sm:$0xff]
        %v7380 = vld [vmem:[%s7049 + $0x61] sm:$0xff]
        %v7381 = vld [vmem:[%s7049 + $0x69] sm:$0xff]
        %v7382 = vld [vmem:[%s7049 + $0x79] sm:$0xff]
        %v7383 = vld [vmem:[%s7049 + $0x81] sm:$0xff]
        %v7384 = vld [vmem:[%s7049 + $0x91] sm:$0xff]
        %v7385 = vld [vmem:[%s7049 + $0x99] sm:$0xff]
        %v7386 = vld [vmem:[%s7049 + $0xa9] sm:$0xff]
        %v7387 = vld [vmem:[%s7049 + $0xb1] sm:$0xff]
        %v7388 = vld [vmem:[%s7049 + $0xc1] sm:$0xff]
        %v7389 = vld [vmem:[%s7049 + $0xc9] sm:$0xff]
        %v7390 = vld [vmem:[%s7049 + $0xd9] sm:$0xff]
        %v7391 = vld [vmem:[%s7049 + $0xe1] sm:$0xff]
        %v7392 = vld [vmem:[%s7049 + $0xf1] sm:$0xff]
        %v7393 = vld [vmem:[%s7049 + $0xf9] sm:$0xff]
        %v7394 = vld [vmem:[%s7049 + $0x109] sm:$0xff]
        %v7395 = vld [vmem:[%s7049 + $0x111] sm:$0xff]
        %v7396 = vld [vmem:[%s7049 + $0x121] sm:$0xff]
        %v7397 = vld [vmem:[%s7049 + $0x129] sm:$0xff]
        %v7398 = vld [vmem:[%s7049 + $0x139] sm:$0xff]
        %v7399 = vld [vmem:[%s7049 + $0x141] sm:$0xff]
        %v7400 = vld [vmem:[%s7049 + $0x151] sm:$0xff]
        %v7401 = vld [vmem:[%s7049 + $0x159] sm:$0xff]
        %v7402 = vld [vmem:[%s7049 + $0x169] sm:$0xff]
        %v7403 = vld [vmem:[%s7049 + $0x171] sm:$0xff]
        %v7404 = vpack.c.bf16 %v7373, %v7372
        %v7405 = vpack.c.bf16 %v7375, %v7374
        %v7406 = vpack.c.bf16 %v7377, %v7376
        %v7407 = vpack.c.bf16 %v7379, %v7378
        %v7408 = vpack.c.bf16 %v7381, %v7380
        %v7409 = vpack.c.bf16 %v7383, %v7382
        %v7410 = vpack.c.bf16 %v7385, %v7384
        %v7411 = vpack.c.bf16 %v7387, %v7386
        %v7412 = vpack.c.bf16 %v7389, %v7388
        %v7413 = vpack.c.bf16 %v7391, %v7390
        %v7414 = vpack.c.bf16 %v7393, %v7392
        %v7415 = vpack.c.bf16 %v7395, %v7394
        %v7416 = vpack.c.bf16 %v7397, %v7396
        %v7417 = vpack.c.bf16 %v7399, %v7398
        %v7418 = vpack.c.bf16 %v7401, %v7400
        %v7419 = vpack.c.bf16 %v7403, %v7402
        %s7420 = scalar_lea.vmem %s3, 224
        %v7421 = vld [vmem:[%s7420] sm:$0xf]
        %v7422 = vld [vmem:[%s7420 + $0x4] sm:$0xf]
        %v7423 = vld [vmem:[%s7420 + $0x8] sm:$0xf]
        %v7424 = vld [vmem:[%s7420 + $0xc] sm:$0xf]
        %v7425 = vld [vmem:[%s7420 + $0x10] sm:$0xf]
        %v7426 = vld [vmem:[%s7420 + $0x14] sm:$0xf]
        %v7427 = vld [vmem:[%s7420 + $0x18] sm:$0xf]
        %v7428 = vld [vmem:[%s7420 + $0x1c] sm:$0xf]
        %v7437 = vunpack.c.l.b16 %v7421
        %v7438 = vunpack.c.l.b16 %v7422
        %v7439 = vunpack.c.l.b16 %v7423
        %v7440 = vunpack.c.l.b16 %v7424
        %v7441 = vunpack.c.l.b16 %v7425
        %v7442 = vunpack.c.l.b16 %v7426
        %v7443 = vunpack.c.l.b16 %v7427
        %v7444 = vunpack.c.l.b16 %v7428
        %v7445 = vpack.c.b16 %v7438, %v7437
        %v7446 = vpack.c.b16 %v7440, %v7439
        %v7447 = vpack.c.b16 %v7442, %v7441
        %v7448 = vpack.c.b16 %v7444, %v7443
        %v7454 = vsel %vm4822, %v7404, 0
        %v7457 = vsel %vm4822, %v7405, 0
        %v7460 = vsel %vm4822, %v7406, 0
        %v7463 = vsel %vm4822, %v7407, 0
        %v7466 = vsel %vm4822, %v7408, 0
        %v7469 = vsel %vm4822, %v7409, 0
        %v7472 = vsel %vm4822, %v7410, 0
        %v7475 = vsel %vm4822, %v7411, 0
        %v7478 = vsel %vm4822, %v7412, 0
        %v7481 = vsel %vm4822, %v7413, 0
        %v7484 = vsel %vm4822, %v7414, 0
        %v7487 = vsel %vm4822, %v7415, 0
        %v7490 = vsel %vm4822, %v7416, 0
        %v7493 = vsel %vm4822, %v7417, 0
        %v7496 = vsel %vm4822, %v7418, 0
        %v7499 = vsel %vm4822, %v7419, 0
        %7501 = vmatprep.subr.bf16.mxu0 0
        %7502 = vmatpush1.bf16.msra.mxu0 %v7445
        %7503 = vmatprep.subr.bf16.mxu0 0
        %7504 = vmatpush1.bf16.msra.mxu0 %v7446
        %7505 = vmatprep.subr.bf16.mxu0 0
        %7506 = vmatpush1.bf16.msra.mxu0 %v7447
        %7507 = vmatprep.subr.bf16.mxu0 0
        %7508 = vmatpush1.bf16.msra.mxu0 %v7448
        %7509 = vmatprep.subr.bf16.mxu0 0
        %7510 = vmatpush1.bf16.msra.mxu0 0
        %7511 = vmatprep.subr.bf16.mxu0 0
        %7512 = vmatpush1.bf16.msra.mxu0 0
        %7513 = vmatprep.subr.bf16.mxu0 0
        %7514 = vmatpush1.bf16.msra.mxu0 0
        %7515 = vmatprep.subr.bf16.mxu0 0
        %7516 = vmatpush1.bf16.msra.mxu0 0
        %7517 = vmatprep.subr.bf16.mxu0 0
        %7518 = vmatpush1.bf16.msra.mxu0 0
        %7519 = vmatprep.subr.bf16.mxu0 0
        %7520 = vmatpush1.bf16.msra.mxu0 0
        %7521 = vmatprep.subr.bf16.mxu0 0
        %7522 = vmatpush1.bf16.msra.mxu0 0
        %7523 = vmatprep.subr.bf16.mxu0 0
        %7524 = vmatpush1.bf16.msra.mxu0 0
        %7525 = vmatprep.subr.bf16.mxu0 0
        %7526 = vmatpush1.bf16.msra.mxu0 0
        %7527 = vmatprep.subr.bf16.mxu0 0
        %7528 = vmatpush1.bf16.msra.mxu0 0
        %7529 = vmatprep.subr.bf16.mxu0 0
        %7530 = vmatpush1.bf16.msra.mxu0 0
        %7531 = vmatprep.subr.bf16.mxu0 0
        %7532 = vmatpush1.bf16.msra.mxu0 0
        %7533 = vmatprep.mubr.bf16.mxu0 0
        %7534 = vmatmul.mubr.bf16.gmra.mrb[0].mxu0 %v7454
        %v7535 = vpop.f32.mrb[0].mxu0
        %v7536 = vadd.f32 0.0, %v7535
        %v7537 = vpop.f32.mrb[0].mxu0
        %v7538 = vpop.f32.mrb[0].mxu0
        %v7539 = vadd.f32 0.0, %v7538
        %v7540 = vpop.f32.mrb[0].mxu0
        %7541 = vmatprep.mubr.bf16.mxu0 0
        %7542 = vmatmul.mubr.bf16.gmra.mrb[0].mxu0 %v7457
        %v7543 = vpop.f32.mrb[0].mxu0
        %v7544 = vadd.f32 0.0, %v7543
        %v7545 = vpop.f32.mrb[0].mxu0
        %v7546 = vpop.f32.mrb[0].mxu0
        %v7547 = vadd.f32 0.0, %v7546
        %v7548 = vpop.f32.mrb[0].mxu0
        %7549 = vmatprep.mubr.bf16.mxu0 0
        %7550 = vmatmul.mubr.bf16.gmra.mrb[0].mxu0 %v7460
        %v7551 = vpop.f32.mrb[0].mxu0
        %v7552 = vadd.f32 0.0, %v7551
        %v7553 = vpop.f32.mrb[0].mxu0
        %v7554 = vpop.f32.mrb[0].mxu0
        %v7555 = vadd.f32 0.0, %v7554
        %v7556 = vpop.f32.mrb[0].mxu0
        %7557 = vmatprep.mubr.bf16.mxu0 0
        %7558 = vmatmul.mubr.bf16.gmra.mrb[0].mxu0 %v7463
        %v7559 = vpop.f32.mrb[0].mxu0
        %v7560 = vadd.f32 0.0, %v7559
        %v7561 = vpop.f32.mrb[0].mxu0
        %v7562 = vpop.f32.mrb[0].mxu0
        %v7563 = vadd.f32 0.0, %v7562
        %v7564 = vpop.f32.mrb[0].mxu0
        %7565 = vmatprep.mubr.bf16.mxu0 0
        %7566 = vmatmul.mubr.bf16.gmra.mrb[0].mxu0 %v7466
        %v7567 = vpop.f32.mrb[0].mxu0
        %v7568 = vadd.f32 0.0, %v7567
        %v7569 = vpop.f32.mrb[0].mxu0
        %v7570 = vpop.f32.mrb[0].mxu0
        %v7571 = vadd.f32 0.0, %v7570
        %v7572 = vpop.f32.mrb[0].mxu0
        %7573 = vmatprep.mubr.bf16.mxu0 0
        %7574 = vmatmul.mubr.bf16.gmra.mrb[0].mxu0 %v7469
        %v7575 = vpop.f32.mrb[0].mxu0
        %v7576 = vadd.f32 0.0, %v7575
        %v7577 = vpop.f32.mrb[0].mxu0
        %v7578 = vpop.f32.mrb[0].mxu0
        %v7579 = vadd.f32 0.0, %v7578
        %v7580 = vpop.f32.mrb[0].mxu0
        %7581 = vmatprep.mubr.bf16.mxu0 0
        %7582 = vmatmul.mubr.bf16.gmra.mrb[0].mxu0 %v7472
        %v7583 = vpop.f32.mrb[0].mxu0
        %v7584 = vadd.f32 0.0, %v7583
        %v7585 = vpop.f32.mrb[0].mxu0
        %v7586 = vpop.f32.mrb[0].mxu0
        %v7587 = vadd.f32 0.0, %v7586
        %v7588 = vpop.f32.mrb[0].mxu0
        %7589 = vmatprep.mubr.bf16.mxu0 0
        %7590 = vmatmul.mubr.bf16.gmra.mrb[0].mxu0 %v7475
        %v7591 = vpop.f32.mrb[0].mxu0
        %v7592 = vadd.f32 0.0, %v7591
        %v7593 = vpop.f32.mrb[0].mxu0
        %v7594 = vpop.f32.mrb[0].mxu0
        %v7595 = vadd.f32 0.0, %v7594
        %v7596 = vpop.f32.mrb[0].mxu0
        %7597 = vmatprep.mubr.bf16.mxu0 0
        %7598 = vmatmul.mubr.bf16.gmra.mrb[0].mxu0 %v7478
        %v7599 = vpop.f32.mrb[0].mxu0
        %v7600 = vadd.f32 0.0, %v7599
        %v7601 = vpop.f32.mrb[0].mxu0
        %v7602 = vpop.f32.mrb[0].mxu0
        %v7603 = vadd.f32 0.0, %v7602
        %v7604 = vpop.f32.mrb[0].mxu0
        %7605 = vmatprep.mubr.bf16.mxu0 0
        %7606 = vmatmul.mubr.bf16.gmra.mrb[0].mxu0 %v7481
        %v7607 = vpop.f32.mrb[0].mxu0
        %v7608 = vadd.f32 0.0, %v7607
        %v7609 = vpop.f32.mrb[0].mxu0
        %v7610 = vpop.f32.mrb[0].mxu0
        %v7611 = vadd.f32 0.0, %v7610
        %v7612 = vpop.f32.mrb[0].mxu0
        %7613 = vmatprep.mubr.bf16.mxu0 0
        %7614 = vmatmul.mubr.bf16.gmra.mrb[0].mxu0 %v7484
        %v7615 = vpop.f32.mrb[0].mxu0
        %v7616 = vadd.f32 0.0, %v7615
        %v7617 = vpop.f32.mrb[0].mxu0
        %v7618 = vpop.f32.mrb[0].mxu0
        %v7619 = vadd.f32 0.0, %v7618
        %v7620 = vpop.f32.mrb[0].mxu0
        %7621 = vmatprep.mubr.bf16.mxu0 0
        %7622 = vmatmul.mubr.bf16.gmra.mrb[0].mxu0 %v7487
        %v7623 = vpop.f32.mrb[0].mxu0
        %v7624 = vadd.f32 0.0, %v7623
        %v7625 = vpop.f32.mrb[0].mxu0
        %v7626 = vpop.f32.mrb[0].mxu0
        %v7627 = vadd.f32 0.0, %v7626
        %v7628 = vpop.f32.mrb[0].mxu0
        %7629 = vmatprep.mubr.bf16.mxu0 0
        %7630 = vmatmul.mubr.bf16.gmra.mrb[0].mxu0 %v7490
        %v7631 = vpop.f32.mrb[0].mxu0
        %v7632 = vadd.f32 0.0, %v7631
        %v7633 = vpop.f32.mrb[0].mxu0
        %v7634 = vpop.f32.mrb[0].mxu0
        %v7635 = vadd.f32 0.0, %v7634
        %v7636 = vpop.f32.mrb[0].mxu0
        %7637 = vmatprep.mubr.bf16.mxu0 0
        %7638 = vmatmul.mubr.bf16.gmra.mrb[0].mxu0 %v7493
        %v7639 = vpop.f32.mrb[0].mxu0
        %v7640 = vadd.f32 0.0, %v7639
        %v7641 = vpop.f32.mrb[0].mxu0
        %v7642 = vpop.f32.mrb[0].mxu0
        %v7643 = vadd.f32 0.0, %v7642
        %v7644 = vpop.f32.mrb[0].mxu0
        %7645 = vmatprep.mubr.bf16.mxu0 0
        %7646 = vmatmul.mubr.bf16.gmra.mrb[0].mxu0 %v7496
        %v7647 = vpop.f32.mrb[0].mxu0
        %v7648 = vadd.f32 0.0, %v7647
        %v7649 = vpop.f32.mrb[0].mxu0
        %v7650 = vpop.f32.mrb[0].mxu0
        %v7651 = vadd.f32 0.0, %v7650
        %v7652 = vpop.f32.mrb[0].mxu0
        %7653 = vmatprep.mubr.bf16.mxu0 0
        %7654 = vmatmul.mubr.bf16.gmra.mrb[0].mxu0 %v7499
        %v7655 = vpop.f32.mrb[0].mxu0
        %v7656 = vadd.f32 0.0, %v7655
        %v7657 = vpop.f32.mrb[0].mxu0
        %v7658 = vpop.f32.mrb[0].mxu0
        %v7659 = vadd.f32 0.0, %v7658
        %v7660 = vpop.f32.mrb[0].mxu0
        %7661 = vdwg.mxu0
        %v7662 = vadd.f32 %v7340, %v7536
        %v7663 = vadd.f32 %v7341, %v7539
        %v7664 = vadd.f32 %v7342, %v7544
        %v7665 = vadd.f32 %v7343, %v7547
        %v7666 = vadd.f32 %v7344, %v7552
        %v7667 = vadd.f32 %v7345, %v7555
        %v7668 = vadd.f32 %v7346, %v7560
        %v7669 = vadd.f32 %v7347, %v7563
        %v7670 = vadd.f32 %v7348, %v7568
        %v7671 = vadd.f32 %v7349, %v7571
        %v7672 = vadd.f32 %v7350, %v7576
        %v7673 = vadd.f32 %v7351, %v7579
        %v7674 = vadd.f32 %v7352, %v7584
        %v7675 = vadd.f32 %v7353, %v7587
        %v7676 = vadd.f32 %v7354, %v7592
        %v7677 = vadd.f32 %v7355, %v7595
        %v7678 = vadd.f32 %v7356, %v7600
        %v7679 = vadd.f32 %v7357, %v7603
        %v7680 = vadd.f32 %v7358, %v7608
        %v7681 = vadd.f32 %v7359, %v7611
        %v7682 = vadd.f32 %v7360, %v7616
        %v7683 = vadd.f32 %v7361, %v7619
        %v7684 = vadd.f32 %v7362, %v7624
        %v7685 = vadd.f32 %v7363, %v7627
        %v7686 = vadd.f32 %v7364, %v7632
        %v7687 = vadd.f32 %v7365, %v7635
        %v7688 = vadd.f32 %v7366, %v7640
        %v7689 = vadd.f32 %v7367, %v7643
        %v7690 = vadd.f32 %v7368, %v7648
        %v7691 = vadd.f32 %v7369, %v7651
        %v7692 = vadd.f32 %v7370, %v7656
        %v7693 = vadd.f32 %v7371, %v7659
        %v7694 = vld [vmem:[%s7049 + $0x2] sm:$0xff]
        %v7695 = vld [vmem:[%s7049 + $0xa] sm:$0xff]
        %v7696 = vld [vmem:[%s7049 + $0x1a] sm:$0xff]
        %v7697 = vld [vmem:[%s7049 + $0x22] sm:$0xff]
        %v7698 = vld [vmem:[%s7049 + $0x32] sm:$0xff]
        %v7699 = vld [vmem:[%s7049 + $0x3a] sm:$0xff]
        %v7700 = vld [vmem:[%s7049 + $0x4a] sm:$0xff]
        %v7701 = vld [vmem:[%s7049 + $0x52] sm:$0xff]
        %v7702 = vld [vmem:[%s7049 + $0x62] sm:$0xff]
        %v7703 = vld [vmem:[%s7049 + $0x6a] sm:$0xff]
        %v7704 = vld [vmem:[%s7049 + $0x7a] sm:$0xff]
        %v7705 = vld [vmem:[%s7049 + $0x82] sm:$0xff]
        %v7706 = vld [vmem:[%s7049 + $0x92] sm:$0xff]
        %v7707 = vld [vmem:[%s7049 + $0x9a] sm:$0xff]
        %v7708 = vld [vmem:[%s7049 + $0xaa] sm:$0xff]
        %v7709 = vld [vmem:[%s7049 + $0xb2] sm:$0xff]
        %v7710 = vld [vmem:[%s7049 + $0xc2] sm:$0xff]
        %v7711 = vld [vmem:[%s7049 + $0xca] sm:$0xff]
        %v7712 = vld [vmem:[%s7049 + $0xda] sm:$0xff]
        %v7713 = vld [vmem:[%s7049 + $0xe2] sm:$0xff]
        %v7714 = vld [vmem:[%s7049 + $0xf2] sm:$0xff]
        %v7715 = vld [vmem:[%s7049 + $0xfa] sm:$0xff]
        %v7716 = vld [vmem:[%s7049 + $0x10a] sm:$0xff]
        %v7717 = vld [vmem:[%s7049 + $0x112] sm:$0xff]
        %v7718 = vld [vmem:[%s7049 + $0x122] sm:$0xff]
        %v7719 = vld [vmem:[%s7049 + $0x12a] sm:$0xff]
        %v7720 = vld [vmem:[%s7049 + $0x13a] sm:$0xff]
        %v7721 = vld [vmem:[%s7049 + $0x142] sm:$0xff]
        %v7722 = vld [vmem:[%s7049 + $0x152] sm:$0xff]
        %v7723 = vld [vmem:[%s7049 + $0x15a] sm:$0xff]
        %v7724 = vld [vmem:[%s7049 + $0x16a] sm:$0xff]
        %v7725 = vld [vmem:[%s7049 + $0x172] sm:$0xff]
        %v7726 = vpack.c.bf16 %v7695, %v7694
        %v7727 = vpack.c.bf16 %v7697, %v7696
        %v7728 = vpack.c.bf16 %v7699, %v7698
        %v7729 = vpack.c.bf16 %v7701, %v7700
        %v7730 = vpack.c.bf16 %v7703, %v7702
        %v7731 = vpack.c.bf16 %v7705, %v7704
        %v7732 = vpack.c.bf16 %v7707, %v7706
        %v7733 = vpack.c.bf16 %v7709, %v7708
        %v7734 = vpack.c.bf16 %v7711, %v7710
        %v7735 = vpack.c.bf16 %v7713, %v7712
        %v7736 = vpack.c.bf16 %v7715, %v7714
        %v7737 = vpack.c.bf16 %v7717, %v7716
        %v7738 = vpack.c.bf16 %v7719, %v7718
        %v7739 = vpack.c.bf16 %v7721, %v7720
        %v7740 = vpack.c.bf16 %v7723, %v7722
        %v7741 = vpack.c.bf16 %v7725, %v7724
        %s7742 = scalar_lea.vmem %s3, 256
        %v7743 = vld [vmem:[%s7742] sm:$0xf]
        %v7744 = vld [vmem:[%s7742 + $0x4] sm:$0xf]
        %v7745 = vld [vmem:[%s7742 + $0x8] sm:$0xf]
        %v7746 = vld [vmem:[%s7742 + $0xc] sm:$0xf]
        %v7747 = vld [vmem:[%s7742 + $0x10] sm:$0xf]
        %v7748 = vld [vmem:[%s7742 + $0x14] sm:$0xf]
        %v7749 = vld [vmem:[%s7742 + $0x18] sm:$0xf]
        %v7750 = vld [vmem:[%s7742 + $0x1c] sm:$0xf]
        %v7759 = vunpack.c.l.b16 %v7743
        %v7760 = vunpack.c.l.b16 %v7744
        %v7761 = vunpack.c.l.b16 %v7745
        %v7762 = vunpack.c.l.b16 %v7746
        %v7763 = vunpack.c.l.b16 %v7747
        %v7764 = vunpack.c.l.b16 %v7748
        %v7765 = vunpack.c.l.b16 %v7749
        %v7766 = vunpack.c.l.b16 %v7750
        %v7767 = vpack.c.b16 %v7760, %v7759
        %v7768 = vpack.c.b16 %v7762, %v7761
        %v7769 = vpack.c.b16 %v7764, %v7763
        %v7770 = vpack.c.b16 %v7766, %v7765
        %v7776 = vsel %vm4822, %v7726, 0
        %v7779 = vsel %vm4822, %v7727, 0
        %v7782 = vsel %vm4822, %v7728, 0
        %v7785 = vsel %vm4822, %v7729, 0
        %v7788 = vsel %vm4822, %v7730, 0
        %v7791 = vsel %vm4822, %v7731, 0
        %v7794 = vsel %vm4822, %v7732, 0
        %v7797 = vsel %vm4822, %v7733, 0
        %v7800 = vsel %vm4822, %v7734, 0
        %v7803 = vsel %vm4822, %v7735, 0
        %v7806 = vsel %vm4822, %v7736, 0
        %v7809 = vsel %vm4822, %v7737, 0
        %v7812 = vsel %vm4822, %v7738, 0
        %v7815 = vsel %vm4822, %v7739, 0
        %v7818 = vsel %vm4822, %v7740, 0
        %v7821 = vsel %vm4822, %v7741, 0
        %7823 = vmatprep.subr.bf16.mxu0 0
        %7824 = vmatpush1.bf16.msra.mxu0 %v7767
        %7825 = vmatprep.subr.bf16.mxu0 0
        %7826 = vmatpush1.bf16.msra.mxu0 %v7768
        %7827 = vmatprep.subr.bf16.mxu0 0
        %7828 = vmatpush1.bf16.msra.mxu0 %v7769
        %7829 = vmatprep.subr.bf16.mxu0 0
        %7830 = vmatpush1.bf16.msra.mxu0 %v7770
        %7831 = vmatprep.subr.bf16.mxu0 0
        %7832 = vmatpush1.bf16.msra.mxu0 0
        %7833 = vmatprep.subr.bf16.mxu0 0
        %7834 = vmatpush1.bf16.msra.mxu0 0
        %7835 = vmatprep.subr.bf16.mxu0 0
        %7836 = vmatpush1.bf16.msra.mxu0 0
        %7837 = vmatprep.subr.bf16.mxu0 0
        %7838 = vmatpush1.bf16.msra.mxu0 0
        %7839 = vmatprep.subr.bf16.mxu0 0
        %7840 = vmatpush1.bf16.msra.mxu0 0
        %7841 = vmatprep.subr.bf16.mxu0 0
        %7842 = vmatpush1.bf16.msra.mxu0 0
        %7843 = vmatprep.subr.bf16.mxu0 0
        %7844 = vmatpush1.bf16.msra.mxu0 0
        %7845 = vmatprep.subr.bf16.mxu0 0
        %7846 = vmatpush1.bf16.msra.mxu0 0
        %7847 = vmatprep.subr.bf16.mxu0 0
        %7848 = vmatpush1.bf16.msra.mxu0 0
        %7849 = vmatprep.subr.bf16.mxu0 0
        %7850 = vmatpush1.bf16.msra.mxu0 0
        %7851 = vmatprep.subr.bf16.mxu0 0
        %7852 = vmatpush1.bf16.msra.mxu0 0
        %7853 = vmatprep.subr.bf16.mxu0 0
        %7854 = vmatpush1.bf16.msra.mxu0 0
        %7855 = vmatprep.mubr.bf16.mxu0 0
        %7856 = vmatmul.mubr.bf16.gmra.mrb[0].mxu0 %v7776
        %v7857 = vpop.f32.mrb[0].mxu0
        %v7858 = vadd.f32 0.0, %v7857
        %v7859 = vpop.f32.mrb[0].mxu0
        %v7860 = vpop.f32.mrb[0].mxu0
        %v7861 = vadd.f32 0.0, %v7860
        %v7862 = vpop.f32.mrb[0].mxu0
        %7863 = vmatprep.mubr.bf16.mxu0 0
        %7864 = vmatmul.mubr.bf16.gmra.mrb[0].mxu0 %v7779
        %v7865 = vpop.f32.mrb[0].mxu0
        %v7866 = vadd.f32 0.0, %v7865
        %v7867 = vpop.f32.mrb[0].mxu0
        %v7868 = vpop.f32.mrb[0].mxu0
        %v7869 = vadd.f32 0.0, %v7868
        %v7870 = vpop.f32.mrb[0].mxu0
        %7871 = vmatprep.mubr.bf16.mxu0 0
        %7872 = vmatmul.mubr.bf16.gmra.mrb[0].mxu0 %v7782
        %v7873 = vpop.f32.mrb[0].mxu0
        %v7874 = vadd.f32 0.0, %v7873
        %v7875 = vpop.f32.mrb[0].mxu0
        %v7876 = vpop.f32.mrb[0].mxu0
        %v7877 = vadd.f32 0.0, %v7876
        %v7878 = vpop.f32.mrb[0].mxu0
        %7879 = vmatprep.mubr.bf16.mxu0 0
        %7880 = vmatmul.mubr.bf16.gmra.mrb[0].mxu0 %v7785
        %v7881 = vpop.f32.mrb[0].mxu0
        %v7882 = vadd.f32 0.0, %v7881
        %v7883 = vpop.f32.mrb[0].mxu0
        %v7884 = vpop.f32.mrb[0].mxu0
        %v7885 = vadd.f32 0.0, %v7884
        %v7886 = vpop.f32.mrb[0].mxu0
        %7887 = vmatprep.mubr.bf16.mxu0 0
        %7888 = vmatmul.mubr.bf16.gmra.mrb[0].mxu0 %v7788
        %v7889 = vpop.f32.mrb[0].mxu0
        %v7890 = vadd.f32 0.0, %v7889
        %v7891 = vpop.f32.mrb[0].mxu0
        %v7892 = vpop.f32.mrb[0].mxu0
        %v7893 = vadd.f32 0.0, %v7892
        %v7894 = vpop.f32.mrb[0].mxu0
        %7895 = vmatprep.mubr.bf16.mxu0 0
        %7896 = vmatmul.mubr.bf16.gmra.mrb[0].mxu0 %v7791
        %v7897 = vpop.f32.mrb[0].mxu0
        %v7898 = vadd.f32 0.0, %v7897
        %v7899 = vpop.f32.mrb[0].mxu0
        %v7900 = vpop.f32.mrb[0].mxu0
        %v7901 = vadd.f32 0.0, %v7900
        %v7902 = vpop.f32.mrb[0].mxu0
        %7903 = vmatprep.mubr.bf16.mxu0 0
        %7904 = vmatmul.mubr.bf16.gmra.mrb[0].mxu0 %v7794
        %v7905 = vpop.f32.mrb[0].mxu0
        %v7906 = vadd.f32 0.0, %v7905
        %v7907 = vpop.f32.mrb[0].mxu0
        %v7908 = vpop.f32.mrb[0].mxu0
        %v7909 = vadd.f32 0.0, %v7908
        %v7910 = vpop.f32.mrb[0].mxu0
        %7911 = vmatprep.mubr.bf16.mxu0 0
        %7912 = vmatmul.mubr.bf16.gmra.mrb[0].mxu0 %v7797
        %v7913 = vpop.f32.mrb[0].mxu0
        %v7914 = vadd.f32 0.0, %v7913
        %v7915 = vpop.f32.mrb[0].mxu0
        %v7916 = vpop.f32.mrb[0].mxu0
        %v7917 = vadd.f32 0.0, %v7916
        %v7918 = vpop.f32.mrb[0].mxu0
        %7919 = vmatprep.mubr.bf16.mxu0 0
        %7920 = vmatmul.mubr.bf16.gmra.mrb[0].mxu0 %v7800
        %v7921 = vpop.f32.mrb[0].mxu0
        %v7922 = vadd.f32 0.0, %v7921
        %v7923 = vpop.f32.mrb[0].mxu0
        %v7924 = vpop.f32.mrb[0].mxu0
        %v7925 = vadd.f32 0.0, %v7924
        %v7926 = vpop.f32.mrb[0].mxu0
        %7927 = vmatprep.mubr.bf16.mxu0 0
        %7928 = vmatmul.mubr.bf16.gmra.mrb[0].mxu0 %v7803
        %v7929 = vpop.f32.mrb[0].mxu0
        %v7930 = vadd.f32 0.0, %v7929
        %v7931 = vpop.f32.mrb[0].mxu0
        %v7932 = vpop.f32.mrb[0].mxu0
        %v7933 = vadd.f32 0.0, %v7932
        %v7934 = vpop.f32.mrb[0].mxu0
        %7935 = vmatprep.mubr.bf16.mxu0 0
        %7936 = vmatmul.mubr.bf16.gmra.mrb[0].mxu0 %v7806
        %v7937 = vpop.f32.mrb[0].mxu0
        %v7938 = vadd.f32 0.0, %v7937
        %v7939 = vpop.f32.mrb[0].mxu0
        %v7940 = vpop.f32.mrb[0].mxu0
        %v7941 = vadd.f32 0.0, %v7940
        %v7942 = vpop.f32.mrb[0].mxu0
        %7943 = vmatprep.mubr.bf16.mxu0 0
        %7944 = vmatmul.mubr.bf16.gmra.mrb[0].mxu0 %v7809
        %v7945 = vpop.f32.mrb[0].mxu0
        %v7946 = vadd.f32 0.0, %v7945
        %v7947 = vpop.f32.mrb[0].mxu0
        %v7948 = vpop.f32.mrb[0].mxu0
        %v7949 = vadd.f32 0.0, %v7948
        %v7950 = vpop.f32.mrb[0].mxu0
        %7951 = vmatprep.mubr.bf16.mxu0 0
        %7952 = vmatmul.mubr.bf16.gmra.mrb[0].mxu0 %v7812
        %v7953 = vpop.f32.mrb[0].mxu0
        %v7954 = vadd.f32 0.0, %v7953
        %v7955 = vpop.f32.mrb[0].mxu0
        %v7956 = vpop.f32.mrb[0].mxu0
        %v7957 = vadd.f32 0.0, %v7956
        %v7958 = vpop.f32.mrb[0].mxu0
        %7959 = vmatprep.mubr.bf16.mxu0 0
        %7960 = vmatmul.mubr.bf16.gmra.mrb[0].mxu0 %v7815
        %v7961 = vpop.f32.mrb[0].mxu0
        %v7962 = vadd.f32 0.0, %v7961
        %v7963 = vpop.f32.mrb[0].mxu0
        %v7964 = vpop.f32.mrb[0].mxu0
        %v7965 = vadd.f32 0.0, %v7964
        %v7966 = vpop.f32.mrb[0].mxu0
        %7967 = vmatprep.mubr.bf16.mxu0 0
        %7968 = vmatmul.mubr.bf16.gmra.mrb[0].mxu0 %v7818
        %v7969 = vpop.f32.mrb[0].mxu0
        %v7970 = vadd.f32 0.0, %v7969
        %v7971 = vpop.f32.mrb[0].mxu0
        %v7972 = vpop.f32.mrb[0].mxu0
        %v7973 = vadd.f32 0.0, %v7972
        %v7974 = vpop.f32.mrb[0].mxu0
        %7975 = vmatprep.mubr.bf16.mxu0 0
        %7976 = vmatmul.mubr.bf16.gmra.mrb[0].mxu0 %v7821
        %v7977 = vpop.f32.mrb[0].mxu0
        %v7978 = vadd.f32 0.0, %v7977
        %v7979 = vpop.f32.mrb[0].mxu0
        %v7980 = vpop.f32.mrb[0].mxu0
        %v7981 = vadd.f32 0.0, %v7980
        %v7982 = vpop.f32.mrb[0].mxu0
        %7983 = vdwg.mxu0
        %v7984 = vadd.f32 %v7662, %v7858
        %v7985 = vadd.f32 %v7663, %v7861
        %v7986 = vadd.f32 %v7664, %v7866
        %v7987 = vadd.f32 %v7665, %v7869
        %v7988 = vadd.f32 %v7666, %v7874
        %v7989 = vadd.f32 %v7667, %v7877
        %v7990 = vadd.f32 %v7668, %v7882
        %v7991 = vadd.f32 %v7669, %v7885
        %v7992 = vadd.f32 %v7670, %v7890
        %v7993 = vadd.f32 %v7671, %v7893
        %v7994 = vadd.f32 %v7672, %v7898
        %v7995 = vadd.f32 %v7673, %v7901
        %v7996 = vadd.f32 %v7674, %v7906
        %v7997 = vadd.f32 %v7675, %v7909
        %v7998 = vadd.f32 %v7676, %v7914
        %v7999 = vadd.f32 %v7677, %v7917
        %v8000 = vadd.f32 %v7678, %v7922
        %v8001 = vadd.f32 %v7679, %v7925
        %v8002 = vadd.f32 %v7680, %v7930
        %v8003 = vadd.f32 %v7681, %v7933
        %v8004 = vadd.f32 %v7682, %v7938
        %v8005 = vadd.f32 %v7683, %v7941
        %v8006 = vadd.f32 %v7684, %v7946
        %v8007 = vadd.f32 %v7685, %v7949
        %v8008 = vadd.f32 %v7686, %v7954
        %v8009 = vadd.f32 %v7687, %v7957
        %v8010 = vadd.f32 %v7688, %v7962
        %v8011 = vadd.f32 %v7689, %v7965
        %v8012 = vadd.f32 %v7690, %v7970
        %v8013 = vadd.f32 %v7691, %v7973
        %v8014 = vadd.f32 %v7692, %v7978
        %v8015 = vadd.f32 %v7693, %v7981
        %v8016 = vld [vmem:[%s4] sm:$0x1]
        %v8018 = vlaneseq
        %v8019 = vshrl.u32 %v8018, 7
        %v8020 = vsub.s32 0, %v8019
        %v8021 = vrot.slane %v8016, %v8020
        %v8023 = vadd.f32 %v7984, %v8021
        %v8024 = vadd.f32 %v7985, %v8021
        %v8025 = vadd.f32 %v7986, %v8021
        %v8026 = vadd.f32 %v7987, %v8021
        %v8027 = vadd.f32 %v7988, %v8021
        %v8028 = vadd.f32 %v7989, %v8021
        %v8029 = vadd.f32 %v7990, %v8021
        %v8030 = vadd.f32 %v7991, %v8021
        %v8031 = vadd.f32 %v7992, %v8021
        %v8032 = vadd.f32 %v7993, %v8021
        %v8033 = vadd.f32 %v7994, %v8021
        %v8034 = vadd.f32 %v7995, %v8021
        %v8035 = vadd.f32 %v7996, %v8021
        %v8036 = vadd.f32 %v7997, %v8021
        %v8037 = vadd.f32 %v7998, %v8021
        %v8038 = vadd.f32 %v7999, %v8021
        %v8039 = vadd.f32 %v8000, %v8021
        %v8040 = vadd.f32 %v8001, %v8021
        %v8041 = vadd.f32 %v8002, %v8021
        %v8042 = vadd.f32 %v8003, %v8021
        %v8043 = vadd.f32 %v8004, %v8021
        %v8044 = vadd.f32 %v8005, %v8021
        %v8045 = vadd.f32 %v8006, %v8021
        %v8046 = vadd.f32 %v8007, %v8021
        %v8047 = vadd.f32 %v8008, %v8021
        %v8048 = vadd.f32 %v8009, %v8021
        %v8049 = vadd.f32 %v8010, %v8021
        %v8050 = vadd.f32 %v8011, %v8021
        %v8051 = vadd.f32 %v8012, %v8021
        %v8052 = vadd.f32 %v8013, %v8021
        %v8053 = vadd.f32 %v8014, %v8021
        %v8054 = vadd.f32 %v8015, %v8021
        %v8055 = vsel %vm4822, %v8023, 0.0
        %v8056 = vsel %vm4822, %v8024, 0.0
        %v8057 = vadd.f32 %v8055, %v8056
        %v8058 = vsel %vm4822, %v8025, 0.0
        %v8059 = vadd.f32 %v8057, %v8058
        %v8060 = vsel %vm4822, %v8026, 0.0
        %v8061 = vadd.f32 %v8059, %v8060
        %v8062 = vsel %vm4822, %v8027, 0.0
        %v8063 = vadd.f32 %v8061, %v8062
        %v8064 = vsel %vm4822, %v8028, 0.0
        %v8065 = vadd.f32 %v8063, %v8064
        %v8066 = vsel %vm4822, %v8029, 0.0
        %v8067 = vadd.f32 %v8065, %v8066
        %v8068 = vsel %vm4822, %v8030, 0.0
        %v8069 = vadd.f32 %v8067, %v8068
        %v8070 = vsel %vm4822, %v8031, 0.0
        %v8071 = vadd.f32 %v8069, %v8070
        %v8072 = vsel %vm4822, %v8032, 0.0
        %v8073 = vadd.f32 %v8071, %v8072
        %v8074 = vsel %vm4822, %v8033, 0.0
        %v8075 = vadd.f32 %v8073, %v8074
        %v8076 = vsel %vm4822, %v8034, 0.0
        %v8077 = vadd.f32 %v8075, %v8076
        %v8078 = vsel %vm4822, %v8035, 0.0
        %v8079 = vadd.f32 %v8077, %v8078
        %v8080 = vsel %vm4822, %v8036, 0.0
        %v8081 = vadd.f32 %v8079, %v8080
        %v8082 = vsel %vm4822, %v8037, 0.0
        %v8083 = vadd.f32 %v8081, %v8082
        %v8084 = vsel %vm4822, %v8038, 0.0
        %v8085 = vadd.f32 %v8083, %v8084
        %v8086 = vsel %vm4822, %v8039, 0.0
        %v8087 = vadd.f32 %v8085, %v8086
        %v8088 = vsel %vm4822, %v8040, 0.0
        %v8089 = vadd.f32 %v8087, %v8088
        %v8090 = vsel %vm4822, %v8041, 0.0
        %v8091 = vadd.f32 %v8089, %v8090
        %v8092 = vsel %vm4822, %v8042, 0.0
        %v8093 = vadd.f32 %v8091, %v8092
        %v8094 = vsel %vm4822, %v8043, 0.0
        %v8095 = vadd.f32 %v8093, %v8094
        %v8096 = vsel %vm4822, %v8044, 0.0
        %v8097 = vadd.f32 %v8095, %v8096
        %v8098 = vsel %vm4822, %v8045, 0.0
        %v8099 = vadd.f32 %v8097, %v8098
        %v8100 = vsel %vm4822, %v8046, 0.0
        %v8101 = vadd.f32 %v8099, %v8100
        %v8102 = vsel %vm4822, %v8047, 0.0
        %v8103 = vadd.f32 %v8101, %v8102
        %v8104 = vsel %vm4822, %v8048, 0.0
        %v8105 = vadd.f32 %v8103, %v8104
        %v8106 = vsel %vm4822, %v8049, 0.0
        %v8107 = vadd.f32 %v8105, %v8106
        %v8108 = vsel %vm4822, %v8050, 0.0
        %v8109 = vadd.f32 %v8107, %v8108
        %v8110 = vsel %vm4822, %v8051, 0.0
        %v8111 = vadd.f32 %v8109, %v8110
        %v8112 = vsel %vm4822, %v8052, 0.0
        %v8113 = vadd.f32 %v8111, %v8112
        %v8114 = vsel %vm4822, %v8053, 0.0
        %v8115 = vadd.f32 %v8113, %v8114
        %v8116 = vsel %vm4822, %v8054, 0.0
        %v8117 = vadd.f32 %v8115, %v8116
        %v8118 = vrot.slane %v8117, 4
        %v8119 = vadd.f32 %v8117, %v8118
        %v8120 = vrot.slane %v8119, 2
        %v8121 = vadd.f32 %v8119, %v8120
        %v8122 = vrot.slane %v8121, 1
        %v8123 = vadd.f32 %v8121, %v8122
        %v8124 = vmul.f32 %v8123, %v4892
        %v8125 = vsub.f32 %v8023, %v8124
        %v8126 = vsub.f32 %v8024, %v8124
        %v8127 = vsub.f32 %v8025, %v8124
        %v8128 = vsub.f32 %v8026, %v8124
        %v8129 = vsub.f32 %v8027, %v8124
        %v8130 = vsub.f32 %v8028, %v8124
        %v8131 = vsub.f32 %v8029, %v8124
        %v8132 = vsub.f32 %v8030, %v8124
        %v8133 = vsub.f32 %v8031, %v8124
        %v8134 = vsub.f32 %v8032, %v8124
        %v8135 = vsub.f32 %v8033, %v8124
        %v8136 = vsub.f32 %v8034, %v8124
        %v8137 = vsub.f32 %v8035, %v8124
        %v8138 = vsub.f32 %v8036, %v8124
        %v8139 = vsub.f32 %v8037, %v8124
        %v8140 = vsub.f32 %v8038, %v8124
        %v8141 = vsub.f32 %v8039, %v8124
        %v8142 = vsub.f32 %v8040, %v8124
        %v8143 = vsub.f32 %v8041, %v8124
        %v8144 = vsub.f32 %v8042, %v8124
        %v8145 = vsub.f32 %v8043, %v8124
        %v8146 = vsub.f32 %v8044, %v8124
        %v8147 = vsub.f32 %v8045, %v8124
        %v8148 = vsub.f32 %v8046, %v8124
        %v8149 = vsub.f32 %v8047, %v8124
        %v8150 = vsub.f32 %v8048, %v8124
        %v8151 = vsub.f32 %v8049, %v8124
        %v8152 = vsub.f32 %v8050, %v8124
        %v8153 = vsub.f32 %v8051, %v8124
        %v8154 = vsub.f32 %v8052, %v8124
        %v8155 = vsub.f32 %v8053, %v8124
        %v8156 = vsub.f32 %v8054, %v8124
        %v8157 = vmul.f32 %v8125, %v8125
        %v8158 = vmul.f32 %v8126, %v8126
        %v8159 = vmul.f32 %v8127, %v8127
        %v8160 = vmul.f32 %v8128, %v8128
        %v8161 = vmul.f32 %v8129, %v8129
        %v8162 = vmul.f32 %v8130, %v8130
        %v8163 = vmul.f32 %v8131, %v8131
        %v8164 = vmul.f32 %v8132, %v8132
        %v8165 = vmul.f32 %v8133, %v8133
        %v8166 = vmul.f32 %v8134, %v8134
        %v8167 = vmul.f32 %v8135, %v8135
        %v8168 = vmul.f32 %v8136, %v8136
        %v8169 = vmul.f32 %v8137, %v8137
        %v8170 = vmul.f32 %v8138, %v8138
        %v8171 = vmul.f32 %v8139, %v8139
        %v8172 = vmul.f32 %v8140, %v8140
        %v8173 = vmul.f32 %v8141, %v8141
        %v8174 = vmul.f32 %v8142, %v8142
        %v8175 = vmul.f32 %v8143, %v8143
        %v8176 = vmul.f32 %v8144, %v8144
        %v8177 = vmul.f32 %v8145, %v8145
        %v8178 = vmul.f32 %v8146, %v8146
        %v8179 = vmul.f32 %v8147, %v8147
        %v8180 = vmul.f32 %v8148, %v8148
        %v8181 = vmul.f32 %v8149, %v8149
        %v8182 = vmul.f32 %v8150, %v8150
        %v8183 = vmul.f32 %v8151, %v8151
        %v8184 = vmul.f32 %v8152, %v8152
        %v8185 = vmul.f32 %v8153, %v8153
        %v8186 = vmul.f32 %v8154, %v8154
        %v8187 = vmul.f32 %v8155, %v8155
        %v8188 = vmul.f32 %v8156, %v8156
        %v8189 = vsel %vm4822, %v8157, 0.0
        %v8190 = vsel %vm4822, %v8158, 0.0
        %v8191 = vadd.f32 %v8189, %v8190
        %v8192 = vsel %vm4822, %v8159, 0.0
        %v8193 = vadd.f32 %v8191, %v8192
        %v8194 = vsel %vm4822, %v8160, 0.0
        %v8195 = vadd.f32 %v8193, %v8194
        %v8196 = vsel %vm4822, %v8161, 0.0
        %v8197 = vadd.f32 %v8195, %v8196
        %v8198 = vsel %vm4822, %v8162, 0.0
        %v8199 = vadd.f32 %v8197, %v8198
        %v8200 = vsel %vm4822, %v8163, 0.0
        %v8201 = vadd.f32 %v8199, %v8200
        %v8202 = vsel %vm4822, %v8164, 0.0
        %v8203 = vadd.f32 %v8201, %v8202
        %v8204 = vsel %vm4822, %v8165, 0.0
        %v8205 = vadd.f32 %v8203, %v8204
        %v8206 = vsel %vm4822, %v8166, 0.0
        %v8207 = vadd.f32 %v8205, %v8206
        %v8208 = vsel %vm4822, %v8167, 0.0
        %v8209 = vadd.f32 %v8207, %v8208
        %v8210 = vsel %vm4822, %v8168, 0.0
        %v8211 = vadd.f32 %v8209, %v8210
        %v8212 = vsel %vm4822, %v8169, 0.0
        %v8213 = vadd.f32 %v8211, %v8212
        %v8214 = vsel %vm4822, %v8170, 0.0
        %v8215 = vadd.f32 %v8213, %v8214
        %v8216 = vsel %vm4822, %v8171, 0.0
        %v8217 = vadd.f32 %v8215, %v8216
        %v8218 = vsel %vm4822, %v8172, 0.0
        %v8219 = vadd.f32 %v8217, %v8218
        %v8220 = vsel %vm4822, %v8173, 0.0
        %v8221 = vadd.f32 %v8219, %v8220
        %v8222 = vsel %vm4822, %v8174, 0.0
        %v8223 = vadd.f32 %v8221, %v8222
        %v8224 = vsel %vm4822, %v8175, 0.0
        %v8225 = vadd.f32 %v8223, %v8224
        %v8226 = vsel %vm4822, %v8176, 0.0
        %v8227 = vadd.f32 %v8225, %v8226
        %v8228 = vsel %vm4822, %v8177, 0.0
        %v8229 = vadd.f32 %v8227, %v8228
        %v8230 = vsel %vm4822, %v8178, 0.0
        %v8231 = vadd.f32 %v8229, %v8230
        %v8232 = vsel %vm4822, %v8179, 0.0
        %v8233 = vadd.f32 %v8231, %v8232
        %v8234 = vsel %vm4822, %v8180, 0.0
        %v8235 = vadd.f32 %v8233, %v8234
        %v8236 = vsel %vm4822, %v8181, 0.0
        %v8237 = vadd.f32 %v8235, %v8236
        %v8238 = vsel %vm4822, %v8182, 0.0
        %v8239 = vadd.f32 %v8237, %v8238
        %v8240 = vsel %vm4822, %v8183, 0.0
        %v8241 = vadd.f32 %v8239, %v8240
        %v8242 = vsel %vm4822, %v8184, 0.0
        %v8243 = vadd.f32 %v8241, %v8242
        %v8244 = vsel %vm4822, %v8185, 0.0
        %v8245 = vadd.f32 %v8243, %v8244
        %v8246 = vsel %vm4822, %v8186, 0.0
        %v8247 = vadd.f32 %v8245, %v8246
        %v8248 = vsel %vm4822, %v8187, 0.0
        %v8249 = vadd.f32 %v8247, %v8248
        %v8250 = vsel %vm4822, %v8188, 0.0
        %v8251 = vadd.f32 %v8249, %v8250
        %v8252 = vrot.slane %v8251, 4
        %v8253 = vadd.f32 %v8251, %v8252
        %v8254 = vrot.slane %v8253, 2
        %v8255 = vadd.f32 %v8253, %v8254
        %v8256 = vrot.slane %v8255, 1
        %v8257 = vadd.f32 %v8255, %v8256
        %v8258 = vmul.f32 %v8257, %v4892
        %v8259 = vadd.f32 %v8258, 1e-05
        %v8260 = vrsqrt.pop %v8259
        %v8261 = vmul.f32 %v8125, %v8260
        %v8262 = vmul.f32 %v8126, %v8260
        %v8263 = vmul.f32 %v8127, %v8260
        %v8264 = vmul.f32 %v8128, %v8260
        %v8265 = vmul.f32 %v8129, %v8260
        %v8266 = vmul.f32 %v8130, %v8260
        %v8267 = vmul.f32 %v8131, %v8260
        %v8268 = vmul.f32 %v8132, %v8260
        %v8269 = vmul.f32 %v8133, %v8260
        %v8270 = vmul.f32 %v8134, %v8260
        %v8271 = vmul.f32 %v8135, %v8260
        %v8272 = vmul.f32 %v8136, %v8260
        %v8273 = vmul.f32 %v8137, %v8260
        %v8274 = vmul.f32 %v8138, %v8260
        %v8275 = vmul.f32 %v8139, %v8260
        %v8276 = vmul.f32 %v8140, %v8260
        %v8277 = vmul.f32 %v8141, %v8260
        %v8278 = vmul.f32 %v8142, %v8260
        %v8279 = vmul.f32 %v8143, %v8260
        %v8280 = vmul.f32 %v8144, %v8260
        %v8281 = vmul.f32 %v8145, %v8260
        %v8282 = vmul.f32 %v8146, %v8260
        %v8283 = vmul.f32 %v8147, %v8260
        %v8284 = vmul.f32 %v8148, %v8260
        %v8285 = vmul.f32 %v8149, %v8260
        %v8286 = vmul.f32 %v8150, %v8260
        %v8287 = vmul.f32 %v8151, %v8260
        %v8288 = vmul.f32 %v8152, %v8260
        %v8289 = vmul.f32 %v8153, %v8260
        %v8290 = vmul.f32 %v8154, %v8260
        %v8291 = vmul.f32 %v8155, %v8260
        %v8292 = vmul.f32 %v8156, %v8260
        %v8293 = vmax.f32 %v8261, 0.0
        %v8294 = vmax.f32 %v8262, 0.0
        %v8295 = vmax.f32 %v8263, 0.0
        %v8296 = vmax.f32 %v8264, 0.0
        %v8297 = vmax.f32 %v8265, 0.0
        %v8298 = vmax.f32 %v8266, 0.0
        %v8299 = vmax.f32 %v8267, 0.0
        %v8300 = vmax.f32 %v8268, 0.0
        %v8301 = vmax.f32 %v8269, 0.0
        %v8302 = vmax.f32 %v8270, 0.0
        %v8303 = vmax.f32 %v8271, 0.0
        %v8304 = vmax.f32 %v8272, 0.0
        %v8305 = vmax.f32 %v8273, 0.0
        %v8306 = vmax.f32 %v8274, 0.0
        %v8307 = vmax.f32 %v8275, 0.0
        %v8308 = vmax.f32 %v8276, 0.0
        %v8309 = vmax.f32 %v8277, 0.0
        %v8310 = vmax.f32 %v8278, 0.0
        %v8311 = vmax.f32 %v8279, 0.0
        %v8312 = vmax.f32 %v8280, 0.0
        %v8313 = vmax.f32 %v8281, 0.0
        %v8314 = vmax.f32 %v8282, 0.0
        %v8315 = vmax.f32 %v8283, 0.0
        %v8316 = vmax.f32 %v8284, 0.0
        %v8317 = vmax.f32 %v8285, 0.0
        %v8318 = vmax.f32 %v8286, 0.0
        %v8319 = vmax.f32 %v8287, 0.0
        %v8320 = vmax.f32 %v8288, 0.0
        %v8321 = vmax.f32 %v8289, 0.0
        %v8322 = vmax.f32 %v8290, 0.0
        %v8323 = vmax.f32 %v8291, 0.0
        %v8324 = vmax.f32 %v8292, 0.0
        %8325 = vst.msk [vmem:[%s217] sm:$0xff] %vm4822, %v8293
        %8326 = vst.msk [vmem:[%s217 + $0x8] sm:$0xff] %vm4822, %v8294
        %8327 = vst.msk [vmem:[%s217 + $0x10] sm:$0xff] %vm4822, %v8295
        %8328 = vst.msk [vmem:[%s217 + $0x18] sm:$0xff] %vm4822, %v8296
        %8329 = vst.msk [vmem:[%s217 + $0x20] sm:$0xff] %vm4822, %v8297
        %8330 = vst.msk [vmem:[%s217 + $0x28] sm:$0xff] %vm4822, %v8298
        %8331 = vst.msk [vmem:[%s217 + $0x30] sm:$0xff] %vm4822, %v8299
        %8332 = vst.msk [vmem:[%s217 + $0x38] sm:$0xff] %vm4822, %v8300
        %8333 = vst.msk [vmem:[%s217 + $0x40] sm:$0xff] %vm4822, %v8301
        %8334 = vst.msk [vmem:[%s217 + $0x48] sm:$0xff] %vm4822, %v8302
        %8335 = vst.msk [vmem:[%s217 + $0x50] sm:$0xff] %vm4822, %v8303
        %8336 = vst.msk [vmem:[%s217 + $0x58] sm:$0xff] %vm4822, %v8304
        %8337 = vst.msk [vmem:[%s217 + $0x60] sm:$0xff] %vm4822, %v8305
        %8338 = vst.msk [vmem:[%s217 + $0x68] sm:$0xff] %vm4822, %v8306
        %8339 = vst.msk [vmem:[%s217 + $0x70] sm:$0xff] %vm4822, %v8307
        %8340 = vst.msk [vmem:[%s217 + $0x78] sm:$0xff] %vm4822, %v8308
        %8341 = vst.msk [vmem:[%s217 + $0x80] sm:$0xff] %vm4822, %v8309
        %8342 = vst.msk [vmem:[%s217 + $0x88] sm:$0xff] %vm4822, %v8310
        %8343 = vst.msk [vmem:[%s217 + $0x90] sm:$0xff] %vm4822, %v8311
        %8344 = vst.msk [vmem:[%s217 + $0x98] sm:$0xff] %vm4822, %v8312
        %8345 = vst.msk [vmem:[%s217 + $0xa0] sm:$0xff] %vm4822, %v8313
        %8346 = vst.msk [vmem:[%s217 + $0xa8] sm:$0xff] %vm4822, %v8314
        %8347 = vst.msk [vmem:[%s217 + $0xb0] sm:$0xff] %vm4822, %v8315
        %8348 = vst.msk [vmem:[%s217 + $0xb8] sm:$0xff] %vm4822, %v8316
        %8349 = vst.msk [vmem:[%s217 + $0xc0] sm:$0xff] %vm4822, %v8317
        %8350 = vst.msk [vmem:[%s217 + $0xc8] sm:$0xff] %vm4822, %v8318
        %8351 = vst.msk [vmem:[%s217 + $0xd0] sm:$0xff] %vm4822, %v8319
        %8352 = vst.msk [vmem:[%s217 + $0xd8] sm:$0xff] %vm4822, %v8320
        %8353 = vst.msk [vmem:[%s217 + $0xe0] sm:$0xff] %vm4822, %v8321
        %8354 = vst.msk [vmem:[%s217 + $0xe8] sm:$0xff] %vm4822, %v8322
        %8355 = vst.msk [vmem:[%s217 + $0xf0] sm:$0xff] %vm4822, %v8323
        %8356 = vst.msk [vmem:[%s217 + $0xf8] sm:$0xff] %vm4822, %v8324
        %s8357 = sand.u32 %s137, 1
        %s8358 = scalar_lea.sflag [#allocation4], %s8357
        %s8359 = sand.u32 %s137, 1
        %s8360 = smul.addr %s8359, 256
        %s8361 = scalar_lea.vmem [#allocation3], %s8360
        // Predicated region
        $region41: #{inconv_forward.1} parent=39 // pred_check
          %p8362 = pneg %p147
        $region42: #{inconv_forward.1} parent=39 // pred_check_branch
          %8364 = sbr.rel (%p8362) target = $region44
        $region43: #{inconv_forward.1} parent=39 // pred_region
          %s8366 = ssub.s32 4096, 4096
          %8367 = vsyncadd %s8358, %s8366
          %s8368 = smul.addr %s19, 32
          %s8369 = smul.addr %s8368, 128
          %s8370 = scalar_lea.hbm %s5, %s8369
          %s8371 = sshll.u32 %s8361, 4
          %s8372 = int_to_ptr.vmem [resolvable:$true] %s8371
          %8377 = dma.vmem_to_hbm [thread:$0]  %s8372, 4096, %s8370, %s8358, 128, 128, 8
        $region44: #{inconv_forward.1} parent=39 // pred_fallthru
          _
      $region40: #{inconv_forward.1} parent=5 // pred_fallthru
        _
      %p8378 = scmp.le.s32.totalorder 2, %s14
      // Predicated region
      $region45: #{inconv_forward.1} parent=5 // pred_check
        %p8379 = pneg %p8378
      $region46: #{inconv_forward.1} parent=5 // pred_check_branch
        %8381 = sbr.rel (%p8379) target = $region48
      $region47: #{inconv_forward.1} parent=5 // pred_region
        %s8382 = ssub.s32 %s14, 2
        // Predicated region
        $region49: #{inconv_forward.1} parent=47 // pred_check
          %p8383 = pneg %p153
        $region50: #{inconv_forward.1} parent=47 // pred_check_branch
          %8385 = sbr.rel (%p8383) target = $region52
        $region51: #{inconv_forward.1} parent=47 // pred_region
          %s8386 = sand.u32 %s138, 1
          %s8387 = scalar_lea.sflag [#allocation4], %s8386
          %s8388 = sand.u32 %s138, 1
          %s8389 = smul.addr %s8388, 256
          %s8390 = scalar_lea.vmem [#allocation3], %s8389
          %8391 = dma.done %s8387, 4096
        $region52: #{inconv_forward.1} parent=47 // pred_fallthru
          _
      $region48: #{inconv_forward.1} parent=5 // pred_fallthru
        _
    $region6: #{inconv_forward.1} parent=1 // loop_footer
      %s18 = sadd.s32 1, %s14
    $region7: #{inconv_forward.1} parent=1 // loop_footer_branch
      %13 = sbr.rel target = $region3
    $region8: #{inconv_forward.1} parent=1 // loop_exit
      _
    %8392 = vsyncpa [#allocation4], 1
    %s8393 = scalar_lea.sflag [#allocation4], 1
    %8394 = vsyncpa %s8393, 1

</llo_original>
